<compile_context>
chip_gen: v7x
topology: tpu7x:2x2x1
jax: 0.10.0
libtpu: 0.0.40
codegen_flags: <defaults>
</compile_context>

<pallas_src>
import math
import functools

import jax
import jax.numpy as jnp
from jax.experimental import pallas as pl
from jax.experimental.pallas import tpu as pltpu


VEC_ORDER = ("ln1g", "ln1b", "bq", "bk", "bv", "bo", "ln2g", "ln2b", "b2")
ARG_ORDER = ("vecs", "b1", "wq", "wk", "wv", "wo", "w1", "w2")


# -----------------------------------------------------------------------------
# Pallas kernel: one encoder-layer step of the fused stack.
# grid = (B // b_blk, num_layers); the output block (b_blk, T, D) is resident
# across the layer axis and holds the running (f32) activation.
# -----------------------------------------------------------------------------
def encoder_stack_kernel(x_ref, vecs, b1v, wq, wk, wv, wo, w1, w2, o_ref,
                         *, n_heads, head_dim, b_blk):
    eps = 1e-5
    layer = pl.program_id(1)

    # Layer 0: seed the resident activation (output VMEM block) with the input.
    @pl.when(layer == 0)
    def _():
        o_ref[...] = x_ref[...].astype(o_ref.dtype)

    Bb, T, D = o_ref.shape
    M = Bb * T
    x = o_ref[...].reshape(M, D)                     # flattened f32 residual stream

    # Unpack the per-layer vector pack (one small (9, D) tile -> static slices).
    vv = vecs[0]                                     # (9, D)
    ln1g, ln1b = vv[0:1], vv[1:2]
    bq, bk, bv, bo = vv[2:3], vv[3:4], vv[4:5], vv[5:6]
    ln2g, ln2b, b2 = vv[6:7], vv[7:8], vv[8:9]
    b1 = b1v[0]                                      # (1, ff)

    def layer_norm(z, g, b):
        mu = jnp.mean(z, axis=-1, keepdims=True)
        var = jnp.mean(jnp.square(z - mu), axis=-1, keepdims=True)
        return (z - mu) * jax.lax.rsqrt(var + eps) * g + b

    # ---- LayerNorm 1 + QKV projections over all b_blk*T rows (bf16 MXU, f32 acc).
    # NOTE: 1/sqrt(head_dim) is already folded into wq / bq at stacking time.
    xn = layer_norm(x, ln1g, ln1b).astype(jnp.bfloat16)
    q = jnp.dot(xn, wq[0], preferred_element_type=jnp.float32) + bq
    k = jnp.dot(xn, wk[0], preferred_element_type=jnp.float32) + bk
    v = jnp.dot(xn, wv[0], preferred_element_type=jnp.float32) + bv

    # ---- multi-head attention, per sample (head-batched einsums, no per-head loop).
    H, hd = n_heads, head_dim
    att_rows = []
    for b in range(b_blk):                           # static, small
        qb = q[b * T:(b + 1) * T]
        kb = k[b * T:(b + 1) * T]
        vb = v[b * T:(b + 1) * T]
        qh = jnp.transpose(qb.reshape(T, H, hd), (1, 0, 2)).astype(jnp.bfloat16)
        kh = jnp.transpose(kb.reshape(T, H, hd), (1, 0, 2)).astype(jnp.bfloat16)
        vh = jnp.transpose(vb.reshape(T, H, hd), (1, 0, 2)).astype(jnp.bfloat16)

        s = jnp.einsum("htd,hsd->hts", qh, kh,
                       preferred_element_type=jnp.float32)        # (H,T,T), pre-scaled
        s = s - jnp.max(s, axis=-1, keepdims=True)
        p = jnp.exp(s)
        p = p * pl.reciprocal(jnp.sum(p, axis=-1, keepdims=True), approx=True)
        ah = jnp.einsum("hts,hsd->htd", p.astype(jnp.bfloat16), vh,
                        preferred_element_type=jnp.float32)       # (H,T,hd)
        att_rows.append(jnp.transpose(ah, (1, 0, 2)).reshape(T, D))

    att = att_rows[0] if b_blk == 1 else jnp.concatenate(att_rows, axis=0)  # (M, D)

    attn_out = jnp.dot(att.astype(jnp.bfloat16), wo[0],
                       preferred_element_type=jnp.float32) + bo
    x1 = x + attn_out                                              # residual 1

    # ---- LayerNorm 2 + MLP (Linear -> ReLU -> Linear) over all rows.
    xn2 = layer_norm(x1, ln2g, ln2b).astype(jnp.bfloat16)
    h1 = jnp.maximum(
        jnp.dot(xn2, w1[0], preferred_element_type=jnp.float32) + b1, 0.0)
    y = jnp.dot(h1.astype(jnp.bfloat16), w2[0],
                preferred_element_type=jnp.float32) + b2

    o_ref[...] = (x1 + y).reshape(Bb, T, D)                        # residual 2


# -----------------------------------------------------------------------------
# Parameter stacking: per-layer dicts -> stacked arrays with a leading layer
# axis; weights bf16; softmax scale folded into wq/bq; small vectors packed.
# -----------------------------------------------------------------------------
def stack_layer_params(layer_params, n_heads):
    dim = layer_params[0]["wq"].shape[0]
    head_dim = dim // n_heads
    scale = 1.0 / math.sqrt(head_dim)

    vecs, b1s = [], []
    mats = {n: [] for n in ("wq", "wk", "wv", "wo", "w1", "w2")}
    for p in layer_params:
        flat = {k: jnp.reshape(p[k], (-1,)).astype(jnp.float32)
                for k in VEC_ORDER + ("b1",)}
        flat["bq"] = flat["bq"] * scale                 # fold softmax scale (free)
        vecs.append(jnp.stack([flat[k] for k in VEC_ORDER], axis=0))   # (9, D)
        b1s.append(flat["b1"][None, :])                                # (1, ff)
        mats["wq"].append((p["wq"].astype(jnp.float32) * scale).astype(jnp.bfloat16))
        for n in ("wk", "wv", "wo", "w1", "w2"):
            mats[n].append(p[n].astype(jnp.bfloat16))

    out = {"vecs": jnp.stack(vecs), "b1": jnp.stack(b1s)}
    for n, lst in mats.items():
        out[n] = jnp.stack(lst)
    return out


def choose_b_blk(B, T, target_rows=256):
    """Pick a batch block so b_blk*T ~ target MXU rows, keeping >=2 grid programs
    on the parallel batch axis (v7x megacore) whenever B >= 2."""
    b = max(1, min(B, max(1, target_rows // max(T, 1))))
    while B % b:
        b -= 1
    if B >= 2 and B // b < 2:
        b = max(1, B // 2)
        while b > 1 and B % b:
            b -= 1
    return b


# -----------------------------------------------------------------------------
# Wrapper: whole stack in one pallas_call.
# -----------------------------------------------------------------------------
def transformer_encoder_pallas(x, layer_params, n_heads, b_blk=None):
    B, T, D = x.shape
    num_layers = len(layer_params)
    assert D % n_heads == 0
    head_dim = D // n_heads

    if b_blk is None:
        b_blk = choose_b_blk(B, T)
    assert B % b_blk == 0

    stacked = stack_layer_params(layer_params, n_heads)
    args = tuple(stacked[n] for n in ARG_ORDER)

    def param_spec(arr):
        # One layer's slice of each stacked parameter; block index follows the
        # layer grid axis so next-layer weights prefetch during current compute.
        return pl.BlockSpec((1,) + arr.shape[1:],
                            lambda b, l, _n=arr.ndim - 1: (l,) + (0,) * _n)

    in_specs = [pl.BlockSpec((b_blk, T, D), lambda b, l: (b, 0, 0))]
    in_specs += [param_spec(a) for a in args]

    # Size the VMEM limit to the generation (~48 MiB on v7x, ~96 MiB on v5e/v6e).
    try:
        vmem_cap = pltpu.get_tpu_info().vmem_capacity_bytes
    except Exception:
        vmem_cap = 128 * 1024 * 1024
    vmem_limit = max(32 * 1024 * 1024, int(vmem_cap) * 3 // 4)

    kernel = functools.partial(encoder_stack_kernel, n_heads=n_heads,
                               head_dim=head_dim, b_blk=b_blk)

    out = pl.pallas_call(
        kernel,
        # f32 resident activation / output regardless of input dtype.
        out_shape=jax.ShapeDtypeStruct((B, T, D), jnp.float32),
        grid=(B // b_blk, num_layers),
        in_specs=in_specs,
        out_specs=pl.BlockSpec((b_blk, T, D), lambda b, l: (b, 0, 0)),
        compiler_params=pltpu.CompilerParams(
            dimension_semantics=("parallel", "arbitrary"),
            vmem_limit_bytes=vmem_limit),
    )(x.astype(jnp.float32), *args)
    return out.astype(x.dtype)


# -----------------------------------------------------------------------------
# Pure-JAX f32 reference (PyTorch semantics, eval mode) for correctness check.
# -----------------------------------------------------------------------------
def encoder_layer_ref(x, p, n_heads):
    B, T, D = x.shape
    hd = D // n_heads
    eps = 1e-5

    def ln(z, g, b):
        mu = jnp.mean(z, axis=-1, keepdims=True)
        var = jnp.mean(jnp.square(z - mu), axis=-1, keepdims=True)
        return (z - mu) * jax.lax.rsqrt(var + eps) * g + b

    xn = ln(x, p["ln1g"], p["ln1b"])
    q = xn @ p["wq"] + p["bq"]
    k = xn @ p["wk"] + p["bk"]
    v = xn @ p["wv"] + p["bv"]
    q = q.reshape(B, T, n_heads, hd).transpose(0, 2, 1, 3)
    k = k.reshape(B, T, n_heads, hd).transpose(0, 2, 1, 3)
    v = v.reshape(B, T, n_heads, hd).transpose(0, 2, 1, 3)
    s = jnp.einsum("bhtd,bhsd->bhts", q, k) / math.sqrt(hd)
    pw = jax.nn.softmax(s, axis=-1)
    att = jnp.einsum("bhts,bhsd->bhtd", pw, v).transpose(0, 2, 1, 3).reshape(B, T, D)
    x1 = x + att @ p["wo"] + p["bo"]
    xn2 = ln(x1, p["ln2g"], p["ln2b"])
    h1 = jnp.maximum(xn2 @ p["w1"] + p["b1"], 0.0)
    return x1 + h1 @ p["w2"] + p["b2"]


def transformer_encoder_ref(x, layer_params, n_heads):
    for p in layer_params:
        x = encoder_layer_ref(x, p, n_heads)
    return x


# -----------------------------------------------------------------------------
# Deterministic parameter construction (weights pre-transposed to (D_in, D_out);
# weight matrices rounded to bf16-representable values so the bf16 kernel and
# the f32 reference share identical weight values).
# -----------------------------------------------------------------------------
def init_layer_params(key, dim, ff_dim):
    ks = jax.random.split(key, 12)
    u = lambda k, shape, bound: jax.random.uniform(
        k, shape, jnp.float32, -bound, bound)
    rb = lambda a: a.astype(jnp.bfloat16).astype(jnp.float32)
    bd = 1.0 / math.sqrt(dim)
    bf = 1.0 / math.sqrt(ff_dim)
    return {
        "ln1g": jnp.ones((1, dim), jnp.float32),
        "ln1b": jnp.zeros((1, dim), jnp.float32),
        "wq": rb(u(ks[0], (dim, dim), bd)), "bq": u(ks[1], (1, dim), bd),
        "wk": rb(u(ks[2], (dim, dim), bd)), "bk": u(ks[3], (1, dim), bd),
        "wv": rb(u(ks[4], (dim, dim), bd)), "bv": u(ks[5], (1, dim), bd),
        "wo": rb(u(ks[6], (dim, dim), bd)), "bo": u(ks[7], (1, dim), bd),
        "ln2g": jnp.ones((1, dim), jnp.float32),
        "ln2b": jnp.zeros((1, dim), jnp.float32),
        "w1": rb(u(ks[8], (dim, ff_dim), bd)), "b1": u(ks[9], (1, ff_dim), bd),
        "w2": rb(u(ks[10], (ff_dim, dim), bf)), "b2": u(ks[11], (1, dim), bf),
    }


if __name__ == "__main__":
    B, T, D = 4, 16, 128          # lane-friendly small demo shapes
    N_HEADS, FF_DIM, NUM_LAYERS = 8, 256, 2

    key = jax.random.PRNGKey(0)
    kx, *klayers = jax.random.split(key, NUM_LAYERS + 1)
    x = jax.random.normal(kx, (B, T, D), jnp.float32)
    layer_params = [init_layer_params(k, D, FF_DIM) for k in klayers]

    out = jax.block_until_ready(
        transformer_encoder_pallas(x, layer_params, N_HEADS))
    ref = jax.block_until_ready(
        transformer_encoder_ref(x, layer_params, N_HEADS))

    assert out.shape == (B, T, D)
    max_err = float(jnp.max(jnp.abs(out - ref)))
    # bf16 matmul operands + approx reciprocal => loosened tolerance vs f32 ref
    assert jnp.allclose(out, ref, atol=5e-2, rtol=5e-2), max_err

    print("KERNEL_OK")
</pallas_src>

<mosaic_0001>
module attributes {stable_mosaic.version = 11 : i64} {
  func.func @encoder_stack_kernel(%arg0: i32, %arg1: i32, %arg2: memref<2x16x128xf32, #tpu.memory_space<vmem>>, %arg3: memref<1x9x128xf32, #tpu.memory_space<vmem>>, %arg4: memref<1x1x256xf32, #tpu.memory_space<vmem>>, %arg5: memref<1x128x128xbf16, #tpu.memory_space<vmem>>, %arg6: memref<1x128x128xbf16, #tpu.memory_space<vmem>>, %arg7: memref<1x128x128xbf16, #tpu.memory_space<vmem>>, %arg8: memref<1x128x128xbf16, #tpu.memory_space<vmem>>, %arg9: memref<1x128x256xbf16, #tpu.memory_space<vmem>>, %arg10: memref<1x256x128xbf16, #tpu.memory_space<vmem>>, %arg11: memref<2x16x128xf32, #tpu.memory_space<vmem>>) attributes {dimension_semantics = [#tpu.dimension_semantics<parallel>, #tpu.dimension_semantics<arbitrary>], iteration_bounds = array<i64: 2, 2>, scalar_prefetch = 0 : i64, scratch_operands = 0 : i64, tpu.core_type = #tpu.core_type<tc>, window_params = [{transform_indices = @transform_0, window_bounds = array<i64: 2, 16, 128>}, {transform_indices = @transform_1, window_bounds = array<i64: 1, 9, 128>}, {transform_indices = @transform_2, window_bounds = array<i64: 1, 1, 256>}, {transform_indices = @transform_3, window_bounds = array<i64: 1, 128, 128>}, {transform_indices = @transform_4, window_bounds = array<i64: 1, 128, 128>}, {transform_indices = @transform_5, window_bounds = array<i64: 1, 128, 128>}, {transform_indices = @transform_6, window_bounds = array<i64: 1, 128, 128>}, {transform_indices = @transform_7, window_bounds = array<i64: 1, 128, 256>}, {transform_indices = @transform_8, window_bounds = array<i64: 1, 256, 128>}, {transform_indices = @transform_9, window_bounds = array<i64: 2, 16, 128>}]} {
    %c0_i32 = arith.constant 0 : i32
    %0 = arith.cmpi eq, %arg1, %c0_i32 : i32
    %1 = arith.extui %0 : i1 to i32
    %c0_i32_0 = arith.constant 0 : i32
    %2 = arith.cmpi ne, %1, %c0_i32_0 : i32
    scf.if %2 {
      %c0_54 = arith.constant 0 : index
      %c0_55 = arith.constant 0 : index
      %c0_56 = arith.constant 0 : index
      %157 = vector.load %arg2[%c0_54, %c0_55, %c0_56] : memref<2x16x128xf32, #tpu.memory_space<vmem>>, vector<2x16x128xf32>
      %c0_57 = arith.constant 0 : index
      %c0_58 = arith.constant 0 : index
      %c0_59 = arith.constant 0 : index
      %158 = vector.load %arg11[%c0_57, %c0_58, %c0_59] : memref<2x16x128xf32, #tpu.memory_space<vmem>>, vector<2x16x128xf32>
      tpu.vector_store %arg11[%c0_57, %c0_58, %c0_59], %157 {strides = array<i32>} : memref<2x16x128xf32, #tpu.memory_space<vmem>>, vector<2x16x128xf32>,
    } else {
    }
    %c0 = arith.constant 0 : index
    %c0_1 = arith.constant 0 : index
    %c0_2 = arith.constant 0 : index
    %3 = vector.load %arg11[%c0, %c0_1, %c0_2] : memref<2x16x128xf32, #tpu.memory_space<vmem>>, vector<2x16x128xf32>
    %4 = vector.shape_cast %3 : vector<2x16x128xf32> to vector<32x128xf32>
    %c0_3 = arith.constant 0 : index
    %c0_4 = arith.constant 0 : index
    %c0_5 = arith.constant 0 : index
    %5 = vector.load %arg3[%c0_3, %c0_4, %c0_5] : memref<1x9x128xf32, #tpu.memory_space<vmem>>, vector<1x9x128xf32>
    %6 = vector.shape_cast %5 : vector<1x9x128xf32> to vector<9x128xf32>
    %7 = vector.extract_strided_slice %6 {offsets = [0, 0], sizes = [1, 128], strides = [1, 1]} : vector<9x128xf32> to vector<1x128xf32>
    %8 = vector.extract_strided_slice %6 {offsets = [1, 0], sizes = [1, 128], strides = [1, 1]} : vector<9x128xf32> to vector<1x128xf32>
    %9 = vector.extract_strided_slice %6 {offsets = [2, 0], sizes = [1, 128], strides = [1, 1]} : vector<9x128xf32> to vector<1x128xf32>
    %10 = vector.extract_strided_slice %6 {offsets = [3, 0], sizes = [1, 128], strides = [1, 1]} : vector<9x128xf32> to vector<1x128xf32>
    %11 = vector.extract_strided_slice %6 {offsets = [4, 0], sizes = [1, 128], strides = [1, 1]} : vector<9x128xf32> to vector<1x128xf32>
    %12 = vector.extract_strided_slice %6 {offsets = [5, 0], sizes = [1, 128], strides = [1, 1]} : vector<9x128xf32> to vector<1x128xf32>
    %13 = vector.extract_strided_slice %6 {offsets = [6, 0], sizes = [1, 128], strides = [1, 1]} : vector<9x128xf32> to vector<1x128xf32>
    %14 = vector.extract_strided_slice %6 {offsets = [7, 0], sizes = [1, 128], strides = [1, 1]} : vector<9x128xf32> to vector<1x128xf32>
    %15 = vector.extract_strided_slice %6 {offsets = [8, 0], sizes = [1, 128], strides = [1, 1]} : vector<9x128xf32> to vector<1x128xf32>
    %c0_6 = arith.constant 0 : index
    %c0_7 = arith.constant 0 : index
    %c0_8 = arith.constant 0 : index
    %16 = vector.load %arg4[%c0_6, %c0_7, %c0_8] : memref<1x1x256xf32, #tpu.memory_space<vmem>>, vector<1x1x256xf32>
    %17 = vector.shape_cast %16 : vector<1x1x256xf32> to vector<1x256xf32>
    %cst = arith.constant dense<0.000000e+00> : vector<32xf32>
    %18 = vector.multi_reduction <add>, %4, %cst [1] : vector<32x128xf32> to vector<32xf32>
    %19 = vector.shape_cast %18 : vector<32xf32> to vector<32x1xf32>
    %cst_9 = arith.constant 1.280000e+02 : f32
    %20 = vector.broadcast %cst_9 : f32 to vector<32x1xf32>
    %21 = arith.divf %19, %20 : vector<32x1xf32>
    %22 = vector.broadcast %21 : vector<32x1xf32> to vector<32x128xf32>
    %23 = arith.subf %4, %22 : vector<32x128xf32>
    %24 = arith.mulf %23, %23 : vector<32x128xf32>
    %cst_10 = arith.constant dense<0.000000e+00> : vector<32xf32>
    %25 = vector.multi_reduction <add>, %24, %cst_10 [1] : vector<32x128xf32> to vector<32xf32>
    %26 = vector.shape_cast %25 : vector<32xf32> to vector<32x1xf32>
    %cst_11 = arith.constant 1.280000e+02 : f32
    %27 = vector.broadcast %cst_11 : f32 to vector<32x1xf32>
    %28 = arith.divf %26, %27 : vector<32x1xf32>
    %29 = vector.broadcast %21 : vector<32x1xf32> to vector<32x128xf32>
    %30 = arith.subf %4, %29 : vector<32x128xf32>
    %cst_12 = arith.constant 9.99999974E-6 : f32
    %31 = vector.broadcast %cst_12 : f32 to vector<32x1xf32>
    %32 = arith.addf %28, %31 : vector<32x1xf32>
    %33 = math.rsqrt %32 : vector<32x1xf32>
    %34 = vector.broadcast %33 : vector<32x1xf32> to vector<32x128xf32>
    %35 = arith.mulf %30, %34 : vector<32x128xf32>
    %36 = vector.broadcast %7 : vector<1x128xf32> to vector<32x128xf32>
    %37 = arith.mulf %35, %36 : vector<32x128xf32>
    %38 = vector.broadcast %8 : vector<1x128xf32> to vector<32x128xf32>
    %39 = arith.addf %37, %38 : vector<32x128xf32>
    %40 = arith.truncf %39 : vector<32x128xf32> to vector<32x128xbf16>
    %c0_13 = arith.constant 0 : index
    %c0_14 = arith.constant 0 : index
    %c0_15 = arith.constant 0 : index
    %41 = vector.load %arg5[%c0_13, %c0_14, %c0_15] : memref<1x128x128xbf16, #tpu.memory_space<vmem>>, vector<1x128x128xbf16>
    %42 = vector.shape_cast %41 : vector<1x128x128xbf16> to vector<128x128xbf16>
    %cst_16 = arith.constant dense<0.000000e+00> : vector<32x128xf32>
    %43 = tpu.matmul %40, %42, %cst_16 {dimension_numbers = #tpu.dot_dimension_numbers<[1], [0], [0], [1], [0, 0, 1, 1], [], []>} : vector<32x128xbf16>, vector<128x128xbf16>, vector<32x128xf32> -> vector<32x128xf32>
    %44 = vector.broadcast %9 : vector<1x128xf32> to vector<32x128xf32>
    %45 = arith.addf %43, %44 : vector<32x128xf32>
    %c0_17 = arith.constant 0 : index
    %c0_18 = arith.constant 0 : index
    %c0_19 = arith.constant 0 : index
    %46 = vector.load %arg6[%c0_17, %c0_18, %c0_19] : memref<1x128x128xbf16, #tpu.memory_space<vmem>>, vector<1x128x128xbf16>
    %47 = vector.shape_cast %46 : vector<1x128x128xbf16> to vector<128x128xbf16>
    %cst_20 = arith.constant dense<0.000000e+00> : vector<32x128xf32>
    %48 = tpu.matmul %40, %47, %cst_20 {dimension_numbers = #tpu.dot_dimension_numbers<[1], [0], [0], [1], [0, 0, 1, 1], [], []>} : vector<32x128xbf16>, vector<128x128xbf16>, vector<32x128xf32> -> vector<32x128xf32>
    %49 = vector.broadcast %10 : vector<1x128xf32> to vector<32x128xf32>
    %50 = arith.addf %48, %49 : vector<32x128xf32>
    %c0_21 = arith.constant 0 : index
    %c0_22 = arith.constant 0 : index
    %c0_23 = arith.constant 0 : index
    %51 = vector.load %arg7[%c0_21, %c0_22, %c0_23] : memref<1x128x128xbf16, #tpu.memory_space<vmem>>, vector<1x128x128xbf16>
    %52 = vector.shape_cast %51 : vector<1x128x128xbf16> to vector<128x128xbf16>
    %cst_24 = arith.constant dense<0.000000e+00> : vector<32x128xf32>
    %53 = tpu.matmul %40, %52, %cst_24 {dimension_numbers = #tpu.dot_dimension_numbers<[1], [0], [0], [1], [0, 0, 1, 1], [], []>} : vector<32x128xbf16>, vector<128x128xbf16>, vector<32x128xf32> -> vector<32x128xf32>
    %54 = vector.broadcast %11 : vector<1x128xf32> to vector<32x128xf32>
    %55 = arith.addf %53, %54 : vector<32x128xf32>
    %56 = vector.extract_strided_slice %45 {offsets = [0, 0], sizes = [16, 128], strides = [1, 1]} : vector<32x128xf32> to vector<16x128xf32>
    %57 = vector.extract_strided_slice %50 {offsets = [0, 0], sizes = [16, 128], strides = [1, 1]} : vector<32x128xf32> to vector<16x128xf32>
    %58 = vector.extract_strided_slice %55 {offsets = [0, 0], sizes = [16, 128], strides = [1, 1]} : vector<32x128xf32> to vector<16x128xf32>
    %59 = vector.shape_cast %56 : vector<16x128xf32> to vector<16x8x16xf32>
    %60 = tpu.transpose %59, [1, 0, 2] : vector<16x8x16xf32> -> vector<8x16x16xf32>
    %61 = arith.truncf %60 : vector<8x16x16xf32> to vector<8x16x16xbf16>
    %62 = vector.shape_cast %57 : vector<16x128xf32> to vector<16x8x16xf32>
    %63 = tpu.transpose %62, [1, 0, 2] : vector<16x8x16xf32> -> vector<8x16x16xf32>
    %64 = arith.truncf %63 : vector<8x16x16xf32> to vector<8x16x16xbf16>
    %65 = vector.shape_cast %58 : vector<16x128xf32> to vector<16x8x16xf32>
    %66 = tpu.transpose %65, [1, 0, 2] : vector<16x8x16xf32> -> vector<8x16x16xf32>
    %67 = arith.truncf %66 : vector<8x16x16xf32> to vector<8x16x16xbf16>
    "tpu.trace_start"() <{level = 10 : i32, message = "htd,hsd->hts"}> : () -> ()
    %cst_25 = arith.constant dense<0.000000e+00> : vector<8x16x16xf32>
    %68 = tpu.matmul %61, %64, %cst_25 {dimension_numbers = #tpu.dot_dimension_numbers<[2], [2], [1], [1], [0, 0, 0, 1, 1, 1], [0], [0]>} : vector<8x16x16xbf16>, vector<8x16x16xbf16>, vector<8x16x16xf32> -> vector<8x16x16xf32>
    "tpu.trace_stop"() : () -> ()
    %cst_26 = arith.constant dense<0xFF800000> : vector<8x16xf32>
    %69 = vector.multi_reduction <maximumf>, %68, %cst_26 [2] : vector<8x16x16xf32> to vector<8x16xf32>
    %70 = vector.shape_cast %69 : vector<8x16xf32> to vector<8x16x1xf32>
    %71 = vector.broadcast %70 : vector<8x16x1xf32> to vector<8x16x16xf32>
    %72 = arith.subf %68, %71 : vector<8x16x16xf32>
    %73 = math.exp %72 : vector<8x16x16xf32>
    %cst_27 = arith.constant dense<0.000000e+00> : vector<8x16xf32>
    %74 = vector.multi_reduction <add>, %73, %cst_27 [2] : vector<8x16x16xf32> to vector<8x16xf32>
    %75 = vector.shape_cast %74 : vector<8x16xf32> to vector<8x16x1xf32>
    %76 = tpu.reciprocal %75 {approx = true} : vector<8x16x1xf32> -> vector<8x16x1xf32>
    %77 = vector.broadcast %76 : vector<8x16x1xf32> to vector<8x16x16xf32>
    %78 = arith.mulf %73, %77 : vector<8x16x16xf32>
    %79 = arith.truncf %78 : vector<8x16x16xf32> to vector<8x16x16xbf16>
    "tpu.trace_start"() <{level = 10 : i32, message = "hts,hsd->htd"}> : () -> ()
    %cst_28 = arith.constant dense<0.000000e+00> : vector<8x16x16xf32>
    %80 = tpu.matmul %79, %67, %cst_28 {dimension_numbers = #tpu.dot_dimension_numbers<[2], [1], [1], [2], [0, 0, 0, 1, 1, 2], [0], [0]>} : vector<8x16x16xbf16>, vector<8x16x16xbf16>, vector<8x16x16xf32> -> vector<8x16x16xf32>
    "tpu.trace_stop"() : () -> ()
    %81 = tpu.transpose %80, [1, 0, 2] : vector<8x16x16xf32> -> vector<16x8x16xf32>
    %82 = vector.shape_cast %81 : vector<16x8x16xf32> to vector<16x128xf32>
    %83 = vector.extract_strided_slice %45 {offsets = [16, 0], sizes = [16, 128], strides = [1, 1]} : vector<32x128xf32> to vector<16x128xf32>
    %84 = vector.extract_strided_slice %50 {offsets = [16, 0], sizes = [16, 128], strides = [1, 1]} : vector<32x128xf32> to vector<16x128xf32>
    %85 = vector.extract_strided_slice %55 {offsets = [16, 0], sizes = [16, 128], strides = [1, 1]} : vector<32x128xf32> to vector<16x128xf32>
    %86 = vector.shape_cast %83 : vector<16x128xf32> to vector<16x8x16xf32>
    %87 = tpu.transpose %86, [1, 0, 2] : vector<16x8x16xf32> -> vector<8x16x16xf32>
    %88 = arith.truncf %87 : vector<8x16x16xf32> to vector<8x16x16xbf16>
    %89 = vector.shape_cast %84 : vector<16x128xf32> to vector<16x8x16xf32>
    %90 = tpu.transpose %89, [1, 0, 2] : vector<16x8x16xf32> -> vector<8x16x16xf32>
    %91 = arith.truncf %90 : vector<8x16x16xf32> to vector<8x16x16xbf16>
    %92 = vector.shape_cast %85 : vector<16x128xf32> to vector<16x8x16xf32>
    %93 = tpu.transpose %92, [1, 0, 2] : vector<16x8x16xf32> -> vector<8x16x16xf32>
    %94 = arith.truncf %93 : vector<8x16x16xf32> to vector<8x16x16xbf16>
    "tpu.trace_start"() <{level = 10 : i32, message = "htd,hsd->hts"}> : () -> ()
    %cst_29 = arith.constant dense<0.000000e+00> : vector<8x16x16xf32>
    %95 = tpu.matmul %88, %91, %cst_29 {dimension_numbers = #tpu.dot_dimension_numbers<[2], [2], [1], [1], [0, 0, 0, 1, 1, 1], [0], [0]>} : vector<8x16x16xbf16>, vector<8x16x16xbf16>, vector<8x16x16xf32> -> vector<8x16x16xf32>
    "tpu.trace_stop"() : () -> ()
    %cst_30 = arith.constant dense<0xFF800000> : vector<8x16xf32>
    %96 = vector.multi_reduction <maximumf>, %95, %cst_30 [2] : vector<8x16x16xf32> to vector<8x16xf32>
    %97 = vector.shape_cast %96 : vector<8x16xf32> to vector<8x16x1xf32>
    %98 = vector.broadcast %97 : vector<8x16x1xf32> to vector<8x16x16xf32>
    %99 = arith.subf %95, %98 : vector<8x16x16xf32>
    %100 = math.exp %99 : vector<8x16x16xf32>
    %cst_31 = arith.constant dense<0.000000e+00> : vector<8x16xf32>
    %101 = vector.multi_reduction <add>, %100, %cst_31 [2] : vector<8x16x16xf32> to vector<8x16xf32>
    %102 = vector.shape_cast %101 : vector<8x16xf32> to vector<8x16x1xf32>
    %103 = tpu.reciprocal %102 {approx = true} : vector<8x16x1xf32> -> vector<8x16x1xf32>
    %104 = vector.broadcast %103 : vector<8x16x1xf32> to vector<8x16x16xf32>
    %105 = arith.mulf %100, %104 : vector<8x16x16xf32>
    %106 = arith.truncf %105 : vector<8x16x16xf32> to vector<8x16x16xbf16>
    "tpu.trace_start"() <{level = 10 : i32, message = "hts,hsd->htd"}> : () -> ()
    %cst_32 = arith.constant dense<0.000000e+00> : vector<8x16x16xf32>
    %107 = tpu.matmul %106, %94, %cst_32 {dimension_numbers = #tpu.dot_dimension_numbers<[2], [1], [1], [2], [0, 0, 0, 1, 1, 2], [0], [0]>} : vector<8x16x16xbf16>, vector<8x16x16xbf16>, vector<8x16x16xf32> -> vector<8x16x16xf32>
    "tpu.trace_stop"() : () -> ()
    %108 = tpu.transpose %107, [1, 0, 2] : vector<8x16x16xf32> -> vector<16x8x16xf32>
    %109 = vector.shape_cast %108 : vector<16x8x16xf32> to vector<16x128xf32>
    %110 = tpu.concatenate %82, %109 in 0 : vector<16x128xf32>, vector<16x128xf32> -> vector<32x128xf32>
    %111 = arith.truncf %110 : vector<32x128xf32> to vector<32x128xbf16>
    %c0_33 = arith.constant 0 : index
    %c0_34 = arith.constant 0 : index
    %c0_35 = arith.constant 0 : index
    %112 = vector.load %arg8[%c0_33, %c0_34, %c0_35] : memref<1x128x128xbf16, #tpu.memory_space<vmem>>, vector<1x128x128xbf16>
    %113 = vector.shape_cast %112 : vector<1x128x128xbf16> to vector<128x128xbf16>
    %cst_36 = arith.constant dense<0.000000e+00> : vector<32x128xf32>
    %114 = tpu.matmul %111, %113, %cst_36 {dimension_numbers = #tpu.dot_dimension_numbers<[1], [0], [0], [1], [0, 0, 1, 1], [], []>} : vector<32x128xbf16>, vector<128x128xbf16>, vector<32x128xf32> -> vector<32x128xf32>
    %115 = vector.broadcast %12 : vector<1x128xf32> to vector<32x128xf32>
    %116 = arith.addf %114, %115 : vector<32x128xf32>
    %117 = arith.addf %4, %116 : vector<32x128xf32>
    %cst_37 = arith.constant dense<0.000000e+00> : vector<32xf32>
    %118 = vector.multi_reduction <add>, %117, %cst_37 [1] : vector<32x128xf32> to vector<32xf32>
    %119 = vector.shape_cast %118 : vector<32xf32> to vector<32x1xf32>
    %cst_38 = arith.constant 1.280000e+02 : f32
    %120 = vector.broadcast %cst_38 : f32 to vector<32x1xf32>
    %121 = arith.divf %119, %120 : vector<32x1xf32>
    %122 = vector.broadcast %121 : vector<32x1xf32> to vector<32x128xf32>
    %123 = arith.subf %117, %122 : vector<32x128xf32>
    %124 = arith.mulf %123, %123 : vector<32x128xf32>
    %cst_39 = arith.constant dense<0.000000e+00> : vector<32xf32>
    %125 = vector.multi_reduction <add>, %124, %cst_39 [1] : vector<32x128xf32> to vector<32xf32>
    %126 = vector.shape_cast %125 : vector<32xf32> to vector<32x1xf32>
    %cst_40 = arith.constant 1.280000e+02 : f32
    %127 = vector.broadcast %cst_40 : f32 to vector<32x1xf32>
    %128 = arith.divf %126, %127 : vector<32x1xf32>
    %129 = vector.broadcast %121 : vector<32x1xf32> to vector<32x128xf32>
    %130 = arith.subf %117, %129 : vector<32x128xf32>
    %cst_41 = arith.constant 9.99999974E-6 : f32
    %131 = vector.broadcast %cst_41 : f32 to vector<32x1xf32>
    %132 = arith.addf %128, %131 : vector<32x1xf32>
    %133 = math.rsqrt %132 : vector<32x1xf32>
    %134 = vector.broadcast %133 : vector<32x1xf32> to vector<32x128xf32>
    %135 = arith.mulf %130, %134 : vector<32x128xf32>
    %136 = vector.broadcast %13 : vector<1x128xf32> to vector<32x128xf32>
    %137 = arith.mulf %135, %136 : vector<32x128xf32>
    %138 = vector.broadcast %14 : vector<1x128xf32> to vector<32x128xf32>
    %139 = arith.addf %137, %138 : vector<32x128xf32>
    %140 = arith.truncf %139 : vector<32x128xf32> to vector<32x128xbf16>
    %c0_42 = arith.constant 0 : index
    %c0_43 = arith.constant 0 : index
    %c0_44 = arith.constant 0 : index
    %141 = vector.load %arg9[%c0_42, %c0_43, %c0_44] : memref<1x128x256xbf16, #tpu.memory_space<vmem>>, vector<1x128x256xbf16>
    %142 = vector.shape_cast %141 : vector<1x128x256xbf16> to vector<128x256xbf16>
    %cst_45 = arith.constant dense<0.000000e+00> : vector<32x256xf32>
    %143 = tpu.matmul %140, %142, %cst_45 {dimension_numbers = #tpu.dot_dimension_numbers<[1], [0], [0], [1], [0, 0, 1, 1], [], []>} : vector<32x128xbf16>, vector<128x256xbf16>, vector<32x256xf32> -> vector<32x256xf32>
    %144 = vector.broadcast %17 : vector<1x256xf32> to vector<32x256xf32>
    %145 = arith.addf %143, %144 : vector<32x256xf32>
    %cst_46 = arith.constant 0.000000e+00 : f32
    %146 = vector.broadcast %cst_46 : f32 to vector<32x256xf32>
    %147 = arith.maximumf %145, %146 : vector<32x256xf32>
    %148 = arith.truncf %147 : vector<32x256xf32> to vector<32x256xbf16>
    %c0_47 = arith.constant 0 : index
    %c0_48 = arith.constant 0 : index
    %c0_49 = arith.constant 0 : index
    %149 = vector.load %arg10[%c0_47, %c0_48, %c0_49] : memref<1x256x128xbf16, #tpu.memory_space<vmem>>, vector<1x256x128xbf16>
    %150 = vector.shape_cast %149 : vector<1x256x128xbf16> to vector<256x128xbf16>
    %cst_50 = arith.constant dense<0.000000e+00> : vector<32x128xf32>
    %151 = tpu.matmul %148, %150, %cst_50 {dimension_numbers = #tpu.dot_dimension_numbers<[1], [0], [0], [1], [0, 0, 1, 1], [], []>} : vector<32x256xbf16>, vector<256x128xbf16>, vector<32x128xf32> -> vector<32x128xf32>
    %152 = vector.broadcast %15 : vector<1x128xf32> to vector<32x128xf32>
    %153 = arith.addf %151, %152 : vector<32x128xf32>
    %154 = arith.addf %117, %153 : vector<32x128xf32>
    %155 = vector.shape_cast %154 : vector<32x128xf32> to vector<2x16x128xf32>
    %c0_51 = arith.constant 0 : index
    %c0_52 = arith.constant 0 : index
    %c0_53 = arith.constant 0 : index
    %156 = vector.load %arg11[%c0_51, %c0_52, %c0_53] : memref<2x16x128xf32, #tpu.memory_space<vmem>>, vector<2x16x128xf32>
    tpu.vector_store %arg11[%c0_51, %c0_52, %c0_53], %155 {strides = array<i32>} : memref<2x16x128xf32, #tpu.memory_space<vmem>>, vector<2x16x128xf32>,
    return
  }
  func.func @transform_0(%arg0: i32, %arg1: i32) -> (i32, i32, i32) {
    %c0_i32 = arith.constant 0 : i32
    %c0_i32_0 = arith.constant 0 : i32
    %c0_i32_1 = arith.constant 0 : i32
    return %arg0, %c0_i32, %c0_i32_0 : i32, i32, i32
  }
  func.func @transform_1(%arg0: i32, %arg1: i32) -> (i32, i32, i32) {
    %c0_i32 = arith.constant 0 : i32
    %c0_i32_0 = arith.constant 0 : i32
    %c0_i32_1 = arith.constant 0 : i32
    return %arg1, %c0_i32, %c0_i32_0 : i32, i32, i32
  }
  func.func @transform_2(%arg0: i32, %arg1: i32) -> (i32, i32, i32) {
    %c0_i32 = arith.constant 0 : i32
    %c0_i32_0 = arith.constant 0 : i32
    %c0_i32_1 = arith.constant 0 : i32
    return %arg1, %c0_i32, %c0_i32_0 : i32, i32, i32
  }
  func.func @transform_3(%arg0: i32, %arg1: i32) -> (i32, i32, i32) {
    %c0_i32 = arith.constant 0 : i32
    %c0_i32_0 = arith.constant 0 : i32
    %c0_i32_1 = arith.constant 0 : i32
    return %arg1, %c0_i32, %c0_i32_0 : i32, i32, i32
  }
  func.func @transform_4(%arg0: i32, %arg1: i32) -> (i32, i32, i32) {
    %c0_i32 = arith.constant 0 : i32
    %c0_i32_0 = arith.constant 0 : i32
    %c0_i32_1 = arith.constant 0 : i32
    return %arg1, %c0_i32, %c0_i32_0 : i32, i32, i32
  }
  func.func @transform_5(%arg0: i32, %arg1: i32) -> (i32, i32, i32) {
    %c0_i32 = arith.constant 0 : i32
    %c0_i32_0 = arith.constant 0 : i32
    %c0_i32_1 = arith.constant 0 : i32
    return %arg1, %c0_i32, %c0_i32_0 : i32, i32, i32
  }
  func.func @transform_6(%arg0: i32, %arg1: i32) -> (i32, i32, i32) {
    %c0_i32 = arith.constant 0 : i32
    %c0_i32_0 = arith.constant 0 : i32
    %c0_i32_1 = arith.constant 0 : i32
    return %arg1, %c0_i32, %c0_i32_0 : i32, i32, i32
  }
  func.func @transform_7(%arg0: i32, %arg1: i32) -> (i32, i32, i32) {
    %c0_i32 = arith.constant 0 : i32
    %c0_i32_0 = arith.constant 0 : i32
    %c0_i32_1 = arith.constant 0 : i32
    return %arg1, %c0_i32, %c0_i32_0 : i32, i32, i32
  }
  func.func @transform_8(%arg0: i32, %arg1: i32) -> (i32, i32, i32) {
    %c0_i32 = arith.constant 0 : i32
    %c0_i32_0 = arith.constant 0 : i32
    %c0_i32_1 = arith.constant 0 : i32
    return %arg1, %c0_i32, %c0_i32_0 : i32, i32, i32
  }
  func.func @transform_9(%arg0: i32, %arg1: i32) -> (i32, i32, i32) {
    %c0_i32 = arith.constant 0 : i32
    %c0_i32_0 = arith.constant 0 : i32
    %c0_i32_1 = arith.constant 0 : i32
    return %arg0, %c0_i32, %c0_i32_0 : i32, i32, i32
  }
}

</mosaic_0001>

<llo_original>
// kernel: tpu_custom_call.1
$region0: #{tpu_custom_call.1}
  #allocation0 [shape = 'u32[]', space=smem, size = 0x4, offset = 0x4, fixed_abs, tag = 'smem constant byte address 0x4 - core index']
  #allocation1 [shape = 'u32[144,128]{1,0:T(1,128)}', space=vmem, size = 0x12000, scoped, tag = 'internal scratch']
  %s0 = inlined_call_operand.hbm [shape: f32[4,16,128], index: 0, kind: input, shape index: {}]
  %s1 = inlined_call_operand.hbm [shape: f32[2,9,128], index: 1, kind: input, shape index: {}]
  %s2 = inlined_call_operand.hbm [shape: f32[2,1,256], index: 2, kind: input, shape index: {}]
  %s3 = inlined_call_operand.hbm [shape: bf16[2,128,128], index: 3, kind: input, shape index: {}]
  %s4 = inlined_call_operand.hbm [shape: bf16[2,128,128], index: 4, kind: input, shape index: {}]
  %s5 = inlined_call_operand.hbm [shape: bf16[2,128,128], index: 5, kind: input, shape index: {}]
  %s6 = inlined_call_operand.hbm [shape: bf16[2,128,128], index: 6, kind: input, shape index: {}]
  %s7 = inlined_call_operand.hbm [shape: bf16[2,128,256], index: 7, kind: input, shape index: {}]
  %s8 = inlined_call_operand.hbm [shape: bf16[2,256,128], index: 8, kind: input, shape index: {}]
  %s9 = inlined_call_operand.hbm [shape: f32[4,16,128], index: 9, kind: output, shape index: {}]
  %s10 = sld [smem:[#allocation0]]
  $region109: #{tpu_custom_call.1} parent=0
    _
  %s12 = ssub.s32 1, %s10
  %s13 = scalar_select 0, %s12, %s10
  $region1: #{tpu_custom_call.1} parent=0
    #allocation2 [shape = 'u8[32768]{0}', space=vmem, size = 0x8000, scoped, tag = 'input window, operand 0']
    #allocation3 [shape = 's32[2]{0}', space=sflag, size = 0x8, scoped, tag = 'scoped memory for tpu_custom_call.1']
    #allocation4 [shape = 's32[2]{0}', space=sflag, size = 0x8, scoped, tag = 'scoped memory for tpu_custom_call.1']
    #allocation5 [shape = 'u8[16384]{0}', space=vmem, size = 0x4000, scoped, tag = 'input window, operand 1']
    #allocation6 [shape = 's32[2]{0}', space=sflag, size = 0x8, scoped, tag = 'scoped memory for tpu_custom_call.1']
    #allocation7 [shape = 'u8[2048]{0}', space=vmem, size = 0x800, scoped, tag = 'input window, operand 2']
    #allocation8 [shape = 'u8[65536]{0}', space=vmem, size = 0x10000, scoped, tag = 'input window, operand 3']
    #allocation9 [shape = 's32[2]{0}', space=sflag, size = 0x8, scoped, tag = 'scoped memory for tpu_custom_call.1']
    #allocation10 [shape = 'u8[65536]{0}', space=vmem, size = 0x10000, scoped, tag = 'input window, operand 4']
    #allocation11 [shape = 'u8[65536]{0}', space=vmem, size = 0x10000, scoped, tag = 'input window, operand 5']
    #allocation12 [shape = 's32[2]{0}', space=sflag, size = 0x8, scoped, tag = 'scoped memory for tpu_custom_call.1']
    #allocation13 [shape = 'u8[65536]{0}', space=vmem, size = 0x10000, scoped, tag = 'input window, operand 6']
    #allocation14 [shape = 'u8[131072]{0}', space=vmem, size = 0x20000, scoped, tag = 'input window, operand 7']
    #allocation15 [shape = 's32[2]{0}', space=sflag, size = 0x8, scoped, tag = 'scoped memory for tpu_custom_call.1']
    #allocation16 [shape = 'u8[131072]{0}', space=vmem, size = 0x20000, scoped, tag = 'input window, operand 8']
    #allocation17 [shape = 'u8[32768]{0}', space=vmem, size = 0x8000, scoped, tag = 'output window, operand 0']
    %14 = vsyncpa [#allocation3], 0
    %s15 = scalar_lea.sflag [#allocation3], 1
    %16 = vsyncpa %s15, 0
    %17 = vsyncpa [#allocation6], 0
    %s18 = scalar_lea.sflag [#allocation6], 1
    %19 = vsyncpa %s18, 0
    %20 = vsyncpa [#allocation9], 0
    %s21 = scalar_lea.sflag [#allocation9], 1
    %22 = vsyncpa %s21, 0
    %23 = vsyncpa [#allocation12], 0
    %s24 = scalar_lea.sflag [#allocation12], 1
    %25 = vsyncpa %s24, 0
    %26 = vsyncpa [#allocation15], 0
    %s27 = scalar_lea.sflag [#allocation15], 1
    %28 = vsyncpa %s27, 0
    %29 = vsyncpa [#allocation4], 0
    %s30 = scalar_lea.sflag [#allocation4], 1
    %31 = vsyncpa %s30, 0
    loop: start=0, step=1, limit=6
    $region2: #{tpu_custom_call.1} parent=1 // loop_pre_header
      _
    $region3: #{tpu_custom_call.1} parent=1 // loop_header
      %s33 = sphi 0, %s37
      %p34 = scmp.ge.s32.totalorder %s33, 6
      %s40 = sphi 0, %s52
      %s41 = sphi 0, %s48
      %s42 = sphi 0, %s40
      %s43 = sphi 0, %s41
      %s44 = sphi 0, %s42
      %s45 = sphi 0, %s43
      %s55 = sphi 0, %s57
      %s58 = sphi 0, %s55
      %s59 = sphi 0, %s58
      %s75 = sphi 0, %s59
      %s81 = sphi 0, %s83
      %s84 = sphi 0, %s81
      %s85 = sphi 0, %s84
      %s101 = sphi 0, %s85
      %s107 = sphi 0, %s109
      %s110 = sphi 0, %s107
      %s111 = sphi 0, %s110
      %s127 = sphi 0, %s111
      %s133 = sphi 0, %s135
      %s136 = sphi 0, %s133
      %s137 = sphi 0, %s136
      %s153 = sphi 0, %s137
      %s159 = sphi 0, %s161
      %s162 = sphi 0, %s159
      %s163 = sphi 0, %s162
      %s179 = sphi 0, %s163
      %s185 = sphi 0, %s187
      %s188 = sphi 0, %s185
      %s189 = sphi 0, %s188
      %s205 = sphi 0, %s189
      %s211 = sphi 0, %s213
      %s214 = sphi 0, %s211
      %s215 = sphi 0, %s214
      %s231 = sphi 0, %s215
      %s237 = sphi 0, %s239
      %s240 = sphi 0, %s237
      %s241 = sphi 0, %s240
      %s257 = sphi 0, %s241
      %s263 = sphi 0, %s265
      %s266 = sphi 0, %s263
      %s267 = sphi 0, %s266
      %s283 = sphi 0, %s267
      %s289 = sphi 0, %s291
      %s292 = sphi 0, %s289
      %s293 = sphi 0, %s292
      %s309 = sphi 0, %s293
    $region4: #{tpu_custom_call.1} parent=1 // loop_header_branch
      %36 = sbr.rel (%p34) target = $region8
    $region5: #{tpu_custom_call.1} parent=1 // loop_body
      %s38 = ssub.s32 %s33, 1
      %s39 = ssub.s32 %s33, 2
      %s46 = sadd.s32 1, %s41
      %p47 = scmp.ge.s32.totalorder %s46, 2
      %s48 = scalar_select %p47, 0, %s46
      %s49 = sadd.s32 1, %s40
      %s50 = scalar_select %p47, %s49, %s40
      %p51 = scmp.ge.s32.totalorder %s50, 2
      %s52 = scalar_select %p51, 0, %s50
      %s53 = ssub.s32 %s40, %s52
      %p54 = scmp.eq.s32.totalorder %s53, 0
      %s56 = sadd.s32 %s55, 1
      %s57 = scalar_select %p54, %s55, %s56
      %p60 = pneg %p54
      %p61 = scmp.eq.s32.totalorder %s33, 3
      %p62 = por %p60, %p61
      %p63 = scmp.ne.s32.totalorder %s55, %s58
      %p64 = scmp.eq.s32.totalorder %s33, 0
      %p65 = por %p63, %p64
      %p66 = scmp.ne.s32.totalorder %s55, %s58
      %p67 = scmp.eq.s32.totalorder %s38, 3
      %p68 = por %p66, %p67
      %p69 = scmp.ne.s32.totalorder %s58, %s59
      %p70 = scmp.eq.s32.totalorder %s38, 0
      %p71 = por %p69, %p70
      %p72 = scmp.ne.s32.totalorder %s58, %s59
      %p73 = scmp.eq.s32.totalorder %s39, 3
      %p74 = por %p72, %p73
      %p76 = scmp.ne.s32.totalorder %s59, %s75
      %p77 = scmp.eq.s32.totalorder %s39, 0
      %p78 = por %p76, %p77
      %s79 = ssub.s32 %s41, %s48
      %p80 = scmp.eq.s32.totalorder %s79, 0
      %s82 = sadd.s32 %s81, 1
      %s83 = scalar_select %p80, %s81, %s82
      %p86 = pneg %p80
      %p87 = scmp.eq.s32.totalorder %s33, 3
      %p88 = por %p86, %p87
      %p89 = scmp.ne.s32.totalorder %s81, %s84
      %p90 = scmp.eq.s32.totalorder %s33, 0
      %p91 = por %p89, %p90
      %p92 = scmp.ne.s32.totalorder %s81, %s84
      %p93 = scmp.eq.s32.totalorder %s38, 3
      %p94 = por %p92, %p93
      %p95 = scmp.ne.s32.totalorder %s84, %s85
      %p96 = scmp.eq.s32.totalorder %s38, 0
      %p97 = por %p95, %p96
      %p98 = scmp.ne.s32.totalorder %s84, %s85
      %p99 = scmp.eq.s32.totalorder %s39, 3
      %p100 = por %p98, %p99
      %p102 = scmp.ne.s32.totalorder %s85, %s101
      %p103 = scmp.eq.s32.totalorder %s39, 0
      %p104 = por %p102, %p103
      %s105 = ssub.s32 %s41, %s48
      %p106 = scmp.eq.s32.totalorder %s105, 0
      %s108 = sadd.s32 %s107, 1
      %s109 = scalar_select %p106, %s107, %s108
      %p112 = pneg %p106
      %p113 = scmp.eq.s32.totalorder %s33, 3
      %p114 = por %p112, %p113
      %p115 = scmp.ne.s32.totalorder %s107, %s110
      %p116 = scmp.eq.s32.totalorder %s33, 0
      %p117 = por %p115, %p116
      %p118 = scmp.ne.s32.totalorder %s107, %s110
      %p119 = scmp.eq.s32.totalorder %s38, 3
      %p120 = por %p118, %p119
      %p121 = scmp.ne.s32.totalorder %s110, %s111
      %p122 = scmp.eq.s32.totalorder %s38, 0
      %p123 = por %p121, %p122
      %p124 = scmp.ne.s32.totalorder %s110, %s111
      %p125 = scmp.eq.s32.totalorder %s39, 3
      %p126 = por %p124, %p125
      %p128 = scmp.ne.s32.totalorder %s111, %s127
      %p129 = scmp.eq.s32.totalorder %s39, 0
      %p130 = por %p128, %p129
      %s131 = ssub.s32 %s41, %s48
      %p132 = scmp.eq.s32.totalorder %s131, 0
      %s134 = sadd.s32 %s133, 1
      %s135 = scalar_select %p132, %s133, %s134
      %p138 = pneg %p132
      %p139 = scmp.eq.s32.totalorder %s33, 3
      %p140 = por %p138, %p139
      %p141 = scmp.ne.s32.totalorder %s133, %s136
      %p142 = scmp.eq.s32.totalorder %s33, 0
      %p143 = por %p141, %p142
      %p144 = scmp.ne.s32.totalorder %s133, %s136
      %p145 = scmp.eq.s32.totalorder %s38, 3
      %p146 = por %p144, %p145
      %p147 = scmp.ne.s32.totalorder %s136, %s137
      %p148 = scmp.eq.s32.totalorder %s38, 0
      %p149 = por %p147, %p148
      %p150 = scmp.ne.s32.totalorder %s136, %s137
      %p151 = scmp.eq.s32.totalorder %s39, 3
      %p152 = por %p150, %p151
      %p154 = scmp.ne.s32.totalorder %s137, %s153
      %p155 = scmp.eq.s32.totalorder %s39, 0
      %p156 = por %p154, %p155
      %s157 = ssub.s32 %s41, %s48
      %p158 = scmp.eq.s32.totalorder %s157, 0
      %s160 = sadd.s32 %s159, 1
      %s161 = scalar_select %p158, %s159, %s160
      %p164 = pneg %p158
      %p165 = scmp.eq.s32.totalorder %s33, 3
      %p166 = por %p164, %p165
      %p167 = scmp.ne.s32.totalorder %s159, %s162
      %p168 = scmp.eq.s32.totalorder %s33, 0
      %p169 = por %p167, %p168
      %p170 = scmp.ne.s32.totalorder %s159, %s162
      %p171 = scmp.eq.s32.totalorder %s38, 3
      %p172 = por %p170, %p171
      %p173 = scmp.ne.s32.totalorder %s162, %s163
      %p174 = scmp.eq.s32.totalorder %s38, 0
      %p175 = por %p173, %p174
      %p176 = scmp.ne.s32.totalorder %s162, %s163
      %p177 = scmp.eq.s32.totalorder %s39, 3
      %p178 = por %p176, %p177
      %p180 = scmp.ne.s32.totalorder %s163, %s179
      %p181 = scmp.eq.s32.totalorder %s39, 0
      %p182 = por %p180, %p181
      %s183 = ssub.s32 %s41, %s48
      %p184 = scmp.eq.s32.totalorder %s183, 0
      %s186 = sadd.s32 %s185, 1
      %s187 = scalar_select %p184, %s185, %s186
      %p190 = pneg %p184
      %p191 = scmp.eq.s32.totalorder %s33, 3
      %p192 = por %p190, %p191
      %p193 = scmp.ne.s32.totalorder %s185, %s188
      %p194 = scmp.eq.s32.totalorder %s33, 0
      %p195 = por %p193, %p194
      %p196 = scmp.ne.s32.totalorder %s185, %s188
      %p197 = scmp.eq.s32.totalorder %s38, 3
      %p198 = por %p196, %p197
      %p199 = scmp.ne.s32.totalorder %s188, %s189
      %p200 = scmp.eq.s32.totalorder %s38, 0
      %p201 = por %p199, %p200
      %p202 = scmp.ne.s32.totalorder %s188, %s189
      %p203 = scmp.eq.s32.totalorder %s39, 3
      %p204 = por %p202, %p203
      %p206 = scmp.ne.s32.totalorder %s189, %s205
      %p207 = scmp.eq.s32.totalorder %s39, 0
      %p208 = por %p206, %p207
      %s209 = ssub.s32 %s41, %s48
      %p210 = scmp.eq.s32.totalorder %s209, 0
      %s212 = sadd.s32 %s211, 1
      %s213 = scalar_select %p210, %s211, %s212
      %p216 = pneg %p210
      %p217 = scmp.eq.s32.totalorder %s33, 3
      %p218 = por %p216, %p217
      %p219 = scmp.ne.s32.totalorder %s211, %s214
      %p220 = scmp.eq.s32.totalorder %s33, 0
      %p221 = por %p219, %p220
      %p222 = scmp.ne.s32.totalorder %s211, %s214
      %p223 = scmp.eq.s32.totalorder %s38, 3
      %p224 = por %p222, %p223
      %p225 = scmp.ne.s32.totalorder %s214, %s215
      %p226 = scmp.eq.s32.totalorder %s38, 0
      %p227 = por %p225, %p226
      %p228 = scmp.ne.s32.totalorder %s214, %s215
      %p229 = scmp.eq.s32.totalorder %s39, 3
      %p230 = por %p228, %p229
      %p232 = scmp.ne.s32.totalorder %s215, %s231
      %p233 = scmp.eq.s32.totalorder %s39, 0
      %p234 = por %p232, %p233
      %s235 = ssub.s32 %s41, %s48
      %p236 = scmp.eq.s32.totalorder %s235, 0
      %s238 = sadd.s32 %s237, 1
      %s239 = scalar_select %p236, %s237, %s238
      %p242 = pneg %p236
      %p243 = scmp.eq.s32.totalorder %s33, 3
      %p244 = por %p242, %p243
      %p245 = scmp.ne.s32.totalorder %s237, %s240
      %p246 = scmp.eq.s32.totalorder %s33, 0
      %p247 = por %p245, %p246
      %p248 = scmp.ne.s32.totalorder %s237, %s240
      %p249 = scmp.eq.s32.totalorder %s38, 3
      %p250 = por %p248, %p249
      %p251 = scmp.ne.s32.totalorder %s240, %s241
      %p252 = scmp.eq.s32.totalorder %s38, 0
      %p253 = por %p251, %p252
      %p254 = scmp.ne.s32.totalorder %s240, %s241
      %p255 = scmp.eq.s32.totalorder %s39, 3
      %p256 = por %p254, %p255
      %p258 = scmp.ne.s32.totalorder %s241, %s257
      %p259 = scmp.eq.s32.totalorder %s39, 0
      %p260 = por %p258, %p259
      %s261 = ssub.s32 %s41, %s48
      %p262 = scmp.eq.s32.totalorder %s261, 0
      %s264 = sadd.s32 %s263, 1
      %s265 = scalar_select %p262, %s263, %s264
      %p268 = pneg %p262
      %p269 = scmp.eq.s32.totalorder %s33, 3
      %p270 = por %p268, %p269
      %p271 = scmp.ne.s32.totalorder %s263, %s266
      %p272 = scmp.eq.s32.totalorder %s33, 0
      %p273 = por %p271, %p272
      %p274 = scmp.ne.s32.totalorder %s263, %s266
      %p275 = scmp.eq.s32.totalorder %s38, 3
      %p276 = por %p274, %p275
      %p277 = scmp.ne.s32.totalorder %s266, %s267
      %p278 = scmp.eq.s32.totalorder %s38, 0
      %p279 = por %p277, %p278
      %p280 = scmp.ne.s32.totalorder %s266, %s267
      %p281 = scmp.eq.s32.totalorder %s39, 3
      %p282 = por %p280, %p281
      %p284 = scmp.ne.s32.totalorder %s267, %s283
      %p285 = scmp.eq.s32.totalorder %s39, 0
      %p286 = por %p284, %p285
      %s287 = ssub.s32 %s40, %s52
      %p288 = scmp.eq.s32.totalorder %s287, 0
      %s290 = sadd.s32 %s289, 1
      %s291 = scalar_select %p288, %s289, %s290
      %p294 = pneg %p288
      %p295 = scmp.eq.s32.totalorder %s33, 3
      %p296 = por %p294, %p295
      %p297 = scmp.ne.s32.totalorder %s289, %s292
      %p298 = scmp.eq.s32.totalorder %s33, 0
      %p299 = por %p297, %p298
      %p300 = scmp.ne.s32.totalorder %s289, %s292
      %p301 = scmp.eq.s32.totalorder %s38, 3
      %p302 = por %p300, %p301
      %p303 = scmp.ne.s32.totalorder %s292, %s293
      %p304 = scmp.eq.s32.totalorder %s38, 0
      %p305 = por %p303, %p304
      %p306 = scmp.ne.s32.totalorder %s292, %s293
      %p307 = scmp.eq.s32.totalorder %s39, 3
      %p308 = por %p306, %p307
      %p310 = scmp.ne.s32.totalorder %s293, %s309
      %p311 = scmp.eq.s32.totalorder %s39, 0
      %p312 = por %p310, %p311
      %p313 = scmp.le.s32.totalorder 1, %s33
      %p314 = scmp.lt.s32.totalorder %s33, 5
      %p315 = pnand %p313, %p314
      %p316 = pneg %p315
      // Predicated region
      $region9: #{tpu_custom_call.1} parent=5 // pred_check
        _
      $region10: #{tpu_custom_call.1} parent=5 // pred_check_branch
        %318 = sbr.rel (%p315) target = $region12
      $region11: #{tpu_custom_call.1} parent=5 // pred_region
        %s319 = ssub.s32 %s33, 1
      $region12: #{tpu_custom_call.1} parent=5 // pred_fallthru
        _
      %p320 = scmp.lt.s32.totalorder %s33, 4
      // Predicated region
      $region13: #{tpu_custom_call.1} parent=5 // pred_check
        %p321 = pneg %p320
      $region14: #{tpu_custom_call.1} parent=5 // pred_check_branch
        %323 = sbr.rel (%p321) target = $region16
      $region15: #{tpu_custom_call.1} parent=5 // pred_region
        // Predicated region
        $region17: #{tpu_custom_call.1} parent=15 // pred_check
          %p324 = pneg %p65
        $region18: #{tpu_custom_call.1} parent=15 // pred_check_branch
          %326 = sbr.rel (%p324) target = $region20
        $region19: #{tpu_custom_call.1} parent=15 // pred_region
          %s327 = sand.u32 %s55, 1
          %s328 = scalar_lea.sflag [#allocation3], %s327
          %s329 = sand.u32 %s55, 1
          %s330 = smul.addr %s329, 32
          %s331 = scalar_lea.vmem [#allocation2], %s330
          %s332 = smul.u32 2, %s40
          %s334 = ssub.s32 512, 512
          %335 = vsyncadd %s328, %s334
          %s336 = smul.addr %s332, 2
          %s337 = smul.addr %s336, 128
          %s338 = scalar_lea.hbm %s0, %s337
          %s339 = sshll.u32 %s331, 4
          %s340 = int_to_ptr.vmem [resolvable:$true] %s339
          %345 = dma.hbm_to_vmem [thread:$0]  %s338, 512, %s340, %s328, 128, 128, 8
        $region20: #{tpu_custom_call.1} parent=15 // pred_fallthru
          _
        // Predicated region
        $region21: #{tpu_custom_call.1} parent=15 // pred_check
          %p346 = pneg %p91
        $region22: #{tpu_custom_call.1} parent=15 // pred_check_branch
          %348 = sbr.rel (%p346) target = $region24
        $region23: #{tpu_custom_call.1} parent=15 // pred_region
          %s349 = sand.u32 %s33, 1
          %s350 = scalar_lea.sflag [#allocation6], %s349
          %s351 = sand.u32 %s81, 1
          %s352 = smul.addr %s351, 16
          %s353 = scalar_lea.vmem [#allocation5], %s352
          %s355 = ssub.s32 256, 256
          %356 = vsyncadd %s350, %s355
          %s357 = smul.addr %s41, 2
          %s358 = smul.addr %s357, 128
          %s359 = scalar_lea.hbm %s1, %s358
          %s360 = sshll.u32 %s353, 4
          %s361 = int_to_ptr.vmem [resolvable:$true] %s360
          %366 = dma.hbm_to_vmem [thread:$0]  %s359, 256, %s361, %s350, 128, 128, 8
        $region24: #{tpu_custom_call.1} parent=15 // pred_fallthru
          _
        // Predicated region
        $region25: #{tpu_custom_call.1} parent=15 // pred_check
          %p367 = pneg %p117
        $region26: #{tpu_custom_call.1} parent=15 // pred_check_branch
          %369 = sbr.rel (%p367) target = $region28
        $region27: #{tpu_custom_call.1} parent=15 // pred_region
          %s370 = sand.u32 %s33, 1
          %s371 = scalar_lea.sflag [#allocation6], %s370
          %s372 = sand.u32 %s107, 1
          %s373 = smul.addr %s372, 2
          %s374 = scalar_lea.vmem [#allocation7], %s373
          %s376 = ssub.s32 32, 32
          %377 = vsyncadd %s371, %s376
          %s378 = smul.addr %s41, 2
          %s379 = smul.addr %s378, 16
          %s380 = scalar_lea.hbm %s2, %s379
          %s382 = sshll.u32 %s374, 4
          %s383 = int_to_ptr.vmem [resolvable:$true] %s382
          %385 = dma.hbm_to_vmem [thread:$0]  %s380, 32, %s383, %s371
        $region28: #{tpu_custom_call.1} parent=15 // pred_fallthru
          _
        // Predicated region
        $region29: #{tpu_custom_call.1} parent=15 // pred_check
          %p386 = pneg %p143
        $region30: #{tpu_custom_call.1} parent=15 // pred_check_branch
          %388 = sbr.rel (%p386) target = $region32
        $region31: #{tpu_custom_call.1} parent=15 // pred_region
          %s389 = sand.u32 %s33, 1
          %s390 = scalar_lea.sflag [#allocation9], %s389
          %s391 = sand.u32 %s133, 1
          %s392 = smul.addr %s391, 64
          %s393 = scalar_lea.vmem [#allocation8], %s392
          %s395 = ssub.s32 1024, 1024
          %396 = vsyncadd %s390, %s395
          %s397 = smul.addr %s41, 16
          %s398 = smul.addr %s397, 64
          %s399 = scalar_lea.hbm %s3, %s398
          %s400 = sshll.u32 %s393, 4
          %s401 = int_to_ptr.vmem [resolvable:$true] %s400
          %406 = dma.hbm_to_vmem [thread:$0]  %s399, 1024, %s401, %s390, 64, 64, 4
        $region32: #{tpu_custom_call.1} parent=15 // pred_fallthru
          _
        // Predicated region
        $region33: #{tpu_custom_call.1} parent=15 // pred_check
          %p407 = pneg %p169
        $region34: #{tpu_custom_call.1} parent=15 // pred_check_branch
          %409 = sbr.rel (%p407) target = $region36
        $region35: #{tpu_custom_call.1} parent=15 // pred_region
          %s410 = sand.u32 %s33, 1
          %s411 = scalar_lea.sflag [#allocation9], %s410
          %s412 = sand.u32 %s159, 1
          %s413 = smul.addr %s412, 64
          %s414 = scalar_lea.vmem [#allocation10], %s413
          %s416 = ssub.s32 1024, 1024
          %417 = vsyncadd %s411, %s416
          %s418 = smul.addr %s41, 16
          %s419 = smul.addr %s418, 64
          %s420 = scalar_lea.hbm %s4, %s419
          %s421 = sshll.u32 %s414, 4
          %s422 = int_to_ptr.vmem [resolvable:$true] %s421
          %427 = dma.hbm_to_vmem [thread:$0]  %s420, 1024, %s422, %s411, 64, 64, 4
        $region36: #{tpu_custom_call.1} parent=15 // pred_fallthru
          _
        // Predicated region
        $region37: #{tpu_custom_call.1} parent=15 // pred_check
          %p428 = pneg %p195
        $region38: #{tpu_custom_call.1} parent=15 // pred_check_branch
          %430 = sbr.rel (%p428) target = $region40
        $region39: #{tpu_custom_call.1} parent=15 // pred_region
          %s431 = sand.u32 %s33, 1
          %s432 = scalar_lea.sflag [#allocation12], %s431
          %s433 = sand.u32 %s185, 1
          %s434 = smul.addr %s433, 64
          %s435 = scalar_lea.vmem [#allocation11], %s434
          %s437 = ssub.s32 1024, 1024
          %438 = vsyncadd %s432, %s437
          %s439 = smul.addr %s41, 16
          %s440 = smul.addr %s439, 64
          %s441 = scalar_lea.hbm %s5, %s440
          %s442 = sshll.u32 %s435, 4
          %s443 = int_to_ptr.vmem [resolvable:$true] %s442
          %448 = dma.hbm_to_vmem [thread:$0]  %s441, 1024, %s443, %s432, 64, 64, 4
        $region40: #{tpu_custom_call.1} parent=15 // pred_fallthru
          _
        // Predicated region
        $region41: #{tpu_custom_call.1} parent=15 // pred_check
          %p449 = pneg %p221
        $region42: #{tpu_custom_call.1} parent=15 // pred_check_branch
          %451 = sbr.rel (%p449) target = $region44
        $region43: #{tpu_custom_call.1} parent=15 // pred_region
          %s452 = sand.u32 %s33, 1
          %s453 = scalar_lea.sflag [#allocation12], %s452
          %s454 = sand.u32 %s211, 1
          %s455 = smul.addr %s454, 64
          %s456 = scalar_lea.vmem [#allocation13], %s455
          %s458 = ssub.s32 1024, 1024
          %459 = vsyncadd %s453, %s458
          %s460 = smul.addr %s41, 16
          %s461 = smul.addr %s460, 64
          %s462 = scalar_lea.hbm %s6, %s461
          %s463 = sshll.u32 %s456, 4
          %s464 = int_to_ptr.vmem [resolvable:$true] %s463
          %469 = dma.hbm_to_vmem [thread:$0]  %s462, 1024, %s464, %s453, 64, 64, 4
        $region44: #{tpu_custom_call.1} parent=15 // pred_fallthru
          _
        // Predicated region
        $region45: #{tpu_custom_call.1} parent=15 // pred_check
          %p470 = pneg %p247
        $region46: #{tpu_custom_call.1} parent=15 // pred_check_branch
          %472 = sbr.rel (%p470) target = $region48
        $region47: #{tpu_custom_call.1} parent=15 // pred_region
          %s473 = sand.u32 %s33, 1
          %s474 = scalar_lea.sflag [#allocation15], %s473
          %s475 = sand.u32 %s237, 1
          %s476 = smul.addr %s475, 128
          %s477 = scalar_lea.vmem [#allocation14], %s476
          %s479 = ssub.s32 2048, 2048
          %480 = vsyncadd %s474, %s479
          %s481 = smul.addr %s41, 32
          %s482 = smul.addr %s481, 64
          %s483 = scalar_lea.hbm %s7, %s482
          %s484 = sshll.u32 %s477, 4
          %s485 = int_to_ptr.vmem [resolvable:$true] %s484
          %490 = dma.hbm_to_vmem [thread:$0]  %s483, 2048, %s485, %s474, 128, 128, 8
        $region48: #{tpu_custom_call.1} parent=15 // pred_fallthru
          _
        // Predicated region
        $region49: #{tpu_custom_call.1} parent=15 // pred_check
          %p491 = pneg %p273
        $region50: #{tpu_custom_call.1} parent=15 // pred_check_branch
          %493 = sbr.rel (%p491) target = $region52
        $region51: #{tpu_custom_call.1} parent=15 // pred_region
          %s494 = sand.u32 %s33, 1
          %s495 = scalar_lea.sflag [#allocation15], %s494
          %s496 = sand.u32 %s263, 1
          %s497 = smul.addr %s496, 128
          %s498 = scalar_lea.vmem [#allocation16], %s497
          %s500 = ssub.s32 2048, 2048
          %501 = vsyncadd %s495, %s500
          %s502 = smul.addr %s41, 32
          %s503 = smul.addr %s502, 64
          %s504 = scalar_lea.hbm %s8, %s503
          %s505 = sshll.u32 %s498, 4
          %s506 = int_to_ptr.vmem [resolvable:$true] %s505
          %511 = dma.hbm_to_vmem [thread:$0]  %s504, 2048, %s506, %s495, 64, 64, 4
        $region52: #{tpu_custom_call.1} parent=15 // pred_fallthru
          _
      $region16: #{tpu_custom_call.1} parent=5 // pred_fallthru
        _
      %p512 = scmp.le.s32.totalorder 1, %s33
      %p513 = scmp.lt.s32.totalorder %s33, 5
      %p514 = pnand %p512, %p513
      %p515 = pneg %p514
      // Predicated region
      $region53: #{tpu_custom_call.1} parent=5 // pred_check
        _
      $region54: #{tpu_custom_call.1} parent=5 // pred_check_branch
        %517 = sbr.rel (%p514) target = $region56
      $region55: #{tpu_custom_call.1} parent=5 // pred_region
        %s518 = ssub.s32 %s33, 1
        %s519 = sand.u32 %s58, 1
        %s520 = scalar_lea.sflag [#allocation3], %s519
        %s521 = sand.u32 %s58, 1
        %s522 = smul.addr %s521, 32
        %s523 = scalar_lea.vmem [#allocation2], %s522
        // Predicated region
        $region57: #{tpu_custom_call.1} parent=55 // pred_check
          %p524 = pneg %p71
        $region58: #{tpu_custom_call.1} parent=55 // pred_check_branch
          %526 = sbr.rel (%p524) target = $region60
        $region59: #{tpu_custom_call.1} parent=55 // pred_region
          %527 = dma.done %s520, 512
        $region60: #{tpu_custom_call.1} parent=55 // pred_fallthru
          _
        %s528 = sand.u32 %s38, 1
        %s529 = scalar_lea.sflag [#allocation6], %s528
        %s530 = sand.u32 %s84, 1
        %s531 = smul.addr %s530, 16
        %s532 = scalar_lea.vmem [#allocation5], %s531
        // Predicated region
        $region61: #{tpu_custom_call.1} parent=55 // pred_check
          %p533 = pneg %p97
        $region62: #{tpu_custom_call.1} parent=55 // pred_check_branch
          %535 = sbr.rel (%p533) target = $region64
        $region63: #{tpu_custom_call.1} parent=55 // pred_region
          %536 = dma.done %s529, 256
        $region64: #{tpu_custom_call.1} parent=55 // pred_fallthru
          _
        %s537 = sand.u32 %s38, 1
        %s538 = scalar_lea.sflag [#allocation6], %s537
        %s539 = sand.u32 %s110, 1
        %s540 = smul.addr %s539, 2
        %s541 = scalar_lea.vmem [#allocation7], %s540
        // Predicated region
        $region65: #{tpu_custom_call.1} parent=55 // pred_check
          %p542 = pneg %p123
        $region66: #{tpu_custom_call.1} parent=55 // pred_check_branch
          %544 = sbr.rel (%p542) target = $region68
        $region67: #{tpu_custom_call.1} parent=55 // pred_region
          %545 = dma.done %s538, 32
        $region68: #{tpu_custom_call.1} parent=55 // pred_fallthru
          _
        %s546 = sand.u32 %s38, 1
        %s547 = scalar_lea.sflag [#allocation9], %s546
        %s548 = sand.u32 %s136, 1
        %s549 = smul.addr %s548, 64
        %s550 = scalar_lea.vmem [#allocation8], %s549
        // Predicated region
        $region69: #{tpu_custom_call.1} parent=55 // pred_check
          %p551 = pneg %p149
        $region70: #{tpu_custom_call.1} parent=55 // pred_check_branch
          %553 = sbr.rel (%p551) target = $region72
        $region71: #{tpu_custom_call.1} parent=55 // pred_region
          %554 = dma.done %s547, 1024
        $region72: #{tpu_custom_call.1} parent=55 // pred_fallthru
          _
        %s555 = sand.u32 %s38, 1
        %s556 = scalar_lea.sflag [#allocation9], %s555
        %s557 = sand.u32 %s162, 1
        %s558 = smul.addr %s557, 64
        %s559 = scalar_lea.vmem [#allocation10], %s558
        // Predicated region
        $region73: #{tpu_custom_call.1} parent=55 // pred_check
          %p560 = pneg %p175
        $region74: #{tpu_custom_call.1} parent=55 // pred_check_branch
          %562 = sbr.rel (%p560) target = $region76
        $region75: #{tpu_custom_call.1} parent=55 // pred_region
          %563 = dma.done %s556, 1024
        $region76: #{tpu_custom_call.1} parent=55 // pred_fallthru
          _
        %s564 = sand.u32 %s38, 1
        %s565 = scalar_lea.sflag [#allocation12], %s564
        %s566 = sand.u32 %s188, 1
        %s567 = smul.addr %s566, 64
        %s568 = scalar_lea.vmem [#allocation11], %s567
        // Predicated region
        $region77: #{tpu_custom_call.1} parent=55 // pred_check
          %p569 = pneg %p201
        $region78: #{tpu_custom_call.1} parent=55 // pred_check_branch
          %571 = sbr.rel (%p569) target = $region80
        $region79: #{tpu_custom_call.1} parent=55 // pred_region
          %572 = dma.done %s565, 1024
        $region80: #{tpu_custom_call.1} parent=55 // pred_fallthru
          _
        %s573 = sand.u32 %s38, 1
        %s574 = scalar_lea.sflag [#allocation12], %s573
        %s575 = sand.u32 %s214, 1
        %s576 = smul.addr %s575, 64
        %s577 = scalar_lea.vmem [#allocation13], %s576
        // Predicated region
        $region81: #{tpu_custom_call.1} parent=55 // pred_check
          %p578 = pneg %p227
        $region82: #{tpu_custom_call.1} parent=55 // pred_check_branch
          %580 = sbr.rel (%p578) target = $region84
        $region83: #{tpu_custom_call.1} parent=55 // pred_region
          %581 = dma.done %s574, 1024
        $region84: #{tpu_custom_call.1} parent=55 // pred_fallthru
          _
        %s582 = sand.u32 %s38, 1
        %s583 = scalar_lea.sflag [#allocation15], %s582
        %s584 = sand.u32 %s240, 1
        %s585 = smul.addr %s584, 128
        %s586 = scalar_lea.vmem [#allocation14], %s585
        // Predicated region
        $region85: #{tpu_custom_call.1} parent=55 // pred_check
          %p587 = pneg %p253
        $region86: #{tpu_custom_call.1} parent=55 // pred_check_branch
          %589 = sbr.rel (%p587) target = $region88
        $region87: #{tpu_custom_call.1} parent=55 // pred_region
          %590 = dma.done %s583, 2048
        $region88: #{tpu_custom_call.1} parent=55 // pred_fallthru
          _
        %s591 = sand.u32 %s38, 1
        %s592 = scalar_lea.sflag [#allocation15], %s591
        %s593 = sand.u32 %s266, 1
        %s594 = smul.addr %s593, 128
        %s595 = scalar_lea.vmem [#allocation16], %s594
        // Predicated region
        $region89: #{tpu_custom_call.1} parent=55 // pred_check
          %p596 = pneg %p279
        $region90: #{tpu_custom_call.1} parent=55 // pred_check_branch
          %598 = sbr.rel (%p596) target = $region92
        $region91: #{tpu_custom_call.1} parent=55 // pred_region
          %599 = dma.done %s592, 2048
        $region92: #{tpu_custom_call.1} parent=55 // pred_fallthru
          _
        %s600 = sand.u32 %s58, 1
        %s601 = scalar_lea.sflag [#allocation3], %s600
        %s602 = sand.u32 %s58, 1
        %s603 = smul.addr %s602, 32
        %s604 = scalar_lea.vmem [#allocation2], %s603
        %p605 = pneg %p71
        %p606 = pneg %p68
        %s607 = sand.u32 %s38, 1
        %s608 = scalar_lea.sflag [#allocation6], %s607
        %s609 = sand.u32 %s84, 1
        %s610 = smul.addr %s609, 16
        %s611 = scalar_lea.vmem [#allocation5], %s610
        %p612 = pneg %p97
        %p613 = pneg %p94
        %s614 = sand.u32 %s38, 1
        %s615 = scalar_lea.sflag [#allocation6], %s614
        %s616 = sand.u32 %s110, 1
        %s617 = smul.addr %s616, 2
        %s618 = scalar_lea.vmem [#allocation7], %s617
        %p619 = pneg %p123
        %p620 = pneg %p120
        %s621 = sand.u32 %s38, 1
        %s622 = scalar_lea.sflag [#allocation9], %s621
        %s623 = sand.u32 %s136, 1
        %s624 = smul.addr %s623, 64
        %s625 = scalar_lea.vmem [#allocation8], %s624
        %p626 = pneg %p149
        %p627 = pneg %p146
        %s628 = sand.u32 %s38, 1
        %s629 = scalar_lea.sflag [#allocation9], %s628
        %s630 = sand.u32 %s162, 1
        %s631 = smul.addr %s630, 64
        %s632 = scalar_lea.vmem [#allocation10], %s631
        %p633 = pneg %p175
        %p634 = pneg %p172
        %s635 = sand.u32 %s38, 1
        %s636 = scalar_lea.sflag [#allocation12], %s635
        %s637 = sand.u32 %s188, 1
        %s638 = smul.addr %s637, 64
        %s639 = scalar_lea.vmem [#allocation11], %s638
        %p640 = pneg %p201
        %p641 = pneg %p198
        %s642 = sand.u32 %s38, 1
        %s643 = scalar_lea.sflag [#allocation12], %s642
        %s644 = sand.u32 %s214, 1
        %s645 = smul.addr %s644, 64
        %s646 = scalar_lea.vmem [#allocation13], %s645
        %p647 = pneg %p227
        %p648 = pneg %p224
        %s649 = sand.u32 %s38, 1
        %s650 = scalar_lea.sflag [#allocation15], %s649
        %s651 = sand.u32 %s240, 1
        %s652 = smul.addr %s651, 128
        %s653 = scalar_lea.vmem [#allocation14], %s652
        %p654 = pneg %p253
        %p655 = pneg %p250
        %s656 = sand.u32 %s38, 1
        %s657 = scalar_lea.sflag [#allocation15], %s656
        %s658 = sand.u32 %s266, 1
        %s659 = smul.addr %s658, 128
        %s660 = scalar_lea.vmem [#allocation16], %s659
        %p661 = pneg %p279
        %p662 = pneg %p276
        %p663 = pneg %p305
        %p664 = pneg %p302
        %s665 = sand.u32 %s292, 1
        %s666 = scalar_lea.sflag [#allocation4], %s665
        %s667 = sand.u32 %s292, 1
        %s668 = smul.addr %s667, 32
        %s669 = scalar_lea.vmem [#allocation17], %s668
        %s670 = smul.u32 2, %s42
        %s671 = smul.u32 2, %s42
        %p673 = scmp.eq.s32.totalorder %s43, 0
        // Predicated region
        $region93: #{tpu_custom_call.1} parent=55 // pred_check
          %p674 = pneg %p673
        $region94: #{tpu_custom_call.1} parent=55 // pred_check_branch
          %676 = sbr.rel (%p674) target = $region96
        $region95: #{tpu_custom_call.1} parent=55 // pred_region
          %v677 = vld [vmem:[%s523] sm:$0xff]
          %v678 = vld [vmem:[%s523 + $0x8] sm:$0xff]
          %v679 = vld [vmem:[%s523 + $0x10] sm:$0xff]
          %v680 = vld [vmem:[%s523 + $0x18] sm:$0xff]
          %681 = vst [vmem:[%s669] sm:$0xff] %v677
          %682 = vst [vmem:[%s669 + $0x8] sm:$0xff] %v678
          %683 = vst [vmem:[%s669 + $0x10] sm:$0xff] %v679
          %684 = vst [vmem:[%s669 + $0x18] sm:$0xff] %v680
        $region96: #{tpu_custom_call.1} parent=55 // pred_fallthru
          _
        %v685 = vld [vmem:[%s669] sm:$0xff]
        %v686 = vld [vmem:[%s669 + $0x8] sm:$0xff]
        %v687 = vld [vmem:[%s669 + $0x10] sm:$0xff]
        %v688 = vld [vmem:[%s669 + $0x18] sm:$0xff]
        %v689 = vld [vmem:[%s532] sm:$0xff]
        %v690 = vld [vmem:[%s532 + $0x8] sm:$0x1]
        %v691 = vld [vmem:[%s541] sm:$0x3]
        %692 = vadd.xlane.f32.xlu0 %v685
        %v693 = vpop.xlane.xlu0 %692
        %694 = vadd.xlane.f32.xlu0 %v686
        %v695 = vpop.xlane.xlu0 %694
        %696 = vadd.xlane.f32.xlu0 %v687
        %v697 = vpop.xlane.xlu0 %696
        %698 = vadd.xlane.f32.xlu0 %v688
        %v699 = vpop.xlane.xlu0 %698
        %v700 = vrcp.pop 128.0
        %v701 = vmul.f32 %v693, %v700
        %v702 = vmul.f32 %v695, %v700
        %v703 = vmul.f32 %v697, %v700
        %v704 = vmul.f32 %v699, %v700
        %v705 = vsub.f32 %v685, %v701
        %v706 = vsub.f32 %v686, %v702
        %v707 = vsub.f32 %v687, %v703
        %v708 = vsub.f32 %v688, %v704
        %v709 = vmul.f32 %v705, %v705
        %v710 = vmul.f32 %v706, %v706
        %v711 = vmul.f32 %v707, %v707
        %v712 = vmul.f32 %v708, %v708
        %713 = vadd.xlane.f32.xlu0 %v709
        %v714 = vpop.xlane.xlu0 %713
        %715 = vadd.xlane.f32.xlu0 %v710
        %v716 = vpop.xlane.xlu0 %715
        %717 = vadd.xlane.f32.xlu0 %v711
        %v718 = vpop.xlane.xlu0 %717
        %719 = vadd.xlane.f32.xlu0 %v712
        %v720 = vpop.xlane.xlu0 %719
        %v721 = vmul.f32 %v714, %v700
        %v722 = vmul.f32 %v716, %v700
        %v723 = vmul.f32 %v718, %v700
        %v724 = vmul.f32 %v720, %v700
        %v725 = vadd.f32 %v721, 1e-05
        %v726 = vadd.f32 %v722, 1e-05
        %v727 = vadd.f32 %v723, 1e-05
        %v728 = vadd.f32 %v724, 1e-05
        %v729 = vrsqrt.pop %v725
        %v730 = vrsqrt.pop %v726
        %v731 = vrsqrt.pop %v727
        %v732 = vrsqrt.pop %v728
        %v733 = vmul.f32 %v705, %v729
        %v734 = vmul.f32 %v706, %v730
        %v735 = vmul.f32 %v707, %v731
        %v736 = vmul.f32 %v708, %v732
        %v737 = vlaneseq
        %v738 = vshrl.u32 %v737, 7
        %v739 = vsub.s32 0, %v738
        %v740 = vrot.slane %v689, %v739
        %v741 = vmul.f32 %v733, %v740
        %v742 = vmul.f32 %v734, %v740
        %v743 = vmul.f32 %v735, %v740
        %v744 = vmul.f32 %v736, %v740
        %v745 = vlaneseq
        %v746 = vshrl.u32 %v745, 7
        %v747 = vsub.s32 1, %v746
        %v748 = vrot.slane %v689, %v747
        %v749 = vadd.f32 %v741, %v748
        %v750 = vadd.f32 %v742, %v748
        %v751 = vadd.f32 %v743, %v748
        %v752 = vadd.f32 %v744, %v748
        %v753 = vpack.c.bf16 %v750, %v749
        %v754 = vpack.c.bf16 %v752, %v751
        %v755 = vld [vmem:[%s550] sm:$0xf]
        %v756 = vld [vmem:[%s550 + $0x4] sm:$0xf]
        %v757 = vld [vmem:[%s550 + $0x8] sm:$0xf]
        %v758 = vld [vmem:[%s550 + $0xc] sm:$0xf]
        %v759 = vld [vmem:[%s550 + $0x10] sm:$0xf]
        %v760 = vld [vmem:[%s550 + $0x14] sm:$0xf]
        %v761 = vld [vmem:[%s550 + $0x18] sm:$0xf]
        %v762 = vld [vmem:[%s550 + $0x1c] sm:$0xf]
        %v763 = vld [vmem:[%s550 + $0x20] sm:$0xf]
        %v764 = vld [vmem:[%s550 + $0x24] sm:$0xf]
        %v765 = vld [vmem:[%s550 + $0x28] sm:$0xf]
        %v766 = vld [vmem:[%s550 + $0x2c] sm:$0xf]
        %v767 = vld [vmem:[%s550 + $0x30] sm:$0xf]
        %v768 = vld [vmem:[%s550 + $0x34] sm:$0xf]
        %v769 = vld [vmem:[%s550 + $0x38] sm:$0xf]
        %v770 = vld [vmem:[%s550 + $0x3c] sm:$0xf]
        %v771 = vlaneseq
        %v772 = vshrl.u32 %v771, 7
        %v773 = vsub.s32 2, %v772
        %v774 = vrot.slane %v689, %v773
        %v791 = vunpack.c.l.b16 %v755
        %v792 = vunpack.c.l.b16 %v756
        %v793 = vunpack.c.l.b16 %v757
        %v794 = vunpack.c.l.b16 %v758
        %v795 = vunpack.c.l.b16 %v759
        %v796 = vunpack.c.l.b16 %v760
        %v797 = vunpack.c.l.b16 %v761
        %v798 = vunpack.c.l.b16 %v762
        %v799 = vunpack.c.l.b16 %v763
        %v800 = vunpack.c.l.b16 %v764
        %v801 = vunpack.c.l.b16 %v765
        %v802 = vunpack.c.l.b16 %v766
        %v803 = vunpack.c.l.b16 %v767
        %v804 = vunpack.c.l.b16 %v768
        %v805 = vunpack.c.l.b16 %v769
        %v806 = vunpack.c.l.b16 %v770
        %v807 = vpack.c.b16 %v792, %v791
        %v808 = vpack.c.b16 %v794, %v793
        %v809 = vpack.c.b16 %v796, %v795
        %v810 = vpack.c.b16 %v798, %v797
        %v811 = vpack.c.b16 %v800, %v799
        %v812 = vpack.c.b16 %v802, %v801
        %v813 = vpack.c.b16 %v804, %v803
        %v814 = vpack.c.b16 %v806, %v805
        %823 = vmatprep.subr.bf16.mxu0 0
        %824 = vmatpush1.bf16.msra.mxu0 %v807
        %825 = vmatprep.subr.bf16.mxu0 0
        %826 = vmatpush1.bf16.msra.mxu0 %v808
        %827 = vmatprep.subr.bf16.mxu0 0
        %828 = vmatpush1.bf16.msra.mxu0 %v809
        %829 = vmatprep.subr.bf16.mxu0 0
        %830 = vmatpush1.bf16.msra.mxu0 %v810
        %831 = vmatprep.subr.bf16.mxu0 0
        %832 = vmatpush1.bf16.msra.mxu0 %v811
        %833 = vmatprep.subr.bf16.mxu0 0
        %834 = vmatpush1.bf16.msra.mxu0 %v812
        %835 = vmatprep.subr.bf16.mxu0 0
        %836 = vmatpush1.bf16.msra.mxu0 %v813
        %837 = vmatprep.subr.bf16.mxu0 0
        %838 = vmatpush1.bf16.msra.mxu0 %v814
        %839 = vmatprep.subr.bf16.mxu0 0
        %840 = vmatpush1.bf16.msra.mxu0 0
        %841 = vmatprep.subr.bf16.mxu0 0
        %842 = vmatpush1.bf16.msra.mxu0 0
        %843 = vmatprep.subr.bf16.mxu0 0
        %844 = vmatpush1.bf16.msra.mxu0 0
        %845 = vmatprep.subr.bf16.mxu0 0
        %846 = vmatpush1.bf16.msra.mxu0 0
        %847 = vmatprep.subr.bf16.mxu0 0
        %848 = vmatpush1.bf16.msra.mxu0 0
        %849 = vmatprep.subr.bf16.mxu0 0
        %850 = vmatpush1.bf16.msra.mxu0 0
        %851 = vmatprep.subr.bf16.mxu0 0
        %852 = vmatpush1.bf16.msra.mxu0 0
        %853 = vmatprep.subr.bf16.mxu0 0
        %854 = vmatpush1.bf16.msra.mxu0 0
        %855 = vmatprep.mubr.bf16.mxu0 0
        %856 = vmatmul.mubr.bf16.gmra.mrb[0].mxu0 %v753
        %v857 = vpop.f32.mrb[0].mxu0
        %v858 = vadd.f32 %v774, %v857
        %v859 = vpop.f32.mrb[0].mxu0
        %v860 = vpop.f32.mrb[0].mxu0
        %v861 = vadd.f32 %v774, %v860
        %v862 = vpop.f32.mrb[0].mxu0
        %863 = vmatprep.mubr.bf16.mxu0 0
        %864 = vmatmul.mubr.bf16.gmra.mrb[0].mxu0 %v754
        %v865 = vpop.f32.mrb[0].mxu0
        %v866 = vadd.f32 %v774, %v865
        %v867 = vpop.f32.mrb[0].mxu0
        %v868 = vpop.f32.mrb[0].mxu0
        %v869 = vadd.f32 %v774, %v868
        %v870 = vpop.f32.mrb[0].mxu0
        %871 = vdwg.mxu0
        %v872 = vld [vmem:[%s559] sm:$0xf]
        %v873 = vld [vmem:[%s559 + $0x4] sm:$0xf]
        %v874 = vld [vmem:[%s559 + $0x8] sm:$0xf]
        %v875 = vld [vmem:[%s559 + $0xc] sm:$0xf]
        %v876 = vld [vmem:[%s559 + $0x10] sm:$0xf]
        %v877 = vld [vmem:[%s559 + $0x14] sm:$0xf]
        %v878 = vld [vmem:[%s559 + $0x18] sm:$0xf]
        %v879 = vld [vmem:[%s559 + $0x1c] sm:$0xf]
        %v880 = vld [vmem:[%s559 + $0x20] sm:$0xf]
        %v881 = vld [vmem:[%s559 + $0x24] sm:$0xf]
        %v882 = vld [vmem:[%s559 + $0x28] sm:$0xf]
        %v883 = vld [vmem:[%s559 + $0x2c] sm:$0xf]
        %v884 = vld [vmem:[%s559 + $0x30] sm:$0xf]
        %v885 = vld [vmem:[%s559 + $0x34] sm:$0xf]
        %v886 = vld [vmem:[%s559 + $0x38] sm:$0xf]
        %v887 = vld [vmem:[%s559 + $0x3c] sm:$0xf]
        %v888 = vlaneseq
        %v889 = vshrl.u32 %v888, 7
        %v890 = vsub.s32 3, %v889
        %v891 = vrot.slane %v689, %v890
        %v908 = vunpack.c.l.b16 %v872
        %v909 = vunpack.c.l.b16 %v873
        %v910 = vunpack.c.l.b16 %v874
        %v911 = vunpack.c.l.b16 %v875
        %v912 = vunpack.c.l.b16 %v876
        %v913 = vunpack.c.l.b16 %v877
        %v914 = vunpack.c.l.b16 %v878
        %v915 = vunpack.c.l.b16 %v879
        %v916 = vunpack.c.l.b16 %v880
        %v917 = vunpack.c.l.b16 %v881
        %v918 = vunpack.c.l.b16 %v882
        %v919 = vunpack.c.l.b16 %v883
        %v920 = vunpack.c.l.b16 %v884
        %v921 = vunpack.c.l.b16 %v885
        %v922 = vunpack.c.l.b16 %v886
        %v923 = vunpack.c.l.b16 %v887
        %v924 = vpack.c.b16 %v909, %v908
        %v925 = vpack.c.b16 %v911, %v910
        %v926 = vpack.c.b16 %v913, %v912
        %v927 = vpack.c.b16 %v915, %v914
        %v928 = vpack.c.b16 %v917, %v916
        %v929 = vpack.c.b16 %v919, %v918
        %v930 = vpack.c.b16 %v921, %v920
        %v931 = vpack.c.b16 %v923, %v922
        %940 = vmatprep.subr.bf16.mxu0 0
        %941 = vmatpush1.bf16.msra.mxu0 %v924
        %942 = vmatprep.subr.bf16.mxu0 0
        %943 = vmatpush1.bf16.msra.mxu0 %v925
        %944 = vmatprep.subr.bf16.mxu0 0
        %945 = vmatpush1.bf16.msra.mxu0 %v926
        %946 = vmatprep.subr.bf16.mxu0 0
        %947 = vmatpush1.bf16.msra.mxu0 %v927
        %948 = vmatprep.subr.bf16.mxu0 0
        %949 = vmatpush1.bf16.msra.mxu0 %v928
        %950 = vmatprep.subr.bf16.mxu0 0
        %951 = vmatpush1.bf16.msra.mxu0 %v929
        %952 = vmatprep.subr.bf16.mxu0 0
        %953 = vmatpush1.bf16.msra.mxu0 %v930
        %954 = vmatprep.subr.bf16.mxu0 0
        %955 = vmatpush1.bf16.msra.mxu0 %v931
        %956 = vmatprep.subr.bf16.mxu0 0
        %957 = vmatpush1.bf16.msra.mxu0 0
        %958 = vmatprep.subr.bf16.mxu0 0
        %959 = vmatpush1.bf16.msra.mxu0 0
        %960 = vmatprep.subr.bf16.mxu0 0
        %961 = vmatpush1.bf16.msra.mxu0 0
        %962 = vmatprep.subr.bf16.mxu0 0
        %963 = vmatpush1.bf16.msra.mxu0 0
        %964 = vmatprep.subr.bf16.mxu0 0
        %965 = vmatpush1.bf16.msra.mxu0 0
        %966 = vmatprep.subr.bf16.mxu0 0
        %967 = vmatpush1.bf16.msra.mxu0 0
        %968 = vmatprep.subr.bf16.mxu0 0
        %969 = vmatpush1.bf16.msra.mxu0 0
        %970 = vmatprep.subr.bf16.mxu0 0
        %971 = vmatpush1.bf16.msra.mxu0 0
        %972 = vmatprep.mubr.bf16.mxu0 0
        %973 = vmatmul.mubr.bf16.gmra.mrb[0].mxu0 %v753
        %v974 = vpop.f32.mrb[0].mxu0
        %v975 = vadd.f32 %v891, %v974
        %v976 = vpop.f32.mrb[0].mxu0
        %v977 = vpop.f32.mrb[0].mxu0
        %v978 = vadd.f32 %v891, %v977
        %v979 = vpop.f32.mrb[0].mxu0
        %980 = vmatprep.mubr.bf16.mxu0 0
        %981 = vmatmul.mubr.bf16.gmra.mrb[0].mxu0 %v754
        %v982 = vpop.f32.mrb[0].mxu0
        %v983 = vadd.f32 %v891, %v982
        %v984 = vpop.f32.mrb[0].mxu0
        %v985 = vpop.f32.mrb[0].mxu0
        %v986 = vadd.f32 %v891, %v985
        %v987 = vpop.f32.mrb[0].mxu0
        %988 = vdwg.mxu0
        %v989 = vld [vmem:[%s568] sm:$0xf]
        %v990 = vld [vmem:[%s568 + $0x4] sm:$0xf]
        %v991 = vld [vmem:[%s568 + $0x8] sm:$0xf]
        %v992 = vld [vmem:[%s568 + $0xc] sm:$0xf]
        %v993 = vld [vmem:[%s568 + $0x10] sm:$0xf]
        %v994 = vld [vmem:[%s568 + $0x14] sm:$0xf]
        %v995 = vld [vmem:[%s568 + $0x18] sm:$0xf]
        %v996 = vld [vmem:[%s568 + $0x1c] sm:$0xf]
        %v997 = vld [vmem:[%s568 + $0x20] sm:$0xf]
        %v998 = vld [vmem:[%s568 + $0x24] sm:$0xf]
        %v999 = vld [vmem:[%s568 + $0x28] sm:$0xf]
        %v1000 = vld [vmem:[%s568 + $0x2c] sm:$0xf]
        %v1001 = vld [vmem:[%s568 + $0x30] sm:$0xf]
        %v1002 = vld [vmem:[%s568 + $0x34] sm:$0xf]
        %v1003 = vld [vmem:[%s568 + $0x38] sm:$0xf]
        %v1004 = vld [vmem:[%s568 + $0x3c] sm:$0xf]
        %v1005 = vlaneseq
        %v1006 = vshrl.u32 %v1005, 7
        %v1007 = vsub.s32 4, %v1006
        %v1008 = vrot.slane %v689, %v1007
        %v1025 = vunpack.c.l.b16 %v989
        %v1026 = vunpack.c.l.b16 %v990
        %v1027 = vunpack.c.l.b16 %v991
        %v1028 = vunpack.c.l.b16 %v992
        %v1029 = vunpack.c.l.b16 %v993
        %v1030 = vunpack.c.l.b16 %v994
        %v1031 = vunpack.c.l.b16 %v995
        %v1032 = vunpack.c.l.b16 %v996
        %v1033 = vunpack.c.l.b16 %v997
        %v1034 = vunpack.c.l.b16 %v998
        %v1035 = vunpack.c.l.b16 %v999
        %v1036 = vunpack.c.l.b16 %v1000
        %v1037 = vunpack.c.l.b16 %v1001
        %v1038 = vunpack.c.l.b16 %v1002
        %v1039 = vunpack.c.l.b16 %v1003
        %v1040 = vunpack.c.l.b16 %v1004
        %v1041 = vpack.c.b16 %v1026, %v1025
        %v1042 = vpack.c.b16 %v1028, %v1027
        %v1043 = vpack.c.b16 %v1030, %v1029
        %v1044 = vpack.c.b16 %v1032, %v1031
        %v1045 = vpack.c.b16 %v1034, %v1033
        %v1046 = vpack.c.b16 %v1036, %v1035
        %v1047 = vpack.c.b16 %v1038, %v1037
        %v1048 = vpack.c.b16 %v1040, %v1039
        %1057 = vmatprep.subr.bf16.mxu0 0
        %1058 = vmatpush1.bf16.msra.mxu0 %v1041
        %1059 = vmatprep.subr.bf16.mxu0 0
        %1060 = vmatpush1.bf16.msra.mxu0 %v1042
        %1061 = vmatprep.subr.bf16.mxu0 0
        %1062 = vmatpush1.bf16.msra.mxu0 %v1043
        %1063 = vmatprep.subr.bf16.mxu0 0
        %1064 = vmatpush1.bf16.msra.mxu0 %v1044
        %1065 = vmatprep.subr.bf16.mxu0 0
        %1066 = vmatpush1.bf16.msra.mxu0 %v1045
        %1067 = vmatprep.subr.bf16.mxu0 0
        %1068 = vmatpush1.bf16.msra.mxu0 %v1046
        %1069 = vmatprep.subr.bf16.mxu0 0
        %1070 = vmatpush1.bf16.msra.mxu0 %v1047
        %1071 = vmatprep.subr.bf16.mxu0 0
        %1072 = vmatpush1.bf16.msra.mxu0 %v1048
        %1073 = vmatprep.subr.bf16.mxu0 0
        %1074 = vmatpush1.bf16.msra.mxu0 0
        %1075 = vmatprep.subr.bf16.mxu0 0
        %1076 = vmatpush1.bf16.msra.mxu0 0
        %1077 = vmatprep.subr.bf16.mxu0 0
        %1078 = vmatpush1.bf16.msra.mxu0 0
        %1079 = vmatprep.subr.bf16.mxu0 0
        %1080 = vmatpush1.bf16.msra.mxu0 0
        %1081 = vmatprep.subr.bf16.mxu0 0
        %1082 = vmatpush1.bf16.msra.mxu0 0
        %1083 = vmatprep.subr.bf16.mxu0 0
        %1084 = vmatpush1.bf16.msra.mxu0 0
        %1085 = vmatprep.subr.bf16.mxu0 0
        %1086 = vmatpush1.bf16.msra.mxu0 0
        %1087 = vmatprep.subr.bf16.mxu0 0
        %1088 = vmatpush1.bf16.msra.mxu0 0
        %1089 = vmatprep.mubr.bf16.mxu0 0
        %1090 = vmatmul.mubr.bf16.gmra.mrb[0].mxu0 %v753
        %v1091 = vpop.f32.mrb[0].mxu0
        %v1092 = vadd.f32 %v1008, %v1091
        %v1093 = vpop.f32.mrb[0].mxu0
        %v1094 = vpop.f32.mrb[0].mxu0
        %v1095 = vadd.f32 %v1008, %v1094
        %v1096 = vpop.f32.mrb[0].mxu0
        %1097 = vmatprep.mubr.bf16.mxu0 0
        %1098 = vmatmul.mubr.bf16.gmra.mrb[0].mxu0 %v754
        %v1099 = vpop.f32.mrb[0].mxu0
        %v1100 = vadd.f32 %v1008, %v1099
        %v1101 = vpop.f32.mrb[0].mxu0
        %v1102 = vpop.f32.mrb[0].mxu0
        %v1103 = vadd.f32 %v1008, %v1102
        %v1104 = vpop.f32.mrb[0].mxu0
        %1105 = vdwg.mxu0
        %1108 = vrot.lane.b32.xlu0 %v858, 112
        %v1109 = vpop.permute.xlu0 %1108
        %1110 = vrot.lane.b32.xlu0 %v861, 112
        %v1111 = vpop.permute.xlu0 %1110
        %1114 = vrot.lane.b32.xlu0 %v858, 96
        %v1115 = vpop.permute.xlu0 %1114
        %1116 = vrot.lane.b32.xlu0 %v861, 96
        %v1117 = vpop.permute.xlu0 %1116
        %1120 = vrot.lane.b32.xlu0 %v858, 80
        %v1121 = vpop.permute.xlu0 %1120
        %1122 = vrot.lane.b32.xlu0 %v861, 80
        %v1123 = vpop.permute.xlu0 %1122
        %1126 = vrot.lane.b32.xlu0 %v858, 64
        %v1127 = vpop.permute.xlu0 %1126
        %1128 = vrot.lane.b32.xlu0 %v861, 64
        %v1129 = vpop.permute.xlu0 %1128
        %1132 = vrot.lane.b32.xlu0 %v858, 48
        %v1133 = vpop.permute.xlu0 %1132
        %1134 = vrot.lane.b32.xlu0 %v861, 48
        %v1135 = vpop.permute.xlu0 %1134
        %1138 = vrot.lane.b32.xlu0 %v858, 32
        %v1139 = vpop.permute.xlu0 %1138
        %1140 = vrot.lane.b32.xlu0 %v861, 32
        %v1141 = vpop.permute.xlu0 %1140
        %1144 = vrot.lane.b32.xlu0 %v858, 16
        %v1145 = vpop.permute.xlu0 %1144
        %1146 = vrot.lane.b32.xlu0 %v861, 16
        %v1147 = vpop.permute.xlu0 %1146
        %v1150 = vcombine.low %v858, %v1115
        %v1151 = vcombine.high %v858, %v1115
        %v1153 = vunpack.c.l.s4 1983009808
        %v1154 = vunpack.c.0.s8 %v1153
        %v1155 = vlaneseq
        %v1156 = vshrl.u32 %v1155, 7
        %v1157 = vsub.s32 %v1154, %v1156
        %v1158 = vrot.slane %v1150, %v1157
        %v1160 = vunpack.c.l.s4 1983009808
        %v1161 = vunpack.c.0.s8 %v1160
        %v1162 = vlaneseq
        %v1163 = vshrl.u32 %v1162, 7
        %v1164 = vsub.s32 %v1161, %v1163
        %v1165 = vrot.slane %v1151, %v1164
        %v1166 = vcombine.low %v1109, %v1121
        %v1167 = vcombine.high %v1109, %v1121
        %v1169 = vunpack.c.l.s4 1983009808
        %v1170 = vunpack.c.0.s8 %v1169
        %v1171 = vlaneseq
        %v1172 = vshrl.u32 %v1171, 7
        %v1173 = vsub.s32 %v1170, %v1172
        %v1174 = vrot.slane %v1166, %v1173
        %v1176 = vunpack.c.l.s4 1983009808
        %v1177 = vunpack.c.0.s8 %v1176
        %v1178 = vlaneseq
        %v1179 = vshrl.u32 %v1178, 7
        %v1180 = vsub.s32 %v1177, %v1179
        %v1181 = vrot.slane %v1167, %v1180
        %v1182 = vcombine.low %v1127, %v1139
        %v1183 = vcombine.high %v1127, %v1139
        %v1185 = vunpack.c.l.s4 1983009808
        %v1186 = vunpack.c.0.s8 %v1185
        %v1187 = vlaneseq
        %v1188 = vshrl.u32 %v1187, 7
        %v1189 = vsub.s32 %v1186, %v1188
        %v1190 = vrot.slane %v1182, %v1189
        %v1192 = vunpack.c.l.s4 1983009808
        %v1193 = vunpack.c.0.s8 %v1192
        %v1194 = vlaneseq
        %v1195 = vshrl.u32 %v1194, 7
        %v1196 = vsub.s32 %v1193, %v1195
        %v1197 = vrot.slane %v1183, %v1196
        %v1198 = vcombine.low %v1133, %v1145
        %v1199 = vcombine.high %v1133, %v1145
        %v1201 = vunpack.c.l.s4 1983009808
        %v1202 = vunpack.c.0.s8 %v1201
        %v1203 = vlaneseq
        %v1204 = vshrl.u32 %v1203, 7
        %v1205 = vsub.s32 %v1202, %v1204
        %v1206 = vrot.slane %v1198, %v1205
        %v1208 = vunpack.c.l.s4 1983009808
        %v1209 = vunpack.c.0.s8 %v1208
        %v1210 = vlaneseq
        %v1211 = vshrl.u32 %v1210, 7
        %v1212 = vsub.s32 %v1209, %v1211
        %v1213 = vrot.slane %v1199, %v1212
        %v1214 = vcombine.low %v1158, %v1174
        %v1215 = vcombine.high %v1158, %v1174
        %v1217 = vunpack.c.l.s4 1934713408
        %v1218 = vunpack.c.0.s8 %v1217
        %v1219 = vlaneseq
        %v1220 = vshrl.u32 %v1219, 7
        %v1221 = vsub.s32 %v1218, %v1220
        %v1222 = vrot.slane %v1214, %v1221
        %v1224 = vunpack.c.l.s4 1934713408
        %v1225 = vunpack.c.0.s8 %v1224
        %v1226 = vlaneseq
        %v1227 = vshrl.u32 %v1226, 7
        %v1228 = vsub.s32 %v1225, %v1227
        %v1229 = vrot.slane %v1215, %v1228
        %v1230 = vcombine.low %v1165, %v1181
        %v1231 = vcombine.high %v1165, %v1181
        %v1233 = vunpack.c.l.s4 1934713408
        %v1234 = vunpack.c.0.s8 %v1233
        %v1235 = vlaneseq
        %v1236 = vshrl.u32 %v1235, 7
        %v1237 = vsub.s32 %v1234, %v1236
        %v1238 = vrot.slane %v1230, %v1237
        %v1240 = vunpack.c.l.s4 1934713408
        %v1241 = vunpack.c.0.s8 %v1240
        %v1242 = vlaneseq
        %v1243 = vshrl.u32 %v1242, 7
        %v1244 = vsub.s32 %v1241, %v1243
        %v1245 = vrot.slane %v1231, %v1244
        %v1246 = vcombine.low %v1190, %v1206
        %v1247 = vcombine.high %v1190, %v1206
        %v1249 = vunpack.c.l.s4 1934713408
        %v1250 = vunpack.c.0.s8 %v1249
        %v1251 = vlaneseq
        %v1252 = vshrl.u32 %v1251, 7
        %v1253 = vsub.s32 %v1250, %v1252
        %v1254 = vrot.slane %v1246, %v1253
        %v1256 = vunpack.c.l.s4 1934713408
        %v1257 = vunpack.c.0.s8 %v1256
        %v1258 = vlaneseq
        %v1259 = vshrl.u32 %v1258, 7
        %v1260 = vsub.s32 %v1257, %v1259
        %v1261 = vrot.slane %v1247, %v1260
        %v1262 = vcombine.low %v1197, %v1213
        %v1263 = vcombine.high %v1197, %v1213
        %v1265 = vunpack.c.l.s4 1934713408
        %v1266 = vunpack.c.0.s8 %v1265
        %v1267 = vlaneseq
        %v1268 = vshrl.u32 %v1267, 7
        %v1269 = vsub.s32 %v1266, %v1268
        %v1270 = vrot.slane %v1262, %v1269
        %v1272 = vunpack.c.l.s4 1934713408
        %v1273 = vunpack.c.0.s8 %v1272
        %v1274 = vlaneseq
        %v1275 = vshrl.u32 %v1274, 7
        %v1276 = vsub.s32 %v1273, %v1275
        %v1277 = vrot.slane %v1263, %v1276
        %v1278 = vcombine.low %v1222, %v1254
        %v1279 = vcombine.high %v1222, %v1254
        %v1280 = vcombine.low %v1229, %v1261
        %v1281 = vcombine.high %v1229, %v1261
        %v1282 = vcombine.low %v1238, %v1270
        %v1283 = vcombine.high %v1238, %v1270
        %v1284 = vcombine.low %v1245, %v1277
        %v1285 = vcombine.high %v1245, %v1277
        %v1286 = vcombine.low %v861, %v1117
        %v1287 = vcombine.high %v861, %v1117
        %v1289 = vunpack.c.l.s4 1983009808
        %v1290 = vunpack.c.0.s8 %v1289
        %v1291 = vlaneseq
        %v1292 = vshrl.u32 %v1291, 7
        %v1293 = vsub.s32 %v1290, %v1292
        %v1294 = vrot.slane %v1286, %v1293
        %v1296 = vunpack.c.l.s4 1983009808
        %v1297 = vunpack.c.0.s8 %v1296
        %v1298 = vlaneseq
        %v1299 = vshrl.u32 %v1298, 7
        %v1300 = vsub.s32 %v1297, %v1299
        %v1301 = vrot.slane %v1287, %v1300
        %v1302 = vcombine.low %v1111, %v1123
        %v1303 = vcombine.high %v1111, %v1123
        %v1305 = vunpack.c.l.s4 1983009808
        %v1306 = vunpack.c.0.s8 %v1305
        %v1307 = vlaneseq
        %v1308 = vshrl.u32 %v1307, 7
        %v1309 = vsub.s32 %v1306, %v1308
        %v1310 = vrot.slane %v1302, %v1309
        %v1312 = vunpack.c.l.s4 1983009808
        %v1313 = vunpack.c.0.s8 %v1312
        %v1314 = vlaneseq
        %v1315 = vshrl.u32 %v1314, 7
        %v1316 = vsub.s32 %v1313, %v1315
        %v1317 = vrot.slane %v1303, %v1316
        %v1318 = vcombine.low %v1129, %v1141
        %v1319 = vcombine.high %v1129, %v1141
        %v1321 = vunpack.c.l.s4 1983009808
        %v1322 = vunpack.c.0.s8 %v1321
        %v1323 = vlaneseq
        %v1324 = vshrl.u32 %v1323, 7
        %v1325 = vsub.s32 %v1322, %v1324
        %v1326 = vrot.slane %v1318, %v1325
        %v1328 = vunpack.c.l.s4 1983009808
        %v1329 = vunpack.c.0.s8 %v1328
        %v1330 = vlaneseq
        %v1331 = vshrl.u32 %v1330, 7
        %v1332 = vsub.s32 %v1329, %v1331
        %v1333 = vrot.slane %v1319, %v1332
        %v1334 = vcombine.low %v1135, %v1147
        %v1335 = vcombine.high %v1135, %v1147
        %v1337 = vunpack.c.l.s4 1983009808
        %v1338 = vunpack.c.0.s8 %v1337
        %v1339 = vlaneseq
        %v1340 = vshrl.u32 %v1339, 7
        %v1341 = vsub.s32 %v1338, %v1340
        %v1342 = vrot.slane %v1334, %v1341
        %v1344 = vunpack.c.l.s4 1983009808
        %v1345 = vunpack.c.0.s8 %v1344
        %v1346 = vlaneseq
        %v1347 = vshrl.u32 %v1346, 7
        %v1348 = vsub.s32 %v1345, %v1347
        %v1349 = vrot.slane %v1335, %v1348
        %v1350 = vcombine.low %v1294, %v1310
        %v1351 = vcombine.high %v1294, %v1310
        %v1353 = vunpack.c.l.s4 1934713408
        %v1354 = vunpack.c.0.s8 %v1353
        %v1355 = vlaneseq
        %v1356 = vshrl.u32 %v1355, 7
        %v1357 = vsub.s32 %v1354, %v1356
        %v1358 = vrot.slane %v1350, %v1357
        %v1360 = vunpack.c.l.s4 1934713408
        %v1361 = vunpack.c.0.s8 %v1360
        %v1362 = vlaneseq
        %v1363 = vshrl.u32 %v1362, 7
        %v1364 = vsub.s32 %v1361, %v1363
        %v1365 = vrot.slane %v1351, %v1364
        %v1366 = vcombine.low %v1301, %v1317
        %v1367 = vcombine.high %v1301, %v1317
        %v1369 = vunpack.c.l.s4 1934713408
        %v1370 = vunpack.c.0.s8 %v1369
        %v1371 = vlaneseq
        %v1372 = vshrl.u32 %v1371, 7
        %v1373 = vsub.s32 %v1370, %v1372
        %v1374 = vrot.slane %v1366, %v1373
        %v1376 = vunpack.c.l.s4 1934713408
        %v1377 = vunpack.c.0.s8 %v1376
        %v1378 = vlaneseq
        %v1379 = vshrl.u32 %v1378, 7
        %v1380 = vsub.s32 %v1377, %v1379
        %v1381 = vrot.slane %v1367, %v1380
        %v1382 = vcombine.low %v1326, %v1342
        %v1383 = vcombine.high %v1326, %v1342
        %v1385 = vunpack.c.l.s4 1934713408
        %v1386 = vunpack.c.0.s8 %v1385
        %v1387 = vlaneseq
        %v1388 = vshrl.u32 %v1387, 7
        %v1389 = vsub.s32 %v1386, %v1388
        %v1390 = vrot.slane %v1382, %v1389
        %v1392 = vunpack.c.l.s4 1934713408
        %v1393 = vunpack.c.0.s8 %v1392
        %v1394 = vlaneseq
        %v1395 = vshrl.u32 %v1394, 7
        %v1396 = vsub.s32 %v1393, %v1395
        %v1397 = vrot.slane %v1383, %v1396
        %v1398 = vcombine.low %v1333, %v1349
        %v1399 = vcombine.high %v1333, %v1349
        %v1401 = vunpack.c.l.s4 1934713408
        %v1402 = vunpack.c.0.s8 %v1401
        %v1403 = vlaneseq
        %v1404 = vshrl.u32 %v1403, 7
        %v1405 = vsub.s32 %v1402, %v1404
        %v1406 = vrot.slane %v1398, %v1405
        %v1408 = vunpack.c.l.s4 1934713408
        %v1409 = vunpack.c.0.s8 %v1408
        %v1410 = vlaneseq
        %v1411 = vshrl.u32 %v1410, 7
        %v1412 = vsub.s32 %v1409, %v1411
        %v1413 = vrot.slane %v1399, %v1412
        %v1414 = vcombine.low %v1358, %v1390
        %v1415 = vcombine.high %v1358, %v1390
        %v1416 = vcombine.low %v1365, %v1397
        %v1417 = vcombine.high %v1365, %v1397
        %v1418 = vcombine.low %v1374, %v1406
        %v1419 = vcombine.high %v1374, %v1406
        %v1420 = vcombine.low %v1381, %v1413
        %v1421 = vcombine.high %v1381, %v1413
        %v1422 = vcombine.low %v1278, %v1280
        %v1423 = vcombine.high %v1278, %v1280
        %v1425 = vunpack.c.l.s4 1983009808
        %v1426 = vunpack.c.0.s8 %v1425
        %v1427 = vlaneseq
        %v1428 = vshrl.u32 %v1427, 7
        %v1429 = vsub.s32 %v1426, %v1428
        %v1430 = vrot.slane %v1422, %v1429
        %v1432 = vunpack.c.l.s4 1983009808
        %v1433 = vunpack.c.0.s8 %v1432
        %v1434 = vlaneseq
        %v1435 = vshrl.u32 %v1434, 7
        %v1436 = vsub.s32 %v1433, %v1435
        %v1437 = vrot.slane %v1423, %v1436
        %v1438 = vcombine.low %v1279, %v1281
        %v1439 = vcombine.high %v1279, %v1281
        %v1441 = vunpack.c.l.s4 1983009808
        %v1442 = vunpack.c.0.s8 %v1441
        %v1443 = vlaneseq
        %v1444 = vshrl.u32 %v1443, 7
        %v1445 = vsub.s32 %v1442, %v1444
        %v1446 = vrot.slane %v1438, %v1445
        %v1448 = vunpack.c.l.s4 1983009808
        %v1449 = vunpack.c.0.s8 %v1448
        %v1450 = vlaneseq
        %v1451 = vshrl.u32 %v1450, 7
        %v1452 = vsub.s32 %v1449, %v1451
        %v1453 = vrot.slane %v1439, %v1452
        %v1454 = vcombine.low %v1282, %v1284
        %v1455 = vcombine.high %v1282, %v1284
        %v1457 = vunpack.c.l.s4 1983009808
        %v1458 = vunpack.c.0.s8 %v1457
        %v1459 = vlaneseq
        %v1460 = vshrl.u32 %v1459, 7
        %v1461 = vsub.s32 %v1458, %v1460
        %v1462 = vrot.slane %v1454, %v1461
        %v1464 = vunpack.c.l.s4 1983009808
        %v1465 = vunpack.c.0.s8 %v1464
        %v1466 = vlaneseq
        %v1467 = vshrl.u32 %v1466, 7
        %v1468 = vsub.s32 %v1465, %v1467
        %v1469 = vrot.slane %v1455, %v1468
        %v1470 = vcombine.low %v1283, %v1285
        %v1471 = vcombine.high %v1283, %v1285
        %v1473 = vunpack.c.l.s4 1983009808
        %v1474 = vunpack.c.0.s8 %v1473
        %v1475 = vlaneseq
        %v1476 = vshrl.u32 %v1475, 7
        %v1477 = vsub.s32 %v1474, %v1476
        %v1478 = vrot.slane %v1470, %v1477
        %v1480 = vunpack.c.l.s4 1983009808
        %v1481 = vunpack.c.0.s8 %v1480
        %v1482 = vlaneseq
        %v1483 = vshrl.u32 %v1482, 7
        %v1484 = vsub.s32 %v1481, %v1483
        %v1485 = vrot.slane %v1471, %v1484
        %v1486 = vcombine.low %v1430, %v1446
        %v1487 = vcombine.high %v1430, %v1446
        %v1489 = vunpack.c.l.s4 1934713408
        %v1490 = vunpack.c.0.s8 %v1489
        %v1491 = vlaneseq
        %v1492 = vshrl.u32 %v1491, 7
        %v1493 = vsub.s32 %v1490, %v1492
        %v1494 = vrot.slane %v1486, %v1493
        %v1496 = vunpack.c.l.s4 1934713408
        %v1497 = vunpack.c.0.s8 %v1496
        %v1498 = vlaneseq
        %v1499 = vshrl.u32 %v1498, 7
        %v1500 = vsub.s32 %v1497, %v1499
        %v1501 = vrot.slane %v1487, %v1500
        %v1502 = vcombine.low %v1437, %v1453
        %v1503 = vcombine.high %v1437, %v1453
        %v1505 = vunpack.c.l.s4 1934713408
        %v1506 = vunpack.c.0.s8 %v1505
        %v1507 = vlaneseq
        %v1508 = vshrl.u32 %v1507, 7
        %v1509 = vsub.s32 %v1506, %v1508
        %v1510 = vrot.slane %v1502, %v1509
        %v1512 = vunpack.c.l.s4 1934713408
        %v1513 = vunpack.c.0.s8 %v1512
        %v1514 = vlaneseq
        %v1515 = vshrl.u32 %v1514, 7
        %v1516 = vsub.s32 %v1513, %v1515
        %v1517 = vrot.slane %v1503, %v1516
        %v1518 = vcombine.low %v1462, %v1478
        %v1519 = vcombine.high %v1462, %v1478
        %v1521 = vunpack.c.l.s4 1934713408
        %v1522 = vunpack.c.0.s8 %v1521
        %v1523 = vlaneseq
        %v1524 = vshrl.u32 %v1523, 7
        %v1525 = vsub.s32 %v1522, %v1524
        %v1526 = vrot.slane %v1518, %v1525
        %v1528 = vunpack.c.l.s4 1934713408
        %v1529 = vunpack.c.0.s8 %v1528
        %v1530 = vlaneseq
        %v1531 = vshrl.u32 %v1530, 7
        %v1532 = vsub.s32 %v1529, %v1531
        %v1533 = vrot.slane %v1519, %v1532
        %v1534 = vcombine.low %v1469, %v1485
        %v1535 = vcombine.high %v1469, %v1485
        %v1537 = vunpack.c.l.s4 1934713408
        %v1538 = vunpack.c.0.s8 %v1537
        %v1539 = vlaneseq
        %v1540 = vshrl.u32 %v1539, 7
        %v1541 = vsub.s32 %v1538, %v1540
        %v1542 = vrot.slane %v1534, %v1541
        %v1544 = vunpack.c.l.s4 1934713408
        %v1545 = vunpack.c.0.s8 %v1544
        %v1546 = vlaneseq
        %v1547 = vshrl.u32 %v1546, 7
        %v1548 = vsub.s32 %v1545, %v1547
        %v1549 = vrot.slane %v1535, %v1548
        %v1550 = vcombine.low %v1494, %v1526
        %v1551 = vcombine.high %v1494, %v1526
        %v1552 = vcombine.low %v1501, %v1533
        %v1553 = vcombine.high %v1501, %v1533
        %v1554 = vcombine.low %v1510, %v1542
        %v1555 = vcombine.high %v1510, %v1542
        %v1556 = vcombine.low %v1517, %v1549
        %v1557 = vcombine.high %v1517, %v1549
        %v1558 = vcombine.low %v1414, %v1416
        %v1559 = vcombine.high %v1414, %v1416
        %v1561 = vunpack.c.l.s4 1983009808
        %v1562 = vunpack.c.0.s8 %v1561
        %v1563 = vlaneseq
        %v1564 = vshrl.u32 %v1563, 7
        %v1565 = vsub.s32 %v1562, %v1564
        %v1566 = vrot.slane %v1558, %v1565
        %v1568 = vunpack.c.l.s4 1983009808
        %v1569 = vunpack.c.0.s8 %v1568
        %v1570 = vlaneseq
        %v1571 = vshrl.u32 %v1570, 7
        %v1572 = vsub.s32 %v1569, %v1571
        %v1573 = vrot.slane %v1559, %v1572
        %v1574 = vcombine.low %v1415, %v1417
        %v1575 = vcombine.high %v1415, %v1417
        %v1577 = vunpack.c.l.s4 1983009808
        %v1578 = vunpack.c.0.s8 %v1577
        %v1579 = vlaneseq
        %v1580 = vshrl.u32 %v1579, 7
        %v1581 = vsub.s32 %v1578, %v1580
        %v1582 = vrot.slane %v1574, %v1581
        %v1584 = vunpack.c.l.s4 1983009808
        %v1585 = vunpack.c.0.s8 %v1584
        %v1586 = vlaneseq
        %v1587 = vshrl.u32 %v1586, 7
        %v1588 = vsub.s32 %v1585, %v1587
        %v1589 = vrot.slane %v1575, %v1588
        %v1590 = vcombine.low %v1418, %v1420
        %v1591 = vcombine.high %v1418, %v1420
        %v1593 = vunpack.c.l.s4 1983009808
        %v1594 = vunpack.c.0.s8 %v1593
        %v1595 = vlaneseq
        %v1596 = vshrl.u32 %v1595, 7
        %v1597 = vsub.s32 %v1594, %v1596
        %v1598 = vrot.slane %v1590, %v1597
        %v1600 = vunpack.c.l.s4 1983009808
        %v1601 = vunpack.c.0.s8 %v1600
        %v1602 = vlaneseq
        %v1603 = vshrl.u32 %v1602, 7
        %v1604 = vsub.s32 %v1601, %v1603
        %v1605 = vrot.slane %v1591, %v1604
        %v1606 = vcombine.low %v1419, %v1421
        %v1607 = vcombine.high %v1419, %v1421
        %v1609 = vunpack.c.l.s4 1983009808
        %v1610 = vunpack.c.0.s8 %v1609
        %v1611 = vlaneseq
        %v1612 = vshrl.u32 %v1611, 7
        %v1613 = vsub.s32 %v1610, %v1612
        %v1614 = vrot.slane %v1606, %v1613
        %v1616 = vunpack.c.l.s4 1983009808
        %v1617 = vunpack.c.0.s8 %v1616
        %v1618 = vlaneseq
        %v1619 = vshrl.u32 %v1618, 7
        %v1620 = vsub.s32 %v1617, %v1619
        %v1621 = vrot.slane %v1607, %v1620
        %v1622 = vcombine.low %v1566, %v1582
        %v1623 = vcombine.high %v1566, %v1582
        %v1625 = vunpack.c.l.s4 1934713408
        %v1626 = vunpack.c.0.s8 %v1625
        %v1627 = vlaneseq
        %v1628 = vshrl.u32 %v1627, 7
        %v1629 = vsub.s32 %v1626, %v1628
        %v1630 = vrot.slane %v1622, %v1629
        %v1632 = vunpack.c.l.s4 1934713408
        %v1633 = vunpack.c.0.s8 %v1632
        %v1634 = vlaneseq
        %v1635 = vshrl.u32 %v1634, 7
        %v1636 = vsub.s32 %v1633, %v1635
        %v1637 = vrot.slane %v1623, %v1636
        %v1638 = vcombine.low %v1573, %v1589
        %v1639 = vcombine.high %v1573, %v1589
        %v1641 = vunpack.c.l.s4 1934713408
        %v1642 = vunpack.c.0.s8 %v1641
        %v1643 = vlaneseq
        %v1644 = vshrl.u32 %v1643, 7
        %v1645 = vsub.s32 %v1642, %v1644
        %v1646 = vrot.slane %v1638, %v1645
        %v1648 = vunpack.c.l.s4 1934713408
        %v1649 = vunpack.c.0.s8 %v1648
        %v1650 = vlaneseq
        %v1651 = vshrl.u32 %v1650, 7
        %v1652 = vsub.s32 %v1649, %v1651
        %v1653 = vrot.slane %v1639, %v1652
        %v1654 = vcombine.low %v1598, %v1614
        %v1655 = vcombine.high %v1598, %v1614
        %v1657 = vunpack.c.l.s4 1934713408
        %v1658 = vunpack.c.0.s8 %v1657
        %v1659 = vlaneseq
        %v1660 = vshrl.u32 %v1659, 7
        %v1661 = vsub.s32 %v1658, %v1660
        %v1662 = vrot.slane %v1654, %v1661
        %v1664 = vunpack.c.l.s4 1934713408
        %v1665 = vunpack.c.0.s8 %v1664
        %v1666 = vlaneseq
        %v1667 = vshrl.u32 %v1666, 7
        %v1668 = vsub.s32 %v1665, %v1667
        %v1669 = vrot.slane %v1655, %v1668
        %v1670 = vcombine.low %v1605, %v1621
        %v1671 = vcombine.high %v1605, %v1621
        %v1673 = vunpack.c.l.s4 1934713408
        %v1674 = vunpack.c.0.s8 %v1673
        %v1675 = vlaneseq
        %v1676 = vshrl.u32 %v1675, 7
        %v1677 = vsub.s32 %v1674, %v1676
        %v1678 = vrot.slane %v1670, %v1677
        %v1680 = vunpack.c.l.s4 1934713408
        %v1681 = vunpack.c.0.s8 %v1680
        %v1682 = vlaneseq
        %v1683 = vshrl.u32 %v1682, 7
        %v1684 = vsub.s32 %v1681, %v1683
        %v1685 = vrot.slane %v1671, %v1684
        %v1686 = vcombine.low %v1630, %v1662
        %v1687 = vcombine.high %v1630, %v1662
        %v1688 = vcombine.low %v1637, %v1669
        %v1689 = vcombine.high %v1637, %v1669
        %v1690 = vcombine.low %v1646, %v1678
        %v1691 = vcombine.high %v1646, %v1678
        %v1692 = vcombine.low %v1653, %v1685
        %v1693 = vcombine.high %v1653, %v1685
        %v1694 = vpack.c.bf16 %v1686, %v1550
        %v1695 = vpack.c.bf16 %v1687, %v1551
        %v1696 = vpack.c.bf16 %v1688, %v1552
        %v1697 = vpack.c.bf16 %v1689, %v1553
        %v1698 = vpack.c.bf16 %v1690, %v1554
        %v1699 = vpack.c.bf16 %v1691, %v1555
        %v1700 = vpack.c.bf16 %v1692, %v1556
        %v1701 = vpack.c.bf16 %v1693, %v1557
        %1704 = vrot.lane.b32.xlu0 %v975, 112
        %v1705 = vpop.permute.xlu0 %1704
        %1706 = vrot.lane.b32.xlu0 %v978, 112
        %v1707 = vpop.permute.xlu0 %1706
        %1710 = vrot.lane.b32.xlu0 %v975, 96
        %v1711 = vpop.permute.xlu0 %1710
        %1712 = vrot.lane.b32.xlu0 %v978, 96
        %v1713 = vpop.permute.xlu0 %1712
        %1716 = vrot.lane.b32.xlu0 %v975, 80
        %v1717 = vpop.permute.xlu0 %1716
        %1718 = vrot.lane.b32.xlu0 %v978, 80
        %v1719 = vpop.permute.xlu0 %1718
        %1722 = vrot.lane.b32.xlu0 %v975, 64
        %v1723 = vpop.permute.xlu0 %1722
        %1724 = vrot.lane.b32.xlu0 %v978, 64
        %v1725 = vpop.permute.xlu0 %1724
        %1728 = vrot.lane.b32.xlu0 %v975, 48
        %v1729 = vpop.permute.xlu0 %1728
        %1730 = vrot.lane.b32.xlu0 %v978, 48
        %v1731 = vpop.permute.xlu0 %1730
        %1734 = vrot.lane.b32.xlu0 %v975, 32
        %v1735 = vpop.permute.xlu0 %1734
        %1736 = vrot.lane.b32.xlu0 %v978, 32
        %v1737 = vpop.permute.xlu0 %1736
        %1740 = vrot.lane.b32.xlu0 %v975, 16
        %v1741 = vpop.permute.xlu0 %1740
        %1742 = vrot.lane.b32.xlu0 %v978, 16
        %v1743 = vpop.permute.xlu0 %1742
        %v1746 = vcombine.low %v975, %v1711
        %v1747 = vcombine.high %v975, %v1711
        %v1749 = vunpack.c.l.s4 1983009808
        %v1750 = vunpack.c.0.s8 %v1749
        %v1751 = vlaneseq
        %v1752 = vshrl.u32 %v1751, 7
        %v1753 = vsub.s32 %v1750, %v1752
        %v1754 = vrot.slane %v1746, %v1753
        %v1756 = vunpack.c.l.s4 1983009808
        %v1757 = vunpack.c.0.s8 %v1756
        %v1758 = vlaneseq
        %v1759 = vshrl.u32 %v1758, 7
        %v1760 = vsub.s32 %v1757, %v1759
        %v1761 = vrot.slane %v1747, %v1760
        %v1762 = vcombine.low %v1705, %v1717
        %v1763 = vcombine.high %v1705, %v1717
        %v1765 = vunpack.c.l.s4 1983009808
        %v1766 = vunpack.c.0.s8 %v1765
        %v1767 = vlaneseq
        %v1768 = vshrl.u32 %v1767, 7
        %v1769 = vsub.s32 %v1766, %v1768
        %v1770 = vrot.slane %v1762, %v1769
        %v1772 = vunpack.c.l.s4 1983009808
        %v1773 = vunpack.c.0.s8 %v1772
        %v1774 = vlaneseq
        %v1775 = vshrl.u32 %v1774, 7
        %v1776 = vsub.s32 %v1773, %v1775
        %v1777 = vrot.slane %v1763, %v1776
        %v1778 = vcombine.low %v1723, %v1735
        %v1779 = vcombine.high %v1723, %v1735
        %v1781 = vunpack.c.l.s4 1983009808
        %v1782 = vunpack.c.0.s8 %v1781
        %v1783 = vlaneseq
        %v1784 = vshrl.u32 %v1783, 7
        %v1785 = vsub.s32 %v1782, %v1784
        %v1786 = vrot.slane %v1778, %v1785
        %v1788 = vunpack.c.l.s4 1983009808
        %v1789 = vunpack.c.0.s8 %v1788
        %v1790 = vlaneseq
        %v1791 = vshrl.u32 %v1790, 7
        %v1792 = vsub.s32 %v1789, %v1791
        %v1793 = vrot.slane %v1779, %v1792
        %v1794 = vcombine.low %v1729, %v1741
        %v1795 = vcombine.high %v1729, %v1741
        %v1797 = vunpack.c.l.s4 1983009808
        %v1798 = vunpack.c.0.s8 %v1797
        %v1799 = vlaneseq
        %v1800 = vshrl.u32 %v1799, 7
        %v1801 = vsub.s32 %v1798, %v1800
        %v1802 = vrot.slane %v1794, %v1801
        %v1804 = vunpack.c.l.s4 1983009808
        %v1805 = vunpack.c.0.s8 %v1804
        %v1806 = vlaneseq
        %v1807 = vshrl.u32 %v1806, 7
        %v1808 = vsub.s32 %v1805, %v1807
        %v1809 = vrot.slane %v1795, %v1808
        %v1810 = vcombine.low %v1754, %v1770
        %v1811 = vcombine.high %v1754, %v1770
        %v1813 = vunpack.c.l.s4 1934713408
        %v1814 = vunpack.c.0.s8 %v1813
        %v1815 = vlaneseq
        %v1816 = vshrl.u32 %v1815, 7
        %v1817 = vsub.s32 %v1814, %v1816
        %v1818 = vrot.slane %v1810, %v1817
        %v1820 = vunpack.c.l.s4 1934713408
        %v1821 = vunpack.c.0.s8 %v1820
        %v1822 = vlaneseq
        %v1823 = vshrl.u32 %v1822, 7
        %v1824 = vsub.s32 %v1821, %v1823
        %v1825 = vrot.slane %v1811, %v1824
        %v1826 = vcombine.low %v1761, %v1777
        %v1827 = vcombine.high %v1761, %v1777
        %v1829 = vunpack.c.l.s4 1934713408
        %v1830 = vunpack.c.0.s8 %v1829
        %v1831 = vlaneseq
        %v1832 = vshrl.u32 %v1831, 7
        %v1833 = vsub.s32 %v1830, %v1832
        %v1834 = vrot.slane %v1826, %v1833
        %v1836 = vunpack.c.l.s4 1934713408
        %v1837 = vunpack.c.0.s8 %v1836
        %v1838 = vlaneseq
        %v1839 = vshrl.u32 %v1838, 7
        %v1840 = vsub.s32 %v1837, %v1839
        %v1841 = vrot.slane %v1827, %v1840
        %v1842 = vcombine.low %v1786, %v1802
        %v1843 = vcombine.high %v1786, %v1802
        %v1845 = vunpack.c.l.s4 1934713408
        %v1846 = vunpack.c.0.s8 %v1845
        %v1847 = vlaneseq
        %v1848 = vshrl.u32 %v1847, 7
        %v1849 = vsub.s32 %v1846, %v1848
        %v1850 = vrot.slane %v1842, %v1849
        %v1852 = vunpack.c.l.s4 1934713408
        %v1853 = vunpack.c.0.s8 %v1852
        %v1854 = vlaneseq
        %v1855 = vshrl.u32 %v1854, 7
        %v1856 = vsub.s32 %v1853, %v1855
        %v1857 = vrot.slane %v1843, %v1856
        %v1858 = vcombine.low %v1793, %v1809
        %v1859 = vcombine.high %v1793, %v1809
        %v1861 = vunpack.c.l.s4 1934713408
        %v1862 = vunpack.c.0.s8 %v1861
        %v1863 = vlaneseq
        %v1864 = vshrl.u32 %v1863, 7
        %v1865 = vsub.s32 %v1862, %v1864
        %v1866 = vrot.slane %v1858, %v1865
        %v1868 = vunpack.c.l.s4 1934713408
        %v1869 = vunpack.c.0.s8 %v1868
        %v1870 = vlaneseq
        %v1871 = vshrl.u32 %v1870, 7
        %v1872 = vsub.s32 %v1869, %v1871
        %v1873 = vrot.slane %v1859, %v1872
        %v1874 = vcombine.low %v1818, %v1850
        %v1875 = vcombine.high %v1818, %v1850
        %v1876 = vcombine.low %v1825, %v1857
        %v1877 = vcombine.high %v1825, %v1857
        %v1878 = vcombine.low %v1834, %v1866
        %v1879 = vcombine.high %v1834, %v1866
        %v1880 = vcombine.low %v1841, %v1873
        %v1881 = vcombine.high %v1841, %v1873
        %v1882 = vcombine.low %v978, %v1713
        %v1883 = vcombine.high %v978, %v1713
        %v1885 = vunpack.c.l.s4 1983009808
        %v1886 = vunpack.c.0.s8 %v1885
        %v1887 = vlaneseq
        %v1888 = vshrl.u32 %v1887, 7
        %v1889 = vsub.s32 %v1886, %v1888
        %v1890 = vrot.slane %v1882, %v1889
        %v1892 = vunpack.c.l.s4 1983009808
        %v1893 = vunpack.c.0.s8 %v1892
        %v1894 = vlaneseq
        %v1895 = vshrl.u32 %v1894, 7
        %v1896 = vsub.s32 %v1893, %v1895
        %v1897 = vrot.slane %v1883, %v1896
        %v1898 = vcombine.low %v1707, %v1719
        %v1899 = vcombine.high %v1707, %v1719
        %v1901 = vunpack.c.l.s4 1983009808
        %v1902 = vunpack.c.0.s8 %v1901
        %v1903 = vlaneseq
        %v1904 = vshrl.u32 %v1903, 7
        %v1905 = vsub.s32 %v1902, %v1904
        %v1906 = vrot.slane %v1898, %v1905
        %v1908 = vunpack.c.l.s4 1983009808
        %v1909 = vunpack.c.0.s8 %v1908
        %v1910 = vlaneseq
        %v1911 = vshrl.u32 %v1910, 7
        %v1912 = vsub.s32 %v1909, %v1911
        %v1913 = vrot.slane %v1899, %v1912
        %v1914 = vcombine.low %v1725, %v1737
        %v1915 = vcombine.high %v1725, %v1737
        %v1917 = vunpack.c.l.s4 1983009808
        %v1918 = vunpack.c.0.s8 %v1917
        %v1919 = vlaneseq
        %v1920 = vshrl.u32 %v1919, 7
        %v1921 = vsub.s32 %v1918, %v1920
        %v1922 = vrot.slane %v1914, %v1921
        %v1924 = vunpack.c.l.s4 1983009808
        %v1925 = vunpack.c.0.s8 %v1924
        %v1926 = vlaneseq
        %v1927 = vshrl.u32 %v1926, 7
        %v1928 = vsub.s32 %v1925, %v1927
        %v1929 = vrot.slane %v1915, %v1928
        %v1930 = vcombine.low %v1731, %v1743
        %v1931 = vcombine.high %v1731, %v1743
        %v1933 = vunpack.c.l.s4 1983009808
        %v1934 = vunpack.c.0.s8 %v1933
        %v1935 = vlaneseq
        %v1936 = vshrl.u32 %v1935, 7
        %v1937 = vsub.s32 %v1934, %v1936
        %v1938 = vrot.slane %v1930, %v1937
        %v1940 = vunpack.c.l.s4 1983009808
        %v1941 = vunpack.c.0.s8 %v1940
        %v1942 = vlaneseq
        %v1943 = vshrl.u32 %v1942, 7
        %v1944 = vsub.s32 %v1941, %v1943
        %v1945 = vrot.slane %v1931, %v1944
        %v1946 = vcombine.low %v1890, %v1906
        %v1947 = vcombine.high %v1890, %v1906
        %v1949 = vunpack.c.l.s4 1934713408
        %v1950 = vunpack.c.0.s8 %v1949
        %v1951 = vlaneseq
        %v1952 = vshrl.u32 %v1951, 7
        %v1953 = vsub.s32 %v1950, %v1952
        %v1954 = vrot.slane %v1946, %v1953
        %v1956 = vunpack.c.l.s4 1934713408
        %v1957 = vunpack.c.0.s8 %v1956
        %v1958 = vlaneseq
        %v1959 = vshrl.u32 %v1958, 7
        %v1960 = vsub.s32 %v1957, %v1959
        %v1961 = vrot.slane %v1947, %v1960
        %v1962 = vcombine.low %v1897, %v1913
        %v1963 = vcombine.high %v1897, %v1913
        %v1965 = vunpack.c.l.s4 1934713408
        %v1966 = vunpack.c.0.s8 %v1965
        %v1967 = vlaneseq
        %v1968 = vshrl.u32 %v1967, 7
        %v1969 = vsub.s32 %v1966, %v1968
        %v1970 = vrot.slane %v1962, %v1969
        %v1972 = vunpack.c.l.s4 1934713408
        %v1973 = vunpack.c.0.s8 %v1972
        %v1974 = vlaneseq
        %v1975 = vshrl.u32 %v1974, 7
        %v1976 = vsub.s32 %v1973, %v1975
        %v1977 = vrot.slane %v1963, %v1976
        %v1978 = vcombine.low %v1922, %v1938
        %v1979 = vcombine.high %v1922, %v1938
        %v1981 = vunpack.c.l.s4 1934713408
        %v1982 = vunpack.c.0.s8 %v1981
        %v1983 = vlaneseq
        %v1984 = vshrl.u32 %v1983, 7
        %v1985 = vsub.s32 %v1982, %v1984
        %v1986 = vrot.slane %v1978, %v1985
        %v1988 = vunpack.c.l.s4 1934713408
        %v1989 = vunpack.c.0.s8 %v1988
        %v1990 = vlaneseq
        %v1991 = vshrl.u32 %v1990, 7
        %v1992 = vsub.s32 %v1989, %v1991
        %v1993 = vrot.slane %v1979, %v1992
        %v1994 = vcombine.low %v1929, %v1945
        %v1995 = vcombine.high %v1929, %v1945
        %v1997 = vunpack.c.l.s4 1934713408
        %v1998 = vunpack.c.0.s8 %v1997
        %v1999 = vlaneseq
        %v2000 = vshrl.u32 %v1999, 7
        %v2001 = vsub.s32 %v1998, %v2000
        %v2002 = vrot.slane %v1994, %v2001
        %v2004 = vunpack.c.l.s4 1934713408
        %v2005 = vunpack.c.0.s8 %v2004
        %v2006 = vlaneseq
        %v2007 = vshrl.u32 %v2006, 7
        %v2008 = vsub.s32 %v2005, %v2007
        %v2009 = vrot.slane %v1995, %v2008
        %v2010 = vcombine.low %v1954, %v1986
        %v2011 = vcombine.high %v1954, %v1986
        %v2012 = vcombine.low %v1961, %v1993
        %v2013 = vcombine.high %v1961, %v1993
        %v2014 = vcombine.low %v1970, %v2002
        %v2015 = vcombine.high %v1970, %v2002
        %v2016 = vcombine.low %v1977, %v2009
        %v2017 = vcombine.high %v1977, %v2009
        %v2018 = vcombine.low %v1874, %v1876
        %v2019 = vcombine.high %v1874, %v1876
        %v2021 = vunpack.c.l.s4 1983009808
        %v2022 = vunpack.c.0.s8 %v2021
        %v2023 = vlaneseq
        %v2024 = vshrl.u32 %v2023, 7
        %v2025 = vsub.s32 %v2022, %v2024
        %v2026 = vrot.slane %v2018, %v2025
        %v2028 = vunpack.c.l.s4 1983009808
        %v2029 = vunpack.c.0.s8 %v2028
        %v2030 = vlaneseq
        %v2031 = vshrl.u32 %v2030, 7
        %v2032 = vsub.s32 %v2029, %v2031
        %v2033 = vrot.slane %v2019, %v2032
        %v2034 = vcombine.low %v1875, %v1877
        %v2035 = vcombine.high %v1875, %v1877
        %v2037 = vunpack.c.l.s4 1983009808
        %v2038 = vunpack.c.0.s8 %v2037
        %v2039 = vlaneseq
        %v2040 = vshrl.u32 %v2039, 7
        %v2041 = vsub.s32 %v2038, %v2040
        %v2042 = vrot.slane %v2034, %v2041
        %v2044 = vunpack.c.l.s4 1983009808
        %v2045 = vunpack.c.0.s8 %v2044
        %v2046 = vlaneseq
        %v2047 = vshrl.u32 %v2046, 7
        %v2048 = vsub.s32 %v2045, %v2047
        %v2049 = vrot.slane %v2035, %v2048
        %v2050 = vcombine.low %v1878, %v1880
        %v2051 = vcombine.high %v1878, %v1880
        %v2053 = vunpack.c.l.s4 1983009808
        %v2054 = vunpack.c.0.s8 %v2053
        %v2055 = vlaneseq
        %v2056 = vshrl.u32 %v2055, 7
        %v2057 = vsub.s32 %v2054, %v2056
        %v2058 = vrot.slane %v2050, %v2057
        %v2060 = vunpack.c.l.s4 1983009808
        %v2061 = vunpack.c.0.s8 %v2060
        %v2062 = vlaneseq
        %v2063 = vshrl.u32 %v2062, 7
        %v2064 = vsub.s32 %v2061, %v2063
        %v2065 = vrot.slane %v2051, %v2064
        %v2066 = vcombine.low %v1879, %v1881
        %v2067 = vcombine.high %v1879, %v1881
        %v2069 = vunpack.c.l.s4 1983009808
        %v2070 = vunpack.c.0.s8 %v2069
        %v2071 = vlaneseq
        %v2072 = vshrl.u32 %v2071, 7
        %v2073 = vsub.s32 %v2070, %v2072
        %v2074 = vrot.slane %v2066, %v2073
        %v2076 = vunpack.c.l.s4 1983009808
        %v2077 = vunpack.c.0.s8 %v2076
        %v2078 = vlaneseq
        %v2079 = vshrl.u32 %v2078, 7
        %v2080 = vsub.s32 %v2077, %v2079
        %v2081 = vrot.slane %v2067, %v2080
        %v2082 = vcombine.low %v2026, %v2042
        %v2083 = vcombine.high %v2026, %v2042
        %v2085 = vunpack.c.l.s4 1934713408
        %v2086 = vunpack.c.0.s8 %v2085
        %v2087 = vlaneseq
        %v2088 = vshrl.u32 %v2087, 7
        %v2089 = vsub.s32 %v2086, %v2088
        %v2090 = vrot.slane %v2082, %v2089
        %v2092 = vunpack.c.l.s4 1934713408
        %v2093 = vunpack.c.0.s8 %v2092
        %v2094 = vlaneseq
        %v2095 = vshrl.u32 %v2094, 7
        %v2096 = vsub.s32 %v2093, %v2095
        %v2097 = vrot.slane %v2083, %v2096
        %v2098 = vcombine.low %v2033, %v2049
        %v2099 = vcombine.high %v2033, %v2049
        %v2101 = vunpack.c.l.s4 1934713408
        %v2102 = vunpack.c.0.s8 %v2101
        %v2103 = vlaneseq
        %v2104 = vshrl.u32 %v2103, 7
        %v2105 = vsub.s32 %v2102, %v2104
        %v2106 = vrot.slane %v2098, %v2105
        %v2108 = vunpack.c.l.s4 1934713408
        %v2109 = vunpack.c.0.s8 %v2108
        %v2110 = vlaneseq
        %v2111 = vshrl.u32 %v2110, 7
        %v2112 = vsub.s32 %v2109, %v2111
        %v2113 = vrot.slane %v2099, %v2112
        %v2114 = vcombine.low %v2058, %v2074
        %v2115 = vcombine.high %v2058, %v2074
        %v2117 = vunpack.c.l.s4 1934713408
        %v2118 = vunpack.c.0.s8 %v2117
        %v2119 = vlaneseq
        %v2120 = vshrl.u32 %v2119, 7
        %v2121 = vsub.s32 %v2118, %v2120
        %v2122 = vrot.slane %v2114, %v2121
        %v2124 = vunpack.c.l.s4 1934713408
        %v2125 = vunpack.c.0.s8 %v2124
        %v2126 = vlaneseq
        %v2127 = vshrl.u32 %v2126, 7
        %v2128 = vsub.s32 %v2125, %v2127
        %v2129 = vrot.slane %v2115, %v2128
        %v2130 = vcombine.low %v2065, %v2081
        %v2131 = vcombine.high %v2065, %v2081
        %v2133 = vunpack.c.l.s4 1934713408
        %v2134 = vunpack.c.0.s8 %v2133
        %v2135 = vlaneseq
        %v2136 = vshrl.u32 %v2135, 7
        %v2137 = vsub.s32 %v2134, %v2136
        %v2138 = vrot.slane %v2130, %v2137
        %v2140 = vunpack.c.l.s4 1934713408
        %v2141 = vunpack.c.0.s8 %v2140
        %v2142 = vlaneseq
        %v2143 = vshrl.u32 %v2142, 7
        %v2144 = vsub.s32 %v2141, %v2143
        %v2145 = vrot.slane %v2131, %v2144
        %v2146 = vcombine.low %v2090, %v2122
        %v2147 = vcombine.high %v2090, %v2122
        %v2148 = vcombine.low %v2097, %v2129
        %v2149 = vcombine.high %v2097, %v2129
        %v2150 = vcombine.low %v2106, %v2138
        %v2151 = vcombine.high %v2106, %v2138
        %v2152 = vcombine.low %v2113, %v2145
        %v2153 = vcombine.high %v2113, %v2145
        %v2154 = vcombine.low %v2010, %v2012
        %v2155 = vcombine.high %v2010, %v2012
        %v2157 = vunpack.c.l.s4 1983009808
        %v2158 = vunpack.c.0.s8 %v2157
        %v2159 = vlaneseq
        %v2160 = vshrl.u32 %v2159, 7
        %v2161 = vsub.s32 %v2158, %v2160
        %v2162 = vrot.slane %v2154, %v2161
        %v2164 = vunpack.c.l.s4 1983009808
        %v2165 = vunpack.c.0.s8 %v2164
        %v2166 = vlaneseq
        %v2167 = vshrl.u32 %v2166, 7
        %v2168 = vsub.s32 %v2165, %v2167
        %v2169 = vrot.slane %v2155, %v2168
        %v2170 = vcombine.low %v2011, %v2013
        %v2171 = vcombine.high %v2011, %v2013
        %v2173 = vunpack.c.l.s4 1983009808
        %v2174 = vunpack.c.0.s8 %v2173
        %v2175 = vlaneseq
        %v2176 = vshrl.u32 %v2175, 7
        %v2177 = vsub.s32 %v2174, %v2176
        %v2178 = vrot.slane %v2170, %v2177
        %v2180 = vunpack.c.l.s4 1983009808
        %v2181 = vunpack.c.0.s8 %v2180
        %v2182 = vlaneseq
        %v2183 = vshrl.u32 %v2182, 7
        %v2184 = vsub.s32 %v2181, %v2183
        %v2185 = vrot.slane %v2171, %v2184
        %v2186 = vcombine.low %v2014, %v2016
        %v2187 = vcombine.high %v2014, %v2016
        %v2189 = vunpack.c.l.s4 1983009808
        %v2190 = vunpack.c.0.s8 %v2189
        %v2191 = vlaneseq
        %v2192 = vshrl.u32 %v2191, 7
        %v2193 = vsub.s32 %v2190, %v2192
        %v2194 = vrot.slane %v2186, %v2193
        %v2196 = vunpack.c.l.s4 1983009808
        %v2197 = vunpack.c.0.s8 %v2196
        %v2198 = vlaneseq
        %v2199 = vshrl.u32 %v2198, 7
        %v2200 = vsub.s32 %v2197, %v2199
        %v2201 = vrot.slane %v2187, %v2200
        %v2202 = vcombine.low %v2015, %v2017
        %v2203 = vcombine.high %v2015, %v2017
        %v2205 = vunpack.c.l.s4 1983009808
        %v2206 = vunpack.c.0.s8 %v2205
        %v2207 = vlaneseq
        %v2208 = vshrl.u32 %v2207, 7
        %v2209 = vsub.s32 %v2206, %v2208
        %v2210 = vrot.slane %v2202, %v2209
        %v2212 = vunpack.c.l.s4 1983009808
        %v2213 = vunpack.c.0.s8 %v2212
        %v2214 = vlaneseq
        %v2215 = vshrl.u32 %v2214, 7
        %v2216 = vsub.s32 %v2213, %v2215
        %v2217 = vrot.slane %v2203, %v2216
        %v2218 = vcombine.low %v2162, %v2178
        %v2219 = vcombine.high %v2162, %v2178
        %v2221 = vunpack.c.l.s4 1934713408
        %v2222 = vunpack.c.0.s8 %v2221
        %v2223 = vlaneseq
        %v2224 = vshrl.u32 %v2223, 7
        %v2225 = vsub.s32 %v2222, %v2224
        %v2226 = vrot.slane %v2218, %v2225
        %v2228 = vunpack.c.l.s4 1934713408
        %v2229 = vunpack.c.0.s8 %v2228
        %v2230 = vlaneseq
        %v2231 = vshrl.u32 %v2230, 7
        %v2232 = vsub.s32 %v2229, %v2231
        %v2233 = vrot.slane %v2219, %v2232
        %v2234 = vcombine.low %v2169, %v2185
        %v2235 = vcombine.high %v2169, %v2185
        %v2237 = vunpack.c.l.s4 1934713408
        %v2238 = vunpack.c.0.s8 %v2237
        %v2239 = vlaneseq
        %v2240 = vshrl.u32 %v2239, 7
        %v2241 = vsub.s32 %v2238, %v2240
        %v2242 = vrot.slane %v2234, %v2241
        %v2244 = vunpack.c.l.s4 1934713408
        %v2245 = vunpack.c.0.s8 %v2244
        %v2246 = vlaneseq
        %v2247 = vshrl.u32 %v2246, 7
        %v2248 = vsub.s32 %v2245, %v2247
        %v2249 = vrot.slane %v2235, %v2248
        %v2250 = vcombine.low %v2194, %v2210
        %v2251 = vcombine.high %v2194, %v2210
        %v2253 = vunpack.c.l.s4 1934713408
        %v2254 = vunpack.c.0.s8 %v2253
        %v2255 = vlaneseq
        %v2256 = vshrl.u32 %v2255, 7
        %v2257 = vsub.s32 %v2254, %v2256
        %v2258 = vrot.slane %v2250, %v2257
        %v2260 = vunpack.c.l.s4 1934713408
        %v2261 = vunpack.c.0.s8 %v2260
        %v2262 = vlaneseq
        %v2263 = vshrl.u32 %v2262, 7
        %v2264 = vsub.s32 %v2261, %v2263
        %v2265 = vrot.slane %v2251, %v2264
        %v2266 = vcombine.low %v2201, %v2217
        %v2267 = vcombine.high %v2201, %v2217
        %v2269 = vunpack.c.l.s4 1934713408
        %v2270 = vunpack.c.0.s8 %v2269
        %v2271 = vlaneseq
        %v2272 = vshrl.u32 %v2271, 7
        %v2273 = vsub.s32 %v2270, %v2272
        %v2274 = vrot.slane %v2266, %v2273
        %v2276 = vunpack.c.l.s4 1934713408
        %v2277 = vunpack.c.0.s8 %v2276
        %v2278 = vlaneseq
        %v2279 = vshrl.u32 %v2278, 7
        %v2280 = vsub.s32 %v2277, %v2279
        %v2281 = vrot.slane %v2267, %v2280
        %v2282 = vcombine.low %v2226, %v2258
        %v2283 = vcombine.high %v2226, %v2258
        %v2284 = vcombine.low %v2233, %v2265
        %v2285 = vcombine.high %v2233, %v2265
        %v2286 = vcombine.low %v2242, %v2274
        %v2287 = vcombine.high %v2242, %v2274
        %v2288 = vcombine.low %v2249, %v2281
        %v2289 = vcombine.high %v2249, %v2281
        %v2290 = vpack.c.bf16 %v2282, %v2146
        %v2291 = vpack.c.bf16 %v2283, %v2147
        %v2292 = vpack.c.bf16 %v2284, %v2148
        %v2293 = vpack.c.bf16 %v2285, %v2149
        %v2294 = vpack.c.bf16 %v2286, %v2150
        %v2295 = vpack.c.bf16 %v2287, %v2151
        %v2296 = vpack.c.bf16 %v2288, %v2152
        %v2297 = vpack.c.bf16 %v2289, %v2153
        %2300 = vrot.lane.b32.xlu0 %v1092, 112
        %v2301 = vpop.permute.xlu0 %2300
        %2302 = vrot.lane.b32.xlu0 %v1095, 112
        %v2303 = vpop.permute.xlu0 %2302
        %2306 = vrot.lane.b32.xlu0 %v1092, 96
        %v2307 = vpop.permute.xlu0 %2306
        %2308 = vrot.lane.b32.xlu0 %v1095, 96
        %v2309 = vpop.permute.xlu0 %2308
        %2312 = vrot.lane.b32.xlu0 %v1092, 80
        %v2313 = vpop.permute.xlu0 %2312
        %2314 = vrot.lane.b32.xlu0 %v1095, 80
        %v2315 = vpop.permute.xlu0 %2314
        %2318 = vrot.lane.b32.xlu0 %v1092, 64
        %v2319 = vpop.permute.xlu0 %2318
        %2320 = vrot.lane.b32.xlu0 %v1095, 64
        %v2321 = vpop.permute.xlu0 %2320
        %2324 = vrot.lane.b32.xlu0 %v1092, 48
        %v2325 = vpop.permute.xlu0 %2324
        %2326 = vrot.lane.b32.xlu0 %v1095, 48
        %v2327 = vpop.permute.xlu0 %2326
        %2330 = vrot.lane.b32.xlu0 %v1092, 32
        %v2331 = vpop.permute.xlu0 %2330
        %2332 = vrot.lane.b32.xlu0 %v1095, 32
        %v2333 = vpop.permute.xlu0 %2332
        %2336 = vrot.lane.b32.xlu0 %v1092, 16
        %v2337 = vpop.permute.xlu0 %2336
        %2338 = vrot.lane.b32.xlu0 %v1095, 16
        %v2339 = vpop.permute.xlu0 %2338
        %v2342 = vcombine.low %v1092, %v2307
        %v2343 = vcombine.high %v1092, %v2307
        %v2345 = vunpack.c.l.s4 1983009808
        %v2346 = vunpack.c.0.s8 %v2345
        %v2347 = vlaneseq
        %v2348 = vshrl.u32 %v2347, 7
        %v2349 = vsub.s32 %v2346, %v2348
        %v2350 = vrot.slane %v2342, %v2349
        %v2352 = vunpack.c.l.s4 1983009808
        %v2353 = vunpack.c.0.s8 %v2352
        %v2354 = vlaneseq
        %v2355 = vshrl.u32 %v2354, 7
        %v2356 = vsub.s32 %v2353, %v2355
        %v2357 = vrot.slane %v2343, %v2356
        %v2358 = vcombine.low %v2301, %v2313
        %v2359 = vcombine.high %v2301, %v2313
        %v2361 = vunpack.c.l.s4 1983009808
        %v2362 = vunpack.c.0.s8 %v2361
        %v2363 = vlaneseq
        %v2364 = vshrl.u32 %v2363, 7
        %v2365 = vsub.s32 %v2362, %v2364
        %v2366 = vrot.slane %v2358, %v2365
        %v2368 = vunpack.c.l.s4 1983009808
        %v2369 = vunpack.c.0.s8 %v2368
        %v2370 = vlaneseq
        %v2371 = vshrl.u32 %v2370, 7
        %v2372 = vsub.s32 %v2369, %v2371
        %v2373 = vrot.slane %v2359, %v2372
        %v2374 = vcombine.low %v2319, %v2331
        %v2375 = vcombine.high %v2319, %v2331
        %v2377 = vunpack.c.l.s4 1983009808
        %v2378 = vunpack.c.0.s8 %v2377
        %v2379 = vlaneseq
        %v2380 = vshrl.u32 %v2379, 7
        %v2381 = vsub.s32 %v2378, %v2380
        %v2382 = vrot.slane %v2374, %v2381
        %v2384 = vunpack.c.l.s4 1983009808
        %v2385 = vunpack.c.0.s8 %v2384
        %v2386 = vlaneseq
        %v2387 = vshrl.u32 %v2386, 7
        %v2388 = vsub.s32 %v2385, %v2387
        %v2389 = vrot.slane %v2375, %v2388
        %v2390 = vcombine.low %v2325, %v2337
        %v2391 = vcombine.high %v2325, %v2337
        %v2393 = vunpack.c.l.s4 1983009808
        %v2394 = vunpack.c.0.s8 %v2393
        %v2395 = vlaneseq
        %v2396 = vshrl.u32 %v2395, 7
        %v2397 = vsub.s32 %v2394, %v2396
        %v2398 = vrot.slane %v2390, %v2397
        %v2400 = vunpack.c.l.s4 1983009808
        %v2401 = vunpack.c.0.s8 %v2400
        %v2402 = vlaneseq
        %v2403 = vshrl.u32 %v2402, 7
        %v2404 = vsub.s32 %v2401, %v2403
        %v2405 = vrot.slane %v2391, %v2404
        %v2406 = vcombine.low %v2350, %v2366
        %v2407 = vcombine.high %v2350, %v2366
        %v2409 = vunpack.c.l.s4 1934713408
        %v2410 = vunpack.c.0.s8 %v2409
        %v2411 = vlaneseq
        %v2412 = vshrl.u32 %v2411, 7
        %v2413 = vsub.s32 %v2410, %v2412
        %v2414 = vrot.slane %v2406, %v2413
        %v2416 = vunpack.c.l.s4 1934713408
        %v2417 = vunpack.c.0.s8 %v2416
        %v2418 = vlaneseq
        %v2419 = vshrl.u32 %v2418, 7
        %v2420 = vsub.s32 %v2417, %v2419
        %v2421 = vrot.slane %v2407, %v2420
        %v2422 = vcombine.low %v2357, %v2373
        %v2423 = vcombine.high %v2357, %v2373
        %v2425 = vunpack.c.l.s4 1934713408
        %v2426 = vunpack.c.0.s8 %v2425
        %v2427 = vlaneseq
        %v2428 = vshrl.u32 %v2427, 7
        %v2429 = vsub.s32 %v2426, %v2428
        %v2430 = vrot.slane %v2422, %v2429
        %v2432 = vunpack.c.l.s4 1934713408
        %v2433 = vunpack.c.0.s8 %v2432
        %v2434 = vlaneseq
        %v2435 = vshrl.u32 %v2434, 7
        %v2436 = vsub.s32 %v2433, %v2435
        %v2437 = vrot.slane %v2423, %v2436
        %v2438 = vcombine.low %v2382, %v2398
        %v2439 = vcombine.high %v2382, %v2398
        %v2441 = vunpack.c.l.s4 1934713408
        %v2442 = vunpack.c.0.s8 %v2441
        %v2443 = vlaneseq
        %v2444 = vshrl.u32 %v2443, 7
        %v2445 = vsub.s32 %v2442, %v2444
        %v2446 = vrot.slane %v2438, %v2445
        %v2448 = vunpack.c.l.s4 1934713408
        %v2449 = vunpack.c.0.s8 %v2448
        %v2450 = vlaneseq
        %v2451 = vshrl.u32 %v2450, 7
        %v2452 = vsub.s32 %v2449, %v2451
        %v2453 = vrot.slane %v2439, %v2452
        %v2454 = vcombine.low %v2389, %v2405
        %v2455 = vcombine.high %v2389, %v2405
        %v2457 = vunpack.c.l.s4 1934713408
        %v2458 = vunpack.c.0.s8 %v2457
        %v2459 = vlaneseq
        %v2460 = vshrl.u32 %v2459, 7
        %v2461 = vsub.s32 %v2458, %v2460
        %v2462 = vrot.slane %v2454, %v2461
        %v2464 = vunpack.c.l.s4 1934713408
        %v2465 = vunpack.c.0.s8 %v2464
        %v2466 = vlaneseq
        %v2467 = vshrl.u32 %v2466, 7
        %v2468 = vsub.s32 %v2465, %v2467
        %v2469 = vrot.slane %v2455, %v2468
        %v2470 = vcombine.low %v2414, %v2446
        %v2471 = vcombine.high %v2414, %v2446
        %v2472 = vcombine.low %v2421, %v2453
        %v2473 = vcombine.high %v2421, %v2453
        %v2474 = vcombine.low %v2430, %v2462
        %v2475 = vcombine.high %v2430, %v2462
        %v2476 = vcombine.low %v2437, %v2469
        %v2477 = vcombine.high %v2437, %v2469
        %v2478 = vcombine.low %v1095, %v2309
        %v2479 = vcombine.high %v1095, %v2309
        %v2481 = vunpack.c.l.s4 1983009808
        %v2482 = vunpack.c.0.s8 %v2481
        %v2483 = vlaneseq
        %v2484 = vshrl.u32 %v2483, 7
        %v2485 = vsub.s32 %v2482, %v2484
        %v2486 = vrot.slane %v2478, %v2485
        %v2488 = vunpack.c.l.s4 1983009808
        %v2489 = vunpack.c.0.s8 %v2488
        %v2490 = vlaneseq
        %v2491 = vshrl.u32 %v2490, 7
        %v2492 = vsub.s32 %v2489, %v2491
        %v2493 = vrot.slane %v2479, %v2492
        %v2494 = vcombine.low %v2303, %v2315
        %v2495 = vcombine.high %v2303, %v2315
        %v2497 = vunpack.c.l.s4 1983009808
        %v2498 = vunpack.c.0.s8 %v2497
        %v2499 = vlaneseq
        %v2500 = vshrl.u32 %v2499, 7
        %v2501 = vsub.s32 %v2498, %v2500
        %v2502 = vrot.slane %v2494, %v2501
        %v2504 = vunpack.c.l.s4 1983009808
        %v2505 = vunpack.c.0.s8 %v2504
        %v2506 = vlaneseq
        %v2507 = vshrl.u32 %v2506, 7
        %v2508 = vsub.s32 %v2505, %v2507
        %v2509 = vrot.slane %v2495, %v2508
        %v2510 = vcombine.low %v2321, %v2333
        %v2511 = vcombine.high %v2321, %v2333
        %v2513 = vunpack.c.l.s4 1983009808
        %v2514 = vunpack.c.0.s8 %v2513
        %v2515 = vlaneseq
        %v2516 = vshrl.u32 %v2515, 7
        %v2517 = vsub.s32 %v2514, %v2516
        %v2518 = vrot.slane %v2510, %v2517
        %v2520 = vunpack.c.l.s4 1983009808
        %v2521 = vunpack.c.0.s8 %v2520
        %v2522 = vlaneseq
        %v2523 = vshrl.u32 %v2522, 7
        %v2524 = vsub.s32 %v2521, %v2523
        %v2525 = vrot.slane %v2511, %v2524
        %v2526 = vcombine.low %v2327, %v2339
        %v2527 = vcombine.high %v2327, %v2339
        %v2529 = vunpack.c.l.s4 1983009808
        %v2530 = vunpack.c.0.s8 %v2529
        %v2531 = vlaneseq
        %v2532 = vshrl.u32 %v2531, 7
        %v2533 = vsub.s32 %v2530, %v2532
        %v2534 = vrot.slane %v2526, %v2533
        %v2536 = vunpack.c.l.s4 1983009808
        %v2537 = vunpack.c.0.s8 %v2536
        %v2538 = vlaneseq
        %v2539 = vshrl.u32 %v2538, 7
        %v2540 = vsub.s32 %v2537, %v2539
        %v2541 = vrot.slane %v2527, %v2540
        %v2542 = vcombine.low %v2486, %v2502
        %v2543 = vcombine.high %v2486, %v2502
        %v2545 = vunpack.c.l.s4 1934713408
        %v2546 = vunpack.c.0.s8 %v2545
        %v2547 = vlaneseq
        %v2548 = vshrl.u32 %v2547, 7
        %v2549 = vsub.s32 %v2546, %v2548
        %v2550 = vrot.slane %v2542, %v2549
        %v2552 = vunpack.c.l.s4 1934713408
        %v2553 = vunpack.c.0.s8 %v2552
        %v2554 = vlaneseq
        %v2555 = vshrl.u32 %v2554, 7
        %v2556 = vsub.s32 %v2553, %v2555
        %v2557 = vrot.slane %v2543, %v2556
        %v2558 = vcombine.low %v2493, %v2509
        %v2559 = vcombine.high %v2493, %v2509
        %v2561 = vunpack.c.l.s4 1934713408
        %v2562 = vunpack.c.0.s8 %v2561
        %v2563 = vlaneseq
        %v2564 = vshrl.u32 %v2563, 7
        %v2565 = vsub.s32 %v2562, %v2564
        %v2566 = vrot.slane %v2558, %v2565
        %v2568 = vunpack.c.l.s4 1934713408
        %v2569 = vunpack.c.0.s8 %v2568
        %v2570 = vlaneseq
        %v2571 = vshrl.u32 %v2570, 7
        %v2572 = vsub.s32 %v2569, %v2571
        %v2573 = vrot.slane %v2559, %v2572
        %v2574 = vcombine.low %v2518, %v2534
        %v2575 = vcombine.high %v2518, %v2534
        %v2577 = vunpack.c.l.s4 1934713408
        %v2578 = vunpack.c.0.s8 %v2577
        %v2579 = vlaneseq
        %v2580 = vshrl.u32 %v2579, 7
        %v2581 = vsub.s32 %v2578, %v2580
        %v2582 = vrot.slane %v2574, %v2581
        %v2584 = vunpack.c.l.s4 1934713408
        %v2585 = vunpack.c.0.s8 %v2584
        %v2586 = vlaneseq
        %v2587 = vshrl.u32 %v2586, 7
        %v2588 = vsub.s32 %v2585, %v2587
        %v2589 = vrot.slane %v2575, %v2588
        %v2590 = vcombine.low %v2525, %v2541
        %v2591 = vcombine.high %v2525, %v2541
        %v2593 = vunpack.c.l.s4 1934713408
        %v2594 = vunpack.c.0.s8 %v2593
        %v2595 = vlaneseq
        %v2596 = vshrl.u32 %v2595, 7
        %v2597 = vsub.s32 %v2594, %v2596
        %v2598 = vrot.slane %v2590, %v2597
        %v2600 = vunpack.c.l.s4 1934713408
        %v2601 = vunpack.c.0.s8 %v2600
        %v2602 = vlaneseq
        %v2603 = vshrl.u32 %v2602, 7
        %v2604 = vsub.s32 %v2601, %v2603
        %v2605 = vrot.slane %v2591, %v2604
        %v2606 = vcombine.low %v2550, %v2582
        %v2607 = vcombine.high %v2550, %v2582
        %v2608 = vcombine.low %v2557, %v2589
        %v2609 = vcombine.high %v2557, %v2589
        %v2610 = vcombine.low %v2566, %v2598
        %v2611 = vcombine.high %v2566, %v2598
        %v2612 = vcombine.low %v2573, %v2605
        %v2613 = vcombine.high %v2573, %v2605
        %v2614 = vcombine.low %v2470, %v2472
        %v2615 = vcombine.high %v2470, %v2472
        %v2617 = vunpack.c.l.s4 1983009808
        %v2618 = vunpack.c.0.s8 %v2617
        %v2619 = vlaneseq
        %v2620 = vshrl.u32 %v2619, 7
        %v2621 = vsub.s32 %v2618, %v2620
        %v2622 = vrot.slane %v2614, %v2621
        %v2624 = vunpack.c.l.s4 1983009808
        %v2625 = vunpack.c.0.s8 %v2624
        %v2626 = vlaneseq
        %v2627 = vshrl.u32 %v2626, 7
        %v2628 = vsub.s32 %v2625, %v2627
        %v2629 = vrot.slane %v2615, %v2628
        %v2630 = vcombine.low %v2471, %v2473
        %v2631 = vcombine.high %v2471, %v2473
        %v2633 = vunpack.c.l.s4 1983009808
        %v2634 = vunpack.c.0.s8 %v2633
        %v2635 = vlaneseq
        %v2636 = vshrl.u32 %v2635, 7
        %v2637 = vsub.s32 %v2634, %v2636
        %v2638 = vrot.slane %v2630, %v2637
        %v2640 = vunpack.c.l.s4 1983009808
        %v2641 = vunpack.c.0.s8 %v2640
        %v2642 = vlaneseq
        %v2643 = vshrl.u32 %v2642, 7
        %v2644 = vsub.s32 %v2641, %v2643
        %v2645 = vrot.slane %v2631, %v2644
        %v2646 = vcombine.low %v2474, %v2476
        %v2647 = vcombine.high %v2474, %v2476
        %v2649 = vunpack.c.l.s4 1983009808
        %v2650 = vunpack.c.0.s8 %v2649
        %v2651 = vlaneseq
        %v2652 = vshrl.u32 %v2651, 7
        %v2653 = vsub.s32 %v2650, %v2652
        %v2654 = vrot.slane %v2646, %v2653
        %v2656 = vunpack.c.l.s4 1983009808
        %v2657 = vunpack.c.0.s8 %v2656
        %v2658 = vlaneseq
        %v2659 = vshrl.u32 %v2658, 7
        %v2660 = vsub.s32 %v2657, %v2659
        %v2661 = vrot.slane %v2647, %v2660
        %v2662 = vcombine.low %v2475, %v2477
        %v2663 = vcombine.high %v2475, %v2477
        %v2665 = vunpack.c.l.s4 1983009808
        %v2666 = vunpack.c.0.s8 %v2665
        %v2667 = vlaneseq
        %v2668 = vshrl.u32 %v2667, 7
        %v2669 = vsub.s32 %v2666, %v2668
        %v2670 = vrot.slane %v2662, %v2669
        %v2672 = vunpack.c.l.s4 1983009808
        %v2673 = vunpack.c.0.s8 %v2672
        %v2674 = vlaneseq
        %v2675 = vshrl.u32 %v2674, 7
        %v2676 = vsub.s32 %v2673, %v2675
        %v2677 = vrot.slane %v2663, %v2676
        %v2678 = vcombine.low %v2622, %v2638
        %v2679 = vcombine.high %v2622, %v2638
        %v2681 = vunpack.c.l.s4 1934713408
        %v2682 = vunpack.c.0.s8 %v2681
        %v2683 = vlaneseq
        %v2684 = vshrl.u32 %v2683, 7
        %v2685 = vsub.s32 %v2682, %v2684
        %v2686 = vrot.slane %v2678, %v2685
        %v2688 = vunpack.c.l.s4 1934713408
        %v2689 = vunpack.c.0.s8 %v2688
        %v2690 = vlaneseq
        %v2691 = vshrl.u32 %v2690, 7
        %v2692 = vsub.s32 %v2689, %v2691
        %v2693 = vrot.slane %v2679, %v2692
        %v2694 = vcombine.low %v2629, %v2645
        %v2695 = vcombine.high %v2629, %v2645
        %v2697 = vunpack.c.l.s4 1934713408
        %v2698 = vunpack.c.0.s8 %v2697
        %v2699 = vlaneseq
        %v2700 = vshrl.u32 %v2699, 7
        %v2701 = vsub.s32 %v2698, %v2700
        %v2702 = vrot.slane %v2694, %v2701
        %v2704 = vunpack.c.l.s4 1934713408
        %v2705 = vunpack.c.0.s8 %v2704
        %v2706 = vlaneseq
        %v2707 = vshrl.u32 %v2706, 7
        %v2708 = vsub.s32 %v2705, %v2707
        %v2709 = vrot.slane %v2695, %v2708
        %v2710 = vcombine.low %v2654, %v2670
        %v2711 = vcombine.high %v2654, %v2670
        %v2713 = vunpack.c.l.s4 1934713408
        %v2714 = vunpack.c.0.s8 %v2713
        %v2715 = vlaneseq
        %v2716 = vshrl.u32 %v2715, 7
        %v2717 = vsub.s32 %v2714, %v2716
        %v2718 = vrot.slane %v2710, %v2717
        %v2720 = vunpack.c.l.s4 1934713408
        %v2721 = vunpack.c.0.s8 %v2720
        %v2722 = vlaneseq
        %v2723 = vshrl.u32 %v2722, 7
        %v2724 = vsub.s32 %v2721, %v2723
        %v2725 = vrot.slane %v2711, %v2724
        %v2726 = vcombine.low %v2661, %v2677
        %v2727 = vcombine.high %v2661, %v2677
        %v2729 = vunpack.c.l.s4 1934713408
        %v2730 = vunpack.c.0.s8 %v2729
        %v2731 = vlaneseq
        %v2732 = vshrl.u32 %v2731, 7
        %v2733 = vsub.s32 %v2730, %v2732
        %v2734 = vrot.slane %v2726, %v2733
        %v2736 = vunpack.c.l.s4 1934713408
        %v2737 = vunpack.c.0.s8 %v2736
        %v2738 = vlaneseq
        %v2739 = vshrl.u32 %v2738, 7
        %v2740 = vsub.s32 %v2737, %v2739
        %v2741 = vrot.slane %v2727, %v2740
        %v2742 = vcombine.low %v2686, %v2718
        %v2743 = vcombine.high %v2686, %v2718
        %v2744 = vcombine.low %v2693, %v2725
        %v2745 = vcombine.high %v2693, %v2725
        %v2746 = vcombine.low %v2702, %v2734
        %v2747 = vcombine.high %v2702, %v2734
        %v2748 = vcombine.low %v2709, %v2741
        %v2749 = vcombine.high %v2709, %v2741
        %v2750 = vcombine.low %v2606, %v2608
        %v2751 = vcombine.high %v2606, %v2608
        %v2753 = vunpack.c.l.s4 1983009808
        %v2754 = vunpack.c.0.s8 %v2753
        %v2755 = vlaneseq
        %v2756 = vshrl.u32 %v2755, 7
        %v2757 = vsub.s32 %v2754, %v2756
        %v2758 = vrot.slane %v2750, %v2757
        %v2760 = vunpack.c.l.s4 1983009808
        %v2761 = vunpack.c.0.s8 %v2760
        %v2762 = vlaneseq
        %v2763 = vshrl.u32 %v2762, 7
        %v2764 = vsub.s32 %v2761, %v2763
        %v2765 = vrot.slane %v2751, %v2764
        %v2766 = vcombine.low %v2607, %v2609
        %v2767 = vcombine.high %v2607, %v2609
        %v2769 = vunpack.c.l.s4 1983009808
        %v2770 = vunpack.c.0.s8 %v2769
        %v2771 = vlaneseq
        %v2772 = vshrl.u32 %v2771, 7
        %v2773 = vsub.s32 %v2770, %v2772
        %v2774 = vrot.slane %v2766, %v2773
        %v2776 = vunpack.c.l.s4 1983009808
        %v2777 = vunpack.c.0.s8 %v2776
        %v2778 = vlaneseq
        %v2779 = vshrl.u32 %v2778, 7
        %v2780 = vsub.s32 %v2777, %v2779
        %v2781 = vrot.slane %v2767, %v2780
        %v2782 = vcombine.low %v2610, %v2612
        %v2783 = vcombine.high %v2610, %v2612
        %v2785 = vunpack.c.l.s4 1983009808
        %v2786 = vunpack.c.0.s8 %v2785
        %v2787 = vlaneseq
        %v2788 = vshrl.u32 %v2787, 7
        %v2789 = vsub.s32 %v2786, %v2788
        %v2790 = vrot.slane %v2782, %v2789
        %v2792 = vunpack.c.l.s4 1983009808
        %v2793 = vunpack.c.0.s8 %v2792
        %v2794 = vlaneseq
        %v2795 = vshrl.u32 %v2794, 7
        %v2796 = vsub.s32 %v2793, %v2795
        %v2797 = vrot.slane %v2783, %v2796
        %v2798 = vcombine.low %v2611, %v2613
        %v2799 = vcombine.high %v2611, %v2613
        %v2801 = vunpack.c.l.s4 1983009808
        %v2802 = vunpack.c.0.s8 %v2801
        %v2803 = vlaneseq
        %v2804 = vshrl.u32 %v2803, 7
        %v2805 = vsub.s32 %v2802, %v2804
        %v2806 = vrot.slane %v2798, %v2805
        %v2808 = vunpack.c.l.s4 1983009808
        %v2809 = vunpack.c.0.s8 %v2808
        %v2810 = vlaneseq
        %v2811 = vshrl.u32 %v2810, 7
        %v2812 = vsub.s32 %v2809, %v2811
        %v2813 = vrot.slane %v2799, %v2812
        %v2814 = vcombine.low %v2758, %v2774
        %v2815 = vcombine.high %v2758, %v2774
        %v2817 = vunpack.c.l.s4 1934713408
        %v2818 = vunpack.c.0.s8 %v2817
        %v2819 = vlaneseq
        %v2820 = vshrl.u32 %v2819, 7
        %v2821 = vsub.s32 %v2818, %v2820
        %v2822 = vrot.slane %v2814, %v2821
        %v2824 = vunpack.c.l.s4 1934713408
        %v2825 = vunpack.c.0.s8 %v2824
        %v2826 = vlaneseq
        %v2827 = vshrl.u32 %v2826, 7
        %v2828 = vsub.s32 %v2825, %v2827
        %v2829 = vrot.slane %v2815, %v2828
        %v2830 = vcombine.low %v2765, %v2781
        %v2831 = vcombine.high %v2765, %v2781
        %v2833 = vunpack.c.l.s4 1934713408
        %v2834 = vunpack.c.0.s8 %v2833
        %v2835 = vlaneseq
        %v2836 = vshrl.u32 %v2835, 7
        %v2837 = vsub.s32 %v2834, %v2836
        %v2838 = vrot.slane %v2830, %v2837
        %v2840 = vunpack.c.l.s4 1934713408
        %v2841 = vunpack.c.0.s8 %v2840
        %v2842 = vlaneseq
        %v2843 = vshrl.u32 %v2842, 7
        %v2844 = vsub.s32 %v2841, %v2843
        %v2845 = vrot.slane %v2831, %v2844
        %v2846 = vcombine.low %v2790, %v2806
        %v2847 = vcombine.high %v2790, %v2806
        %v2849 = vunpack.c.l.s4 1934713408
        %v2850 = vunpack.c.0.s8 %v2849
        %v2851 = vlaneseq
        %v2852 = vshrl.u32 %v2851, 7
        %v2853 = vsub.s32 %v2850, %v2852
        %v2854 = vrot.slane %v2846, %v2853
        %v2856 = vunpack.c.l.s4 1934713408
        %v2857 = vunpack.c.0.s8 %v2856
        %v2858 = vlaneseq
        %v2859 = vshrl.u32 %v2858, 7
        %v2860 = vsub.s32 %v2857, %v2859
        %v2861 = vrot.slane %v2847, %v2860
        %v2862 = vcombine.low %v2797, %v2813
        %v2863 = vcombine.high %v2797, %v2813
        %v2865 = vunpack.c.l.s4 1934713408
        %v2866 = vunpack.c.0.s8 %v2865
        %v2867 = vlaneseq
        %v2868 = vshrl.u32 %v2867, 7
        %v2869 = vsub.s32 %v2866, %v2868
        %v2870 = vrot.slane %v2862, %v2869
        %v2872 = vunpack.c.l.s4 1934713408
        %v2873 = vunpack.c.0.s8 %v2872
        %v2874 = vlaneseq
        %v2875 = vshrl.u32 %v2874, 7
        %v2876 = vsub.s32 %v2873, %v2875
        %v2877 = vrot.slane %v2863, %v2876
        %v2878 = vcombine.low %v2822, %v2854
        %v2879 = vcombine.high %v2822, %v2854
        %v2880 = vcombine.low %v2829, %v2861
        %v2881 = vcombine.high %v2829, %v2861
        %v2882 = vcombine.low %v2838, %v2870
        %v2883 = vcombine.high %v2838, %v2870
        %v2884 = vcombine.low %v2845, %v2877
        %v2885 = vcombine.high %v2845, %v2877
        %v2886 = vpack.c.bf16 %v2878, %v2742
        %v2887 = vpack.c.bf16 %v2879, %v2743
        %v2888 = vpack.c.bf16 %v2880, %v2744
        %v2889 = vpack.c.bf16 %v2881, %v2745
        %v2890 = vpack.c.bf16 %v2882, %v2746
        %v2891 = vpack.c.bf16 %v2883, %v2747
        %v2892 = vpack.c.bf16 %v2884, %v2748
        %v2893 = vpack.c.bf16 %v2885, %v2749
        %vm2894 = vcmask 130048
        %v2896 = vsel %vm2894, %v1694, 0
        %v2899 = vsel %vm2894, %v2290, 0
        %2901 = vmatprep.subr.bf16.mxu0 0
        %2902 = vmatpush1.bf16.xpose.msra.mxu0 %v2899
        %2903 = vmatprep.subr.bf16.mxu0 0
        %2904 = vmatpush1.bf16.xpose.msra.mxu0 0
        %2905 = vmatprep.subr.bf16.mxu0 0
        %2906 = vmatpush1.bf16.xpose.msra.mxu0 0
        %2907 = vmatprep.subr.bf16.mxu0 0
        %2908 = vmatpush1.bf16.xpose.msra.mxu0 0
        %2909 = vmatprep.subr.bf16.mxu0 0
        %2910 = vmatpush1.bf16.xpose.msra.mxu0 0
        %2911 = vmatprep.subr.bf16.mxu0 0
        %2912 = vmatpush1.bf16.xpose.msra.mxu0 0
        %2913 = vmatprep.subr.bf16.mxu0 0
        %2914 = vmatpush1.bf16.xpose.msra.mxu0 0
        %2915 = vmatprep.subr.bf16.mxu0 0
        %2916 = vmatpush1.bf16.xpose.msra.mxu0 0
        %2917 = vmatprep.subr.bf16.mxu0 0
        %2918 = vmatpush1.bf16.xpose.msra.mxu0 0
        %2919 = vmatprep.subr.bf16.mxu0 0
        %2920 = vmatpush1.bf16.xpose.msra.mxu0 0
        %2921 = vmatprep.subr.bf16.mxu0 0
        %2922 = vmatpush1.bf16.xpose.msra.mxu0 0
        %2923 = vmatprep.subr.bf16.mxu0 0
        %2924 = vmatpush1.bf16.xpose.msra.mxu0 0
        %2925 = vmatprep.subr.bf16.mxu0 0
        %2926 = vmatpush1.bf16.xpose.msra.mxu0 0
        %2927 = vmatprep.subr.bf16.mxu0 0
        %2928 = vmatpush1.bf16.xpose.msra.mxu0 0
        %2929 = vmatprep.subr.bf16.mxu0 0
        %2930 = vmatpush1.bf16.xpose.msra.mxu0 0
        %2931 = vmatprep.subr.bf16.mxu0 0
        %2932 = vmatpush1.bf16.xpose.msra.mxu0 0
        %2933 = vmatprep.mubr.bf16.mxu0 0
        %2934 = vmatmul.mubr.bf16.gmra.mrb[0].mxu0 %v2896
        %v2935 = vpop.f32.mrb[0].mxu0
        %v2936 = vadd.f32 0.0, %v2935
        %v2937 = vpop.f32.mrb[0].mxu0
        %v2938 = vpop.f32.mrb[0].mxu0
        %v2939 = vadd.f32 0.0, %v2938
        %v2940 = vpop.f32.mrb[0].mxu0
        %2941 = vdwg.mxu0
        %v2943 = vsel %vm2894, %v1695, 0
        %v2946 = vsel %vm2894, %v2291, 0
        %2948 = vmatprep.subr.bf16.mxu0 0
        %2949 = vmatpush1.bf16.xpose.msra.mxu0 %v2946
        %2950 = vmatprep.subr.bf16.mxu0 0
        %2951 = vmatpush1.bf16.xpose.msra.mxu0 0
        %2952 = vmatprep.subr.bf16.mxu0 0
        %2953 = vmatpush1.bf16.xpose.msra.mxu0 0
        %2954 = vmatprep.subr.bf16.mxu0 0
        %2955 = vmatpush1.bf16.xpose.msra.mxu0 0
        %2956 = vmatprep.subr.bf16.mxu0 0
        %2957 = vmatpush1.bf16.xpose.msra.mxu0 0
        %2958 = vmatprep.subr.bf16.mxu0 0
        %2959 = vmatpush1.bf16.xpose.msra.mxu0 0
        %2960 = vmatprep.subr.bf16.mxu0 0
        %2961 = vmatpush1.bf16.xpose.msra.mxu0 0
        %2962 = vmatprep.subr.bf16.mxu0 0
        %2963 = vmatpush1.bf16.xpose.msra.mxu0 0
        %2964 = vmatprep.subr.bf16.mxu0 0
        %2965 = vmatpush1.bf16.xpose.msra.mxu0 0
        %2966 = vmatprep.subr.bf16.mxu0 0
        %2967 = vmatpush1.bf16.xpose.msra.mxu0 0
        %2968 = vmatprep.subr.bf16.mxu0 0
        %2969 = vmatpush1.bf16.xpose.msra.mxu0 0
        %2970 = vmatprep.subr.bf16.mxu0 0
        %2971 = vmatpush1.bf16.xpose.msra.mxu0 0
        %2972 = vmatprep.subr.bf16.mxu0 0
        %2973 = vmatpush1.bf16.xpose.msra.mxu0 0
        %2974 = vmatprep.subr.bf16.mxu0 0
        %2975 = vmatpush1.bf16.xpose.msra.mxu0 0
        %2976 = vmatprep.subr.bf16.mxu0 0
        %2977 = vmatpush1.bf16.xpose.msra.mxu0 0
        %2978 = vmatprep.subr.bf16.mxu0 0
        %2979 = vmatpush1.bf16.xpose.msra.mxu0 0
        %2980 = vmatprep.mubr.bf16.mxu0 0
        %2981 = vmatmul.mubr.bf16.gmra.mrb[0].mxu0 %v2943
        %v2982 = vpop.f32.mrb[0].mxu0
        %v2983 = vadd.f32 0.0, %v2982
        %v2984 = vpop.f32.mrb[0].mxu0
        %v2985 = vpop.f32.mrb[0].mxu0
        %v2986 = vadd.f32 0.0, %v2985
        %v2987 = vpop.f32.mrb[0].mxu0
        %2988 = vdwg.mxu0
        %v2990 = vsel %vm2894, %v1696, 0
        %v2993 = vsel %vm2894, %v2292, 0
        %2995 = vmatprep.subr.bf16.mxu0 0
        %2996 = vmatpush1.bf16.xpose.msra.mxu0 %v2993
        %2997 = vmatprep.subr.bf16.mxu0 0
        %2998 = vmatpush1.bf16.xpose.msra.mxu0 0
        %2999 = vmatprep.subr.bf16.mxu0 0
        %3000 = vmatpush1.bf16.xpose.msra.mxu0 0
        %3001 = vmatprep.subr.bf16.mxu0 0
        %3002 = vmatpush1.bf16.xpose.msra.mxu0 0
        %3003 = vmatprep.subr.bf16.mxu0 0
        %3004 = vmatpush1.bf16.xpose.msra.mxu0 0
        %3005 = vmatprep.subr.bf16.mxu0 0
        %3006 = vmatpush1.bf16.xpose.msra.mxu0 0
        %3007 = vmatprep.subr.bf16.mxu0 0
        %3008 = vmatpush1.bf16.xpose.msra.mxu0 0
        %3009 = vmatprep.subr.bf16.mxu0 0
        %3010 = vmatpush1.bf16.xpose.msra.mxu0 0
        %3011 = vmatprep.subr.bf16.mxu0 0
        %3012 = vmatpush1.bf16.xpose.msra.mxu0 0
        %3013 = vmatprep.subr.bf16.mxu0 0
        %3014 = vmatpush1.bf16.xpose.msra.mxu0 0
        %3015 = vmatprep.subr.bf16.mxu0 0
        %3016 = vmatpush1.bf16.xpose.msra.mxu0 0
        %3017 = vmatprep.subr.bf16.mxu0 0
        %3018 = vmatpush1.bf16.xpose.msra.mxu0 0
        %3019 = vmatprep.subr.bf16.mxu0 0
        %3020 = vmatpush1.bf16.xpose.msra.mxu0 0
        %3021 = vmatprep.subr.bf16.mxu0 0
        %3022 = vmatpush1.bf16.xpose.msra.mxu0 0
        %3023 = vmatprep.subr.bf16.mxu0 0
        %3024 = vmatpush1.bf16.xpose.msra.mxu0 0
        %3025 = vmatprep.subr.bf16.mxu0 0
        %3026 = vmatpush1.bf16.xpose.msra.mxu0 0
        %3027 = vmatprep.mubr.bf16.mxu0 0
        %3028 = vmatmul.mubr.bf16.gmra.mrb[0].mxu0 %v2990
        %v3029 = vpop.f32.mrb[0].mxu0
        %v3030 = vadd.f32 0.0, %v3029
        %v3031 = vpop.f32.mrb[0].mxu0
        %v3032 = vpop.f32.mrb[0].mxu0
        %v3033 = vadd.f32 0.0, %v3032
        %v3034 = vpop.f32.mrb[0].mxu0
        %3035 = vdwg.mxu0
        %v3037 = vsel %vm2894, %v1697, 0
        %v3040 = vsel %vm2894, %v2293, 0
        %3042 = vmatprep.subr.bf16.mxu0 0
        %3043 = vmatpush1.bf16.xpose.msra.mxu0 %v3040
        %3044 = vmatprep.subr.bf16.mxu0 0
        %3045 = vmatpush1.bf16.xpose.msra.mxu0 0
        %3046 = vmatprep.subr.bf16.mxu0 0
        %3047 = vmatpush1.bf16.xpose.msra.mxu0 0
        %3048 = vmatprep.subr.bf16.mxu0 0
        %3049 = vmatpush1.bf16.xpose.msra.mxu0 0
        %3050 = vmatprep.subr.bf16.mxu0 0
        %3051 = vmatpush1.bf16.xpose.msra.mxu0 0
        %3052 = vmatprep.subr.bf16.mxu0 0
        %3053 = vmatpush1.bf16.xpose.msra.mxu0 0
        %3054 = vmatprep.subr.bf16.mxu0 0
        %3055 = vmatpush1.bf16.xpose.msra.mxu0 0
        %3056 = vmatprep.subr.bf16.mxu0 0
        %3057 = vmatpush1.bf16.xpose.msra.mxu0 0
        %3058 = vmatprep.subr.bf16.mxu0 0
        %3059 = vmatpush1.bf16.xpose.msra.mxu0 0
        %3060 = vmatprep.subr.bf16.mxu0 0
        %3061 = vmatpush1.bf16.xpose.msra.mxu0 0
        %3062 = vmatprep.subr.bf16.mxu0 0
        %3063 = vmatpush1.bf16.xpose.msra.mxu0 0
        %3064 = vmatprep.subr.bf16.mxu0 0
        %3065 = vmatpush1.bf16.xpose.msra.mxu0 0
        %3066 = vmatprep.subr.bf16.mxu0 0
        %3067 = vmatpush1.bf16.xpose.msra.mxu0 0
        %3068 = vmatprep.subr.bf16.mxu0 0
        %3069 = vmatpush1.bf16.xpose.msra.mxu0 0
        %3070 = vmatprep.subr.bf16.mxu0 0
        %3071 = vmatpush1.bf16.xpose.msra.mxu0 0
        %3072 = vmatprep.subr.bf16.mxu0 0
        %3073 = vmatpush1.bf16.xpose.msra.mxu0 0
        %3074 = vmatprep.mubr.bf16.mxu0 0
        %3075 = vmatmul.mubr.bf16.gmra.mrb[0].mxu0 %v3037
        %v3076 = vpop.f32.mrb[0].mxu0
        %v3077 = vadd.f32 0.0, %v3076
        %v3078 = vpop.f32.mrb[0].mxu0
        %v3079 = vpop.f32.mrb[0].mxu0
        %v3080 = vadd.f32 0.0, %v3079
        %v3081 = vpop.f32.mrb[0].mxu0
        %3082 = vdwg.mxu0
        %v3084 = vsel %vm2894, %v1698, 0
        %v3087 = vsel %vm2894, %v2294, 0
        %3089 = vmatprep.subr.bf16.mxu0 0
        %3090 = vmatpush1.bf16.xpose.msra.mxu0 %v3087
        %3091 = vmatprep.subr.bf16.mxu0 0
        %3092 = vmatpush1.bf16.xpose.msra.mxu0 0
        %3093 = vmatprep.subr.bf16.mxu0 0
        %3094 = vmatpush1.bf16.xpose.msra.mxu0 0
        %3095 = vmatprep.subr.bf16.mxu0 0
        %3096 = vmatpush1.bf16.xpose.msra.mxu0 0
        %3097 = vmatprep.subr.bf16.mxu0 0
        %3098 = vmatpush1.bf16.xpose.msra.mxu0 0
        %3099 = vmatprep.subr.bf16.mxu0 0
        %3100 = vmatpush1.bf16.xpose.msra.mxu0 0
        %3101 = vmatprep.subr.bf16.mxu0 0
        %3102 = vmatpush1.bf16.xpose.msra.mxu0 0
        %3103 = vmatprep.subr.bf16.mxu0 0
        %3104 = vmatpush1.bf16.xpose.msra.mxu0 0
        %3105 = vmatprep.subr.bf16.mxu0 0
        %3106 = vmatpush1.bf16.xpose.msra.mxu0 0
        %3107 = vmatprep.subr.bf16.mxu0 0
        %3108 = vmatpush1.bf16.xpose.msra.mxu0 0
        %3109 = vmatprep.subr.bf16.mxu0 0
        %3110 = vmatpush1.bf16.xpose.msra.mxu0 0
        %3111 = vmatprep.subr.bf16.mxu0 0
        %3112 = vmatpush1.bf16.xpose.msra.mxu0 0
        %3113 = vmatprep.subr.bf16.mxu0 0
        %3114 = vmatpush1.bf16.xpose.msra.mxu0 0
        %3115 = vmatprep.subr.bf16.mxu0 0
        %3116 = vmatpush1.bf16.xpose.msra.mxu0 0
        %3117 = vmatprep.subr.bf16.mxu0 0
        %3118 = vmatpush1.bf16.xpose.msra.mxu0 0
        %3119 = vmatprep.subr.bf16.mxu0 0
        %3120 = vmatpush1.bf16.xpose.msra.mxu0 0
        %3121 = vmatprep.mubr.bf16.mxu0 0
        %3122 = vmatmul.mubr.bf16.gmra.mrb[0].mxu0 %v3084
        %v3123 = vpop.f32.mrb[0].mxu0
        %v3124 = vadd.f32 0.0, %v3123
        %v3125 = vpop.f32.mrb[0].mxu0
        %v3126 = vpop.f32.mrb[0].mxu0
        %v3127 = vadd.f32 0.0, %v3126
        %v3128 = vpop.f32.mrb[0].mxu0
        %3129 = vdwg.mxu0
        %v3131 = vsel %vm2894, %v1699, 0
        %v3134 = vsel %vm2894, %v2295, 0
        %3136 = vmatprep.subr.bf16.mxu0 0
        %3137 = vmatpush1.bf16.xpose.msra.mxu0 %v3134
        %3138 = vmatprep.subr.bf16.mxu0 0
        %3139 = vmatpush1.bf16.xpose.msra.mxu0 0
        %3140 = vmatprep.subr.bf16.mxu0 0
        %3141 = vmatpush1.bf16.xpose.msra.mxu0 0
        %3142 = vmatprep.subr.bf16.mxu0 0
        %3143 = vmatpush1.bf16.xpose.msra.mxu0 0
        %3144 = vmatprep.subr.bf16.mxu0 0
        %3145 = vmatpush1.bf16.xpose.msra.mxu0 0
        %3146 = vmatprep.subr.bf16.mxu0 0
        %3147 = vmatpush1.bf16.xpose.msra.mxu0 0
        %3148 = vmatprep.subr.bf16.mxu0 0
        %3149 = vmatpush1.bf16.xpose.msra.mxu0 0
        %3150 = vmatprep.subr.bf16.mxu0 0
        %3151 = vmatpush1.bf16.xpose.msra.mxu0 0
        %3152 = vmatprep.subr.bf16.mxu0 0
        %3153 = vmatpush1.bf16.xpose.msra.mxu0 0
        %3154 = vmatprep.subr.bf16.mxu0 0
        %3155 = vmatpush1.bf16.xpose.msra.mxu0 0
        %3156 = vmatprep.subr.bf16.mxu0 0
        %3157 = vmatpush1.bf16.xpose.msra.mxu0 0
        %3158 = vmatprep.subr.bf16.mxu0 0
        %3159 = vmatpush1.bf16.xpose.msra.mxu0 0
        %3160 = vmatprep.subr.bf16.mxu0 0
        %3161 = vmatpush1.bf16.xpose.msra.mxu0 0
        %3162 = vmatprep.subr.bf16.mxu0 0
        %3163 = vmatpush1.bf16.xpose.msra.mxu0 0
        %3164 = vmatprep.subr.bf16.mxu0 0
        %3165 = vmatpush1.bf16.xpose.msra.mxu0 0
        %3166 = vmatprep.subr.bf16.mxu0 0
        %3167 = vmatpush1.bf16.xpose.msra.mxu0 0
        %3168 = vmatprep.mubr.bf16.mxu0 0
        %3169 = vmatmul.mubr.bf16.gmra.mrb[0].mxu0 %v3131
        %v3170 = vpop.f32.mrb[0].mxu0
        %v3171 = vadd.f32 0.0, %v3170
        %v3172 = vpop.f32.mrb[0].mxu0
        %v3173 = vpop.f32.mrb[0].mxu0
        %v3174 = vadd.f32 0.0, %v3173
        %v3175 = vpop.f32.mrb[0].mxu0
        %3176 = vdwg.mxu0
        %v3178 = vsel %vm2894, %v1700, 0
        %v3181 = vsel %vm2894, %v2296, 0
        %3183 = vmatprep.subr.bf16.mxu0 0
        %3184 = vmatpush1.bf16.xpose.msra.mxu0 %v3181
        %3185 = vmatprep.subr.bf16.mxu0 0
        %3186 = vmatpush1.bf16.xpose.msra.mxu0 0
        %3187 = vmatprep.subr.bf16.mxu0 0
        %3188 = vmatpush1.bf16.xpose.msra.mxu0 0
        %3189 = vmatprep.subr.bf16.mxu0 0
        %3190 = vmatpush1.bf16.xpose.msra.mxu0 0
        %3191 = vmatprep.subr.bf16.mxu0 0
        %3192 = vmatpush1.bf16.xpose.msra.mxu0 0
        %3193 = vmatprep.subr.bf16.mxu0 0
        %3194 = vmatpush1.bf16.xpose.msra.mxu0 0
        %3195 = vmatprep.subr.bf16.mxu0 0
        %3196 = vmatpush1.bf16.xpose.msra.mxu0 0
        %3197 = vmatprep.subr.bf16.mxu0 0
        %3198 = vmatpush1.bf16.xpose.msra.mxu0 0
        %3199 = vmatprep.subr.bf16.mxu0 0
        %3200 = vmatpush1.bf16.xpose.msra.mxu0 0
        %3201 = vmatprep.subr.bf16.mxu0 0
        %3202 = vmatpush1.bf16.xpose.msra.mxu0 0
        %3203 = vmatprep.subr.bf16.mxu0 0
        %3204 = vmatpush1.bf16.xpose.msra.mxu0 0
        %3205 = vmatprep.subr.bf16.mxu0 0
        %3206 = vmatpush1.bf16.xpose.msra.mxu0 0
        %3207 = vmatprep.subr.bf16.mxu0 0
        %3208 = vmatpush1.bf16.xpose.msra.mxu0 0
        %3209 = vmatprep.subr.bf16.mxu0 0
        %3210 = vmatpush1.bf16.xpose.msra.mxu0 0
        %3211 = vmatprep.subr.bf16.mxu0 0
        %3212 = vmatpush1.bf16.xpose.msra.mxu0 0
        %3213 = vmatprep.subr.bf16.mxu0 0
        %3214 = vmatpush1.bf16.xpose.msra.mxu0 0
        %3215 = vmatprep.mubr.bf16.mxu0 0
        %3216 = vmatmul.mubr.bf16.gmra.mrb[0].mxu0 %v3178
        %v3217 = vpop.f32.mrb[0].mxu0
        %v3218 = vadd.f32 0.0, %v3217
        %v3219 = vpop.f32.mrb[0].mxu0
        %v3220 = vpop.f32.mrb[0].mxu0
        %v3221 = vadd.f32 0.0, %v3220
        %v3222 = vpop.f32.mrb[0].mxu0
        %3223 = vdwg.mxu0
        %v3225 = vsel %vm2894, %v1701, 0
        %v3228 = vsel %vm2894, %v2297, 0
        %3230 = vmatprep.subr.bf16.mxu0 0
        %3231 = vmatpush1.bf16.xpose.msra.mxu0 %v3228
        %3232 = vmatprep.subr.bf16.mxu0 0
        %3233 = vmatpush1.bf16.xpose.msra.mxu0 0
        %3234 = vmatprep.subr.bf16.mxu0 0
        %3235 = vmatpush1.bf16.xpose.msra.mxu0 0
        %3236 = vmatprep.subr.bf16.mxu0 0
        %3237 = vmatpush1.bf16.xpose.msra.mxu0 0
        %3238 = vmatprep.subr.bf16.mxu0 0
        %3239 = vmatpush1.bf16.xpose.msra.mxu0 0
        %3240 = vmatprep.subr.bf16.mxu0 0
        %3241 = vmatpush1.bf16.xpose.msra.mxu0 0
        %3242 = vmatprep.subr.bf16.mxu0 0
        %3243 = vmatpush1.bf16.xpose.msra.mxu0 0
        %3244 = vmatprep.subr.bf16.mxu0 0
        %3245 = vmatpush1.bf16.xpose.msra.mxu0 0
        %3246 = vmatprep.subr.bf16.mxu0 0
        %3247 = vmatpush1.bf16.xpose.msra.mxu0 0
        %3248 = vmatprep.subr.bf16.mxu0 0
        %3249 = vmatpush1.bf16.xpose.msra.mxu0 0
        %3250 = vmatprep.subr.bf16.mxu0 0
        %3251 = vmatpush1.bf16.xpose.msra.mxu0 0
        %3252 = vmatprep.subr.bf16.mxu0 0
        %3253 = vmatpush1.bf16.xpose.msra.mxu0 0
        %3254 = vmatprep.subr.bf16.mxu0 0
        %3255 = vmatpush1.bf16.xpose.msra.mxu0 0
        %3256 = vmatprep.subr.bf16.mxu0 0
        %3257 = vmatpush1.bf16.xpose.msra.mxu0 0
        %3258 = vmatprep.subr.bf16.mxu0 0
        %3259 = vmatpush1.bf16.xpose.msra.mxu0 0
        %3260 = vmatprep.subr.bf16.mxu0 0
        %3261 = vmatpush1.bf16.xpose.msra.mxu0 0
        %3262 = vmatprep.mubr.bf16.mxu0 0
        %3263 = vmatmul.mubr.bf16.gmra.mrb[0].mxu0 %v3225
        %v3264 = vpop.f32.mrb[0].mxu0
        %v3265 = vadd.f32 0.0, %v3264
        %v3266 = vpop.f32.mrb[0].mxu0
        %v3267 = vpop.f32.mrb[0].mxu0
        %v3268 = vadd.f32 0.0, %v3267
        %v3269 = vpop.f32.mrb[0].mxu0
        %3270 = vdwg.mxu0
        %v3271 = vsel %vm2894, %v2936, -inf
        %3272 = vmax.xlane.f32.xlu0 %v3271
        %v3273 = vpop.xlane.xlu0 %3272
        %v3274 = vsel %vm2894, %v2939, -inf
        %3275 = vmax.xlane.f32.xlu0 %v3274
        %v3276 = vpop.xlane.xlu0 %3275
        %v3277 = vsel %vm2894, %v2983, -inf
        %3278 = vmax.xlane.f32.xlu0 %v3277
        %v3279 = vpop.xlane.xlu0 %3278
        %v3280 = vsel %vm2894, %v2986, -inf
        %3281 = vmax.xlane.f32.xlu0 %v3280
        %v3282 = vpop.xlane.xlu0 %3281
        %v3283 = vsel %vm2894, %v3030, -inf
        %3284 = vmax.xlane.f32.xlu0 %v3283
        %v3285 = vpop.xlane.xlu0 %3284
        %v3286 = vsel %vm2894, %v3033, -inf
        %3287 = vmax.xlane.f32.xlu0 %v3286
        %v3288 = vpop.xlane.xlu0 %3287
        %v3289 = vsel %vm2894, %v3077, -inf
        %3290 = vmax.xlane.f32.xlu0 %v3289
        %v3291 = vpop.xlane.xlu0 %3290
        %v3292 = vsel %vm2894, %v3080, -inf
        %3293 = vmax.xlane.f32.xlu0 %v3292
        %v3294 = vpop.xlane.xlu0 %3293
        %v3295 = vsel %vm2894, %v3124, -inf
        %3296 = vmax.xlane.f32.xlu0 %v3295
        %v3297 = vpop.xlane.xlu0 %3296
        %v3298 = vsel %vm2894, %v3127, -inf
        %3299 = vmax.xlane.f32.xlu0 %v3298
        %v3300 = vpop.xlane.xlu0 %3299
        %v3301 = vsel %vm2894, %v3171, -inf
        %3302 = vmax.xlane.f32.xlu0 %v3301
        %v3303 = vpop.xlane.xlu0 %3302
        %v3304 = vsel %vm2894, %v3174, -inf
        %3305 = vmax.xlane.f32.xlu0 %v3304
        %v3306 = vpop.xlane.xlu0 %3305
        %v3307 = vsel %vm2894, %v3218, -inf
        %3308 = vmax.xlane.f32.xlu0 %v3307
        %v3309 = vpop.xlane.xlu0 %3308
        %v3310 = vsel %vm2894, %v3221, -inf
        %3311 = vmax.xlane.f32.xlu0 %v3310
        %v3312 = vpop.xlane.xlu0 %3311
        %v3313 = vsel %vm2894, %v3265, -inf
        %3314 = vmax.xlane.f32.xlu0 %v3313
        %v3315 = vpop.xlane.xlu0 %3314
        %v3316 = vsel %vm2894, %v3268, -inf
        %3317 = vmax.xlane.f32.xlu0 %v3316
        %v3318 = vpop.xlane.xlu0 %3317
        %v3319 = vsub.f32 %v2936, %v3273
        %v3320 = vsub.f32 %v2939, %v3276
        %v3321 = vsub.f32 %v2983, %v3279
        %v3322 = vsub.f32 %v2986, %v3282
        %v3323 = vsub.f32 %v3030, %v3285
        %v3324 = vsub.f32 %v3033, %v3288
        %v3325 = vsub.f32 %v3077, %v3291
        %v3326 = vsub.f32 %v3080, %v3294
        %v3327 = vsub.f32 %v3124, %v3297
        %v3328 = vsub.f32 %v3127, %v3300
        %v3329 = vsub.f32 %v3171, %v3303
        %v3330 = vsub.f32 %v3174, %v3306
        %v3331 = vsub.f32 %v3218, %v3309
        %v3332 = vsub.f32 %v3221, %v3312
        %v3333 = vsub.f32 %v3265, %v3315
        %v3334 = vsub.f32 %v3268, %v3318
        %v3335 = vmul.f32 %v3319, 1.442695
        %v3336 = vpow.pop %v3335
        %v3337 = vmul.f32 %v3320, 1.442695
        %v3338 = vpow.pop %v3337
        %v3339 = vmul.f32 %v3321, 1.442695
        %v3340 = vpow.pop %v3339
        %v3341 = vmul.f32 %v3322, 1.442695
        %v3342 = vpow.pop %v3341
        %v3343 = vmul.f32 %v3323, 1.442695
        %v3344 = vpow.pop %v3343
        %v3345 = vmul.f32 %v3324, 1.442695
        %v3346 = vpow.pop %v3345
        %v3347 = vmul.f32 %v3325, 1.442695
        %v3348 = vpow.pop %v3347
        %v3349 = vmul.f32 %v3326, 1.442695
        %v3350 = vpow.pop %v3349
        %v3351 = vmul.f32 %v3327, 1.442695
        %v3352 = vpow.pop %v3351
        %v3353 = vmul.f32 %v3328, 1.442695
        %v3354 = vpow.pop %v3353
        %v3355 = vmul.f32 %v3329, 1.442695
        %v3356 = vpow.pop %v3355
        %v3357 = vmul.f32 %v3330, 1.442695
        %v3358 = vpow.pop %v3357
        %v3359 = vmul.f32 %v3331, 1.442695
        %v3360 = vpow.pop %v3359
        %v3361 = vmul.f32 %v3332, 1.442695
        %v3362 = vpow.pop %v3361
        %v3363 = vmul.f32 %v3333, 1.442695
        %v3364 = vpow.pop %v3363
        %v3365 = vmul.f32 %v3334, 1.442695
        %v3366 = vpow.pop %v3365
        %v3367 = vsel %vm2894, %v3336, 0.0
        %3368 = vadd.xlane.f32.xlu0 %v3367
        %v3369 = vpop.xlane.xlu0 %3368
        %v3370 = vsel %vm2894, %v3338, 0.0
        %3371 = vadd.xlane.f32.xlu0 %v3370
        %v3372 = vpop.xlane.xlu0 %3371
        %v3373 = vsel %vm2894, %v3340, 0.0
        %3374 = vadd.xlane.f32.xlu0 %v3373
        %v3375 = vpop.xlane.xlu0 %3374
        %v3376 = vsel %vm2894, %v3342, 0.0
        %3377 = vadd.xlane.f32.xlu0 %v3376
        %v3378 = vpop.xlane.xlu0 %3377
        %v3379 = vsel %vm2894, %v3344, 0.0
        %3380 = vadd.xlane.f32.xlu0 %v3379
        %v3381 = vpop.xlane.xlu0 %3380
        %v3382 = vsel %vm2894, %v3346, 0.0
        %3383 = vadd.xlane.f32.xlu0 %v3382
        %v3384 = vpop.xlane.xlu0 %3383
        %v3385 = vsel %vm2894, %v3348, 0.0
        %3386 = vadd.xlane.f32.xlu0 %v3385
        %v3387 = vpop.xlane.xlu0 %3386
        %v3388 = vsel %vm2894, %v3350, 0.0
        %3389 = vadd.xlane.f32.xlu0 %v3388
        %v3390 = vpop.xlane.xlu0 %3389
        %v3391 = vsel %vm2894, %v3352, 0.0
        %3392 = vadd.xlane.f32.xlu0 %v3391
        %v3393 = vpop.xlane.xlu0 %3392
        %v3394 = vsel %vm2894, %v3354, 0.0
        %3395 = vadd.xlane.f32.xlu0 %v3394
        %v3396 = vpop.xlane.xlu0 %3395
        %v3397 = vsel %vm2894, %v3356, 0.0
        %3398 = vadd.xlane.f32.xlu0 %v3397
        %v3399 = vpop.xlane.xlu0 %3398
        %v3400 = vsel %vm2894, %v3358, 0.0
        %3401 = vadd.xlane.f32.xlu0 %v3400
        %v3402 = vpop.xlane.xlu0 %3401
        %v3403 = vsel %vm2894, %v3360, 0.0
        %3404 = vadd.xlane.f32.xlu0 %v3403
        %v3405 = vpop.xlane.xlu0 %3404
        %v3406 = vsel %vm2894, %v3362, 0.0
        %3407 = vadd.xlane.f32.xlu0 %v3406
        %v3408 = vpop.xlane.xlu0 %3407
        %v3409 = vsel %vm2894, %v3364, 0.0
        %3410 = vadd.xlane.f32.xlu0 %v3409
        %v3411 = vpop.xlane.xlu0 %3410
        %v3412 = vsel %vm2894, %v3366, 0.0
        %3413 = vadd.xlane.f32.xlu0 %v3412
        %v3414 = vpop.xlane.xlu0 %3413
        %v3415 = vrcp.pop %v3369
        %v3416 = vrcp.pop %v3372
        %v3417 = vrcp.pop %v3375
        %v3418 = vrcp.pop %v3378
        %v3419 = vrcp.pop %v3381
        %v3420 = vrcp.pop %v3384
        %v3421 = vrcp.pop %v3387
        %v3422 = vrcp.pop %v3390
        %v3423 = vrcp.pop %v3393
        %v3424 = vrcp.pop %v3396
        %v3425 = vrcp.pop %v3399
        %v3426 = vrcp.pop %v3402
        %v3427 = vrcp.pop %v3405
        %v3428 = vrcp.pop %v3408
        %v3429 = vrcp.pop %v3411
        %v3430 = vrcp.pop %v3414
        %v3431 = vmul.f32 %v3336, %v3415
        %v3432 = vmul.f32 %v3338, %v3416
        %v3433 = vmul.f32 %v3340, %v3417
        %v3434 = vmul.f32 %v3342, %v3418
        %v3435 = vmul.f32 %v3344, %v3419
        %v3436 = vmul.f32 %v3346, %v3420
        %v3437 = vmul.f32 %v3348, %v3421
        %v3438 = vmul.f32 %v3350, %v3422
        %v3439 = vmul.f32 %v3352, %v3423
        %v3440 = vmul.f32 %v3354, %v3424
        %v3441 = vmul.f32 %v3356, %v3425
        %v3442 = vmul.f32 %v3358, %v3426
        %v3443 = vmul.f32 %v3360, %v3427
        %v3444 = vmul.f32 %v3362, %v3428
        %v3445 = vmul.f32 %v3364, %v3429
        %v3446 = vmul.f32 %v3366, %v3430
        %v3447 = vpack.c.bf16 %v3432, %v3431
        %v3448 = vpack.c.bf16 %v3434, %v3433
        %v3449 = vpack.c.bf16 %v3436, %v3435
        %v3450 = vpack.c.bf16 %v3438, %v3437
        %v3451 = vpack.c.bf16 %v3440, %v3439
        %v3452 = vpack.c.bf16 %v3442, %v3441
        %v3453 = vpack.c.bf16 %v3444, %v3443
        %v3454 = vpack.c.bf16 %v3446, %v3445
        %v3456 = vsel %vm2894, %v3447, 0
        %3458 = vmatprep.subr.bf16.mxu0 0
        %3459 = vmatpush1.bf16.msra.mxu0 %v2886
        %3460 = vmatprep.subr.bf16.mxu0 0
        %3461 = vmatpush1.bf16.msra.mxu0 0
        %3462 = vmatprep.subr.bf16.mxu0 0
        %3463 = vmatpush1.bf16.msra.mxu0 0
        %3464 = vmatprep.subr.bf16.mxu0 0
        %3465 = vmatpush1.bf16.msra.mxu0 0
        %3466 = vmatprep.subr.bf16.mxu0 0
        %3467 = vmatpush1.bf16.msra.mxu0 0
        %3468 = vmatprep.subr.bf16.mxu0 0
        %3469 = vmatpush1.bf16.msra.mxu0 0
        %3470 = vmatprep.subr.bf16.mxu0 0
        %3471 = vmatpush1.bf16.msra.mxu0 0
        %3472 = vmatprep.subr.bf16.mxu0 0
        %3473 = vmatpush1.bf16.msra.mxu0 0
        %3474 = vmatprep.subr.bf16.mxu0 0
        %3475 = vmatpush1.bf16.msra.mxu0 0
        %3476 = vmatprep.subr.bf16.mxu0 0
        %3477 = vmatpush1.bf16.msra.mxu0 0
        %3478 = vmatprep.subr.bf16.mxu0 0
        %3479 = vmatpush1.bf16.msra.mxu0 0
        %3480 = vmatprep.subr.bf16.mxu0 0
        %3481 = vmatpush1.bf16.msra.mxu0 0
        %3482 = vmatprep.subr.bf16.mxu0 0
        %3483 = vmatpush1.bf16.msra.mxu0 0
        %3484 = vmatprep.subr.bf16.mxu0 0
        %3485 = vmatpush1.bf16.msra.mxu0 0
        %3486 = vmatprep.subr.bf16.mxu0 0
        %3487 = vmatpush1.bf16.msra.mxu0 0
        %3488 = vmatprep.subr.bf16.mxu0 0
        %3489 = vmatpush1.bf16.msra.mxu0 0
        %3490 = vmatprep.mubr.bf16.mxu0 0
        %3491 = vmatmul.mubr.bf16.gmra.mrb[0].mxu0 %v3456
        %v3492 = vpop.f32.mrb[0].mxu0
        %v3493 = vadd.f32 0.0, %v3492
        %v3494 = vpop.f32.mrb[0].mxu0
        %v3495 = vpop.f32.mrb[0].mxu0
        %v3496 = vadd.f32 0.0, %v3495
        %v3497 = vpop.f32.mrb[0].mxu0
        %3498 = vdwg.mxu0
        %v3500 = vsel %vm2894, %v3448, 0
        %3502 = vmatprep.subr.bf16.mxu0 0
        %3503 = vmatpush1.bf16.msra.mxu0 %v2887
        %3504 = vmatprep.subr.bf16.mxu0 0
        %3505 = vmatpush1.bf16.msra.mxu0 0
        %3506 = vmatprep.subr.bf16.mxu0 0
        %3507 = vmatpush1.bf16.msra.mxu0 0
        %3508 = vmatprep.subr.bf16.mxu0 0
        %3509 = vmatpush1.bf16.msra.mxu0 0
        %3510 = vmatprep.subr.bf16.mxu0 0
        %3511 = vmatpush1.bf16.msra.mxu0 0
        %3512 = vmatprep.subr.bf16.mxu0 0
        %3513 = vmatpush1.bf16.msra.mxu0 0
        %3514 = vmatprep.subr.bf16.mxu0 0
        %3515 = vmatpush1.bf16.msra.mxu0 0
        %3516 = vmatprep.subr.bf16.mxu0 0
        %3517 = vmatpush1.bf16.msra.mxu0 0
        %3518 = vmatprep.subr.bf16.mxu0 0
        %3519 = vmatpush1.bf16.msra.mxu0 0
        %3520 = vmatprep.subr.bf16.mxu0 0
        %3521 = vmatpush1.bf16.msra.mxu0 0
        %3522 = vmatprep.subr.bf16.mxu0 0
        %3523 = vmatpush1.bf16.msra.mxu0 0
        %3524 = vmatprep.subr.bf16.mxu0 0
        %3525 = vmatpush1.bf16.msra.mxu0 0
        %3526 = vmatprep.subr.bf16.mxu0 0
        %3527 = vmatpush1.bf16.msra.mxu0 0
        %3528 = vmatprep.subr.bf16.mxu0 0
        %3529 = vmatpush1.bf16.msra.mxu0 0
        %3530 = vmatprep.subr.bf16.mxu0 0
        %3531 = vmatpush1.bf16.msra.mxu0 0
        %3532 = vmatprep.subr.bf16.mxu0 0
        %3533 = vmatpush1.bf16.msra.mxu0 0
        %3534 = vmatprep.mubr.bf16.mxu0 0
        %3535 = vmatmul.mubr.bf16.gmra.mrb[0].mxu0 %v3500
        %v3536 = vpop.f32.mrb[0].mxu0
        %v3537 = vadd.f32 0.0, %v3536
        %v3538 = vpop.f32.mrb[0].mxu0
        %v3539 = vpop.f32.mrb[0].mxu0
        %v3540 = vadd.f32 0.0, %v3539
        %v3541 = vpop.f32.mrb[0].mxu0
        %3542 = vdwg.mxu0
        %v3544 = vsel %vm2894, %v3449, 0
        %3546 = vmatprep.subr.bf16.mxu0 0
        %3547 = vmatpush1.bf16.msra.mxu0 %v2888
        %3548 = vmatprep.subr.bf16.mxu0 0
        %3549 = vmatpush1.bf16.msra.mxu0 0
        %3550 = vmatprep.subr.bf16.mxu0 0
        %3551 = vmatpush1.bf16.msra.mxu0 0
        %3552 = vmatprep.subr.bf16.mxu0 0
        %3553 = vmatpush1.bf16.msra.mxu0 0
        %3554 = vmatprep.subr.bf16.mxu0 0
        %3555 = vmatpush1.bf16.msra.mxu0 0
        %3556 = vmatprep.subr.bf16.mxu0 0
        %3557 = vmatpush1.bf16.msra.mxu0 0
        %3558 = vmatprep.subr.bf16.mxu0 0
        %3559 = vmatpush1.bf16.msra.mxu0 0
        %3560 = vmatprep.subr.bf16.mxu0 0
        %3561 = vmatpush1.bf16.msra.mxu0 0
        %3562 = vmatprep.subr.bf16.mxu0 0
        %3563 = vmatpush1.bf16.msra.mxu0 0
        %3564 = vmatprep.subr.bf16.mxu0 0
        %3565 = vmatpush1.bf16.msra.mxu0 0
        %3566 = vmatprep.subr.bf16.mxu0 0
        %3567 = vmatpush1.bf16.msra.mxu0 0
        %3568 = vmatprep.subr.bf16.mxu0 0
        %3569 = vmatpush1.bf16.msra.mxu0 0
        %3570 = vmatprep.subr.bf16.mxu0 0
        %3571 = vmatpush1.bf16.msra.mxu0 0
        %3572 = vmatprep.subr.bf16.mxu0 0
        %3573 = vmatpush1.bf16.msra.mxu0 0
        %3574 = vmatprep.subr.bf16.mxu0 0
        %3575 = vmatpush1.bf16.msra.mxu0 0
        %3576 = vmatprep.subr.bf16.mxu0 0
        %3577 = vmatpush1.bf16.msra.mxu0 0
        %3578 = vmatprep.mubr.bf16.mxu0 0
        %3579 = vmatmul.mubr.bf16.gmra.mrb[0].mxu0 %v3544
        %v3580 = vpop.f32.mrb[0].mxu0
        %v3581 = vadd.f32 0.0, %v3580
        %v3582 = vpop.f32.mrb[0].mxu0
        %v3583 = vpop.f32.mrb[0].mxu0
        %v3584 = vadd.f32 0.0, %v3583
        %v3585 = vpop.f32.mrb[0].mxu0
        %3586 = vdwg.mxu0
        %v3588 = vsel %vm2894, %v3450, 0
        %3590 = vmatprep.subr.bf16.mxu0 0
        %3591 = vmatpush1.bf16.msra.mxu0 %v2889
        %3592 = vmatprep.subr.bf16.mxu0 0
        %3593 = vmatpush1.bf16.msra.mxu0 0
        %3594 = vmatprep.subr.bf16.mxu0 0
        %3595 = vmatpush1.bf16.msra.mxu0 0
        %3596 = vmatprep.subr.bf16.mxu0 0
        %3597 = vmatpush1.bf16.msra.mxu0 0
        %3598 = vmatprep.subr.bf16.mxu0 0
        %3599 = vmatpush1.bf16.msra.mxu0 0
        %3600 = vmatprep.subr.bf16.mxu0 0
        %3601 = vmatpush1.bf16.msra.mxu0 0
        %3602 = vmatprep.subr.bf16.mxu0 0
        %3603 = vmatpush1.bf16.msra.mxu0 0
        %3604 = vmatprep.subr.bf16.mxu0 0
        %3605 = vmatpush1.bf16.msra.mxu0 0
        %3606 = vmatprep.subr.bf16.mxu0 0
        %3607 = vmatpush1.bf16.msra.mxu0 0
        %3608 = vmatprep.subr.bf16.mxu0 0
        %3609 = vmatpush1.bf16.msra.mxu0 0
        %3610 = vmatprep.subr.bf16.mxu0 0
        %3611 = vmatpush1.bf16.msra.mxu0 0
        %3612 = vmatprep.subr.bf16.mxu0 0
        %3613 = vmatpush1.bf16.msra.mxu0 0
        %3614 = vmatprep.subr.bf16.mxu0 0
        %3615 = vmatpush1.bf16.msra.mxu0 0
        %3616 = vmatprep.subr.bf16.mxu0 0
        %3617 = vmatpush1.bf16.msra.mxu0 0
        %3618 = vmatprep.subr.bf16.mxu0 0
        %3619 = vmatpush1.bf16.msra.mxu0 0
        %3620 = vmatprep.subr.bf16.mxu0 0
        %3621 = vmatpush1.bf16.msra.mxu0 0
        %3622 = vmatprep.mubr.bf16.mxu0 0
        %3623 = vmatmul.mubr.bf16.gmra.mrb[0].mxu0 %v3588
        %v3624 = vpop.f32.mrb[0].mxu0
        %v3625 = vadd.f32 0.0, %v3624
        %v3626 = vpop.f32.mrb[0].mxu0
        %v3627 = vpop.f32.mrb[0].mxu0
        %v3628 = vadd.f32 0.0, %v3627
        %v3629 = vpop.f32.mrb[0].mxu0
        %3630 = vdwg.mxu0
        %v3632 = vsel %vm2894, %v3451, 0
        %3634 = vmatprep.subr.bf16.mxu0 0
        %3635 = vmatpush1.bf16.msra.mxu0 %v2890
        %3636 = vmatprep.subr.bf16.mxu0 0
        %3637 = vmatpush1.bf16.msra.mxu0 0
        %3638 = vmatprep.subr.bf16.mxu0 0
        %3639 = vmatpush1.bf16.msra.mxu0 0
        %3640 = vmatprep.subr.bf16.mxu0 0
        %3641 = vmatpush1.bf16.msra.mxu0 0
        %3642 = vmatprep.subr.bf16.mxu0 0
        %3643 = vmatpush1.bf16.msra.mxu0 0
        %3644 = vmatprep.subr.bf16.mxu0 0
        %3645 = vmatpush1.bf16.msra.mxu0 0
        %3646 = vmatprep.subr.bf16.mxu0 0
        %3647 = vmatpush1.bf16.msra.mxu0 0
        %3648 = vmatprep.subr.bf16.mxu0 0
        %3649 = vmatpush1.bf16.msra.mxu0 0
        %3650 = vmatprep.subr.bf16.mxu0 0
        %3651 = vmatpush1.bf16.msra.mxu0 0
        %3652 = vmatprep.subr.bf16.mxu0 0
        %3653 = vmatpush1.bf16.msra.mxu0 0
        %3654 = vmatprep.subr.bf16.mxu0 0
        %3655 = vmatpush1.bf16.msra.mxu0 0
        %3656 = vmatprep.subr.bf16.mxu0 0
        %3657 = vmatpush1.bf16.msra.mxu0 0
        %3658 = vmatprep.subr.bf16.mxu0 0
        %3659 = vmatpush1.bf16.msra.mxu0 0
        %3660 = vmatprep.subr.bf16.mxu0 0
        %3661 = vmatpush1.bf16.msra.mxu0 0
        %3662 = vmatprep.subr.bf16.mxu0 0
        %3663 = vmatpush1.bf16.msra.mxu0 0
        %3664 = vmatprep.subr.bf16.mxu0 0
        %3665 = vmatpush1.bf16.msra.mxu0 0
        %3666 = vmatprep.mubr.bf16.mxu0 0
        %3667 = vmatmul.mubr.bf16.gmra.mrb[0].mxu0 %v3632
        %v3668 = vpop.f32.mrb[0].mxu0
        %v3669 = vadd.f32 0.0, %v3668
        %v3670 = vpop.f32.mrb[0].mxu0
        %v3671 = vpop.f32.mrb[0].mxu0
        %v3672 = vadd.f32 0.0, %v3671
        %v3673 = vpop.f32.mrb[0].mxu0
        %3674 = vdwg.mxu0
        %v3676 = vsel %vm2894, %v3452, 0
        %3678 = vmatprep.subr.bf16.mxu0 0
        %3679 = vmatpush1.bf16.msra.mxu0 %v2891
        %3680 = vmatprep.subr.bf16.mxu0 0
        %3681 = vmatpush1.bf16.msra.mxu0 0
        %3682 = vmatprep.subr.bf16.mxu0 0
        %3683 = vmatpush1.bf16.msra.mxu0 0
        %3684 = vmatprep.subr.bf16.mxu0 0
        %3685 = vmatpush1.bf16.msra.mxu0 0
        %3686 = vmatprep.subr.bf16.mxu0 0
        %3687 = vmatpush1.bf16.msra.mxu0 0
        %3688 = vmatprep.subr.bf16.mxu0 0
        %3689 = vmatpush1.bf16.msra.mxu0 0
        %3690 = vmatprep.subr.bf16.mxu0 0
        %3691 = vmatpush1.bf16.msra.mxu0 0
        %3692 = vmatprep.subr.bf16.mxu0 0
        %3693 = vmatpush1.bf16.msra.mxu0 0
        %3694 = vmatprep.subr.bf16.mxu0 0
        %3695 = vmatpush1.bf16.msra.mxu0 0
        %3696 = vmatprep.subr.bf16.mxu0 0
        %3697 = vmatpush1.bf16.msra.mxu0 0
        %3698 = vmatprep.subr.bf16.mxu0 0
        %3699 = vmatpush1.bf16.msra.mxu0 0
        %3700 = vmatprep.subr.bf16.mxu0 0
        %3701 = vmatpush1.bf16.msra.mxu0 0
        %3702 = vmatprep.subr.bf16.mxu0 0
        %3703 = vmatpush1.bf16.msra.mxu0 0
        %3704 = vmatprep.subr.bf16.mxu0 0
        %3705 = vmatpush1.bf16.msra.mxu0 0
        %3706 = vmatprep.subr.bf16.mxu0 0
        %3707 = vmatpush1.bf16.msra.mxu0 0
        %3708 = vmatprep.subr.bf16.mxu0 0
        %3709 = vmatpush1.bf16.msra.mxu0 0
        %3710 = vmatprep.mubr.bf16.mxu0 0
        %3711 = vmatmul.mubr.bf16.gmra.mrb[0].mxu0 %v3676
        %v3712 = vpop.f32.mrb[0].mxu0
        %v3713 = vadd.f32 0.0, %v3712
        %v3714 = vpop.f32.mrb[0].mxu0
        %v3715 = vpop.f32.mrb[0].mxu0
        %v3716 = vadd.f32 0.0, %v3715
        %v3717 = vpop.f32.mrb[0].mxu0
        %3718 = vdwg.mxu0
        %v3720 = vsel %vm2894, %v3453, 0
        %3722 = vmatprep.subr.bf16.mxu0 0
        %3723 = vmatpush1.bf16.msra.mxu0 %v2892
        %3724 = vmatprep.subr.bf16.mxu0 0
        %3725 = vmatpush1.bf16.msra.mxu0 0
        %3726 = vmatprep.subr.bf16.mxu0 0
        %3727 = vmatpush1.bf16.msra.mxu0 0
        %3728 = vmatprep.subr.bf16.mxu0 0
        %3729 = vmatpush1.bf16.msra.mxu0 0
        %3730 = vmatprep.subr.bf16.mxu0 0
        %3731 = vmatpush1.bf16.msra.mxu0 0
        %3732 = vmatprep.subr.bf16.mxu0 0
        %3733 = vmatpush1.bf16.msra.mxu0 0
        %3734 = vmatprep.subr.bf16.mxu0 0
        %3735 = vmatpush1.bf16.msra.mxu0 0
        %3736 = vmatprep.subr.bf16.mxu0 0
        %3737 = vmatpush1.bf16.msra.mxu0 0
        %3738 = vmatprep.subr.bf16.mxu0 0
        %3739 = vmatpush1.bf16.msra.mxu0 0
        %3740 = vmatprep.subr.bf16.mxu0 0
        %3741 = vmatpush1.bf16.msra.mxu0 0
        %3742 = vmatprep.subr.bf16.mxu0 0
        %3743 = vmatpush1.bf16.msra.mxu0 0
        %3744 = vmatprep.subr.bf16.mxu0 0
        %3745 = vmatpush1.bf16.msra.mxu0 0
        %3746 = vmatprep.subr.bf16.mxu0 0
        %3747 = vmatpush1.bf16.msra.mxu0 0
        %3748 = vmatprep.subr.bf16.mxu0 0
        %3749 = vmatpush1.bf16.msra.mxu0 0
        %3750 = vmatprep.subr.bf16.mxu0 0
        %3751 = vmatpush1.bf16.msra.mxu0 0
        %3752 = vmatprep.subr.bf16.mxu0 0
        %3753 = vmatpush1.bf16.msra.mxu0 0
        %3754 = vmatprep.mubr.bf16.mxu0 0
        %3755 = vmatmul.mubr.bf16.gmra.mrb[0].mxu0 %v3720
        %v3756 = vpop.f32.mrb[0].mxu0
        %v3757 = vadd.f32 0.0, %v3756
        %v3758 = vpop.f32.mrb[0].mxu0
        %v3759 = vpop.f32.mrb[0].mxu0
        %v3760 = vadd.f32 0.0, %v3759
        %v3761 = vpop.f32.mrb[0].mxu0
        %3762 = vdwg.mxu0
        %v3764 = vsel %vm2894, %v3454, 0
        %3766 = vmatprep.subr.bf16.mxu0 0
        %3767 = vmatpush1.bf16.msra.mxu0 %v2893
        %3768 = vmatprep.subr.bf16.mxu0 0
        %3769 = vmatpush1.bf16.msra.mxu0 0
        %3770 = vmatprep.subr.bf16.mxu0 0
        %3771 = vmatpush1.bf16.msra.mxu0 0
        %3772 = vmatprep.subr.bf16.mxu0 0
        %3773 = vmatpush1.bf16.msra.mxu0 0
        %3774 = vmatprep.subr.bf16.mxu0 0
        %3775 = vmatpush1.bf16.msra.mxu0 0
        %3776 = vmatprep.subr.bf16.mxu0 0
        %3777 = vmatpush1.bf16.msra.mxu0 0
        %3778 = vmatprep.subr.bf16.mxu0 0
        %3779 = vmatpush1.bf16.msra.mxu0 0
        %3780 = vmatprep.subr.bf16.mxu0 0
        %3781 = vmatpush1.bf16.msra.mxu0 0
        %3782 = vmatprep.subr.bf16.mxu0 0
        %3783 = vmatpush1.bf16.msra.mxu0 0
        %3784 = vmatprep.subr.bf16.mxu0 0
        %3785 = vmatpush1.bf16.msra.mxu0 0
        %3786 = vmatprep.subr.bf16.mxu0 0
        %3787 = vmatpush1.bf16.msra.mxu0 0
        %3788 = vmatprep.subr.bf16.mxu0 0
        %3789 = vmatpush1.bf16.msra.mxu0 0
        %3790 = vmatprep.subr.bf16.mxu0 0
        %3791 = vmatpush1.bf16.msra.mxu0 0
        %3792 = vmatprep.subr.bf16.mxu0 0
        %3793 = vmatpush1.bf16.msra.mxu0 0
        %3794 = vmatprep.subr.bf16.mxu0 0
        %3795 = vmatpush1.bf16.msra.mxu0 0
        %3796 = vmatprep.subr.bf16.mxu0 0
        %3797 = vmatpush1.bf16.msra.mxu0 0
        %3798 = vmatprep.mubr.bf16.mxu0 0
        %3799 = vmatmul.mubr.bf16.gmra.mrb[0].mxu0 %v3764
        %v3800 = vpop.f32.mrb[0].mxu0
        %v3801 = vadd.f32 0.0, %v3800
        %v3802 = vpop.f32.mrb[0].mxu0
        %v3803 = vpop.f32.mrb[0].mxu0
        %v3804 = vadd.f32 0.0, %v3803
        %v3805 = vpop.f32.mrb[0].mxu0
        %3806 = vdwg.mxu0
        %v3807 = vcombine.low %v3493, %v3581
        %v3808 = vcombine.high %v3493, %v3581
        %v3810 = vunpack.c.l.s4 1983009808
        %v3811 = vunpack.c.0.s8 %v3810
        %v3812 = vlaneseq
        %v3813 = vshrl.u32 %v3812, 7
        %v3814 = vsub.s32 %v3811, %v3813
        %v3815 = vrot.slane %v3807, %v3814
        %v3817 = vunpack.c.l.s4 1983009808
        %v3818 = vunpack.c.0.s8 %v3817
        %v3819 = vlaneseq
        %v3820 = vshrl.u32 %v3819, 7
        %v3821 = vsub.s32 %v3818, %v3820
        %v3822 = vrot.slane %v3808, %v3821
        %v3823 = vcombine.low %v3537, %v3625
        %v3824 = vcombine.high %v3537, %v3625
        %v3826 = vunpack.c.l.s4 1983009808
        %v3827 = vunpack.c.0.s8 %v3826
        %v3828 = vlaneseq
        %v3829 = vshrl.u32 %v3828, 7
        %v3830 = vsub.s32 %v3827, %v3829
        %v3831 = vrot.slane %v3823, %v3830
        %v3833 = vunpack.c.l.s4 1983009808
        %v3834 = vunpack.c.0.s8 %v3833
        %v3835 = vlaneseq
        %v3836 = vshrl.u32 %v3835, 7
        %v3837 = vsub.s32 %v3834, %v3836
        %v3838 = vrot.slane %v3824, %v3837
        %v3839 = vcombine.low %v3669, %v3757
        %v3840 = vcombine.high %v3669, %v3757
        %v3842 = vunpack.c.l.s4 1983009808
        %v3843 = vunpack.c.0.s8 %v3842
        %v3844 = vlaneseq
        %v3845 = vshrl.u32 %v3844, 7
        %v3846 = vsub.s32 %v3843, %v3845
        %v3847 = vrot.slane %v3839, %v3846
        %v3849 = vunpack.c.l.s4 1983009808
        %v3850 = vunpack.c.0.s8 %v3849
        %v3851 = vlaneseq
        %v3852 = vshrl.u32 %v3851, 7
        %v3853 = vsub.s32 %v3850, %v3852
        %v3854 = vrot.slane %v3840, %v3853
        %v3855 = vcombine.low %v3713, %v3801
        %v3856 = vcombine.high %v3713, %v3801
        %v3858 = vunpack.c.l.s4 1983009808
        %v3859 = vunpack.c.0.s8 %v3858
        %v3860 = vlaneseq
        %v3861 = vshrl.u32 %v3860, 7
        %v3862 = vsub.s32 %v3859, %v3861
        %v3863 = vrot.slane %v3855, %v3862
        %v3865 = vunpack.c.l.s4 1983009808
        %v3866 = vunpack.c.0.s8 %v3865
        %v3867 = vlaneseq
        %v3868 = vshrl.u32 %v3867, 7
        %v3869 = vsub.s32 %v3866, %v3868
        %v3870 = vrot.slane %v3856, %v3869
        %v3871 = vcombine.low %v3815, %v3831
        %v3872 = vcombine.high %v3815, %v3831
        %v3874 = vunpack.c.l.s4 1934713408
        %v3875 = vunpack.c.0.s8 %v3874
        %v3876 = vlaneseq
        %v3877 = vshrl.u32 %v3876, 7
        %v3878 = vsub.s32 %v3875, %v3877
        %v3879 = vrot.slane %v3871, %v3878
        %v3881 = vunpack.c.l.s4 1934713408
        %v3882 = vunpack.c.0.s8 %v3881
        %v3883 = vlaneseq
        %v3884 = vshrl.u32 %v3883, 7
        %v3885 = vsub.s32 %v3882, %v3884
        %v3886 = vrot.slane %v3872, %v3885
        %v3887 = vcombine.low %v3822, %v3838
        %v3888 = vcombine.high %v3822, %v3838
        %v3890 = vunpack.c.l.s4 1934713408
        %v3891 = vunpack.c.0.s8 %v3890
        %v3892 = vlaneseq
        %v3893 = vshrl.u32 %v3892, 7
        %v3894 = vsub.s32 %v3891, %v3893
        %v3895 = vrot.slane %v3887, %v3894
        %v3897 = vunpack.c.l.s4 1934713408
        %v3898 = vunpack.c.0.s8 %v3897
        %v3899 = vlaneseq
        %v3900 = vshrl.u32 %v3899, 7
        %v3901 = vsub.s32 %v3898, %v3900
        %v3902 = vrot.slane %v3888, %v3901
        %v3903 = vcombine.low %v3847, %v3863
        %v3904 = vcombine.high %v3847, %v3863
        %v3906 = vunpack.c.l.s4 1934713408
        %v3907 = vunpack.c.0.s8 %v3906
        %v3908 = vlaneseq
        %v3909 = vshrl.u32 %v3908, 7
        %v3910 = vsub.s32 %v3907, %v3909
        %v3911 = vrot.slane %v3903, %v3910
        %v3913 = vunpack.c.l.s4 1934713408
        %v3914 = vunpack.c.0.s8 %v3913
        %v3915 = vlaneseq
        %v3916 = vshrl.u32 %v3915, 7
        %v3917 = vsub.s32 %v3914, %v3916
        %v3918 = vrot.slane %v3904, %v3917
        %v3919 = vcombine.low %v3854, %v3870
        %v3920 = vcombine.high %v3854, %v3870
        %v3922 = vunpack.c.l.s4 1934713408
        %v3923 = vunpack.c.0.s8 %v3922
        %v3924 = vlaneseq
        %v3925 = vshrl.u32 %v3924, 7
        %v3926 = vsub.s32 %v3923, %v3925
        %v3927 = vrot.slane %v3919, %v3926
        %v3929 = vunpack.c.l.s4 1934713408
        %v3930 = vunpack.c.0.s8 %v3929
        %v3931 = vlaneseq
        %v3932 = vshrl.u32 %v3931, 7
        %v3933 = vsub.s32 %v3930, %v3932
        %v3934 = vrot.slane %v3920, %v3933
        %v3935 = vcombine.low %v3879, %v3911
        %v3936 = vcombine.high %v3879, %v3911
        %v3937 = vcombine.low %v3886, %v3918
        %v3938 = vcombine.high %v3886, %v3918
        %v3939 = vcombine.low %v3895, %v3927
        %v3940 = vcombine.high %v3895, %v3927
        %v3941 = vcombine.low %v3902, %v3934
        %v3942 = vcombine.high %v3902, %v3934
        %v3943 = vcombine.low %v3496, %v3584
        %v3944 = vcombine.high %v3496, %v3584
        %v3946 = vunpack.c.l.s4 1983009808
        %v3947 = vunpack.c.0.s8 %v3946
        %v3948 = vlaneseq
        %v3949 = vshrl.u32 %v3948, 7
        %v3950 = vsub.s32 %v3947, %v3949
        %v3951 = vrot.slane %v3943, %v3950
        %v3953 = vunpack.c.l.s4 1983009808
        %v3954 = vunpack.c.0.s8 %v3953
        %v3955 = vlaneseq
        %v3956 = vshrl.u32 %v3955, 7
        %v3957 = vsub.s32 %v3954, %v3956
        %v3958 = vrot.slane %v3944, %v3957
        %v3959 = vcombine.low %v3540, %v3628
        %v3960 = vcombine.high %v3540, %v3628
        %v3962 = vunpack.c.l.s4 1983009808
        %v3963 = vunpack.c.0.s8 %v3962
        %v3964 = vlaneseq
        %v3965 = vshrl.u32 %v3964, 7
        %v3966 = vsub.s32 %v3963, %v3965
        %v3967 = vrot.slane %v3959, %v3966
        %v3969 = vunpack.c.l.s4 1983009808
        %v3970 = vunpack.c.0.s8 %v3969
        %v3971 = vlaneseq
        %v3972 = vshrl.u32 %v3971, 7
        %v3973 = vsub.s32 %v3970, %v3972
        %v3974 = vrot.slane %v3960, %v3973
        %v3975 = vcombine.low %v3672, %v3760
        %v3976 = vcombine.high %v3672, %v3760
        %v3978 = vunpack.c.l.s4 1983009808
        %v3979 = vunpack.c.0.s8 %v3978
        %v3980 = vlaneseq
        %v3981 = vshrl.u32 %v3980, 7
        %v3982 = vsub.s32 %v3979, %v3981
        %v3983 = vrot.slane %v3975, %v3982
        %v3985 = vunpack.c.l.s4 1983009808
        %v3986 = vunpack.c.0.s8 %v3985
        %v3987 = vlaneseq
        %v3988 = vshrl.u32 %v3987, 7
        %v3989 = vsub.s32 %v3986, %v3988
        %v3990 = vrot.slane %v3976, %v3989
        %v3991 = vcombine.low %v3716, %v3804
        %v3992 = vcombine.high %v3716, %v3804
        %v3994 = vunpack.c.l.s4 1983009808
        %v3995 = vunpack.c.0.s8 %v3994
        %v3996 = vlaneseq
        %v3997 = vshrl.u32 %v3996, 7
        %v3998 = vsub.s32 %v3995, %v3997
        %v3999 = vrot.slane %v3991, %v3998
        %v4001 = vunpack.c.l.s4 1983009808
        %v4002 = vunpack.c.0.s8 %v4001
        %v4003 = vlaneseq
        %v4004 = vshrl.u32 %v4003, 7
        %v4005 = vsub.s32 %v4002, %v4004
        %v4006 = vrot.slane %v3992, %v4005
        %v4007 = vcombine.low %v3951, %v3967
        %v4008 = vcombine.high %v3951, %v3967
        %v4010 = vunpack.c.l.s4 1934713408
        %v4011 = vunpack.c.0.s8 %v4010
        %v4012 = vlaneseq
        %v4013 = vshrl.u32 %v4012, 7
        %v4014 = vsub.s32 %v4011, %v4013
        %v4015 = vrot.slane %v4007, %v4014
        %v4017 = vunpack.c.l.s4 1934713408
        %v4018 = vunpack.c.0.s8 %v4017
        %v4019 = vlaneseq
        %v4020 = vshrl.u32 %v4019, 7
        %v4021 = vsub.s32 %v4018, %v4020
        %v4022 = vrot.slane %v4008, %v4021
        %v4023 = vcombine.low %v3958, %v3974
        %v4024 = vcombine.high %v3958, %v3974
        %v4026 = vunpack.c.l.s4 1934713408
        %v4027 = vunpack.c.0.s8 %v4026
        %v4028 = vlaneseq
        %v4029 = vshrl.u32 %v4028, 7
        %v4030 = vsub.s32 %v4027, %v4029
        %v4031 = vrot.slane %v4023, %v4030
        %v4033 = vunpack.c.l.s4 1934713408
        %v4034 = vunpack.c.0.s8 %v4033
        %v4035 = vlaneseq
        %v4036 = vshrl.u32 %v4035, 7
        %v4037 = vsub.s32 %v4034, %v4036
        %v4038 = vrot.slane %v4024, %v4037
        %v4039 = vcombine.low %v3983, %v3999
        %v4040 = vcombine.high %v3983, %v3999
        %v4042 = vunpack.c.l.s4 1934713408
        %v4043 = vunpack.c.0.s8 %v4042
        %v4044 = vlaneseq
        %v4045 = vshrl.u32 %v4044, 7
        %v4046 = vsub.s32 %v4043, %v4045
        %v4047 = vrot.slane %v4039, %v4046
        %v4049 = vunpack.c.l.s4 1934713408
        %v4050 = vunpack.c.0.s8 %v4049
        %v4051 = vlaneseq
        %v4052 = vshrl.u32 %v4051, 7
        %v4053 = vsub.s32 %v4050, %v4052
        %v4054 = vrot.slane %v4040, %v4053
        %v4055 = vcombine.low %v3990, %v4006
        %v4056 = vcombine.high %v3990, %v4006
        %v4058 = vunpack.c.l.s4 1934713408
        %v4059 = vunpack.c.0.s8 %v4058
        %v4060 = vlaneseq
        %v4061 = vshrl.u32 %v4060, 7
        %v4062 = vsub.s32 %v4059, %v4061
        %v4063 = vrot.slane %v4055, %v4062
        %v4065 = vunpack.c.l.s4 1934713408
        %v4066 = vunpack.c.0.s8 %v4065
        %v4067 = vlaneseq
        %v4068 = vshrl.u32 %v4067, 7
        %v4069 = vsub.s32 %v4066, %v4068
        %v4070 = vrot.slane %v4056, %v4069
        %v4071 = vcombine.low %v4015, %v4047
        %v4072 = vcombine.high %v4015, %v4047
        %v4073 = vcombine.low %v4022, %v4054
        %v4074 = vcombine.high %v4022, %v4054
        %v4075 = vcombine.low %v4031, %v4063
        %v4076 = vcombine.high %v4031, %v4063
        %v4077 = vcombine.low %v4038, %v4070
        %v4078 = vcombine.high %v4038, %v4070
        %v4079 = vcombine.low %v3935, %v3937
        %v4080 = vcombine.high %v3935, %v3937
        %v4082 = vunpack.c.l.s4 1983009808
        %v4083 = vunpack.c.0.s8 %v4082
        %v4084 = vlaneseq
        %v4085 = vshrl.u32 %v4084, 7
        %v4086 = vsub.s32 %v4083, %v4085
        %v4087 = vrot.slane %v4079, %v4086
        %v4089 = vunpack.c.l.s4 1983009808
        %v4090 = vunpack.c.0.s8 %v4089
        %v4091 = vlaneseq
        %v4092 = vshrl.u32 %v4091, 7
        %v4093 = vsub.s32 %v4090, %v4092
        %v4094 = vrot.slane %v4080, %v4093
        %v4095 = vcombine.low %v3936, %v3938
        %v4096 = vcombine.high %v3936, %v3938
        %v4098 = vunpack.c.l.s4 1983009808
        %v4099 = vunpack.c.0.s8 %v4098
        %v4100 = vlaneseq
        %v4101 = vshrl.u32 %v4100, 7
        %v4102 = vsub.s32 %v4099, %v4101
        %v4103 = vrot.slane %v4095, %v4102
        %v4105 = vunpack.c.l.s4 1983009808
        %v4106 = vunpack.c.0.s8 %v4105
        %v4107 = vlaneseq
        %v4108 = vshrl.u32 %v4107, 7
        %v4109 = vsub.s32 %v4106, %v4108
        %v4110 = vrot.slane %v4096, %v4109
        %v4111 = vcombine.low %v3939, %v3941
        %v4112 = vcombine.high %v3939, %v3941
        %v4114 = vunpack.c.l.s4 1983009808
        %v4115 = vunpack.c.0.s8 %v4114
        %v4116 = vlaneseq
        %v4117 = vshrl.u32 %v4116, 7
        %v4118 = vsub.s32 %v4115, %v4117
        %v4119 = vrot.slane %v4111, %v4118
        %v4121 = vunpack.c.l.s4 1983009808
        %v4122 = vunpack.c.0.s8 %v4121
        %v4123 = vlaneseq
        %v4124 = vshrl.u32 %v4123, 7
        %v4125 = vsub.s32 %v4122, %v4124
        %v4126 = vrot.slane %v4112, %v4125
        %v4127 = vcombine.low %v3940, %v3942
        %v4128 = vcombine.high %v3940, %v3942
        %v4130 = vunpack.c.l.s4 1983009808
        %v4131 = vunpack.c.0.s8 %v4130
        %v4132 = vlaneseq
        %v4133 = vshrl.u32 %v4132, 7
        %v4134 = vsub.s32 %v4131, %v4133
        %v4135 = vrot.slane %v4127, %v4134
        %v4137 = vunpack.c.l.s4 1983009808
        %v4138 = vunpack.c.0.s8 %v4137
        %v4139 = vlaneseq
        %v4140 = vshrl.u32 %v4139, 7
        %v4141 = vsub.s32 %v4138, %v4140
        %v4142 = vrot.slane %v4128, %v4141
        %v4143 = vcombine.low %v4087, %v4103
        %v4144 = vcombine.high %v4087, %v4103
        %v4146 = vunpack.c.l.s4 1934713408
        %v4147 = vunpack.c.0.s8 %v4146
        %v4148 = vlaneseq
        %v4149 = vshrl.u32 %v4148, 7
        %v4150 = vsub.s32 %v4147, %v4149
        %v4151 = vrot.slane %v4143, %v4150
        %v4153 = vunpack.c.l.s4 1934713408
        %v4154 = vunpack.c.0.s8 %v4153
        %v4155 = vlaneseq
        %v4156 = vshrl.u32 %v4155, 7
        %v4157 = vsub.s32 %v4154, %v4156
        %v4158 = vrot.slane %v4144, %v4157
        %v4159 = vcombine.low %v4094, %v4110
        %v4160 = vcombine.high %v4094, %v4110
        %v4162 = vunpack.c.l.s4 1934713408
        %v4163 = vunpack.c.0.s8 %v4162
        %v4164 = vlaneseq
        %v4165 = vshrl.u32 %v4164, 7
        %v4166 = vsub.s32 %v4163, %v4165
        %v4167 = vrot.slane %v4159, %v4166
        %v4169 = vunpack.c.l.s4 1934713408
        %v4170 = vunpack.c.0.s8 %v4169
        %v4171 = vlaneseq
        %v4172 = vshrl.u32 %v4171, 7
        %v4173 = vsub.s32 %v4170, %v4172
        %v4174 = vrot.slane %v4160, %v4173
        %v4175 = vcombine.low %v4119, %v4135
        %v4176 = vcombine.high %v4119, %v4135
        %v4178 = vunpack.c.l.s4 1934713408
        %v4179 = vunpack.c.0.s8 %v4178
        %v4180 = vlaneseq
        %v4181 = vshrl.u32 %v4180, 7
        %v4182 = vsub.s32 %v4179, %v4181
        %v4183 = vrot.slane %v4175, %v4182
        %v4185 = vunpack.c.l.s4 1934713408
        %v4186 = vunpack.c.0.s8 %v4185
        %v4187 = vlaneseq
        %v4188 = vshrl.u32 %v4187, 7
        %v4189 = vsub.s32 %v4186, %v4188
        %v4190 = vrot.slane %v4176, %v4189
        %v4191 = vcombine.low %v4126, %v4142
        %v4192 = vcombine.high %v4126, %v4142
        %v4194 = vunpack.c.l.s4 1934713408
        %v4195 = vunpack.c.0.s8 %v4194
        %v4196 = vlaneseq
        %v4197 = vshrl.u32 %v4196, 7
        %v4198 = vsub.s32 %v4195, %v4197
        %v4199 = vrot.slane %v4191, %v4198
        %v4201 = vunpack.c.l.s4 1934713408
        %v4202 = vunpack.c.0.s8 %v4201
        %v4203 = vlaneseq
        %v4204 = vshrl.u32 %v4203, 7
        %v4205 = vsub.s32 %v4202, %v4204
        %v4206 = vrot.slane %v4192, %v4205
        %v4207 = vcombine.low %v4151, %v4183
        %v4208 = vcombine.high %v4151, %v4183
        %v4209 = vcombine.low %v4158, %v4190
        %v4210 = vcombine.high %v4158, %v4190
        %v4211 = vcombine.low %v4167, %v4199
        %v4212 = vcombine.high %v4167, %v4199
        %v4213 = vcombine.low %v4174, %v4206
        %v4214 = vcombine.high %v4174, %v4206
        %v4215 = vcombine.low %v4071, %v4073
        %v4216 = vcombine.high %v4071, %v4073
        %v4218 = vunpack.c.l.s4 1983009808
        %v4219 = vunpack.c.0.s8 %v4218
        %v4220 = vlaneseq
        %v4221 = vshrl.u32 %v4220, 7
        %v4222 = vsub.s32 %v4219, %v4221
        %v4223 = vrot.slane %v4215, %v4222
        %v4225 = vunpack.c.l.s4 1983009808
        %v4226 = vunpack.c.0.s8 %v4225
        %v4227 = vlaneseq
        %v4228 = vshrl.u32 %v4227, 7
        %v4229 = vsub.s32 %v4226, %v4228
        %v4230 = vrot.slane %v4216, %v4229
        %v4231 = vcombine.low %v4072, %v4074
        %v4232 = vcombine.high %v4072, %v4074
        %v4234 = vunpack.c.l.s4 1983009808
        %v4235 = vunpack.c.0.s8 %v4234
        %v4236 = vlaneseq
        %v4237 = vshrl.u32 %v4236, 7
        %v4238 = vsub.s32 %v4235, %v4237
        %v4239 = vrot.slane %v4231, %v4238
        %v4241 = vunpack.c.l.s4 1983009808
        %v4242 = vunpack.c.0.s8 %v4241
        %v4243 = vlaneseq
        %v4244 = vshrl.u32 %v4243, 7
        %v4245 = vsub.s32 %v4242, %v4244
        %v4246 = vrot.slane %v4232, %v4245
        %v4247 = vcombine.low %v4075, %v4077
        %v4248 = vcombine.high %v4075, %v4077
        %v4250 = vunpack.c.l.s4 1983009808
        %v4251 = vunpack.c.0.s8 %v4250
        %v4252 = vlaneseq
        %v4253 = vshrl.u32 %v4252, 7
        %v4254 = vsub.s32 %v4251, %v4253
        %v4255 = vrot.slane %v4247, %v4254
        %v4257 = vunpack.c.l.s4 1983009808
        %v4258 = vunpack.c.0.s8 %v4257
        %v4259 = vlaneseq
        %v4260 = vshrl.u32 %v4259, 7
        %v4261 = vsub.s32 %v4258, %v4260
        %v4262 = vrot.slane %v4248, %v4261
        %v4263 = vcombine.low %v4076, %v4078
        %v4264 = vcombine.high %v4076, %v4078
        %v4266 = vunpack.c.l.s4 1983009808
        %v4267 = vunpack.c.0.s8 %v4266
        %v4268 = vlaneseq
        %v4269 = vshrl.u32 %v4268, 7
        %v4270 = vsub.s32 %v4267, %v4269
        %v4271 = vrot.slane %v4263, %v4270
        %v4273 = vunpack.c.l.s4 1983009808
        %v4274 = vunpack.c.0.s8 %v4273
        %v4275 = vlaneseq
        %v4276 = vshrl.u32 %v4275, 7
        %v4277 = vsub.s32 %v4274, %v4276
        %v4278 = vrot.slane %v4264, %v4277
        %v4279 = vcombine.low %v4223, %v4239
        %v4280 = vcombine.high %v4223, %v4239
        %v4282 = vunpack.c.l.s4 1934713408
        %v4283 = vunpack.c.0.s8 %v4282
        %v4284 = vlaneseq
        %v4285 = vshrl.u32 %v4284, 7
        %v4286 = vsub.s32 %v4283, %v4285
        %v4287 = vrot.slane %v4279, %v4286
        %v4289 = vunpack.c.l.s4 1934713408
        %v4290 = vunpack.c.0.s8 %v4289
        %v4291 = vlaneseq
        %v4292 = vshrl.u32 %v4291, 7
        %v4293 = vsub.s32 %v4290, %v4292
        %v4294 = vrot.slane %v4280, %v4293
        %v4295 = vcombine.low %v4230, %v4246
        %v4296 = vcombine.high %v4230, %v4246
        %v4298 = vunpack.c.l.s4 1934713408
        %v4299 = vunpack.c.0.s8 %v4298
        %v4300 = vlaneseq
        %v4301 = vshrl.u32 %v4300, 7
        %v4302 = vsub.s32 %v4299, %v4301
        %v4303 = vrot.slane %v4295, %v4302
        %v4305 = vunpack.c.l.s4 1934713408
        %v4306 = vunpack.c.0.s8 %v4305
        %v4307 = vlaneseq
        %v4308 = vshrl.u32 %v4307, 7
        %v4309 = vsub.s32 %v4306, %v4308
        %v4310 = vrot.slane %v4296, %v4309
        %v4311 = vcombine.low %v4255, %v4271
        %v4312 = vcombine.high %v4255, %v4271
        %v4314 = vunpack.c.l.s4 1934713408
        %v4315 = vunpack.c.0.s8 %v4314
        %v4316 = vlaneseq
        %v4317 = vshrl.u32 %v4316, 7
        %v4318 = vsub.s32 %v4315, %v4317
        %v4319 = vrot.slane %v4311, %v4318
        %v4321 = vunpack.c.l.s4 1934713408
        %v4322 = vunpack.c.0.s8 %v4321
        %v4323 = vlaneseq
        %v4324 = vshrl.u32 %v4323, 7
        %v4325 = vsub.s32 %v4322, %v4324
        %v4326 = vrot.slane %v4312, %v4325
        %v4327 = vcombine.low %v4262, %v4278
        %v4328 = vcombine.high %v4262, %v4278
        %v4330 = vunpack.c.l.s4 1934713408
        %v4331 = vunpack.c.0.s8 %v4330
        %v4332 = vlaneseq
        %v4333 = vshrl.u32 %v4332, 7
        %v4334 = vsub.s32 %v4331, %v4333
        %v4335 = vrot.slane %v4327, %v4334
        %v4337 = vunpack.c.l.s4 1934713408
        %v4338 = vunpack.c.0.s8 %v4337
        %v4339 = vlaneseq
        %v4340 = vshrl.u32 %v4339, 7
        %v4341 = vsub.s32 %v4338, %v4340
        %v4342 = vrot.slane %v4328, %v4341
        %v4343 = vcombine.low %v4287, %v4319
        %v4344 = vcombine.high %v4287, %v4319
        %v4345 = vcombine.low %v4294, %v4326
        %v4346 = vcombine.high %v4294, %v4326
        %v4347 = vcombine.low %v4303, %v4335
        %v4348 = vcombine.high %v4303, %v4335
        %v4349 = vcombine.low %v4310, %v4342
        %v4350 = vcombine.high %v4310, %v4342
        %4353 = vrot.lane.b32.xlu0 %v4208, 16
        %v4354 = vpop.permute.xlu0 %4353
        %4355 = vrot.lane.b32.xlu0 %v4344, 16
        %v4356 = vpop.permute.xlu0 %4355
        %4361 = vrot.lane.b32.xlu0 %v4209, 32
        %v4362 = vpop.permute.xlu0 %4361
        %4363 = vrot.lane.b32.xlu0 %v4345, 32
        %v4364 = vpop.permute.xlu0 %4363
        %4369 = vrot.lane.b32.xlu0 %v4210, 48
        %v4370 = vpop.permute.xlu0 %4369
        %4371 = vrot.lane.b32.xlu0 %v4346, 48
        %v4372 = vpop.permute.xlu0 %4371
        %4377 = vrot.lane.b32.xlu0 %v4211, 64
        %v4378 = vpop.permute.xlu0 %4377
        %4379 = vrot.lane.b32.xlu0 %v4347, 64
        %v4380 = vpop.permute.xlu0 %4379
        %4385 = vrot.lane.b32.xlu0 %v4212, 80
        %v4386 = vpop.permute.xlu0 %4385
        %4387 = vrot.lane.b32.xlu0 %v4348, 80
        %v4388 = vpop.permute.xlu0 %4387
        %4393 = vrot.lane.b32.xlu0 %v4213, 96
        %v4394 = vpop.permute.xlu0 %4393
        %4395 = vrot.lane.b32.xlu0 %v4349, 96
        %v4396 = vpop.permute.xlu0 %4395
        %4401 = vrot.lane.b32.xlu0 %v4214, 112
        %v4402 = vpop.permute.xlu0 %4401
        %4403 = vrot.lane.b32.xlu0 %v4350, 112
        %v4404 = vpop.permute.xlu0 %4403
        %v4407 = vsel %vm2894, %v4207, %v4354
        %v4408 = vsel %vm2894, %v4343, %v4356
        %vm4409 = vcmask 261120
        %v4410 = vsel %vm4409, %v4407, %v4362
        %v4411 = vsel %vm4409, %v4408, %v4364
        %vm4412 = vcmask 392192
        %v4413 = vsel %vm4412, %v4410, %v4370
        %v4414 = vsel %vm4412, %v4411, %v4372
        %vm4415 = vcmask 523264
        %v4416 = vsel %vm4415, %v4413, %v4378
        %v4417 = vsel %vm4415, %v4414, %v4380
        %vm4418 = vcmask 654336
        %v4419 = vsel %vm4418, %v4416, %v4386
        %v4420 = vsel %vm4418, %v4417, %v4388
        %vm4421 = vcmask 785408
        %v4422 = vsel %vm4421, %v4419, %v4394
        %v4423 = vsel %vm4421, %v4420, %v4396
        %vm4424 = vcmask 916480
        %v4425 = vsel %vm4424, %v4422, %v4402
        %v4426 = vsel %vm4424, %v4423, %v4404
        %4429 = vrot.lane.b32.xlu0 %v866, 112
        %v4430 = vpop.permute.xlu0 %4429
        %4431 = vrot.lane.b32.xlu0 %v869, 112
        %v4432 = vpop.permute.xlu0 %4431
        %4435 = vrot.lane.b32.xlu0 %v866, 96
        %v4436 = vpop.permute.xlu0 %4435
        %4437 = vrot.lane.b32.xlu0 %v869, 96
        %v4438 = vpop.permute.xlu0 %4437
        %4441 = vrot.lane.b32.xlu0 %v866, 80
        %v4442 = vpop.permute.xlu0 %4441
        %4443 = vrot.lane.b32.xlu0 %v869, 80
        %v4444 = vpop.permute.xlu0 %4443
        %4447 = vrot.lane.b32.xlu0 %v866, 64
        %v4448 = vpop.permute.xlu0 %4447
        %4449 = vrot.lane.b32.xlu0 %v869, 64
        %v4450 = vpop.permute.xlu0 %4449
        %4453 = vrot.lane.b32.xlu0 %v866, 48
        %v4454 = vpop.permute.xlu0 %4453
        %4455 = vrot.lane.b32.xlu0 %v869, 48
        %v4456 = vpop.permute.xlu0 %4455
        %4459 = vrot.lane.b32.xlu0 %v866, 32
        %v4460 = vpop.permute.xlu0 %4459
        %4461 = vrot.lane.b32.xlu0 %v869, 32
        %v4462 = vpop.permute.xlu0 %4461
        %4465 = vrot.lane.b32.xlu0 %v866, 16
        %v4466 = vpop.permute.xlu0 %4465
        %4467 = vrot.lane.b32.xlu0 %v869, 16
        %v4468 = vpop.permute.xlu0 %4467
        %v4471 = vcombine.low %v866, %v4436
        %v4472 = vcombine.high %v866, %v4436
        %v4474 = vunpack.c.l.s4 1983009808
        %v4475 = vunpack.c.0.s8 %v4474
        %v4476 = vlaneseq
        %v4477 = vshrl.u32 %v4476, 7
        %v4478 = vsub.s32 %v4475, %v4477
        %v4479 = vrot.slane %v4471, %v4478
        %v4481 = vunpack.c.l.s4 1983009808
        %v4482 = vunpack.c.0.s8 %v4481
        %v4483 = vlaneseq
        %v4484 = vshrl.u32 %v4483, 7
        %v4485 = vsub.s32 %v4482, %v4484
        %v4486 = vrot.slane %v4472, %v4485
        %v4487 = vcombine.low %v4430, %v4442
        %v4488 = vcombine.high %v4430, %v4442
        %v4490 = vunpack.c.l.s4 1983009808
        %v4491 = vunpack.c.0.s8 %v4490
        %v4492 = vlaneseq
        %v4493 = vshrl.u32 %v4492, 7
        %v4494 = vsub.s32 %v4491, %v4493
        %v4495 = vrot.slane %v4487, %v4494
        %v4497 = vunpack.c.l.s4 1983009808
        %v4498 = vunpack.c.0.s8 %v4497
        %v4499 = vlaneseq
        %v4500 = vshrl.u32 %v4499, 7
        %v4501 = vsub.s32 %v4498, %v4500
        %v4502 = vrot.slane %v4488, %v4501
        %v4503 = vcombine.low %v4448, %v4460
        %v4504 = vcombine.high %v4448, %v4460
        %v4506 = vunpack.c.l.s4 1983009808
        %v4507 = vunpack.c.0.s8 %v4506
        %v4508 = vlaneseq
        %v4509 = vshrl.u32 %v4508, 7
        %v4510 = vsub.s32 %v4507, %v4509
        %v4511 = vrot.slane %v4503, %v4510
        %v4513 = vunpack.c.l.s4 1983009808
        %v4514 = vunpack.c.0.s8 %v4513
        %v4515 = vlaneseq
        %v4516 = vshrl.u32 %v4515, 7
        %v4517 = vsub.s32 %v4514, %v4516
        %v4518 = vrot.slane %v4504, %v4517
        %v4519 = vcombine.low %v4454, %v4466
        %v4520 = vcombine.high %v4454, %v4466
        %v4522 = vunpack.c.l.s4 1983009808
        %v4523 = vunpack.c.0.s8 %v4522
        %v4524 = vlaneseq
        %v4525 = vshrl.u32 %v4524, 7
        %v4526 = vsub.s32 %v4523, %v4525
        %v4527 = vrot.slane %v4519, %v4526
        %v4529 = vunpack.c.l.s4 1983009808
        %v4530 = vunpack.c.0.s8 %v4529
        %v4531 = vlaneseq
        %v4532 = vshrl.u32 %v4531, 7
        %v4533 = vsub.s32 %v4530, %v4532
        %v4534 = vrot.slane %v4520, %v4533
        %v4535 = vcombine.low %v4479, %v4495
        %v4536 = vcombine.high %v4479, %v4495
        %v4538 = vunpack.c.l.s4 1934713408
        %v4539 = vunpack.c.0.s8 %v4538
        %v4540 = vlaneseq
        %v4541 = vshrl.u32 %v4540, 7
        %v4542 = vsub.s32 %v4539, %v4541
        %v4543 = vrot.slane %v4535, %v4542
        %v4545 = vunpack.c.l.s4 1934713408
        %v4546 = vunpack.c.0.s8 %v4545
        %v4547 = vlaneseq
        %v4548 = vshrl.u32 %v4547, 7
        %v4549 = vsub.s32 %v4546, %v4548
        %v4550 = vrot.slane %v4536, %v4549
        %v4551 = vcombine.low %v4486, %v4502
        %v4552 = vcombine.high %v4486, %v4502
        %v4554 = vunpack.c.l.s4 1934713408
        %v4555 = vunpack.c.0.s8 %v4554
        %v4556 = vlaneseq
        %v4557 = vshrl.u32 %v4556, 7
        %v4558 = vsub.s32 %v4555, %v4557
        %v4559 = vrot.slane %v4551, %v4558
        %v4561 = vunpack.c.l.s4 1934713408
        %v4562 = vunpack.c.0.s8 %v4561
        %v4563 = vlaneseq
        %v4564 = vshrl.u32 %v4563, 7
        %v4565 = vsub.s32 %v4562, %v4564
        %v4566 = vrot.slane %v4552, %v4565
        %v4567 = vcombine.low %v4511, %v4527
        %v4568 = vcombine.high %v4511, %v4527
        %v4570 = vunpack.c.l.s4 1934713408
        %v4571 = vunpack.c.0.s8 %v4570
        %v4572 = vlaneseq
        %v4573 = vshrl.u32 %v4572, 7
        %v4574 = vsub.s32 %v4571, %v4573
        %v4575 = vrot.slane %v4567, %v4574
        %v4577 = vunpack.c.l.s4 1934713408
        %v4578 = vunpack.c.0.s8 %v4577
        %v4579 = vlaneseq
        %v4580 = vshrl.u32 %v4579, 7
        %v4581 = vsub.s32 %v4578, %v4580
        %v4582 = vrot.slane %v4568, %v4581
        %v4583 = vcombine.low %v4518, %v4534
        %v4584 = vcombine.high %v4518, %v4534
        %v4586 = vunpack.c.l.s4 1934713408
        %v4587 = vunpack.c.0.s8 %v4586
        %v4588 = vlaneseq
        %v4589 = vshrl.u32 %v4588, 7
        %v4590 = vsub.s32 %v4587, %v4589
        %v4591 = vrot.slane %v4583, %v4590
        %v4593 = vunpack.c.l.s4 1934713408
        %v4594 = vunpack.c.0.s8 %v4593
        %v4595 = vlaneseq
        %v4596 = vshrl.u32 %v4595, 7
        %v4597 = vsub.s32 %v4594, %v4596
        %v4598 = vrot.slane %v4584, %v4597
        %v4599 = vcombine.low %v4543, %v4575
        %v4600 = vcombine.high %v4543, %v4575
        %v4601 = vcombine.low %v4550, %v4582
        %v4602 = vcombine.high %v4550, %v4582
        %v4603 = vcombine.low %v4559, %v4591
        %v4604 = vcombine.high %v4559, %v4591
        %v4605 = vcombine.low %v4566, %v4598
        %v4606 = vcombine.high %v4566, %v4598
        %v4607 = vcombine.low %v869, %v4438
        %v4608 = vcombine.high %v869, %v4438
        %v4610 = vunpack.c.l.s4 1983009808
        %v4611 = vunpack.c.0.s8 %v4610
        %v4612 = vlaneseq
        %v4613 = vshrl.u32 %v4612, 7
        %v4614 = vsub.s32 %v4611, %v4613
        %v4615 = vrot.slane %v4607, %v4614
        %v4617 = vunpack.c.l.s4 1983009808
        %v4618 = vunpack.c.0.s8 %v4617
        %v4619 = vlaneseq
        %v4620 = vshrl.u32 %v4619, 7
        %v4621 = vsub.s32 %v4618, %v4620
        %v4622 = vrot.slane %v4608, %v4621
        %v4623 = vcombine.low %v4432, %v4444
        %v4624 = vcombine.high %v4432, %v4444
        %v4626 = vunpack.c.l.s4 1983009808
        %v4627 = vunpack.c.0.s8 %v4626
        %v4628 = vlaneseq
        %v4629 = vshrl.u32 %v4628, 7
        %v4630 = vsub.s32 %v4627, %v4629
        %v4631 = vrot.slane %v4623, %v4630
        %v4633 = vunpack.c.l.s4 1983009808
        %v4634 = vunpack.c.0.s8 %v4633
        %v4635 = vlaneseq
        %v4636 = vshrl.u32 %v4635, 7
        %v4637 = vsub.s32 %v4634, %v4636
        %v4638 = vrot.slane %v4624, %v4637
        %v4639 = vcombine.low %v4450, %v4462
        %v4640 = vcombine.high %v4450, %v4462
        %v4642 = vunpack.c.l.s4 1983009808
        %v4643 = vunpack.c.0.s8 %v4642
        %v4644 = vlaneseq
        %v4645 = vshrl.u32 %v4644, 7
        %v4646 = vsub.s32 %v4643, %v4645
        %v4647 = vrot.slane %v4639, %v4646
        %v4649 = vunpack.c.l.s4 1983009808
        %v4650 = vunpack.c.0.s8 %v4649
        %v4651 = vlaneseq
        %v4652 = vshrl.u32 %v4651, 7
        %v4653 = vsub.s32 %v4650, %v4652
        %v4654 = vrot.slane %v4640, %v4653
        %v4655 = vcombine.low %v4456, %v4468
        %v4656 = vcombine.high %v4456, %v4468
        %v4658 = vunpack.c.l.s4 1983009808
        %v4659 = vunpack.c.0.s8 %v4658
        %v4660 = vlaneseq
        %v4661 = vshrl.u32 %v4660, 7
        %v4662 = vsub.s32 %v4659, %v4661
        %v4663 = vrot.slane %v4655, %v4662
        %v4665 = vunpack.c.l.s4 1983009808
        %v4666 = vunpack.c.0.s8 %v4665
        %v4667 = vlaneseq
        %v4668 = vshrl.u32 %v4667, 7
        %v4669 = vsub.s32 %v4666, %v4668
        %v4670 = vrot.slane %v4656, %v4669
        %v4671 = vcombine.low %v4615, %v4631
        %v4672 = vcombine.high %v4615, %v4631
        %v4674 = vunpack.c.l.s4 1934713408
        %v4675 = vunpack.c.0.s8 %v4674
        %v4676 = vlaneseq
        %v4677 = vshrl.u32 %v4676, 7
        %v4678 = vsub.s32 %v4675, %v4677
        %v4679 = vrot.slane %v4671, %v4678
        %v4681 = vunpack.c.l.s4 1934713408
        %v4682 = vunpack.c.0.s8 %v4681
        %v4683 = vlaneseq
        %v4684 = vshrl.u32 %v4683, 7
        %v4685 = vsub.s32 %v4682, %v4684
        %v4686 = vrot.slane %v4672, %v4685
        %v4687 = vcombine.low %v4622, %v4638
        %v4688 = vcombine.high %v4622, %v4638
        %v4690 = vunpack.c.l.s4 1934713408
        %v4691 = vunpack.c.0.s8 %v4690
        %v4692 = vlaneseq
        %v4693 = vshrl.u32 %v4692, 7
        %v4694 = vsub.s32 %v4691, %v4693
        %v4695 = vrot.slane %v4687, %v4694
        %v4697 = vunpack.c.l.s4 1934713408
        %v4698 = vunpack.c.0.s8 %v4697
        %v4699 = vlaneseq
        %v4700 = vshrl.u32 %v4699, 7
        %v4701 = vsub.s32 %v4698, %v4700
        %v4702 = vrot.slane %v4688, %v4701
        %v4703 = vcombine.low %v4647, %v4663
        %v4704 = vcombine.high %v4647, %v4663
        %v4706 = vunpack.c.l.s4 1934713408
        %v4707 = vunpack.c.0.s8 %v4706
        %v4708 = vlaneseq
        %v4709 = vshrl.u32 %v4708, 7
        %v4710 = vsub.s32 %v4707, %v4709
        %v4711 = vrot.slane %v4703, %v4710
        %v4713 = vunpack.c.l.s4 1934713408
        %v4714 = vunpack.c.0.s8 %v4713
        %v4715 = vlaneseq
        %v4716 = vshrl.u32 %v4715, 7
        %v4717 = vsub.s32 %v4714, %v4716
        %v4718 = vrot.slane %v4704, %v4717
        %v4719 = vcombine.low %v4654, %v4670
        %v4720 = vcombine.high %v4654, %v4670
        %v4722 = vunpack.c.l.s4 1934713408
        %v4723 = vunpack.c.0.s8 %v4722
        %v4724 = vlaneseq
        %v4725 = vshrl.u32 %v4724, 7
        %v4726 = vsub.s32 %v4723, %v4725
        %v4727 = vrot.slane %v4719, %v4726
        %v4729 = vunpack.c.l.s4 1934713408
        %v4730 = vunpack.c.0.s8 %v4729
        %v4731 = vlaneseq
        %v4732 = vshrl.u32 %v4731, 7
        %v4733 = vsub.s32 %v4730, %v4732
        %v4734 = vrot.slane %v4720, %v4733
        %v4735 = vcombine.low %v4679, %v4711
        %v4736 = vcombine.high %v4679, %v4711
        %v4737 = vcombine.low %v4686, %v4718
        %v4738 = vcombine.high %v4686, %v4718
        %v4739 = vcombine.low %v4695, %v4727
        %v4740 = vcombine.high %v4695, %v4727
        %v4741 = vcombine.low %v4702, %v4734
        %v4742 = vcombine.high %v4702, %v4734
        %v4743 = vcombine.low %v4599, %v4601
        %v4744 = vcombine.high %v4599, %v4601
        %v4746 = vunpack.c.l.s4 1983009808
        %v4747 = vunpack.c.0.s8 %v4746
        %v4748 = vlaneseq
        %v4749 = vshrl.u32 %v4748, 7
        %v4750 = vsub.s32 %v4747, %v4749
        %v4751 = vrot.slane %v4743, %v4750
        %v4753 = vunpack.c.l.s4 1983009808
        %v4754 = vunpack.c.0.s8 %v4753
        %v4755 = vlaneseq
        %v4756 = vshrl.u32 %v4755, 7
        %v4757 = vsub.s32 %v4754, %v4756
        %v4758 = vrot.slane %v4744, %v4757
        %v4759 = vcombine.low %v4600, %v4602
        %v4760 = vcombine.high %v4600, %v4602
        %v4762 = vunpack.c.l.s4 1983009808
        %v4763 = vunpack.c.0.s8 %v4762
        %v4764 = vlaneseq
        %v4765 = vshrl.u32 %v4764, 7
        %v4766 = vsub.s32 %v4763, %v4765
        %v4767 = vrot.slane %v4759, %v4766
        %v4769 = vunpack.c.l.s4 1983009808
        %v4770 = vunpack.c.0.s8 %v4769
        %v4771 = vlaneseq
        %v4772 = vshrl.u32 %v4771, 7
        %v4773 = vsub.s32 %v4770, %v4772
        %v4774 = vrot.slane %v4760, %v4773
        %v4775 = vcombine.low %v4603, %v4605
        %v4776 = vcombine.high %v4603, %v4605
        %v4778 = vunpack.c.l.s4 1983009808
        %v4779 = vunpack.c.0.s8 %v4778
        %v4780 = vlaneseq
        %v4781 = vshrl.u32 %v4780, 7
        %v4782 = vsub.s32 %v4779, %v4781
        %v4783 = vrot.slane %v4775, %v4782
        %v4785 = vunpack.c.l.s4 1983009808
        %v4786 = vunpack.c.0.s8 %v4785
        %v4787 = vlaneseq
        %v4788 = vshrl.u32 %v4787, 7
        %v4789 = vsub.s32 %v4786, %v4788
        %v4790 = vrot.slane %v4776, %v4789
        %v4791 = vcombine.low %v4604, %v4606
        %v4792 = vcombine.high %v4604, %v4606
        %v4794 = vunpack.c.l.s4 1983009808
        %v4795 = vunpack.c.0.s8 %v4794
        %v4796 = vlaneseq
        %v4797 = vshrl.u32 %v4796, 7
        %v4798 = vsub.s32 %v4795, %v4797
        %v4799 = vrot.slane %v4791, %v4798
        %v4801 = vunpack.c.l.s4 1983009808
        %v4802 = vunpack.c.0.s8 %v4801
        %v4803 = vlaneseq
        %v4804 = vshrl.u32 %v4803, 7
        %v4805 = vsub.s32 %v4802, %v4804
        %v4806 = vrot.slane %v4792, %v4805
        %v4807 = vcombine.low %v4751, %v4767
        %v4808 = vcombine.high %v4751, %v4767
        %v4810 = vunpack.c.l.s4 1934713408
        %v4811 = vunpack.c.0.s8 %v4810
        %v4812 = vlaneseq
        %v4813 = vshrl.u32 %v4812, 7
        %v4814 = vsub.s32 %v4811, %v4813
        %v4815 = vrot.slane %v4807, %v4814
        %v4817 = vunpack.c.l.s4 1934713408
        %v4818 = vunpack.c.0.s8 %v4817
        %v4819 = vlaneseq
        %v4820 = vshrl.u32 %v4819, 7
        %v4821 = vsub.s32 %v4818, %v4820
        %v4822 = vrot.slane %v4808, %v4821
        %v4823 = vcombine.low %v4758, %v4774
        %v4824 = vcombine.high %v4758, %v4774
        %v4826 = vunpack.c.l.s4 1934713408
        %v4827 = vunpack.c.0.s8 %v4826
        %v4828 = vlaneseq
        %v4829 = vshrl.u32 %v4828, 7
        %v4830 = vsub.s32 %v4827, %v4829
        %v4831 = vrot.slane %v4823, %v4830
        %v4833 = vunpack.c.l.s4 1934713408
        %v4834 = vunpack.c.0.s8 %v4833
        %v4835 = vlaneseq
        %v4836 = vshrl.u32 %v4835, 7
        %v4837 = vsub.s32 %v4834, %v4836
        %v4838 = vrot.slane %v4824, %v4837
        %v4839 = vcombine.low %v4783, %v4799
        %v4840 = vcombine.high %v4783, %v4799
        %v4842 = vunpack.c.l.s4 1934713408
        %v4843 = vunpack.c.0.s8 %v4842
        %v4844 = vlaneseq
        %v4845 = vshrl.u32 %v4844, 7
        %v4846 = vsub.s32 %v4843, %v4845
        %v4847 = vrot.slane %v4839, %v4846
        %v4849 = vunpack.c.l.s4 1934713408
        %v4850 = vunpack.c.0.s8 %v4849
        %v4851 = vlaneseq
        %v4852 = vshrl.u32 %v4851, 7
        %v4853 = vsub.s32 %v4850, %v4852
        %v4854 = vrot.slane %v4840, %v4853
        %v4855 = vcombine.low %v4790, %v4806
        %v4856 = vcombine.high %v4790, %v4806
        %v4858 = vunpack.c.l.s4 1934713408
        %v4859 = vunpack.c.0.s8 %v4858
        %v4860 = vlaneseq
        %v4861 = vshrl.u32 %v4860, 7
        %v4862 = vsub.s32 %v4859, %v4861
        %v4863 = vrot.slane %v4855, %v4862
        %v4865 = vunpack.c.l.s4 1934713408
        %v4866 = vunpack.c.0.s8 %v4865
        %v4867 = vlaneseq
        %v4868 = vshrl.u32 %v4867, 7
        %v4869 = vsub.s32 %v4866, %v4868
        %v4870 = vrot.slane %v4856, %v4869
        %v4871 = vcombine.low %v4815, %v4847
        %v4872 = vcombine.high %v4815, %v4847
        %v4873 = vcombine.low %v4822, %v4854
        %v4874 = vcombine.high %v4822, %v4854
        %v4875 = vcombine.low %v4831, %v4863
        %v4876 = vcombine.high %v4831, %v4863
        %v4877 = vcombine.low %v4838, %v4870
        %v4878 = vcombine.high %v4838, %v4870
        %v4879 = vcombine.low %v4735, %v4737
        %v4880 = vcombine.high %v4735, %v4737
        %v4882 = vunpack.c.l.s4 1983009808
        %v4883 = vunpack.c.0.s8 %v4882
        %v4884 = vlaneseq
        %v4885 = vshrl.u32 %v4884, 7
        %v4886 = vsub.s32 %v4883, %v4885
        %v4887 = vrot.slane %v4879, %v4886
        %v4889 = vunpack.c.l.s4 1983009808
        %v4890 = vunpack.c.0.s8 %v4889
        %v4891 = vlaneseq
        %v4892 = vshrl.u32 %v4891, 7
        %v4893 = vsub.s32 %v4890, %v4892
        %v4894 = vrot.slane %v4880, %v4893
        %v4895 = vcombine.low %v4736, %v4738
        %v4896 = vcombine.high %v4736, %v4738
        %v4898 = vunpack.c.l.s4 1983009808
        %v4899 = vunpack.c.0.s8 %v4898
        %v4900 = vlaneseq
        %v4901 = vshrl.u32 %v4900, 7
        %v4902 = vsub.s32 %v4899, %v4901
        %v4903 = vrot.slane %v4895, %v4902
        %v4905 = vunpack.c.l.s4 1983009808
        %v4906 = vunpack.c.0.s8 %v4905
        %v4907 = vlaneseq
        %v4908 = vshrl.u32 %v4907, 7
        %v4909 = vsub.s32 %v4906, %v4908
        %v4910 = vrot.slane %v4896, %v4909
        %v4911 = vcombine.low %v4739, %v4741
        %v4912 = vcombine.high %v4739, %v4741
        %v4914 = vunpack.c.l.s4 1983009808
        %v4915 = vunpack.c.0.s8 %v4914
        %v4916 = vlaneseq
        %v4917 = vshrl.u32 %v4916, 7
        %v4918 = vsub.s32 %v4915, %v4917
        %v4919 = vrot.slane %v4911, %v4918
        %v4921 = vunpack.c.l.s4 1983009808
        %v4922 = vunpack.c.0.s8 %v4921
        %v4923 = vlaneseq
        %v4924 = vshrl.u32 %v4923, 7
        %v4925 = vsub.s32 %v4922, %v4924
        %v4926 = vrot.slane %v4912, %v4925
        %v4927 = vcombine.low %v4740, %v4742
        %v4928 = vcombine.high %v4740, %v4742
        %v4930 = vunpack.c.l.s4 1983009808
        %v4931 = vunpack.c.0.s8 %v4930
        %v4932 = vlaneseq
        %v4933 = vshrl.u32 %v4932, 7
        %v4934 = vsub.s32 %v4931, %v4933
        %v4935 = vrot.slane %v4927, %v4934
        %v4937 = vunpack.c.l.s4 1983009808
        %v4938 = vunpack.c.0.s8 %v4937
        %v4939 = vlaneseq
        %v4940 = vshrl.u32 %v4939, 7
        %v4941 = vsub.s32 %v4938, %v4940
        %v4942 = vrot.slane %v4928, %v4941
        %v4943 = vcombine.low %v4887, %v4903
        %v4944 = vcombine.high %v4887, %v4903
        %v4946 = vunpack.c.l.s4 1934713408
        %v4947 = vunpack.c.0.s8 %v4946
        %v4948 = vlaneseq
        %v4949 = vshrl.u32 %v4948, 7
        %v4950 = vsub.s32 %v4947, %v4949
        %v4951 = vrot.slane %v4943, %v4950
        %v4953 = vunpack.c.l.s4 1934713408
        %v4954 = vunpack.c.0.s8 %v4953
        %v4955 = vlaneseq
        %v4956 = vshrl.u32 %v4955, 7
        %v4957 = vsub.s32 %v4954, %v4956
        %v4958 = vrot.slane %v4944, %v4957
        %v4959 = vcombine.low %v4894, %v4910
        %v4960 = vcombine.high %v4894, %v4910
        %v4962 = vunpack.c.l.s4 1934713408
        %v4963 = vunpack.c.0.s8 %v4962
        %v4964 = vlaneseq
        %v4965 = vshrl.u32 %v4964, 7
        %v4966 = vsub.s32 %v4963, %v4965
        %v4967 = vrot.slane %v4959, %v4966
        %v4969 = vunpack.c.l.s4 1934713408
        %v4970 = vunpack.c.0.s8 %v4969
        %v4971 = vlaneseq
        %v4972 = vshrl.u32 %v4971, 7
        %v4973 = vsub.s32 %v4970, %v4972
        %v4974 = vrot.slane %v4960, %v4973
        %v4975 = vcombine.low %v4919, %v4935
        %v4976 = vcombine.high %v4919, %v4935
        %v4978 = vunpack.c.l.s4 1934713408
        %v4979 = vunpack.c.0.s8 %v4978
        %v4980 = vlaneseq
        %v4981 = vshrl.u32 %v4980, 7
        %v4982 = vsub.s32 %v4979, %v4981
        %v4983 = vrot.slane %v4975, %v4982
        %v4985 = vunpack.c.l.s4 1934713408
        %v4986 = vunpack.c.0.s8 %v4985
        %v4987 = vlaneseq
        %v4988 = vshrl.u32 %v4987, 7
        %v4989 = vsub.s32 %v4986, %v4988
        %v4990 = vrot.slane %v4976, %v4989
        %v4991 = vcombine.low %v4926, %v4942
        %v4992 = vcombine.high %v4926, %v4942
        %v4994 = vunpack.c.l.s4 1934713408
        %v4995 = vunpack.c.0.s8 %v4994
        %v4996 = vlaneseq
        %v4997 = vshrl.u32 %v4996, 7
        %v4998 = vsub.s32 %v4995, %v4997
        %v4999 = vrot.slane %v4991, %v4998
        %v5001 = vunpack.c.l.s4 1934713408
        %v5002 = vunpack.c.0.s8 %v5001
        %v5003 = vlaneseq
        %v5004 = vshrl.u32 %v5003, 7
        %v5005 = vsub.s32 %v5002, %v5004
        %v5006 = vrot.slane %v4992, %v5005
        %v5007 = vcombine.low %v4951, %v4983
        %v5008 = vcombine.high %v4951, %v4983
        %v5009 = vcombine.low %v4958, %v4990
        %v5010 = vcombine.high %v4958, %v4990
        %v5011 = vcombine.low %v4967, %v4999
        %v5012 = vcombine.high %v4967, %v4999
        %v5013 = vcombine.low %v4974, %v5006
        %v5014 = vcombine.high %v4974, %v5006
        %v5015 = vpack.c.bf16 %v5007, %v4871
        %v5016 = vpack.c.bf16 %v5008, %v4872
        %v5017 = vpack.c.bf16 %v5009, %v4873
        %v5018 = vpack.c.bf16 %v5010, %v4874
        %v5019 = vpack.c.bf16 %v5011, %v4875
        %v5020 = vpack.c.bf16 %v5012, %v4876
        %v5021 = vpack.c.bf16 %v5013, %v4877
        %v5022 = vpack.c.bf16 %v5014, %v4878
        %5025 = vrot.lane.b32.xlu0 %v983, 112
        %v5026 = vpop.permute.xlu0 %5025
        %5027 = vrot.lane.b32.xlu0 %v986, 112
        %v5028 = vpop.permute.xlu0 %5027
        %5031 = vrot.lane.b32.xlu0 %v983, 96
        %v5032 = vpop.permute.xlu0 %5031
        %5033 = vrot.lane.b32.xlu0 %v986, 96
        %v5034 = vpop.permute.xlu0 %5033
        %5037 = vrot.lane.b32.xlu0 %v983, 80
        %v5038 = vpop.permute.xlu0 %5037
        %5039 = vrot.lane.b32.xlu0 %v986, 80
        %v5040 = vpop.permute.xlu0 %5039
        %5043 = vrot.lane.b32.xlu0 %v983, 64
        %v5044 = vpop.permute.xlu0 %5043
        %5045 = vrot.lane.b32.xlu0 %v986, 64
        %v5046 = vpop.permute.xlu0 %5045
        %5049 = vrot.lane.b32.xlu0 %v983, 48
        %v5050 = vpop.permute.xlu0 %5049
        %5051 = vrot.lane.b32.xlu0 %v986, 48
        %v5052 = vpop.permute.xlu0 %5051
        %5055 = vrot.lane.b32.xlu0 %v983, 32
        %v5056 = vpop.permute.xlu0 %5055
        %5057 = vrot.lane.b32.xlu0 %v986, 32
        %v5058 = vpop.permute.xlu0 %5057
        %5061 = vrot.lane.b32.xlu0 %v983, 16
        %v5062 = vpop.permute.xlu0 %5061
        %5063 = vrot.lane.b32.xlu0 %v986, 16
        %v5064 = vpop.permute.xlu0 %5063
        %v5067 = vcombine.low %v983, %v5032
        %v5068 = vcombine.high %v983, %v5032
        %v5070 = vunpack.c.l.s4 1983009808
        %v5071 = vunpack.c.0.s8 %v5070
        %v5072 = vlaneseq
        %v5073 = vshrl.u32 %v5072, 7
        %v5074 = vsub.s32 %v5071, %v5073
        %v5075 = vrot.slane %v5067, %v5074
        %v5077 = vunpack.c.l.s4 1983009808
        %v5078 = vunpack.c.0.s8 %v5077
        %v5079 = vlaneseq
        %v5080 = vshrl.u32 %v5079, 7
        %v5081 = vsub.s32 %v5078, %v5080
        %v5082 = vrot.slane %v5068, %v5081
        %v5083 = vcombine.low %v5026, %v5038
        %v5084 = vcombine.high %v5026, %v5038
        %v5086 = vunpack.c.l.s4 1983009808
        %v5087 = vunpack.c.0.s8 %v5086
        %v5088 = vlaneseq
        %v5089 = vshrl.u32 %v5088, 7
        %v5090 = vsub.s32 %v5087, %v5089
        %v5091 = vrot.slane %v5083, %v5090
        %v5093 = vunpack.c.l.s4 1983009808
        %v5094 = vunpack.c.0.s8 %v5093
        %v5095 = vlaneseq
        %v5096 = vshrl.u32 %v5095, 7
        %v5097 = vsub.s32 %v5094, %v5096
        %v5098 = vrot.slane %v5084, %v5097
        %v5099 = vcombine.low %v5044, %v5056
        %v5100 = vcombine.high %v5044, %v5056
        %v5102 = vunpack.c.l.s4 1983009808
        %v5103 = vunpack.c.0.s8 %v5102
        %v5104 = vlaneseq
        %v5105 = vshrl.u32 %v5104, 7
        %v5106 = vsub.s32 %v5103, %v5105
        %v5107 = vrot.slane %v5099, %v5106
        %v5109 = vunpack.c.l.s4 1983009808
        %v5110 = vunpack.c.0.s8 %v5109
        %v5111 = vlaneseq
        %v5112 = vshrl.u32 %v5111, 7
        %v5113 = vsub.s32 %v5110, %v5112
        %v5114 = vrot.slane %v5100, %v5113
        %v5115 = vcombine.low %v5050, %v5062
        %v5116 = vcombine.high %v5050, %v5062
        %v5118 = vunpack.c.l.s4 1983009808
        %v5119 = vunpack.c.0.s8 %v5118
        %v5120 = vlaneseq
        %v5121 = vshrl.u32 %v5120, 7
        %v5122 = vsub.s32 %v5119, %v5121
        %v5123 = vrot.slane %v5115, %v5122
        %v5125 = vunpack.c.l.s4 1983009808
        %v5126 = vunpack.c.0.s8 %v5125
        %v5127 = vlaneseq
        %v5128 = vshrl.u32 %v5127, 7
        %v5129 = vsub.s32 %v5126, %v5128
        %v5130 = vrot.slane %v5116, %v5129
        %v5131 = vcombine.low %v5075, %v5091
        %v5132 = vcombine.high %v5075, %v5091
        %v5134 = vunpack.c.l.s4 1934713408
        %v5135 = vunpack.c.0.s8 %v5134
        %v5136 = vlaneseq
        %v5137 = vshrl.u32 %v5136, 7
        %v5138 = vsub.s32 %v5135, %v5137
        %v5139 = vrot.slane %v5131, %v5138
        %v5141 = vunpack.c.l.s4 1934713408
        %v5142 = vunpack.c.0.s8 %v5141
        %v5143 = vlaneseq
        %v5144 = vshrl.u32 %v5143, 7
        %v5145 = vsub.s32 %v5142, %v5144
        %v5146 = vrot.slane %v5132, %v5145
        %v5147 = vcombine.low %v5082, %v5098
        %v5148 = vcombine.high %v5082, %v5098
        %v5150 = vunpack.c.l.s4 1934713408
        %v5151 = vunpack.c.0.s8 %v5150
        %v5152 = vlaneseq
        %v5153 = vshrl.u32 %v5152, 7
        %v5154 = vsub.s32 %v5151, %v5153
        %v5155 = vrot.slane %v5147, %v5154
        %v5157 = vunpack.c.l.s4 1934713408
        %v5158 = vunpack.c.0.s8 %v5157
        %v5159 = vlaneseq
        %v5160 = vshrl.u32 %v5159, 7
        %v5161 = vsub.s32 %v5158, %v5160
        %v5162 = vrot.slane %v5148, %v5161
        %v5163 = vcombine.low %v5107, %v5123
        %v5164 = vcombine.high %v5107, %v5123
        %v5166 = vunpack.c.l.s4 1934713408
        %v5167 = vunpack.c.0.s8 %v5166
        %v5168 = vlaneseq
        %v5169 = vshrl.u32 %v5168, 7
        %v5170 = vsub.s32 %v5167, %v5169
        %v5171 = vrot.slane %v5163, %v5170
        %v5173 = vunpack.c.l.s4 1934713408
        %v5174 = vunpack.c.0.s8 %v5173
        %v5175 = vlaneseq
        %v5176 = vshrl.u32 %v5175, 7
        %v5177 = vsub.s32 %v5174, %v5176
        %v5178 = vrot.slane %v5164, %v5177
        %v5179 = vcombine.low %v5114, %v5130
        %v5180 = vcombine.high %v5114, %v5130
        %v5182 = vunpack.c.l.s4 1934713408
        %v5183 = vunpack.c.0.s8 %v5182
        %v5184 = vlaneseq
        %v5185 = vshrl.u32 %v5184, 7
        %v5186 = vsub.s32 %v5183, %v5185
        %v5187 = vrot.slane %v5179, %v5186
        %v5189 = vunpack.c.l.s4 1934713408
        %v5190 = vunpack.c.0.s8 %v5189
        %v5191 = vlaneseq
        %v5192 = vshrl.u32 %v5191, 7
        %v5193 = vsub.s32 %v5190, %v5192
        %v5194 = vrot.slane %v5180, %v5193
        %v5195 = vcombine.low %v5139, %v5171
        %v5196 = vcombine.high %v5139, %v5171
        %v5197 = vcombine.low %v5146, %v5178
        %v5198 = vcombine.high %v5146, %v5178
        %v5199 = vcombine.low %v5155, %v5187
        %v5200 = vcombine.high %v5155, %v5187
        %v5201 = vcombine.low %v5162, %v5194
        %v5202 = vcombine.high %v5162, %v5194
        %v5203 = vcombine.low %v986, %v5034
        %v5204 = vcombine.high %v986, %v5034
        %v5206 = vunpack.c.l.s4 1983009808
        %v5207 = vunpack.c.0.s8 %v5206
        %v5208 = vlaneseq
        %v5209 = vshrl.u32 %v5208, 7
        %v5210 = vsub.s32 %v5207, %v5209
        %v5211 = vrot.slane %v5203, %v5210
        %v5213 = vunpack.c.l.s4 1983009808
        %v5214 = vunpack.c.0.s8 %v5213
        %v5215 = vlaneseq
        %v5216 = vshrl.u32 %v5215, 7
        %v5217 = vsub.s32 %v5214, %v5216
        %v5218 = vrot.slane %v5204, %v5217
        %v5219 = vcombine.low %v5028, %v5040
        %v5220 = vcombine.high %v5028, %v5040
        %v5222 = vunpack.c.l.s4 1983009808
        %v5223 = vunpack.c.0.s8 %v5222
        %v5224 = vlaneseq
        %v5225 = vshrl.u32 %v5224, 7
        %v5226 = vsub.s32 %v5223, %v5225
        %v5227 = vrot.slane %v5219, %v5226
        %v5229 = vunpack.c.l.s4 1983009808
        %v5230 = vunpack.c.0.s8 %v5229
        %v5231 = vlaneseq
        %v5232 = vshrl.u32 %v5231, 7
        %v5233 = vsub.s32 %v5230, %v5232
        %v5234 = vrot.slane %v5220, %v5233
        %v5235 = vcombine.low %v5046, %v5058
        %v5236 = vcombine.high %v5046, %v5058
        %v5238 = vunpack.c.l.s4 1983009808
        %v5239 = vunpack.c.0.s8 %v5238
        %v5240 = vlaneseq
        %v5241 = vshrl.u32 %v5240, 7
        %v5242 = vsub.s32 %v5239, %v5241
        %v5243 = vrot.slane %v5235, %v5242
        %v5245 = vunpack.c.l.s4 1983009808
        %v5246 = vunpack.c.0.s8 %v5245
        %v5247 = vlaneseq
        %v5248 = vshrl.u32 %v5247, 7
        %v5249 = vsub.s32 %v5246, %v5248
        %v5250 = vrot.slane %v5236, %v5249
        %v5251 = vcombine.low %v5052, %v5064
        %v5252 = vcombine.high %v5052, %v5064
        %v5254 = vunpack.c.l.s4 1983009808
        %v5255 = vunpack.c.0.s8 %v5254
        %v5256 = vlaneseq
        %v5257 = vshrl.u32 %v5256, 7
        %v5258 = vsub.s32 %v5255, %v5257
        %v5259 = vrot.slane %v5251, %v5258
        %v5261 = vunpack.c.l.s4 1983009808
        %v5262 = vunpack.c.0.s8 %v5261
        %v5263 = vlaneseq
        %v5264 = vshrl.u32 %v5263, 7
        %v5265 = vsub.s32 %v5262, %v5264
        %v5266 = vrot.slane %v5252, %v5265
        %v5267 = vcombine.low %v5211, %v5227
        %v5268 = vcombine.high %v5211, %v5227
        %v5270 = vunpack.c.l.s4 1934713408
        %v5271 = vunpack.c.0.s8 %v5270
        %v5272 = vlaneseq
        %v5273 = vshrl.u32 %v5272, 7
        %v5274 = vsub.s32 %v5271, %v5273
        %v5275 = vrot.slane %v5267, %v5274
        %v5277 = vunpack.c.l.s4 1934713408
        %v5278 = vunpack.c.0.s8 %v5277
        %v5279 = vlaneseq
        %v5280 = vshrl.u32 %v5279, 7
        %v5281 = vsub.s32 %v5278, %v5280
        %v5282 = vrot.slane %v5268, %v5281
        %v5283 = vcombine.low %v5218, %v5234
        %v5284 = vcombine.high %v5218, %v5234
        %v5286 = vunpack.c.l.s4 1934713408
        %v5287 = vunpack.c.0.s8 %v5286
        %v5288 = vlaneseq
        %v5289 = vshrl.u32 %v5288, 7
        %v5290 = vsub.s32 %v5287, %v5289
        %v5291 = vrot.slane %v5283, %v5290
        %v5293 = vunpack.c.l.s4 1934713408
        %v5294 = vunpack.c.0.s8 %v5293
        %v5295 = vlaneseq
        %v5296 = vshrl.u32 %v5295, 7
        %v5297 = vsub.s32 %v5294, %v5296
        %v5298 = vrot.slane %v5284, %v5297
        %v5299 = vcombine.low %v5243, %v5259
        %v5300 = vcombine.high %v5243, %v5259
        %v5302 = vunpack.c.l.s4 1934713408
        %v5303 = vunpack.c.0.s8 %v5302
        %v5304 = vlaneseq
        %v5305 = vshrl.u32 %v5304, 7
        %v5306 = vsub.s32 %v5303, %v5305
        %v5307 = vrot.slane %v5299, %v5306
        %v5309 = vunpack.c.l.s4 1934713408
        %v5310 = vunpack.c.0.s8 %v5309
        %v5311 = vlaneseq
        %v5312 = vshrl.u32 %v5311, 7
        %v5313 = vsub.s32 %v5310, %v5312
        %v5314 = vrot.slane %v5300, %v5313
        %v5315 = vcombine.low %v5250, %v5266
        %v5316 = vcombine.high %v5250, %v5266
        %v5318 = vunpack.c.l.s4 1934713408
        %v5319 = vunpack.c.0.s8 %v5318
        %v5320 = vlaneseq
        %v5321 = vshrl.u32 %v5320, 7
        %v5322 = vsub.s32 %v5319, %v5321
        %v5323 = vrot.slane %v5315, %v5322
        %v5325 = vunpack.c.l.s4 1934713408
        %v5326 = vunpack.c.0.s8 %v5325
        %v5327 = vlaneseq
        %v5328 = vshrl.u32 %v5327, 7
        %v5329 = vsub.s32 %v5326, %v5328
        %v5330 = vrot.slane %v5316, %v5329
        %v5331 = vcombine.low %v5275, %v5307
        %v5332 = vcombine.high %v5275, %v5307
        %v5333 = vcombine.low %v5282, %v5314
        %v5334 = vcombine.high %v5282, %v5314
        %v5335 = vcombine.low %v5291, %v5323
        %v5336 = vcombine.high %v5291, %v5323
        %v5337 = vcombine.low %v5298, %v5330
        %v5338 = vcombine.high %v5298, %v5330
        %v5339 = vcombine.low %v5195, %v5197
        %v5340 = vcombine.high %v5195, %v5197
        %v5342 = vunpack.c.l.s4 1983009808
        %v5343 = vunpack.c.0.s8 %v5342
        %v5344 = vlaneseq
        %v5345 = vshrl.u32 %v5344, 7
        %v5346 = vsub.s32 %v5343, %v5345
        %v5347 = vrot.slane %v5339, %v5346
        %v5349 = vunpack.c.l.s4 1983009808
        %v5350 = vunpack.c.0.s8 %v5349
        %v5351 = vlaneseq
        %v5352 = vshrl.u32 %v5351, 7
        %v5353 = vsub.s32 %v5350, %v5352
        %v5354 = vrot.slane %v5340, %v5353
        %v5355 = vcombine.low %v5196, %v5198
        %v5356 = vcombine.high %v5196, %v5198
        %v5358 = vunpack.c.l.s4 1983009808
        %v5359 = vunpack.c.0.s8 %v5358
        %v5360 = vlaneseq
        %v5361 = vshrl.u32 %v5360, 7
        %v5362 = vsub.s32 %v5359, %v5361
        %v5363 = vrot.slane %v5355, %v5362
        %v5365 = vunpack.c.l.s4 1983009808
        %v5366 = vunpack.c.0.s8 %v5365
        %v5367 = vlaneseq
        %v5368 = vshrl.u32 %v5367, 7
        %v5369 = vsub.s32 %v5366, %v5368
        %v5370 = vrot.slane %v5356, %v5369
        %v5371 = vcombine.low %v5199, %v5201
        %v5372 = vcombine.high %v5199, %v5201
        %v5374 = vunpack.c.l.s4 1983009808
        %v5375 = vunpack.c.0.s8 %v5374
        %v5376 = vlaneseq
        %v5377 = vshrl.u32 %v5376, 7
        %v5378 = vsub.s32 %v5375, %v5377
        %v5379 = vrot.slane %v5371, %v5378
        %v5381 = vunpack.c.l.s4 1983009808
        %v5382 = vunpack.c.0.s8 %v5381
        %v5383 = vlaneseq
        %v5384 = vshrl.u32 %v5383, 7
        %v5385 = vsub.s32 %v5382, %v5384
        %v5386 = vrot.slane %v5372, %v5385
        %v5387 = vcombine.low %v5200, %v5202
        %v5388 = vcombine.high %v5200, %v5202
        %v5390 = vunpack.c.l.s4 1983009808
        %v5391 = vunpack.c.0.s8 %v5390
        %v5392 = vlaneseq
        %v5393 = vshrl.u32 %v5392, 7
        %v5394 = vsub.s32 %v5391, %v5393
        %v5395 = vrot.slane %v5387, %v5394
        %v5397 = vunpack.c.l.s4 1983009808
        %v5398 = vunpack.c.0.s8 %v5397
        %v5399 = vlaneseq
        %v5400 = vshrl.u32 %v5399, 7
        %v5401 = vsub.s32 %v5398, %v5400
        %v5402 = vrot.slane %v5388, %v5401
        %v5403 = vcombine.low %v5347, %v5363
        %v5404 = vcombine.high %v5347, %v5363
        %v5406 = vunpack.c.l.s4 1934713408
        %v5407 = vunpack.c.0.s8 %v5406
        %v5408 = vlaneseq
        %v5409 = vshrl.u32 %v5408, 7
        %v5410 = vsub.s32 %v5407, %v5409
        %v5411 = vrot.slane %v5403, %v5410
        %v5413 = vunpack.c.l.s4 1934713408
        %v5414 = vunpack.c.0.s8 %v5413
        %v5415 = vlaneseq
        %v5416 = vshrl.u32 %v5415, 7
        %v5417 = vsub.s32 %v5414, %v5416
        %v5418 = vrot.slane %v5404, %v5417
        %v5419 = vcombine.low %v5354, %v5370
        %v5420 = vcombine.high %v5354, %v5370
        %v5422 = vunpack.c.l.s4 1934713408
        %v5423 = vunpack.c.0.s8 %v5422
        %v5424 = vlaneseq
        %v5425 = vshrl.u32 %v5424, 7
        %v5426 = vsub.s32 %v5423, %v5425
        %v5427 = vrot.slane %v5419, %v5426
        %v5429 = vunpack.c.l.s4 1934713408
        %v5430 = vunpack.c.0.s8 %v5429
        %v5431 = vlaneseq
        %v5432 = vshrl.u32 %v5431, 7
        %v5433 = vsub.s32 %v5430, %v5432
        %v5434 = vrot.slane %v5420, %v5433
        %v5435 = vcombine.low %v5379, %v5395
        %v5436 = vcombine.high %v5379, %v5395
        %v5438 = vunpack.c.l.s4 1934713408
        %v5439 = vunpack.c.0.s8 %v5438
        %v5440 = vlaneseq
        %v5441 = vshrl.u32 %v5440, 7
        %v5442 = vsub.s32 %v5439, %v5441
        %v5443 = vrot.slane %v5435, %v5442
        %v5445 = vunpack.c.l.s4 1934713408
        %v5446 = vunpack.c.0.s8 %v5445
        %v5447 = vlaneseq
        %v5448 = vshrl.u32 %v5447, 7
        %v5449 = vsub.s32 %v5446, %v5448
        %v5450 = vrot.slane %v5436, %v5449
        %v5451 = vcombine.low %v5386, %v5402
        %v5452 = vcombine.high %v5386, %v5402
        %v5454 = vunpack.c.l.s4 1934713408
        %v5455 = vunpack.c.0.s8 %v5454
        %v5456 = vlaneseq
        %v5457 = vshrl.u32 %v5456, 7
        %v5458 = vsub.s32 %v5455, %v5457
        %v5459 = vrot.slane %v5451, %v5458
        %v5461 = vunpack.c.l.s4 1934713408
        %v5462 = vunpack.c.0.s8 %v5461
        %v5463 = vlaneseq
        %v5464 = vshrl.u32 %v5463, 7
        %v5465 = vsub.s32 %v5462, %v5464
        %v5466 = vrot.slane %v5452, %v5465
        %v5467 = vcombine.low %v5411, %v5443
        %v5468 = vcombine.high %v5411, %v5443
        %v5469 = vcombine.low %v5418, %v5450
        %v5470 = vcombine.high %v5418, %v5450
        %v5471 = vcombine.low %v5427, %v5459
        %v5472 = vcombine.high %v5427, %v5459
        %v5473 = vcombine.low %v5434, %v5466
        %v5474 = vcombine.high %v5434, %v5466
        %v5475 = vcombine.low %v5331, %v5333
        %v5476 = vcombine.high %v5331, %v5333
        %v5478 = vunpack.c.l.s4 1983009808
        %v5479 = vunpack.c.0.s8 %v5478
        %v5480 = vlaneseq
        %v5481 = vshrl.u32 %v5480, 7
        %v5482 = vsub.s32 %v5479, %v5481
        %v5483 = vrot.slane %v5475, %v5482
        %v5485 = vunpack.c.l.s4 1983009808
        %v5486 = vunpack.c.0.s8 %v5485
        %v5487 = vlaneseq
        %v5488 = vshrl.u32 %v5487, 7
        %v5489 = vsub.s32 %v5486, %v5488
        %v5490 = vrot.slane %v5476, %v5489
        %v5491 = vcombine.low %v5332, %v5334
        %v5492 = vcombine.high %v5332, %v5334
        %v5494 = vunpack.c.l.s4 1983009808
        %v5495 = vunpack.c.0.s8 %v5494
        %v5496 = vlaneseq
        %v5497 = vshrl.u32 %v5496, 7
        %v5498 = vsub.s32 %v5495, %v5497
        %v5499 = vrot.slane %v5491, %v5498
        %v5501 = vunpack.c.l.s4 1983009808
        %v5502 = vunpack.c.0.s8 %v5501
        %v5503 = vlaneseq
        %v5504 = vshrl.u32 %v5503, 7
        %v5505 = vsub.s32 %v5502, %v5504
        %v5506 = vrot.slane %v5492, %v5505
        %v5507 = vcombine.low %v5335, %v5337
        %v5508 = vcombine.high %v5335, %v5337
        %v5510 = vunpack.c.l.s4 1983009808
        %v5511 = vunpack.c.0.s8 %v5510
        %v5512 = vlaneseq
        %v5513 = vshrl.u32 %v5512, 7
        %v5514 = vsub.s32 %v5511, %v5513
        %v5515 = vrot.slane %v5507, %v5514
        %v5517 = vunpack.c.l.s4 1983009808
        %v5518 = vunpack.c.0.s8 %v5517
        %v5519 = vlaneseq
        %v5520 = vshrl.u32 %v5519, 7
        %v5521 = vsub.s32 %v5518, %v5520
        %v5522 = vrot.slane %v5508, %v5521
        %v5523 = vcombine.low %v5336, %v5338
        %v5524 = vcombine.high %v5336, %v5338
        %v5526 = vunpack.c.l.s4 1983009808
        %v5527 = vunpack.c.0.s8 %v5526
        %v5528 = vlaneseq
        %v5529 = vshrl.u32 %v5528, 7
        %v5530 = vsub.s32 %v5527, %v5529
        %v5531 = vrot.slane %v5523, %v5530
        %v5533 = vunpack.c.l.s4 1983009808
        %v5534 = vunpack.c.0.s8 %v5533
        %v5535 = vlaneseq
        %v5536 = vshrl.u32 %v5535, 7
        %v5537 = vsub.s32 %v5534, %v5536
        %v5538 = vrot.slane %v5524, %v5537
        %v5539 = vcombine.low %v5483, %v5499
        %v5540 = vcombine.high %v5483, %v5499
        %v5542 = vunpack.c.l.s4 1934713408
        %v5543 = vunpack.c.0.s8 %v5542
        %v5544 = vlaneseq
        %v5545 = vshrl.u32 %v5544, 7
        %v5546 = vsub.s32 %v5543, %v5545
        %v5547 = vrot.slane %v5539, %v5546
        %v5549 = vunpack.c.l.s4 1934713408
        %v5550 = vunpack.c.0.s8 %v5549
        %v5551 = vlaneseq
        %v5552 = vshrl.u32 %v5551, 7
        %v5553 = vsub.s32 %v5550, %v5552
        %v5554 = vrot.slane %v5540, %v5553
        %v5555 = vcombine.low %v5490, %v5506
        %v5556 = vcombine.high %v5490, %v5506
        %v5558 = vunpack.c.l.s4 1934713408
        %v5559 = vunpack.c.0.s8 %v5558
        %v5560 = vlaneseq
        %v5561 = vshrl.u32 %v5560, 7
        %v5562 = vsub.s32 %v5559, %v5561
        %v5563 = vrot.slane %v5555, %v5562
        %v5565 = vunpack.c.l.s4 1934713408
        %v5566 = vunpack.c.0.s8 %v5565
        %v5567 = vlaneseq
        %v5568 = vshrl.u32 %v5567, 7
        %v5569 = vsub.s32 %v5566, %v5568
        %v5570 = vrot.slane %v5556, %v5569
        %v5571 = vcombine.low %v5515, %v5531
        %v5572 = vcombine.high %v5515, %v5531
        %v5574 = vunpack.c.l.s4 1934713408
        %v5575 = vunpack.c.0.s8 %v5574
        %v5576 = vlaneseq
        %v5577 = vshrl.u32 %v5576, 7
        %v5578 = vsub.s32 %v5575, %v5577
        %v5579 = vrot.slane %v5571, %v5578
        %v5581 = vunpack.c.l.s4 1934713408
        %v5582 = vunpack.c.0.s8 %v5581
        %v5583 = vlaneseq
        %v5584 = vshrl.u32 %v5583, 7
        %v5585 = vsub.s32 %v5582, %v5584
        %v5586 = vrot.slane %v5572, %v5585
        %v5587 = vcombine.low %v5522, %v5538
        %v5588 = vcombine.high %v5522, %v5538
        %v5590 = vunpack.c.l.s4 1934713408
        %v5591 = vunpack.c.0.s8 %v5590
        %v5592 = vlaneseq
        %v5593 = vshrl.u32 %v5592, 7
        %v5594 = vsub.s32 %v5591, %v5593
        %v5595 = vrot.slane %v5587, %v5594
        %v5597 = vunpack.c.l.s4 1934713408
        %v5598 = vunpack.c.0.s8 %v5597
        %v5599 = vlaneseq
        %v5600 = vshrl.u32 %v5599, 7
        %v5601 = vsub.s32 %v5598, %v5600
        %v5602 = vrot.slane %v5588, %v5601
        %v5603 = vcombine.low %v5547, %v5579
        %v5604 = vcombine.high %v5547, %v5579
        %v5605 = vcombine.low %v5554, %v5586
        %v5606 = vcombine.high %v5554, %v5586
        %v5607 = vcombine.low %v5563, %v5595
        %v5608 = vcombine.high %v5563, %v5595
        %v5609 = vcombine.low %v5570, %v5602
        %v5610 = vcombine.high %v5570, %v5602
        %v5611 = vpack.c.bf16 %v5603, %v5467
        %v5612 = vpack.c.bf16 %v5604, %v5468
        %v5613 = vpack.c.bf16 %v5605, %v5469
        %v5614 = vpack.c.bf16 %v5606, %v5470
        %v5615 = vpack.c.bf16 %v5607, %v5471
        %v5616 = vpack.c.bf16 %v5608, %v5472
        %v5617 = vpack.c.bf16 %v5609, %v5473
        %v5618 = vpack.c.bf16 %v5610, %v5474
        %5621 = vrot.lane.b32.xlu0 %v1100, 112
        %v5622 = vpop.permute.xlu0 %5621
        %5623 = vrot.lane.b32.xlu0 %v1103, 112
        %v5624 = vpop.permute.xlu0 %5623
        %5627 = vrot.lane.b32.xlu0 %v1100, 96
        %v5628 = vpop.permute.xlu0 %5627
        %5629 = vrot.lane.b32.xlu0 %v1103, 96
        %v5630 = vpop.permute.xlu0 %5629
        %5633 = vrot.lane.b32.xlu0 %v1100, 80
        %v5634 = vpop.permute.xlu0 %5633
        %5635 = vrot.lane.b32.xlu0 %v1103, 80
        %v5636 = vpop.permute.xlu0 %5635
        %5639 = vrot.lane.b32.xlu0 %v1100, 64
        %v5640 = vpop.permute.xlu0 %5639
        %5641 = vrot.lane.b32.xlu0 %v1103, 64
        %v5642 = vpop.permute.xlu0 %5641
        %5645 = vrot.lane.b32.xlu0 %v1100, 48
        %v5646 = vpop.permute.xlu0 %5645
        %5647 = vrot.lane.b32.xlu0 %v1103, 48
        %v5648 = vpop.permute.xlu0 %5647
        %5651 = vrot.lane.b32.xlu0 %v1100, 32
        %v5652 = vpop.permute.xlu0 %5651
        %5653 = vrot.lane.b32.xlu0 %v1103, 32
        %v5654 = vpop.permute.xlu0 %5653
        %5657 = vrot.lane.b32.xlu0 %v1100, 16
        %v5658 = vpop.permute.xlu0 %5657
        %5659 = vrot.lane.b32.xlu0 %v1103, 16
        %v5660 = vpop.permute.xlu0 %5659
        %v5663 = vcombine.low %v1100, %v5628
        %v5664 = vcombine.high %v1100, %v5628
        %v5666 = vunpack.c.l.s4 1983009808
        %v5667 = vunpack.c.0.s8 %v5666
        %v5668 = vlaneseq
        %v5669 = vshrl.u32 %v5668, 7
        %v5670 = vsub.s32 %v5667, %v5669
        %v5671 = vrot.slane %v5663, %v5670
        %v5673 = vunpack.c.l.s4 1983009808
        %v5674 = vunpack.c.0.s8 %v5673
        %v5675 = vlaneseq
        %v5676 = vshrl.u32 %v5675, 7
        %v5677 = vsub.s32 %v5674, %v5676
        %v5678 = vrot.slane %v5664, %v5677
        %v5679 = vcombine.low %v5622, %v5634
        %v5680 = vcombine.high %v5622, %v5634
        %v5682 = vunpack.c.l.s4 1983009808
        %v5683 = vunpack.c.0.s8 %v5682
        %v5684 = vlaneseq
        %v5685 = vshrl.u32 %v5684, 7
        %v5686 = vsub.s32 %v5683, %v5685
        %v5687 = vrot.slane %v5679, %v5686
        %v5689 = vunpack.c.l.s4 1983009808
        %v5690 = vunpack.c.0.s8 %v5689
        %v5691 = vlaneseq
        %v5692 = vshrl.u32 %v5691, 7
        %v5693 = vsub.s32 %v5690, %v5692
        %v5694 = vrot.slane %v5680, %v5693
        %v5695 = vcombine.low %v5640, %v5652
        %v5696 = vcombine.high %v5640, %v5652
        %v5698 = vunpack.c.l.s4 1983009808
        %v5699 = vunpack.c.0.s8 %v5698
        %v5700 = vlaneseq
        %v5701 = vshrl.u32 %v5700, 7
        %v5702 = vsub.s32 %v5699, %v5701
        %v5703 = vrot.slane %v5695, %v5702
        %v5705 = vunpack.c.l.s4 1983009808
        %v5706 = vunpack.c.0.s8 %v5705
        %v5707 = vlaneseq
        %v5708 = vshrl.u32 %v5707, 7
        %v5709 = vsub.s32 %v5706, %v5708
        %v5710 = vrot.slane %v5696, %v5709
        %v5711 = vcombine.low %v5646, %v5658
        %v5712 = vcombine.high %v5646, %v5658
        %v5714 = vunpack.c.l.s4 1983009808
        %v5715 = vunpack.c.0.s8 %v5714
        %v5716 = vlaneseq
        %v5717 = vshrl.u32 %v5716, 7
        %v5718 = vsub.s32 %v5715, %v5717
        %v5719 = vrot.slane %v5711, %v5718
        %v5721 = vunpack.c.l.s4 1983009808
        %v5722 = vunpack.c.0.s8 %v5721
        %v5723 = vlaneseq
        %v5724 = vshrl.u32 %v5723, 7
        %v5725 = vsub.s32 %v5722, %v5724
        %v5726 = vrot.slane %v5712, %v5725
        %v5727 = vcombine.low %v5671, %v5687
        %v5728 = vcombine.high %v5671, %v5687
        %v5730 = vunpack.c.l.s4 1934713408
        %v5731 = vunpack.c.0.s8 %v5730
        %v5732 = vlaneseq
        %v5733 = vshrl.u32 %v5732, 7
        %v5734 = vsub.s32 %v5731, %v5733
        %v5735 = vrot.slane %v5727, %v5734
        %v5737 = vunpack.c.l.s4 1934713408
        %v5738 = vunpack.c.0.s8 %v5737
        %v5739 = vlaneseq
        %v5740 = vshrl.u32 %v5739, 7
        %v5741 = vsub.s32 %v5738, %v5740
        %v5742 = vrot.slane %v5728, %v5741
        %v5743 = vcombine.low %v5678, %v5694
        %v5744 = vcombine.high %v5678, %v5694
        %v5746 = vunpack.c.l.s4 1934713408
        %v5747 = vunpack.c.0.s8 %v5746
        %v5748 = vlaneseq
        %v5749 = vshrl.u32 %v5748, 7
        %v5750 = vsub.s32 %v5747, %v5749
        %v5751 = vrot.slane %v5743, %v5750
        %v5753 = vunpack.c.l.s4 1934713408
        %v5754 = vunpack.c.0.s8 %v5753
        %v5755 = vlaneseq
        %v5756 = vshrl.u32 %v5755, 7
        %v5757 = vsub.s32 %v5754, %v5756
        %v5758 = vrot.slane %v5744, %v5757
        %v5759 = vcombine.low %v5703, %v5719
        %v5760 = vcombine.high %v5703, %v5719
        %v5762 = vunpack.c.l.s4 1934713408
        %v5763 = vunpack.c.0.s8 %v5762
        %v5764 = vlaneseq
        %v5765 = vshrl.u32 %v5764, 7
        %v5766 = vsub.s32 %v5763, %v5765
        %v5767 = vrot.slane %v5759, %v5766
        %v5769 = vunpack.c.l.s4 1934713408
        %v5770 = vunpack.c.0.s8 %v5769
        %v5771 = vlaneseq
        %v5772 = vshrl.u32 %v5771, 7
        %v5773 = vsub.s32 %v5770, %v5772
        %v5774 = vrot.slane %v5760, %v5773
        %v5775 = vcombine.low %v5710, %v5726
        %v5776 = vcombine.high %v5710, %v5726
        %v5778 = vunpack.c.l.s4 1934713408
        %v5779 = vunpack.c.0.s8 %v5778
        %v5780 = vlaneseq
        %v5781 = vshrl.u32 %v5780, 7
        %v5782 = vsub.s32 %v5779, %v5781
        %v5783 = vrot.slane %v5775, %v5782
        %v5785 = vunpack.c.l.s4 1934713408
        %v5786 = vunpack.c.0.s8 %v5785
        %v5787 = vlaneseq
        %v5788 = vshrl.u32 %v5787, 7
        %v5789 = vsub.s32 %v5786, %v5788
        %v5790 = vrot.slane %v5776, %v5789
        %v5791 = vcombine.low %v5735, %v5767
        %v5792 = vcombine.high %v5735, %v5767
        %v5793 = vcombine.low %v5742, %v5774
        %v5794 = vcombine.high %v5742, %v5774
        %v5795 = vcombine.low %v5751, %v5783
        %v5796 = vcombine.high %v5751, %v5783
        %v5797 = vcombine.low %v5758, %v5790
        %v5798 = vcombine.high %v5758, %v5790
        %v5799 = vcombine.low %v1103, %v5630
        %v5800 = vcombine.high %v1103, %v5630
        %v5802 = vunpack.c.l.s4 1983009808
        %v5803 = vunpack.c.0.s8 %v5802
        %v5804 = vlaneseq
        %v5805 = vshrl.u32 %v5804, 7
        %v5806 = vsub.s32 %v5803, %v5805
        %v5807 = vrot.slane %v5799, %v5806
        %v5809 = vunpack.c.l.s4 1983009808
        %v5810 = vunpack.c.0.s8 %v5809
        %v5811 = vlaneseq
        %v5812 = vshrl.u32 %v5811, 7
        %v5813 = vsub.s32 %v5810, %v5812
        %v5814 = vrot.slane %v5800, %v5813
        %v5815 = vcombine.low %v5624, %v5636
        %v5816 = vcombine.high %v5624, %v5636
        %v5818 = vunpack.c.l.s4 1983009808
        %v5819 = vunpack.c.0.s8 %v5818
        %v5820 = vlaneseq
        %v5821 = vshrl.u32 %v5820, 7
        %v5822 = vsub.s32 %v5819, %v5821
        %v5823 = vrot.slane %v5815, %v5822
        %v5825 = vunpack.c.l.s4 1983009808
        %v5826 = vunpack.c.0.s8 %v5825
        %v5827 = vlaneseq
        %v5828 = vshrl.u32 %v5827, 7
        %v5829 = vsub.s32 %v5826, %v5828
        %v5830 = vrot.slane %v5816, %v5829
        %v5831 = vcombine.low %v5642, %v5654
        %v5832 = vcombine.high %v5642, %v5654
        %v5834 = vunpack.c.l.s4 1983009808
        %v5835 = vunpack.c.0.s8 %v5834
        %v5836 = vlaneseq
        %v5837 = vshrl.u32 %v5836, 7
        %v5838 = vsub.s32 %v5835, %v5837
        %v5839 = vrot.slane %v5831, %v5838
        %v5841 = vunpack.c.l.s4 1983009808
        %v5842 = vunpack.c.0.s8 %v5841
        %v5843 = vlaneseq
        %v5844 = vshrl.u32 %v5843, 7
        %v5845 = vsub.s32 %v5842, %v5844
        %v5846 = vrot.slane %v5832, %v5845
        %v5847 = vcombine.low %v5648, %v5660
        %v5848 = vcombine.high %v5648, %v5660
        %v5850 = vunpack.c.l.s4 1983009808
        %v5851 = vunpack.c.0.s8 %v5850
        %v5852 = vlaneseq
        %v5853 = vshrl.u32 %v5852, 7
        %v5854 = vsub.s32 %v5851, %v5853
        %v5855 = vrot.slane %v5847, %v5854
        %v5857 = vunpack.c.l.s4 1983009808
        %v5858 = vunpack.c.0.s8 %v5857
        %v5859 = vlaneseq
        %v5860 = vshrl.u32 %v5859, 7
        %v5861 = vsub.s32 %v5858, %v5860
        %v5862 = vrot.slane %v5848, %v5861
        %v5863 = vcombine.low %v5807, %v5823
        %v5864 = vcombine.high %v5807, %v5823
        %v5866 = vunpack.c.l.s4 1934713408
        %v5867 = vunpack.c.0.s8 %v5866
        %v5868 = vlaneseq
        %v5869 = vshrl.u32 %v5868, 7
        %v5870 = vsub.s32 %v5867, %v5869
        %v5871 = vrot.slane %v5863, %v5870
        %v5873 = vunpack.c.l.s4 1934713408
        %v5874 = vunpack.c.0.s8 %v5873
        %v5875 = vlaneseq
        %v5876 = vshrl.u32 %v5875, 7
        %v5877 = vsub.s32 %v5874, %v5876
        %v5878 = vrot.slane %v5864, %v5877
        %v5879 = vcombine.low %v5814, %v5830
        %v5880 = vcombine.high %v5814, %v5830
        %v5882 = vunpack.c.l.s4 1934713408
        %v5883 = vunpack.c.0.s8 %v5882
        %v5884 = vlaneseq
        %v5885 = vshrl.u32 %v5884, 7
        %v5886 = vsub.s32 %v5883, %v5885
        %v5887 = vrot.slane %v5879, %v5886
        %v5889 = vunpack.c.l.s4 1934713408
        %v5890 = vunpack.c.0.s8 %v5889
        %v5891 = vlaneseq
        %v5892 = vshrl.u32 %v5891, 7
        %v5893 = vsub.s32 %v5890, %v5892
        %v5894 = vrot.slane %v5880, %v5893
        %v5895 = vcombine.low %v5839, %v5855
        %v5896 = vcombine.high %v5839, %v5855
        %v5898 = vunpack.c.l.s4 1934713408
        %v5899 = vunpack.c.0.s8 %v5898
        %v5900 = vlaneseq
        %v5901 = vshrl.u32 %v5900, 7
        %v5902 = vsub.s32 %v5899, %v5901
        %v5903 = vrot.slane %v5895, %v5902
        %v5905 = vunpack.c.l.s4 1934713408
        %v5906 = vunpack.c.0.s8 %v5905
        %v5907 = vlaneseq
        %v5908 = vshrl.u32 %v5907, 7
        %v5909 = vsub.s32 %v5906, %v5908
        %v5910 = vrot.slane %v5896, %v5909
        %v5911 = vcombine.low %v5846, %v5862
        %v5912 = vcombine.high %v5846, %v5862
        %v5914 = vunpack.c.l.s4 1934713408
        %v5915 = vunpack.c.0.s8 %v5914
        %v5916 = vlaneseq
        %v5917 = vshrl.u32 %v5916, 7
        %v5918 = vsub.s32 %v5915, %v5917
        %v5919 = vrot.slane %v5911, %v5918
        %v5921 = vunpack.c.l.s4 1934713408
        %v5922 = vunpack.c.0.s8 %v5921
        %v5923 = vlaneseq
        %v5924 = vshrl.u32 %v5923, 7
        %v5925 = vsub.s32 %v5922, %v5924
        %v5926 = vrot.slane %v5912, %v5925
        %v5927 = vcombine.low %v5871, %v5903
        %v5928 = vcombine.high %v5871, %v5903
        %v5929 = vcombine.low %v5878, %v5910
        %v5930 = vcombine.high %v5878, %v5910
        %v5931 = vcombine.low %v5887, %v5919
        %v5932 = vcombine.high %v5887, %v5919
        %v5933 = vcombine.low %v5894, %v5926
        %v5934 = vcombine.high %v5894, %v5926
        %v5935 = vcombine.low %v5791, %v5793
        %v5936 = vcombine.high %v5791, %v5793
        %v5938 = vunpack.c.l.s4 1983009808
        %v5939 = vunpack.c.0.s8 %v5938
        %v5940 = vlaneseq
        %v5941 = vshrl.u32 %v5940, 7
        %v5942 = vsub.s32 %v5939, %v5941
        %v5943 = vrot.slane %v5935, %v5942
        %v5945 = vunpack.c.l.s4 1983009808
        %v5946 = vunpack.c.0.s8 %v5945
        %v5947 = vlaneseq
        %v5948 = vshrl.u32 %v5947, 7
        %v5949 = vsub.s32 %v5946, %v5948
        %v5950 = vrot.slane %v5936, %v5949
        %v5951 = vcombine.low %v5792, %v5794
        %v5952 = vcombine.high %v5792, %v5794
        %v5954 = vunpack.c.l.s4 1983009808
        %v5955 = vunpack.c.0.s8 %v5954
        %v5956 = vlaneseq
        %v5957 = vshrl.u32 %v5956, 7
        %v5958 = vsub.s32 %v5955, %v5957
        %v5959 = vrot.slane %v5951, %v5958
        %v5961 = vunpack.c.l.s4 1983009808
        %v5962 = vunpack.c.0.s8 %v5961
        %v5963 = vlaneseq
        %v5964 = vshrl.u32 %v5963, 7
        %v5965 = vsub.s32 %v5962, %v5964
        %v5966 = vrot.slane %v5952, %v5965
        %v5967 = vcombine.low %v5795, %v5797
        %v5968 = vcombine.high %v5795, %v5797
        %v5970 = vunpack.c.l.s4 1983009808
        %v5971 = vunpack.c.0.s8 %v5970
        %v5972 = vlaneseq
        %v5973 = vshrl.u32 %v5972, 7
        %v5974 = vsub.s32 %v5971, %v5973
        %v5975 = vrot.slane %v5967, %v5974
        %v5977 = vunpack.c.l.s4 1983009808
        %v5978 = vunpack.c.0.s8 %v5977
        %v5979 = vlaneseq
        %v5980 = vshrl.u32 %v5979, 7
        %v5981 = vsub.s32 %v5978, %v5980
        %v5982 = vrot.slane %v5968, %v5981
        %v5983 = vcombine.low %v5796, %v5798
        %v5984 = vcombine.high %v5796, %v5798
        %v5986 = vunpack.c.l.s4 1983009808
        %v5987 = vunpack.c.0.s8 %v5986
        %v5988 = vlaneseq
        %v5989 = vshrl.u32 %v5988, 7
        %v5990 = vsub.s32 %v5987, %v5989
        %v5991 = vrot.slane %v5983, %v5990
        %v5993 = vunpack.c.l.s4 1983009808
        %v5994 = vunpack.c.0.s8 %v5993
        %v5995 = vlaneseq
        %v5996 = vshrl.u32 %v5995, 7
        %v5997 = vsub.s32 %v5994, %v5996
        %v5998 = vrot.slane %v5984, %v5997
        %v5999 = vcombine.low %v5943, %v5959
        %v6000 = vcombine.high %v5943, %v5959
        %v6002 = vunpack.c.l.s4 1934713408
        %v6003 = vunpack.c.0.s8 %v6002
        %v6004 = vlaneseq
        %v6005 = vshrl.u32 %v6004, 7
        %v6006 = vsub.s32 %v6003, %v6005
        %v6007 = vrot.slane %v5999, %v6006
        %v6009 = vunpack.c.l.s4 1934713408
        %v6010 = vunpack.c.0.s8 %v6009
        %v6011 = vlaneseq
        %v6012 = vshrl.u32 %v6011, 7
        %v6013 = vsub.s32 %v6010, %v6012
        %v6014 = vrot.slane %v6000, %v6013
        %v6015 = vcombine.low %v5950, %v5966
        %v6016 = vcombine.high %v5950, %v5966
        %v6018 = vunpack.c.l.s4 1934713408
        %v6019 = vunpack.c.0.s8 %v6018
        %v6020 = vlaneseq
        %v6021 = vshrl.u32 %v6020, 7
        %v6022 = vsub.s32 %v6019, %v6021
        %v6023 = vrot.slane %v6015, %v6022
        %v6025 = vunpack.c.l.s4 1934713408
        %v6026 = vunpack.c.0.s8 %v6025
        %v6027 = vlaneseq
        %v6028 = vshrl.u32 %v6027, 7
        %v6029 = vsub.s32 %v6026, %v6028
        %v6030 = vrot.slane %v6016, %v6029
        %v6031 = vcombine.low %v5975, %v5991
        %v6032 = vcombine.high %v5975, %v5991
        %v6034 = vunpack.c.l.s4 1934713408
        %v6035 = vunpack.c.0.s8 %v6034
        %v6036 = vlaneseq
        %v6037 = vshrl.u32 %v6036, 7
        %v6038 = vsub.s32 %v6035, %v6037
        %v6039 = vrot.slane %v6031, %v6038
        %v6041 = vunpack.c.l.s4 1934713408
        %v6042 = vunpack.c.0.s8 %v6041
        %v6043 = vlaneseq
        %v6044 = vshrl.u32 %v6043, 7
        %v6045 = vsub.s32 %v6042, %v6044
        %v6046 = vrot.slane %v6032, %v6045
        %v6047 = vcombine.low %v5982, %v5998
        %v6048 = vcombine.high %v5982, %v5998
        %v6050 = vunpack.c.l.s4 1934713408
        %v6051 = vunpack.c.0.s8 %v6050
        %v6052 = vlaneseq
        %v6053 = vshrl.u32 %v6052, 7
        %v6054 = vsub.s32 %v6051, %v6053
        %v6055 = vrot.slane %v6047, %v6054
        %v6057 = vunpack.c.l.s4 1934713408
        %v6058 = vunpack.c.0.s8 %v6057
        %v6059 = vlaneseq
        %v6060 = vshrl.u32 %v6059, 7
        %v6061 = vsub.s32 %v6058, %v6060
        %v6062 = vrot.slane %v6048, %v6061
        %v6063 = vcombine.low %v6007, %v6039
        %v6064 = vcombine.high %v6007, %v6039
        %v6065 = vcombine.low %v6014, %v6046
        %v6066 = vcombine.high %v6014, %v6046
        %v6067 = vcombine.low %v6023, %v6055
        %v6068 = vcombine.high %v6023, %v6055
        %v6069 = vcombine.low %v6030, %v6062
        %v6070 = vcombine.high %v6030, %v6062
        %v6071 = vcombine.low %v5927, %v5929
        %v6072 = vcombine.high %v5927, %v5929
        %v6074 = vunpack.c.l.s4 1983009808
        %v6075 = vunpack.c.0.s8 %v6074
        %v6076 = vlaneseq
        %v6077 = vshrl.u32 %v6076, 7
        %v6078 = vsub.s32 %v6075, %v6077
        %v6079 = vrot.slane %v6071, %v6078
        %v6081 = vunpack.c.l.s4 1983009808
        %v6082 = vunpack.c.0.s8 %v6081
        %v6083 = vlaneseq
        %v6084 = vshrl.u32 %v6083, 7
        %v6085 = vsub.s32 %v6082, %v6084
        %v6086 = vrot.slane %v6072, %v6085
        %v6087 = vcombine.low %v5928, %v5930
        %v6088 = vcombine.high %v5928, %v5930
        %v6090 = vunpack.c.l.s4 1983009808
        %v6091 = vunpack.c.0.s8 %v6090
        %v6092 = vlaneseq
        %v6093 = vshrl.u32 %v6092, 7
        %v6094 = vsub.s32 %v6091, %v6093
        %v6095 = vrot.slane %v6087, %v6094
        %v6097 = vunpack.c.l.s4 1983009808
        %v6098 = vunpack.c.0.s8 %v6097
        %v6099 = vlaneseq
        %v6100 = vshrl.u32 %v6099, 7
        %v6101 = vsub.s32 %v6098, %v6100
        %v6102 = vrot.slane %v6088, %v6101
        %v6103 = vcombine.low %v5931, %v5933
        %v6104 = vcombine.high %v5931, %v5933
        %v6106 = vunpack.c.l.s4 1983009808
        %v6107 = vunpack.c.0.s8 %v6106
        %v6108 = vlaneseq
        %v6109 = vshrl.u32 %v6108, 7
        %v6110 = vsub.s32 %v6107, %v6109
        %v6111 = vrot.slane %v6103, %v6110
        %v6113 = vunpack.c.l.s4 1983009808
        %v6114 = vunpack.c.0.s8 %v6113
        %v6115 = vlaneseq
        %v6116 = vshrl.u32 %v6115, 7
        %v6117 = vsub.s32 %v6114, %v6116
        %v6118 = vrot.slane %v6104, %v6117
        %v6119 = vcombine.low %v5932, %v5934
        %v6120 = vcombine.high %v5932, %v5934
        %v6122 = vunpack.c.l.s4 1983009808
        %v6123 = vunpack.c.0.s8 %v6122
        %v6124 = vlaneseq
        %v6125 = vshrl.u32 %v6124, 7
        %v6126 = vsub.s32 %v6123, %v6125
        %v6127 = vrot.slane %v6119, %v6126
        %v6129 = vunpack.c.l.s4 1983009808
        %v6130 = vunpack.c.0.s8 %v6129
        %v6131 = vlaneseq
        %v6132 = vshrl.u32 %v6131, 7
        %v6133 = vsub.s32 %v6130, %v6132
        %v6134 = vrot.slane %v6120, %v6133
        %v6135 = vcombine.low %v6079, %v6095
        %v6136 = vcombine.high %v6079, %v6095
        %v6138 = vunpack.c.l.s4 1934713408
        %v6139 = vunpack.c.0.s8 %v6138
        %v6140 = vlaneseq
        %v6141 = vshrl.u32 %v6140, 7
        %v6142 = vsub.s32 %v6139, %v6141
        %v6143 = vrot.slane %v6135, %v6142
        %v6145 = vunpack.c.l.s4 1934713408
        %v6146 = vunpack.c.0.s8 %v6145
        %v6147 = vlaneseq
        %v6148 = vshrl.u32 %v6147, 7
        %v6149 = vsub.s32 %v6146, %v6148
        %v6150 = vrot.slane %v6136, %v6149
        %v6151 = vcombine.low %v6086, %v6102
        %v6152 = vcombine.high %v6086, %v6102
        %v6154 = vunpack.c.l.s4 1934713408
        %v6155 = vunpack.c.0.s8 %v6154
        %v6156 = vlaneseq
        %v6157 = vshrl.u32 %v6156, 7
        %v6158 = vsub.s32 %v6155, %v6157
        %v6159 = vrot.slane %v6151, %v6158
        %v6161 = vunpack.c.l.s4 1934713408
        %v6162 = vunpack.c.0.s8 %v6161
        %v6163 = vlaneseq
        %v6164 = vshrl.u32 %v6163, 7
        %v6165 = vsub.s32 %v6162, %v6164
        %v6166 = vrot.slane %v6152, %v6165
        %v6167 = vcombine.low %v6111, %v6127
        %v6168 = vcombine.high %v6111, %v6127
        %v6170 = vunpack.c.l.s4 1934713408
        %v6171 = vunpack.c.0.s8 %v6170
        %v6172 = vlaneseq
        %v6173 = vshrl.u32 %v6172, 7
        %v6174 = vsub.s32 %v6171, %v6173
        %v6175 = vrot.slane %v6167, %v6174
        %v6177 = vunpack.c.l.s4 1934713408
        %v6178 = vunpack.c.0.s8 %v6177
        %v6179 = vlaneseq
        %v6180 = vshrl.u32 %v6179, 7
        %v6181 = vsub.s32 %v6178, %v6180
        %v6182 = vrot.slane %v6168, %v6181
        %v6183 = vcombine.low %v6118, %v6134
        %v6184 = vcombine.high %v6118, %v6134
        %v6186 = vunpack.c.l.s4 1934713408
        %v6187 = vunpack.c.0.s8 %v6186
        %v6188 = vlaneseq
        %v6189 = vshrl.u32 %v6188, 7
        %v6190 = vsub.s32 %v6187, %v6189
        %v6191 = vrot.slane %v6183, %v6190
        %v6193 = vunpack.c.l.s4 1934713408
        %v6194 = vunpack.c.0.s8 %v6193
        %v6195 = vlaneseq
        %v6196 = vshrl.u32 %v6195, 7
        %v6197 = vsub.s32 %v6194, %v6196
        %v6198 = vrot.slane %v6184, %v6197
        %v6199 = vcombine.low %v6143, %v6175
        %v6200 = vcombine.high %v6143, %v6175
        %v6201 = vcombine.low %v6150, %v6182
        %v6202 = vcombine.high %v6150, %v6182
        %v6203 = vcombine.low %v6159, %v6191
        %v6204 = vcombine.high %v6159, %v6191
        %v6205 = vcombine.low %v6166, %v6198
        %v6206 = vcombine.high %v6166, %v6198
        %v6207 = vpack.c.bf16 %v6199, %v6063
        %v6208 = vpack.c.bf16 %v6200, %v6064
        %v6209 = vpack.c.bf16 %v6201, %v6065
        %v6210 = vpack.c.bf16 %v6202, %v6066
        %v6211 = vpack.c.bf16 %v6203, %v6067
        %v6212 = vpack.c.bf16 %v6204, %v6068
        %v6213 = vpack.c.bf16 %v6205, %v6069
        %v6214 = vpack.c.bf16 %v6206, %v6070
        %v6216 = vsel %vm2894, %v5015, 0
        %v6219 = vsel %vm2894, %v5611, 0
        %6221 = vmatprep.subr.bf16.mxu0 0
        %6222 = vmatpush1.bf16.xpose.msra.mxu0 %v6219
        %6223 = vmatprep.subr.bf16.mxu0 0
        %6224 = vmatpush1.bf16.xpose.msra.mxu0 0
        %6225 = vmatprep.subr.bf16.mxu0 0
        %6226 = vmatpush1.bf16.xpose.msra.mxu0 0
        %6227 = vmatprep.subr.bf16.mxu0 0
        %6228 = vmatpush1.bf16.xpose.msra.mxu0 0
        %6229 = vmatprep.subr.bf16.mxu0 0
        %6230 = vmatpush1.bf16.xpose.msra.mxu0 0
        %6231 = vmatprep.subr.bf16.mxu0 0
        %6232 = vmatpush1.bf16.xpose.msra.mxu0 0
        %6233 = vmatprep.subr.bf16.mxu0 0
        %6234 = vmatpush1.bf16.xpose.msra.mxu0 0
        %6235 = vmatprep.subr.bf16.mxu0 0
        %6236 = vmatpush1.bf16.xpose.msra.mxu0 0
        %6237 = vmatprep.subr.bf16.mxu0 0
        %6238 = vmatpush1.bf16.xpose.msra.mxu0 0
        %6239 = vmatprep.subr.bf16.mxu0 0
        %6240 = vmatpush1.bf16.xpose.msra.mxu0 0
        %6241 = vmatprep.subr.bf16.mxu0 0
        %6242 = vmatpush1.bf16.xpose.msra.mxu0 0
        %6243 = vmatprep.subr.bf16.mxu0 0
        %6244 = vmatpush1.bf16.xpose.msra.mxu0 0
        %6245 = vmatprep.subr.bf16.mxu0 0
        %6246 = vmatpush1.bf16.xpose.msra.mxu0 0
        %6247 = vmatprep.subr.bf16.mxu0 0
        %6248 = vmatpush1.bf16.xpose.msra.mxu0 0
        %6249 = vmatprep.subr.bf16.mxu0 0
        %6250 = vmatpush1.bf16.xpose.msra.mxu0 0
        %6251 = vmatprep.subr.bf16.mxu0 0
        %6252 = vmatpush1.bf16.xpose.msra.mxu0 0
        %6253 = vmatprep.mubr.bf16.mxu0 0
        %6254 = vmatmul.mubr.bf16.gmra.mrb[0].mxu0 %v6216
        %v6255 = vpop.f32.mrb[0].mxu0
        %v6256 = vadd.f32 0.0, %v6255
        %v6257 = vpop.f32.mrb[0].mxu0
        %v6258 = vpop.f32.mrb[0].mxu0
        %v6259 = vadd.f32 0.0, %v6258
        %v6260 = vpop.f32.mrb[0].mxu0
        %6261 = vdwg.mxu0
        %v6263 = vsel %vm2894, %v5016, 0
        %v6266 = vsel %vm2894, %v5612, 0
        %6268 = vmatprep.subr.bf16.mxu0 0
        %6269 = vmatpush1.bf16.xpose.msra.mxu0 %v6266
        %6270 = vmatprep.subr.bf16.mxu0 0
        %6271 = vmatpush1.bf16.xpose.msra.mxu0 0
        %6272 = vmatprep.subr.bf16.mxu0 0
        %6273 = vmatpush1.bf16.xpose.msra.mxu0 0
        %6274 = vmatprep.subr.bf16.mxu0 0
        %6275 = vmatpush1.bf16.xpose.msra.mxu0 0
        %6276 = vmatprep.subr.bf16.mxu0 0
        %6277 = vmatpush1.bf16.xpose.msra.mxu0 0
        %6278 = vmatprep.subr.bf16.mxu0 0
        %6279 = vmatpush1.bf16.xpose.msra.mxu0 0
        %6280 = vmatprep.subr.bf16.mxu0 0
        %6281 = vmatpush1.bf16.xpose.msra.mxu0 0
        %6282 = vmatprep.subr.bf16.mxu0 0
        %6283 = vmatpush1.bf16.xpose.msra.mxu0 0
        %6284 = vmatprep.subr.bf16.mxu0 0
        %6285 = vmatpush1.bf16.xpose.msra.mxu0 0
        %6286 = vmatprep.subr.bf16.mxu0 0
        %6287 = vmatpush1.bf16.xpose.msra.mxu0 0
        %6288 = vmatprep.subr.bf16.mxu0 0
        %6289 = vmatpush1.bf16.xpose.msra.mxu0 0
        %6290 = vmatprep.subr.bf16.mxu0 0
        %6291 = vmatpush1.bf16.xpose.msra.mxu0 0
        %6292 = vmatprep.subr.bf16.mxu0 0
        %6293 = vmatpush1.bf16.xpose.msra.mxu0 0
        %6294 = vmatprep.subr.bf16.mxu0 0
        %6295 = vmatpush1.bf16.xpose.msra.mxu0 0
        %6296 = vmatprep.subr.bf16.mxu0 0
        %6297 = vmatpush1.bf16.xpose.msra.mxu0 0
        %6298 = vmatprep.subr.bf16.mxu0 0
        %6299 = vmatpush1.bf16.xpose.msra.mxu0 0
        %6300 = vmatprep.mubr.bf16.mxu0 0
        %6301 = vmatmul.mubr.bf16.gmra.mrb[0].mxu0 %v6263
        %v6302 = vpop.f32.mrb[0].mxu0
        %v6303 = vadd.f32 0.0, %v6302
        %v6304 = vpop.f32.mrb[0].mxu0
        %v6305 = vpop.f32.mrb[0].mxu0
        %v6306 = vadd.f32 0.0, %v6305
        %v6307 = vpop.f32.mrb[0].mxu0
        %6308 = vdwg.mxu0
        %v6310 = vsel %vm2894, %v5017, 0
        %v6313 = vsel %vm2894, %v5613, 0
        %6315 = vmatprep.subr.bf16.mxu0 0
        %6316 = vmatpush1.bf16.xpose.msra.mxu0 %v6313
        %6317 = vmatprep.subr.bf16.mxu0 0
        %6318 = vmatpush1.bf16.xpose.msra.mxu0 0
        %6319 = vmatprep.subr.bf16.mxu0 0
        %6320 = vmatpush1.bf16.xpose.msra.mxu0 0
        %6321 = vmatprep.subr.bf16.mxu0 0
        %6322 = vmatpush1.bf16.xpose.msra.mxu0 0
        %6323 = vmatprep.subr.bf16.mxu0 0
        %6324 = vmatpush1.bf16.xpose.msra.mxu0 0
        %6325 = vmatprep.subr.bf16.mxu0 0
        %6326 = vmatpush1.bf16.xpose.msra.mxu0 0
        %6327 = vmatprep.subr.bf16.mxu0 0
        %6328 = vmatpush1.bf16.xpose.msra.mxu0 0
        %6329 = vmatprep.subr.bf16.mxu0 0
        %6330 = vmatpush1.bf16.xpose.msra.mxu0 0
        %6331 = vmatprep.subr.bf16.mxu0 0
        %6332 = vmatpush1.bf16.xpose.msra.mxu0 0
        %6333 = vmatprep.subr.bf16.mxu0 0
        %6334 = vmatpush1.bf16.xpose.msra.mxu0 0
        %6335 = vmatprep.subr.bf16.mxu0 0
        %6336 = vmatpush1.bf16.xpose.msra.mxu0 0
        %6337 = vmatprep.subr.bf16.mxu0 0
        %6338 = vmatpush1.bf16.xpose.msra.mxu0 0
        %6339 = vmatprep.subr.bf16.mxu0 0
        %6340 = vmatpush1.bf16.xpose.msra.mxu0 0
        %6341 = vmatprep.subr.bf16.mxu0 0
        %6342 = vmatpush1.bf16.xpose.msra.mxu0 0
        %6343 = vmatprep.subr.bf16.mxu0 0
        %6344 = vmatpush1.bf16.xpose.msra.mxu0 0
        %6345 = vmatprep.subr.bf16.mxu0 0
        %6346 = vmatpush1.bf16.xpose.msra.mxu0 0
        %6347 = vmatprep.mubr.bf16.mxu0 0
        %6348 = vmatmul.mubr.bf16.gmra.mrb[0].mxu0 %v6310
        %v6349 = vpop.f32.mrb[0].mxu0
        %v6350 = vadd.f32 0.0, %v6349
        %v6351 = vpop.f32.mrb[0].mxu0
        %v6352 = vpop.f32.mrb[0].mxu0
        %v6353 = vadd.f32 0.0, %v6352
        %v6354 = vpop.f32.mrb[0].mxu0
        %6355 = vdwg.mxu0
        %v6357 = vsel %vm2894, %v5018, 0
        %v6360 = vsel %vm2894, %v5614, 0
        %6362 = vmatprep.subr.bf16.mxu0 0
        %6363 = vmatpush1.bf16.xpose.msra.mxu0 %v6360
        %6364 = vmatprep.subr.bf16.mxu0 0
        %6365 = vmatpush1.bf16.xpose.msra.mxu0 0
        %6366 = vmatprep.subr.bf16.mxu0 0
        %6367 = vmatpush1.bf16.xpose.msra.mxu0 0
        %6368 = vmatprep.subr.bf16.mxu0 0
        %6369 = vmatpush1.bf16.xpose.msra.mxu0 0
        %6370 = vmatprep.subr.bf16.mxu0 0
        %6371 = vmatpush1.bf16.xpose.msra.mxu0 0
        %6372 = vmatprep.subr.bf16.mxu0 0
        %6373 = vmatpush1.bf16.xpose.msra.mxu0 0
        %6374 = vmatprep.subr.bf16.mxu0 0
        %6375 = vmatpush1.bf16.xpose.msra.mxu0 0
        %6376 = vmatprep.subr.bf16.mxu0 0
        %6377 = vmatpush1.bf16.xpose.msra.mxu0 0
        %6378 = vmatprep.subr.bf16.mxu0 0
        %6379 = vmatpush1.bf16.xpose.msra.mxu0 0
        %6380 = vmatprep.subr.bf16.mxu0 0
        %6381 = vmatpush1.bf16.xpose.msra.mxu0 0
        %6382 = vmatprep.subr.bf16.mxu0 0
        %6383 = vmatpush1.bf16.xpose.msra.mxu0 0
        %6384 = vmatprep.subr.bf16.mxu0 0
        %6385 = vmatpush1.bf16.xpose.msra.mxu0 0
        %6386 = vmatprep.subr.bf16.mxu0 0
        %6387 = vmatpush1.bf16.xpose.msra.mxu0 0
        %6388 = vmatprep.subr.bf16.mxu0 0
        %6389 = vmatpush1.bf16.xpose.msra.mxu0 0
        %6390 = vmatprep.subr.bf16.mxu0 0
        %6391 = vmatpush1.bf16.xpose.msra.mxu0 0
        %6392 = vmatprep.subr.bf16.mxu0 0
        %6393 = vmatpush1.bf16.xpose.msra.mxu0 0
        %6394 = vmatprep.mubr.bf16.mxu0 0
        %6395 = vmatmul.mubr.bf16.gmra.mrb[0].mxu0 %v6357
        %v6396 = vpop.f32.mrb[0].mxu0
        %v6397 = vadd.f32 0.0, %v6396
        %v6398 = vpop.f32.mrb[0].mxu0
        %v6399 = vpop.f32.mrb[0].mxu0
        %v6400 = vadd.f32 0.0, %v6399
        %v6401 = vpop.f32.mrb[0].mxu0
        %6402 = vdwg.mxu0
        %v6404 = vsel %vm2894, %v5019, 0
        %v6407 = vsel %vm2894, %v5615, 0
        %6409 = vmatprep.subr.bf16.mxu0 0
        %6410 = vmatpush1.bf16.xpose.msra.mxu0 %v6407
        %6411 = vmatprep.subr.bf16.mxu0 0
        %6412 = vmatpush1.bf16.xpose.msra.mxu0 0
        %6413 = vmatprep.subr.bf16.mxu0 0
        %6414 = vmatpush1.bf16.xpose.msra.mxu0 0
        %6415 = vmatprep.subr.bf16.mxu0 0
        %6416 = vmatpush1.bf16.xpose.msra.mxu0 0
        %6417 = vmatprep.subr.bf16.mxu0 0
        %6418 = vmatpush1.bf16.xpose.msra.mxu0 0
        %6419 = vmatprep.subr.bf16.mxu0 0
        %6420 = vmatpush1.bf16.xpose.msra.mxu0 0
        %6421 = vmatprep.subr.bf16.mxu0 0
        %6422 = vmatpush1.bf16.xpose.msra.mxu0 0
        %6423 = vmatprep.subr.bf16.mxu0 0
        %6424 = vmatpush1.bf16.xpose.msra.mxu0 0
        %6425 = vmatprep.subr.bf16.mxu0 0
        %6426 = vmatpush1.bf16.xpose.msra.mxu0 0
        %6427 = vmatprep.subr.bf16.mxu0 0
        %6428 = vmatpush1.bf16.xpose.msra.mxu0 0
        %6429 = vmatprep.subr.bf16.mxu0 0
        %6430 = vmatpush1.bf16.xpose.msra.mxu0 0
        %6431 = vmatprep.subr.bf16.mxu0 0
        %6432 = vmatpush1.bf16.xpose.msra.mxu0 0
        %6433 = vmatprep.subr.bf16.mxu0 0
        %6434 = vmatpush1.bf16.xpose.msra.mxu0 0
        %6435 = vmatprep.subr.bf16.mxu0 0
        %6436 = vmatpush1.bf16.xpose.msra.mxu0 0
        %6437 = vmatprep.subr.bf16.mxu0 0
        %6438 = vmatpush1.bf16.xpose.msra.mxu0 0
        %6439 = vmatprep.subr.bf16.mxu0 0
        %6440 = vmatpush1.bf16.xpose.msra.mxu0 0
        %6441 = vmatprep.mubr.bf16.mxu0 0
        %6442 = vmatmul.mubr.bf16.gmra.mrb[0].mxu0 %v6404
        %v6443 = vpop.f32.mrb[0].mxu0
        %v6444 = vadd.f32 0.0, %v6443
        %v6445 = vpop.f32.mrb[0].mxu0
        %v6446 = vpop.f32.mrb[0].mxu0
        %v6447 = vadd.f32 0.0, %v6446
        %v6448 = vpop.f32.mrb[0].mxu0
        %6449 = vdwg.mxu0
        %v6451 = vsel %vm2894, %v5020, 0
        %v6454 = vsel %vm2894, %v5616, 0
        %6456 = vmatprep.subr.bf16.mxu0 0
        %6457 = vmatpush1.bf16.xpose.msra.mxu0 %v6454
        %6458 = vmatprep.subr.bf16.mxu0 0
        %6459 = vmatpush1.bf16.xpose.msra.mxu0 0
        %6460 = vmatprep.subr.bf16.mxu0 0
        %6461 = vmatpush1.bf16.xpose.msra.mxu0 0
        %6462 = vmatprep.subr.bf16.mxu0 0
        %6463 = vmatpush1.bf16.xpose.msra.mxu0 0
        %6464 = vmatprep.subr.bf16.mxu0 0
        %6465 = vmatpush1.bf16.xpose.msra.mxu0 0
        %6466 = vmatprep.subr.bf16.mxu0 0
        %6467 = vmatpush1.bf16.xpose.msra.mxu0 0
        %6468 = vmatprep.subr.bf16.mxu0 0
        %6469 = vmatpush1.bf16.xpose.msra.mxu0 0
        %6470 = vmatprep.subr.bf16.mxu0 0
        %6471 = vmatpush1.bf16.xpose.msra.mxu0 0
        %6472 = vmatprep.subr.bf16.mxu0 0
        %6473 = vmatpush1.bf16.xpose.msra.mxu0 0
        %6474 = vmatprep.subr.bf16.mxu0 0
        %6475 = vmatpush1.bf16.xpose.msra.mxu0 0
        %6476 = vmatprep.subr.bf16.mxu0 0
        %6477 = vmatpush1.bf16.xpose.msra.mxu0 0
        %6478 = vmatprep.subr.bf16.mxu0 0
        %6479 = vmatpush1.bf16.xpose.msra.mxu0 0
        %6480 = vmatprep.subr.bf16.mxu0 0
        %6481 = vmatpush1.bf16.xpose.msra.mxu0 0
        %6482 = vmatprep.subr.bf16.mxu0 0
        %6483 = vmatpush1.bf16.xpose.msra.mxu0 0
        %6484 = vmatprep.subr.bf16.mxu0 0
        %6485 = vmatpush1.bf16.xpose.msra.mxu0 0
        %6486 = vmatprep.subr.bf16.mxu0 0
        %6487 = vmatpush1.bf16.xpose.msra.mxu0 0
        %6488 = vmatprep.mubr.bf16.mxu0 0
        %6489 = vmatmul.mubr.bf16.gmra.mrb[0].mxu0 %v6451
        %v6490 = vpop.f32.mrb[0].mxu0
        %v6491 = vadd.f32 0.0, %v6490
        %v6492 = vpop.f32.mrb[0].mxu0
        %v6493 = vpop.f32.mrb[0].mxu0
        %v6494 = vadd.f32 0.0, %v6493
        %v6495 = vpop.f32.mrb[0].mxu0
        %6496 = vdwg.mxu0
        %v6498 = vsel %vm2894, %v5021, 0
        %v6501 = vsel %vm2894, %v5617, 0
        %6503 = vmatprep.subr.bf16.mxu0 0
        %6504 = vmatpush1.bf16.xpose.msra.mxu0 %v6501
        %6505 = vmatprep.subr.bf16.mxu0 0
        %6506 = vmatpush1.bf16.xpose.msra.mxu0 0
        %6507 = vmatprep.subr.bf16.mxu0 0
        %6508 = vmatpush1.bf16.xpose.msra.mxu0 0
        %6509 = vmatprep.subr.bf16.mxu0 0
        %6510 = vmatpush1.bf16.xpose.msra.mxu0 0
        %6511 = vmatprep.subr.bf16.mxu0 0
        %6512 = vmatpush1.bf16.xpose.msra.mxu0 0
        %6513 = vmatprep.subr.bf16.mxu0 0
        %6514 = vmatpush1.bf16.xpose.msra.mxu0 0
        %6515 = vmatprep.subr.bf16.mxu0 0
        %6516 = vmatpush1.bf16.xpose.msra.mxu0 0
        %6517 = vmatprep.subr.bf16.mxu0 0
        %6518 = vmatpush1.bf16.xpose.msra.mxu0 0
        %6519 = vmatprep.subr.bf16.mxu0 0
        %6520 = vmatpush1.bf16.xpose.msra.mxu0 0
        %6521 = vmatprep.subr.bf16.mxu0 0
        %6522 = vmatpush1.bf16.xpose.msra.mxu0 0
        %6523 = vmatprep.subr.bf16.mxu0 0
        %6524 = vmatpush1.bf16.xpose.msra.mxu0 0
        %6525 = vmatprep.subr.bf16.mxu0 0
        %6526 = vmatpush1.bf16.xpose.msra.mxu0 0
        %6527 = vmatprep.subr.bf16.mxu0 0
        %6528 = vmatpush1.bf16.xpose.msra.mxu0 0
        %6529 = vmatprep.subr.bf16.mxu0 0
        %6530 = vmatpush1.bf16.xpose.msra.mxu0 0
        %6531 = vmatprep.subr.bf16.mxu0 0
        %6532 = vmatpush1.bf16.xpose.msra.mxu0 0
        %6533 = vmatprep.subr.bf16.mxu0 0
        %6534 = vmatpush1.bf16.xpose.msra.mxu0 0
        %6535 = vmatprep.mubr.bf16.mxu0 0
        %6536 = vmatmul.mubr.bf16.gmra.mrb[0].mxu0 %v6498
        %v6537 = vpop.f32.mrb[0].mxu0
        %v6538 = vadd.f32 0.0, %v6537
        %v6539 = vpop.f32.mrb[0].mxu0
        %v6540 = vpop.f32.mrb[0].mxu0
        %v6541 = vadd.f32 0.0, %v6540
        %v6542 = vpop.f32.mrb[0].mxu0
        %6543 = vdwg.mxu0
        %v6545 = vsel %vm2894, %v5022, 0
        %v6548 = vsel %vm2894, %v5618, 0
        %6550 = vmatprep.subr.bf16.mxu0 0
        %6551 = vmatpush1.bf16.xpose.msra.mxu0 %v6548
        %6552 = vmatprep.subr.bf16.mxu0 0
        %6553 = vmatpush1.bf16.xpose.msra.mxu0 0
        %6554 = vmatprep.subr.bf16.mxu0 0
        %6555 = vmatpush1.bf16.xpose.msra.mxu0 0
        %6556 = vmatprep.subr.bf16.mxu0 0
        %6557 = vmatpush1.bf16.xpose.msra.mxu0 0
        %6558 = vmatprep.subr.bf16.mxu0 0
        %6559 = vmatpush1.bf16.xpose.msra.mxu0 0
        %6560 = vmatprep.subr.bf16.mxu0 0
        %6561 = vmatpush1.bf16.xpose.msra.mxu0 0
        %6562 = vmatprep.subr.bf16.mxu0 0
        %6563 = vmatpush1.bf16.xpose.msra.mxu0 0
        %6564 = vmatprep.subr.bf16.mxu0 0
        %6565 = vmatpush1.bf16.xpose.msra.mxu0 0
        %6566 = vmatprep.subr.bf16.mxu0 0
        %6567 = vmatpush1.bf16.xpose.msra.mxu0 0
        %6568 = vmatprep.subr.bf16.mxu0 0
        %6569 = vmatpush1.bf16.xpose.msra.mxu0 0
        %6570 = vmatprep.subr.bf16.mxu0 0
        %6571 = vmatpush1.bf16.xpose.msra.mxu0 0
        %6572 = vmatprep.subr.bf16.mxu0 0
        %6573 = vmatpush1.bf16.xpose.msra.mxu0 0
        %6574 = vmatprep.subr.bf16.mxu0 0
        %6575 = vmatpush1.bf16.xpose.msra.mxu0 0
        %6576 = vmatprep.subr.bf16.mxu0 0
        %6577 = vmatpush1.bf16.xpose.msra.mxu0 0
        %6578 = vmatprep.subr.bf16.mxu0 0
        %6579 = vmatpush1.bf16.xpose.msra.mxu0 0
        %6580 = vmatprep.subr.bf16.mxu0 0
        %6581 = vmatpush1.bf16.xpose.msra.mxu0 0
        %6582 = vmatprep.mubr.bf16.mxu0 0
        %6583 = vmatmul.mubr.bf16.gmra.mrb[0].mxu0 %v6545
        %v6584 = vpop.f32.mrb[0].mxu0
        %v6585 = vadd.f32 0.0, %v6584
        %v6586 = vpop.f32.mrb[0].mxu0
        %v6587 = vpop.f32.mrb[0].mxu0
        %v6588 = vadd.f32 0.0, %v6587
        %v6589 = vpop.f32.mrb[0].mxu0
        %6590 = vdwg.mxu0
        %v6591 = vsel %vm2894, %v6256, -inf
        %6592 = vmax.xlane.f32.xlu0 %v6591
        %v6593 = vpop.xlane.xlu0 %6592
        %v6594 = vsel %vm2894, %v6259, -inf
        %6595 = vmax.xlane.f32.xlu0 %v6594
        %v6596 = vpop.xlane.xlu0 %6595
        %v6597 = vsel %vm2894, %v6303, -inf
        %6598 = vmax.xlane.f32.xlu0 %v6597
        %v6599 = vpop.xlane.xlu0 %6598
        %v6600 = vsel %vm2894, %v6306, -inf
        %6601 = vmax.xlane.f32.xlu0 %v6600
        %v6602 = vpop.xlane.xlu0 %6601
        %v6603 = vsel %vm2894, %v6350, -inf
        %6604 = vmax.xlane.f32.xlu0 %v6603
        %v6605 = vpop.xlane.xlu0 %6604
        %v6606 = vsel %vm2894, %v6353, -inf
        %6607 = vmax.xlane.f32.xlu0 %v6606
        %v6608 = vpop.xlane.xlu0 %6607
        %v6609 = vsel %vm2894, %v6397, -inf
        %6610 = vmax.xlane.f32.xlu0 %v6609
        %v6611 = vpop.xlane.xlu0 %6610
        %v6612 = vsel %vm2894, %v6400, -inf
        %6613 = vmax.xlane.f32.xlu0 %v6612
        %v6614 = vpop.xlane.xlu0 %6613
        %v6615 = vsel %vm2894, %v6444, -inf
        %6616 = vmax.xlane.f32.xlu0 %v6615
        %v6617 = vpop.xlane.xlu0 %6616
        %v6618 = vsel %vm2894, %v6447, -inf
        %6619 = vmax.xlane.f32.xlu0 %v6618
        %v6620 = vpop.xlane.xlu0 %6619
        %v6621 = vsel %vm2894, %v6491, -inf
        %6622 = vmax.xlane.f32.xlu0 %v6621
        %v6623 = vpop.xlane.xlu0 %6622
        %v6624 = vsel %vm2894, %v6494, -inf
        %6625 = vmax.xlane.f32.xlu0 %v6624
        %v6626 = vpop.xlane.xlu0 %6625
        %v6627 = vsel %vm2894, %v6538, -inf
        %6628 = vmax.xlane.f32.xlu0 %v6627
        %v6629 = vpop.xlane.xlu0 %6628
        %v6630 = vsel %vm2894, %v6541, -inf
        %6631 = vmax.xlane.f32.xlu0 %v6630
        %v6632 = vpop.xlane.xlu0 %6631
        %v6633 = vsel %vm2894, %v6585, -inf
        %6634 = vmax.xlane.f32.xlu0 %v6633
        %v6635 = vpop.xlane.xlu0 %6634
        %v6636 = vsel %vm2894, %v6588, -inf
        %6637 = vmax.xlane.f32.xlu0 %v6636
        %v6638 = vpop.xlane.xlu0 %6637
        %v6639 = vsub.f32 %v6256, %v6593
        %v6640 = vsub.f32 %v6259, %v6596
        %v6641 = vsub.f32 %v6303, %v6599
        %v6642 = vsub.f32 %v6306, %v6602
        %v6643 = vsub.f32 %v6350, %v6605
        %v6644 = vsub.f32 %v6353, %v6608
        %v6645 = vsub.f32 %v6397, %v6611
        %v6646 = vsub.f32 %v6400, %v6614
        %v6647 = vsub.f32 %v6444, %v6617
        %v6648 = vsub.f32 %v6447, %v6620
        %v6649 = vsub.f32 %v6491, %v6623
        %v6650 = vsub.f32 %v6494, %v6626
        %v6651 = vsub.f32 %v6538, %v6629
        %v6652 = vsub.f32 %v6541, %v6632
        %v6653 = vsub.f32 %v6585, %v6635
        %v6654 = vsub.f32 %v6588, %v6638
        %v6655 = vmul.f32 %v6639, 1.442695
        %v6656 = vpow.pop %v6655
        %v6657 = vmul.f32 %v6640, 1.442695
        %v6658 = vpow.pop %v6657
        %v6659 = vmul.f32 %v6641, 1.442695
        %v6660 = vpow.pop %v6659
        %v6661 = vmul.f32 %v6642, 1.442695
        %v6662 = vpow.pop %v6661
        %v6663 = vmul.f32 %v6643, 1.442695
        %v6664 = vpow.pop %v6663
        %v6665 = vmul.f32 %v6644, 1.442695
        %v6666 = vpow.pop %v6665
        %v6667 = vmul.f32 %v6645, 1.442695
        %v6668 = vpow.pop %v6667
        %v6669 = vmul.f32 %v6646, 1.442695
        %v6670 = vpow.pop %v6669
        %v6671 = vmul.f32 %v6647, 1.442695
        %v6672 = vpow.pop %v6671
        %v6673 = vmul.f32 %v6648, 1.442695
        %v6674 = vpow.pop %v6673
        %v6675 = vmul.f32 %v6649, 1.442695
        %v6676 = vpow.pop %v6675
        %v6677 = vmul.f32 %v6650, 1.442695
        %v6678 = vpow.pop %v6677
        %v6679 = vmul.f32 %v6651, 1.442695
        %v6680 = vpow.pop %v6679
        %v6681 = vmul.f32 %v6652, 1.442695
        %v6682 = vpow.pop %v6681
        %v6683 = vmul.f32 %v6653, 1.442695
        %v6684 = vpow.pop %v6683
        %v6685 = vmul.f32 %v6654, 1.442695
        %v6686 = vpow.pop %v6685
        %v6687 = vsel %vm2894, %v6656, 0.0
        %6688 = vadd.xlane.f32.xlu0 %v6687
        %v6689 = vpop.xlane.xlu0 %6688
        %v6690 = vsel %vm2894, %v6658, 0.0
        %6691 = vadd.xlane.f32.xlu0 %v6690
        %v6692 = vpop.xlane.xlu0 %6691
        %v6693 = vsel %vm2894, %v6660, 0.0
        %6694 = vadd.xlane.f32.xlu0 %v6693
        %v6695 = vpop.xlane.xlu0 %6694
        %v6696 = vsel %vm2894, %v6662, 0.0
        %6697 = vadd.xlane.f32.xlu0 %v6696
        %v6698 = vpop.xlane.xlu0 %6697
        %v6699 = vsel %vm2894, %v6664, 0.0
        %6700 = vadd.xlane.f32.xlu0 %v6699
        %v6701 = vpop.xlane.xlu0 %6700
        %v6702 = vsel %vm2894, %v6666, 0.0
        %6703 = vadd.xlane.f32.xlu0 %v6702
        %v6704 = vpop.xlane.xlu0 %6703
        %v6705 = vsel %vm2894, %v6668, 0.0
        %6706 = vadd.xlane.f32.xlu0 %v6705
        %v6707 = vpop.xlane.xlu0 %6706
        %v6708 = vsel %vm2894, %v6670, 0.0
        %6709 = vadd.xlane.f32.xlu0 %v6708
        %v6710 = vpop.xlane.xlu0 %6709
        %v6711 = vsel %vm2894, %v6672, 0.0
        %6712 = vadd.xlane.f32.xlu0 %v6711
        %v6713 = vpop.xlane.xlu0 %6712
        %v6714 = vsel %vm2894, %v6674, 0.0
        %6715 = vadd.xlane.f32.xlu0 %v6714
        %v6716 = vpop.xlane.xlu0 %6715
        %v6717 = vsel %vm2894, %v6676, 0.0
        %6718 = vadd.xlane.f32.xlu0 %v6717
        %v6719 = vpop.xlane.xlu0 %6718
        %v6720 = vsel %vm2894, %v6678, 0.0
        %6721 = vadd.xlane.f32.xlu0 %v6720
        %v6722 = vpop.xlane.xlu0 %6721
        %v6723 = vsel %vm2894, %v6680, 0.0
        %6724 = vadd.xlane.f32.xlu0 %v6723
        %v6725 = vpop.xlane.xlu0 %6724
        %v6726 = vsel %vm2894, %v6682, 0.0
        %6727 = vadd.xlane.f32.xlu0 %v6726
        %v6728 = vpop.xlane.xlu0 %6727
        %v6729 = vsel %vm2894, %v6684, 0.0
        %6730 = vadd.xlane.f32.xlu0 %v6729
        %v6731 = vpop.xlane.xlu0 %6730
        %v6732 = vsel %vm2894, %v6686, 0.0
        %6733 = vadd.xlane.f32.xlu0 %v6732
        %v6734 = vpop.xlane.xlu0 %6733
        %v6735 = vrcp.pop %v6689
        %v6736 = vrcp.pop %v6692
        %v6737 = vrcp.pop %v6695
        %v6738 = vrcp.pop %v6698
        %v6739 = vrcp.pop %v6701
        %v6740 = vrcp.pop %v6704
        %v6741 = vrcp.pop %v6707
        %v6742 = vrcp.pop %v6710
        %v6743 = vrcp.pop %v6713
        %v6744 = vrcp.pop %v6716
        %v6745 = vrcp.pop %v6719
        %v6746 = vrcp.pop %v6722
        %v6747 = vrcp.pop %v6725
        %v6748 = vrcp.pop %v6728
        %v6749 = vrcp.pop %v6731
        %v6750 = vrcp.pop %v6734
        %v6751 = vmul.f32 %v6656, %v6735
        %v6752 = vmul.f32 %v6658, %v6736
        %v6753 = vmul.f32 %v6660, %v6737
        %v6754 = vmul.f32 %v6662, %v6738
        %v6755 = vmul.f32 %v6664, %v6739
        %v6756 = vmul.f32 %v6666, %v6740
        %v6757 = vmul.f32 %v6668, %v6741
        %v6758 = vmul.f32 %v6670, %v6742
        %v6759 = vmul.f32 %v6672, %v6743
        %v6760 = vmul.f32 %v6674, %v6744
        %v6761 = vmul.f32 %v6676, %v6745
        %v6762 = vmul.f32 %v6678, %v6746
        %v6763 = vmul.f32 %v6680, %v6747
        %v6764 = vmul.f32 %v6682, %v6748
        %v6765 = vmul.f32 %v6684, %v6749
        %v6766 = vmul.f32 %v6686, %v6750
        %v6767 = vpack.c.bf16 %v6752, %v6751
        %v6768 = vpack.c.bf16 %v6754, %v6753
        %v6769 = vpack.c.bf16 %v6756, %v6755
        %v6770 = vpack.c.bf16 %v6758, %v6757
        %v6771 = vpack.c.bf16 %v6760, %v6759
        %v6772 = vpack.c.bf16 %v6762, %v6761
        %v6773 = vpack.c.bf16 %v6764, %v6763
        %v6774 = vpack.c.bf16 %v6766, %v6765
        %v6776 = vsel %vm2894, %v6767, 0
        %6778 = vmatprep.subr.bf16.mxu0 0
        %6779 = vmatpush1.bf16.msra.mxu0 %v6207
        %6780 = vmatprep.subr.bf16.mxu0 0
        %6781 = vmatpush1.bf16.msra.mxu0 0
        %6782 = vmatprep.subr.bf16.mxu0 0
        %6783 = vmatpush1.bf16.msra.mxu0 0
        %6784 = vmatprep.subr.bf16.mxu0 0
        %6785 = vmatpush1.bf16.msra.mxu0 0
        %6786 = vmatprep.subr.bf16.mxu0 0
        %6787 = vmatpush1.bf16.msra.mxu0 0
        %6788 = vmatprep.subr.bf16.mxu0 0
        %6789 = vmatpush1.bf16.msra.mxu0 0
        %6790 = vmatprep.subr.bf16.mxu0 0
        %6791 = vmatpush1.bf16.msra.mxu0 0
        %6792 = vmatprep.subr.bf16.mxu0 0
        %6793 = vmatpush1.bf16.msra.mxu0 0
        %6794 = vmatprep.subr.bf16.mxu0 0
        %6795 = vmatpush1.bf16.msra.mxu0 0
        %6796 = vmatprep.subr.bf16.mxu0 0
        %6797 = vmatpush1.bf16.msra.mxu0 0
        %6798 = vmatprep.subr.bf16.mxu0 0
        %6799 = vmatpush1.bf16.msra.mxu0 0
        %6800 = vmatprep.subr.bf16.mxu0 0
        %6801 = vmatpush1.bf16.msra.mxu0 0
        %6802 = vmatprep.subr.bf16.mxu0 0
        %6803 = vmatpush1.bf16.msra.mxu0 0
        %6804 = vmatprep.subr.bf16.mxu0 0
        %6805 = vmatpush1.bf16.msra.mxu0 0
        %6806 = vmatprep.subr.bf16.mxu0 0
        %6807 = vmatpush1.bf16.msra.mxu0 0
        %6808 = vmatprep.subr.bf16.mxu0 0
        %6809 = vmatpush1.bf16.msra.mxu0 0
        %6810 = vmatprep.mubr.bf16.mxu0 0
        %6811 = vmatmul.mubr.bf16.gmra.mrb[0].mxu0 %v6776
        %v6812 = vpop.f32.mrb[0].mxu0
        %v6813 = vadd.f32 0.0, %v6812
        %v6814 = vpop.f32.mrb[0].mxu0
        %v6815 = vpop.f32.mrb[0].mxu0
        %v6816 = vadd.f32 0.0, %v6815
        %v6817 = vpop.f32.mrb[0].mxu0
        %6818 = vdwg.mxu0
        %v6820 = vsel %vm2894, %v6768, 0
        %6822 = vmatprep.subr.bf16.mxu0 0
        %6823 = vmatpush1.bf16.msra.mxu0 %v6208
        %6824 = vmatprep.subr.bf16.mxu0 0
        %6825 = vmatpush1.bf16.msra.mxu0 0
        %6826 = vmatprep.subr.bf16.mxu0 0
        %6827 = vmatpush1.bf16.msra.mxu0 0
        %6828 = vmatprep.subr.bf16.mxu0 0
        %6829 = vmatpush1.bf16.msra.mxu0 0
        %6830 = vmatprep.subr.bf16.mxu0 0
        %6831 = vmatpush1.bf16.msra.mxu0 0
        %6832 = vmatprep.subr.bf16.mxu0 0
        %6833 = vmatpush1.bf16.msra.mxu0 0
        %6834 = vmatprep.subr.bf16.mxu0 0
        %6835 = vmatpush1.bf16.msra.mxu0 0
        %6836 = vmatprep.subr.bf16.mxu0 0
        %6837 = vmatpush1.bf16.msra.mxu0 0
        %6838 = vmatprep.subr.bf16.mxu0 0
        %6839 = vmatpush1.bf16.msra.mxu0 0
        %6840 = vmatprep.subr.bf16.mxu0 0
        %6841 = vmatpush1.bf16.msra.mxu0 0
        %6842 = vmatprep.subr.bf16.mxu0 0
        %6843 = vmatpush1.bf16.msra.mxu0 0
        %6844 = vmatprep.subr.bf16.mxu0 0
        %6845 = vmatpush1.bf16.msra.mxu0 0
        %6846 = vmatprep.subr.bf16.mxu0 0
        %6847 = vmatpush1.bf16.msra.mxu0 0
        %6848 = vmatprep.subr.bf16.mxu0 0
        %6849 = vmatpush1.bf16.msra.mxu0 0
        %6850 = vmatprep.subr.bf16.mxu0 0
        %6851 = vmatpush1.bf16.msra.mxu0 0
        %6852 = vmatprep.subr.bf16.mxu0 0
        %6853 = vmatpush1.bf16.msra.mxu0 0
        %6854 = vmatprep.mubr.bf16.mxu0 0
        %6855 = vmatmul.mubr.bf16.gmra.mrb[0].mxu0 %v6820
        %v6856 = vpop.f32.mrb[0].mxu0
        %v6857 = vadd.f32 0.0, %v6856
        %v6858 = vpop.f32.mrb[0].mxu0
        %v6859 = vpop.f32.mrb[0].mxu0
        %v6860 = vadd.f32 0.0, %v6859
        %v6861 = vpop.f32.mrb[0].mxu0
        %6862 = vdwg.mxu0
        %v6864 = vsel %vm2894, %v6769, 0
        %6866 = vmatprep.subr.bf16.mxu0 0
        %6867 = vmatpush1.bf16.msra.mxu0 %v6209
        %6868 = vmatprep.subr.bf16.mxu0 0
        %6869 = vmatpush1.bf16.msra.mxu0 0
        %6870 = vmatprep.subr.bf16.mxu0 0
        %6871 = vmatpush1.bf16.msra.mxu0 0
        %6872 = vmatprep.subr.bf16.mxu0 0
        %6873 = vmatpush1.bf16.msra.mxu0 0
        %6874 = vmatprep.subr.bf16.mxu0 0
        %6875 = vmatpush1.bf16.msra.mxu0 0
        %6876 = vmatprep.subr.bf16.mxu0 0
        %6877 = vmatpush1.bf16.msra.mxu0 0
        %6878 = vmatprep.subr.bf16.mxu0 0
        %6879 = vmatpush1.bf16.msra.mxu0 0
        %6880 = vmatprep.subr.bf16.mxu0 0
        %6881 = vmatpush1.bf16.msra.mxu0 0
        %6882 = vmatprep.subr.bf16.mxu0 0
        %6883 = vmatpush1.bf16.msra.mxu0 0
        %6884 = vmatprep.subr.bf16.mxu0 0
        %6885 = vmatpush1.bf16.msra.mxu0 0
        %6886 = vmatprep.subr.bf16.mxu0 0
        %6887 = vmatpush1.bf16.msra.mxu0 0
        %6888 = vmatprep.subr.bf16.mxu0 0
        %6889 = vmatpush1.bf16.msra.mxu0 0
        %6890 = vmatprep.subr.bf16.mxu0 0
        %6891 = vmatpush1.bf16.msra.mxu0 0
        %6892 = vmatprep.subr.bf16.mxu0 0
        %6893 = vmatpush1.bf16.msra.mxu0 0
        %6894 = vmatprep.subr.bf16.mxu0 0
        %6895 = vmatpush1.bf16.msra.mxu0 0
        %6896 = vmatprep.subr.bf16.mxu0 0
        %6897 = vmatpush1.bf16.msra.mxu0 0
        %6898 = vmatprep.mubr.bf16.mxu0 0
        %6899 = vmatmul.mubr.bf16.gmra.mrb[0].mxu0 %v6864
        %v6900 = vpop.f32.mrb[0].mxu0
        %v6901 = vadd.f32 0.0, %v6900
        %v6902 = vpop.f32.mrb[0].mxu0
        %v6903 = vpop.f32.mrb[0].mxu0
        %v6904 = vadd.f32 0.0, %v6903
        %v6905 = vpop.f32.mrb[0].mxu0
        %6906 = vdwg.mxu0
        %v6908 = vsel %vm2894, %v6770, 0
        %6910 = vmatprep.subr.bf16.mxu0 0
        %6911 = vmatpush1.bf16.msra.mxu0 %v6210
        %6912 = vmatprep.subr.bf16.mxu0 0
        %6913 = vmatpush1.bf16.msra.mxu0 0
        %6914 = vmatprep.subr.bf16.mxu0 0
        %6915 = vmatpush1.bf16.msra.mxu0 0
        %6916 = vmatprep.subr.bf16.mxu0 0
        %6917 = vmatpush1.bf16.msra.mxu0 0
        %6918 = vmatprep.subr.bf16.mxu0 0
        %6919 = vmatpush1.bf16.msra.mxu0 0
        %6920 = vmatprep.subr.bf16.mxu0 0
        %6921 = vmatpush1.bf16.msra.mxu0 0
        %6922 = vmatprep.subr.bf16.mxu0 0
        %6923 = vmatpush1.bf16.msra.mxu0 0
        %6924 = vmatprep.subr.bf16.mxu0 0
        %6925 = vmatpush1.bf16.msra.mxu0 0
        %6926 = vmatprep.subr.bf16.mxu0 0
        %6927 = vmatpush1.bf16.msra.mxu0 0
        %6928 = vmatprep.subr.bf16.mxu0 0
        %6929 = vmatpush1.bf16.msra.mxu0 0
        %6930 = vmatprep.subr.bf16.mxu0 0
        %6931 = vmatpush1.bf16.msra.mxu0 0
        %6932 = vmatprep.subr.bf16.mxu0 0
        %6933 = vmatpush1.bf16.msra.mxu0 0
        %6934 = vmatprep.subr.bf16.mxu0 0
        %6935 = vmatpush1.bf16.msra.mxu0 0
        %6936 = vmatprep.subr.bf16.mxu0 0
        %6937 = vmatpush1.bf16.msra.mxu0 0
        %6938 = vmatprep.subr.bf16.mxu0 0
        %6939 = vmatpush1.bf16.msra.mxu0 0
        %6940 = vmatprep.subr.bf16.mxu0 0
        %6941 = vmatpush1.bf16.msra.mxu0 0
        %6942 = vmatprep.mubr.bf16.mxu0 0
        %6943 = vmatmul.mubr.bf16.gmra.mrb[0].mxu0 %v6908
        %v6944 = vpop.f32.mrb[0].mxu0
        %v6945 = vadd.f32 0.0, %v6944
        %v6946 = vpop.f32.mrb[0].mxu0
        %v6947 = vpop.f32.mrb[0].mxu0
        %v6948 = vadd.f32 0.0, %v6947
        %v6949 = vpop.f32.mrb[0].mxu0
        %6950 = vdwg.mxu0
        %v6952 = vsel %vm2894, %v6771, 0
        %6954 = vmatprep.subr.bf16.mxu0 0
        %6955 = vmatpush1.bf16.msra.mxu0 %v6211
        %6956 = vmatprep.subr.bf16.mxu0 0
        %6957 = vmatpush1.bf16.msra.mxu0 0
        %6958 = vmatprep.subr.bf16.mxu0 0
        %6959 = vmatpush1.bf16.msra.mxu0 0
        %6960 = vmatprep.subr.bf16.mxu0 0
        %6961 = vmatpush1.bf16.msra.mxu0 0
        %6962 = vmatprep.subr.bf16.mxu0 0
        %6963 = vmatpush1.bf16.msra.mxu0 0
        %6964 = vmatprep.subr.bf16.mxu0 0
        %6965 = vmatpush1.bf16.msra.mxu0 0
        %6966 = vmatprep.subr.bf16.mxu0 0
        %6967 = vmatpush1.bf16.msra.mxu0 0
        %6968 = vmatprep.subr.bf16.mxu0 0
        %6969 = vmatpush1.bf16.msra.mxu0 0
        %6970 = vmatprep.subr.bf16.mxu0 0
        %6971 = vmatpush1.bf16.msra.mxu0 0
        %6972 = vmatprep.subr.bf16.mxu0 0
        %6973 = vmatpush1.bf16.msra.mxu0 0
        %6974 = vmatprep.subr.bf16.mxu0 0
        %6975 = vmatpush1.bf16.msra.mxu0 0
        %6976 = vmatprep.subr.bf16.mxu0 0
        %6977 = vmatpush1.bf16.msra.mxu0 0
        %6978 = vmatprep.subr.bf16.mxu0 0
        %6979 = vmatpush1.bf16.msra.mxu0 0
        %6980 = vmatprep.subr.bf16.mxu0 0
        %6981 = vmatpush1.bf16.msra.mxu0 0
        %6982 = vmatprep.subr.bf16.mxu0 0
        %6983 = vmatpush1.bf16.msra.mxu0 0
        %6984 = vmatprep.subr.bf16.mxu0 0
        %6985 = vmatpush1.bf16.msra.mxu0 0
        %6986 = vmatprep.mubr.bf16.mxu0 0
        %6987 = vmatmul.mubr.bf16.gmra.mrb[0].mxu0 %v6952
        %v6988 = vpop.f32.mrb[0].mxu0
        %v6989 = vadd.f32 0.0, %v6988
        %v6990 = vpop.f32.mrb[0].mxu0
        %v6991 = vpop.f32.mrb[0].mxu0
        %v6992 = vadd.f32 0.0, %v6991
        %v6993 = vpop.f32.mrb[0].mxu0
        %6994 = vdwg.mxu0
        %v6996 = vsel %vm2894, %v6772, 0
        %6998 = vmatprep.subr.bf16.mxu0 0
        %6999 = vmatpush1.bf16.msra.mxu0 %v6212
        %7000 = vmatprep.subr.bf16.mxu0 0
        %7001 = vmatpush1.bf16.msra.mxu0 0
        %7002 = vmatprep.subr.bf16.mxu0 0
        %7003 = vmatpush1.bf16.msra.mxu0 0
        %7004 = vmatprep.subr.bf16.mxu0 0
        %7005 = vmatpush1.bf16.msra.mxu0 0
        %7006 = vmatprep.subr.bf16.mxu0 0
        %7007 = vmatpush1.bf16.msra.mxu0 0
        %7008 = vmatprep.subr.bf16.mxu0 0
        %7009 = vmatpush1.bf16.msra.mxu0 0
        %7010 = vmatprep.subr.bf16.mxu0 0
        %7011 = vmatpush1.bf16.msra.mxu0 0
        %7012 = vmatprep.subr.bf16.mxu0 0
        %7013 = vmatpush1.bf16.msra.mxu0 0
        %7014 = vmatprep.subr.bf16.mxu0 0
        %7015 = vmatpush1.bf16.msra.mxu0 0
        %7016 = vmatprep.subr.bf16.mxu0 0
        %7017 = vmatpush1.bf16.msra.mxu0 0
        %7018 = vmatprep.subr.bf16.mxu0 0
        %7019 = vmatpush1.bf16.msra.mxu0 0
        %7020 = vmatprep.subr.bf16.mxu0 0
        %7021 = vmatpush1.bf16.msra.mxu0 0
        %7022 = vmatprep.subr.bf16.mxu0 0
        %7023 = vmatpush1.bf16.msra.mxu0 0
        %7024 = vmatprep.subr.bf16.mxu0 0
        %7025 = vmatpush1.bf16.msra.mxu0 0
        %7026 = vmatprep.subr.bf16.mxu0 0
        %7027 = vmatpush1.bf16.msra.mxu0 0
        %7028 = vmatprep.subr.bf16.mxu0 0
        %7029 = vmatpush1.bf16.msra.mxu0 0
        %7030 = vmatprep.mubr.bf16.mxu0 0
        %7031 = vmatmul.mubr.bf16.gmra.mrb[0].mxu0 %v6996
        %v7032 = vpop.f32.mrb[0].mxu0
        %v7033 = vadd.f32 0.0, %v7032
        %v7034 = vpop.f32.mrb[0].mxu0
        %v7035 = vpop.f32.mrb[0].mxu0
        %v7036 = vadd.f32 0.0, %v7035
        %v7037 = vpop.f32.mrb[0].mxu0
        %7038 = vdwg.mxu0
        %v7040 = vsel %vm2894, %v6773, 0
        %7042 = vmatprep.subr.bf16.mxu0 0
        %7043 = vmatpush1.bf16.msra.mxu0 %v6213
        %7044 = vmatprep.subr.bf16.mxu0 0
        %7045 = vmatpush1.bf16.msra.mxu0 0
        %7046 = vmatprep.subr.bf16.mxu0 0
        %7047 = vmatpush1.bf16.msra.mxu0 0
        %7048 = vmatprep.subr.bf16.mxu0 0
        %7049 = vmatpush1.bf16.msra.mxu0 0
        %7050 = vmatprep.subr.bf16.mxu0 0
        %7051 = vmatpush1.bf16.msra.mxu0 0
        %7052 = vmatprep.subr.bf16.mxu0 0
        %7053 = vmatpush1.bf16.msra.mxu0 0
        %7054 = vmatprep.subr.bf16.mxu0 0
        %7055 = vmatpush1.bf16.msra.mxu0 0
        %7056 = vmatprep.subr.bf16.mxu0 0
        %7057 = vmatpush1.bf16.msra.mxu0 0
        %7058 = vmatprep.subr.bf16.mxu0 0
        %7059 = vmatpush1.bf16.msra.mxu0 0
        %7060 = vmatprep.subr.bf16.mxu0 0
        %7061 = vmatpush1.bf16.msra.mxu0 0
        %7062 = vmatprep.subr.bf16.mxu0 0
        %7063 = vmatpush1.bf16.msra.mxu0 0
        %7064 = vmatprep.subr.bf16.mxu0 0
        %7065 = vmatpush1.bf16.msra.mxu0 0
        %7066 = vmatprep.subr.bf16.mxu0 0
        %7067 = vmatpush1.bf16.msra.mxu0 0
        %7068 = vmatprep.subr.bf16.mxu0 0
        %7069 = vmatpush1.bf16.msra.mxu0 0
        %7070 = vmatprep.subr.bf16.mxu0 0
        %7071 = vmatpush1.bf16.msra.mxu0 0
        %7072 = vmatprep.subr.bf16.mxu0 0
        %7073 = vmatpush1.bf16.msra.mxu0 0
        %7074 = vmatprep.mubr.bf16.mxu0 0
        %7075 = vmatmul.mubr.bf16.gmra.mrb[0].mxu0 %v7040
        %v7076 = vpop.f32.mrb[0].mxu0
        %v7077 = vadd.f32 0.0, %v7076
        %v7078 = vpop.f32.mrb[0].mxu0
        %v7079 = vpop.f32.mrb[0].mxu0
        %v7080 = vadd.f32 0.0, %v7079
        %v7081 = vpop.f32.mrb[0].mxu0
        %7082 = vdwg.mxu0
        %v7084 = vsel %vm2894, %v6774, 0
        %7086 = vmatprep.subr.bf16.mxu0 0
        %7087 = vmatpush1.bf16.msra.mxu0 %v6214
        %7088 = vmatprep.subr.bf16.mxu0 0
        %7089 = vmatpush1.bf16.msra.mxu0 0
        %7090 = vmatprep.subr.bf16.mxu0 0
        %7091 = vmatpush1.bf16.msra.mxu0 0
        %7092 = vmatprep.subr.bf16.mxu0 0
        %7093 = vmatpush1.bf16.msra.mxu0 0
        %7094 = vmatprep.subr.bf16.mxu0 0
        %7095 = vmatpush1.bf16.msra.mxu0 0
        %7096 = vmatprep.subr.bf16.mxu0 0
        %7097 = vmatpush1.bf16.msra.mxu0 0
        %7098 = vmatprep.subr.bf16.mxu0 0
        %7099 = vmatpush1.bf16.msra.mxu0 0
        %7100 = vmatprep.subr.bf16.mxu0 0
        %7101 = vmatpush1.bf16.msra.mxu0 0
        %7102 = vmatprep.subr.bf16.mxu0 0
        %7103 = vmatpush1.bf16.msra.mxu0 0
        %7104 = vmatprep.subr.bf16.mxu0 0
        %7105 = vmatpush1.bf16.msra.mxu0 0
        %7106 = vmatprep.subr.bf16.mxu0 0
        %7107 = vmatpush1.bf16.msra.mxu0 0
        %7108 = vmatprep.subr.bf16.mxu0 0
        %7109 = vmatpush1.bf16.msra.mxu0 0
        %7110 = vmatprep.subr.bf16.mxu0 0
        %7111 = vmatpush1.bf16.msra.mxu0 0
        %7112 = vmatprep.subr.bf16.mxu0 0
        %7113 = vmatpush1.bf16.msra.mxu0 0
        %7114 = vmatprep.subr.bf16.mxu0 0
        %7115 = vmatpush1.bf16.msra.mxu0 0
        %7116 = vmatprep.subr.bf16.mxu0 0
        %7117 = vmatpush1.bf16.msra.mxu0 0
        %7118 = vmatprep.mubr.bf16.mxu0 0
        %7119 = vmatmul.mubr.bf16.gmra.mrb[0].mxu0 %v7084
        %v7120 = vpop.f32.mrb[0].mxu0
        %v7121 = vadd.f32 0.0, %v7120
        %v7122 = vpop.f32.mrb[0].mxu0
        %v7123 = vpop.f32.mrb[0].mxu0
        %v7124 = vadd.f32 0.0, %v7123
        %v7125 = vpop.f32.mrb[0].mxu0
        %7126 = vdwg.mxu0
        %v7127 = vcombine.low %v6813, %v6901
        %v7128 = vcombine.high %v6813, %v6901
        %v7130 = vunpack.c.l.s4 1983009808
        %v7131 = vunpack.c.0.s8 %v7130
        %v7132 = vlaneseq
        %v7133 = vshrl.u32 %v7132, 7
        %v7134 = vsub.s32 %v7131, %v7133
        %v7135 = vrot.slane %v7127, %v7134
        %v7137 = vunpack.c.l.s4 1983009808
        %v7138 = vunpack.c.0.s8 %v7137
        %v7139 = vlaneseq
        %v7140 = vshrl.u32 %v7139, 7
        %v7141 = vsub.s32 %v7138, %v7140
        %v7142 = vrot.slane %v7128, %v7141
        %v7143 = vcombine.low %v6857, %v6945
        %v7144 = vcombine.high %v6857, %v6945
        %v7146 = vunpack.c.l.s4 1983009808
        %v7147 = vunpack.c.0.s8 %v7146
        %v7148 = vlaneseq
        %v7149 = vshrl.u32 %v7148, 7
        %v7150 = vsub.s32 %v7147, %v7149
        %v7151 = vrot.slane %v7143, %v7150
        %v7153 = vunpack.c.l.s4 1983009808
        %v7154 = vunpack.c.0.s8 %v7153
        %v7155 = vlaneseq
        %v7156 = vshrl.u32 %v7155, 7
        %v7157 = vsub.s32 %v7154, %v7156
        %v7158 = vrot.slane %v7144, %v7157
        %v7159 = vcombine.low %v6989, %v7077
        %v7160 = vcombine.high %v6989, %v7077
        %v7162 = vunpack.c.l.s4 1983009808
        %v7163 = vunpack.c.0.s8 %v7162
        %v7164 = vlaneseq
        %v7165 = vshrl.u32 %v7164, 7
        %v7166 = vsub.s32 %v7163, %v7165
        %v7167 = vrot.slane %v7159, %v7166
        %v7169 = vunpack.c.l.s4 1983009808
        %v7170 = vunpack.c.0.s8 %v7169
        %v7171 = vlaneseq
        %v7172 = vshrl.u32 %v7171, 7
        %v7173 = vsub.s32 %v7170, %v7172
        %v7174 = vrot.slane %v7160, %v7173
        %v7175 = vcombine.low %v7033, %v7121
        %v7176 = vcombine.high %v7033, %v7121
        %v7178 = vunpack.c.l.s4 1983009808
        %v7179 = vunpack.c.0.s8 %v7178
        %v7180 = vlaneseq
        %v7181 = vshrl.u32 %v7180, 7
        %v7182 = vsub.s32 %v7179, %v7181
        %v7183 = vrot.slane %v7175, %v7182
        %v7185 = vunpack.c.l.s4 1983009808
        %v7186 = vunpack.c.0.s8 %v7185
        %v7187 = vlaneseq
        %v7188 = vshrl.u32 %v7187, 7
        %v7189 = vsub.s32 %v7186, %v7188
        %v7190 = vrot.slane %v7176, %v7189
        %v7191 = vcombine.low %v7135, %v7151
        %v7192 = vcombine.high %v7135, %v7151
        %v7194 = vunpack.c.l.s4 1934713408
        %v7195 = vunpack.c.0.s8 %v7194
        %v7196 = vlaneseq
        %v7197 = vshrl.u32 %v7196, 7
        %v7198 = vsub.s32 %v7195, %v7197
        %v7199 = vrot.slane %v7191, %v7198
        %v7201 = vunpack.c.l.s4 1934713408
        %v7202 = vunpack.c.0.s8 %v7201
        %v7203 = vlaneseq
        %v7204 = vshrl.u32 %v7203, 7
        %v7205 = vsub.s32 %v7202, %v7204
        %v7206 = vrot.slane %v7192, %v7205
        %v7207 = vcombine.low %v7142, %v7158
        %v7208 = vcombine.high %v7142, %v7158
        %v7210 = vunpack.c.l.s4 1934713408
        %v7211 = vunpack.c.0.s8 %v7210
        %v7212 = vlaneseq
        %v7213 = vshrl.u32 %v7212, 7
        %v7214 = vsub.s32 %v7211, %v7213
        %v7215 = vrot.slane %v7207, %v7214
        %v7217 = vunpack.c.l.s4 1934713408
        %v7218 = vunpack.c.0.s8 %v7217
        %v7219 = vlaneseq
        %v7220 = vshrl.u32 %v7219, 7
        %v7221 = vsub.s32 %v7218, %v7220
        %v7222 = vrot.slane %v7208, %v7221
        %v7223 = vcombine.low %v7167, %v7183
        %v7224 = vcombine.high %v7167, %v7183
        %v7226 = vunpack.c.l.s4 1934713408
        %v7227 = vunpack.c.0.s8 %v7226
        %v7228 = vlaneseq
        %v7229 = vshrl.u32 %v7228, 7
        %v7230 = vsub.s32 %v7227, %v7229
        %v7231 = vrot.slane %v7223, %v7230
        %v7233 = vunpack.c.l.s4 1934713408
        %v7234 = vunpack.c.0.s8 %v7233
        %v7235 = vlaneseq
        %v7236 = vshrl.u32 %v7235, 7
        %v7237 = vsub.s32 %v7234, %v7236
        %v7238 = vrot.slane %v7224, %v7237
        %v7239 = vcombine.low %v7174, %v7190
        %v7240 = vcombine.high %v7174, %v7190
        %v7242 = vunpack.c.l.s4 1934713408
        %v7243 = vunpack.c.0.s8 %v7242
        %v7244 = vlaneseq
        %v7245 = vshrl.u32 %v7244, 7
        %v7246 = vsub.s32 %v7243, %v7245
        %v7247 = vrot.slane %v7239, %v7246
        %v7249 = vunpack.c.l.s4 1934713408
        %v7250 = vunpack.c.0.s8 %v7249
        %v7251 = vlaneseq
        %v7252 = vshrl.u32 %v7251, 7
        %v7253 = vsub.s32 %v7250, %v7252
        %v7254 = vrot.slane %v7240, %v7253
        %v7255 = vcombine.low %v7199, %v7231
        %v7256 = vcombine.high %v7199, %v7231
        %v7257 = vcombine.low %v7206, %v7238
        %v7258 = vcombine.high %v7206, %v7238
        %v7259 = vcombine.low %v7215, %v7247
        %v7260 = vcombine.high %v7215, %v7247
        %v7261 = vcombine.low %v7222, %v7254
        %v7262 = vcombine.high %v7222, %v7254
        %v7263 = vcombine.low %v6816, %v6904
        %v7264 = vcombine.high %v6816, %v6904
        %v7266 = vunpack.c.l.s4 1983009808
        %v7267 = vunpack.c.0.s8 %v7266
        %v7268 = vlaneseq
        %v7269 = vshrl.u32 %v7268, 7
        %v7270 = vsub.s32 %v7267, %v7269
        %v7271 = vrot.slane %v7263, %v7270
        %v7273 = vunpack.c.l.s4 1983009808
        %v7274 = vunpack.c.0.s8 %v7273
        %v7275 = vlaneseq
        %v7276 = vshrl.u32 %v7275, 7
        %v7277 = vsub.s32 %v7274, %v7276
        %v7278 = vrot.slane %v7264, %v7277
        %v7279 = vcombine.low %v6860, %v6948
        %v7280 = vcombine.high %v6860, %v6948
        %v7282 = vunpack.c.l.s4 1983009808
        %v7283 = vunpack.c.0.s8 %v7282
        %v7284 = vlaneseq
        %v7285 = vshrl.u32 %v7284, 7
        %v7286 = vsub.s32 %v7283, %v7285
        %v7287 = vrot.slane %v7279, %v7286
        %v7289 = vunpack.c.l.s4 1983009808
        %v7290 = vunpack.c.0.s8 %v7289
        %v7291 = vlaneseq
        %v7292 = vshrl.u32 %v7291, 7
        %v7293 = vsub.s32 %v7290, %v7292
        %v7294 = vrot.slane %v7280, %v7293
        %v7295 = vcombine.low %v6992, %v7080
        %v7296 = vcombine.high %v6992, %v7080
        %v7298 = vunpack.c.l.s4 1983009808
        %v7299 = vunpack.c.0.s8 %v7298
        %v7300 = vlaneseq
        %v7301 = vshrl.u32 %v7300, 7
        %v7302 = vsub.s32 %v7299, %v7301
        %v7303 = vrot.slane %v7295, %v7302
        %v7305 = vunpack.c.l.s4 1983009808
        %v7306 = vunpack.c.0.s8 %v7305
        %v7307 = vlaneseq
        %v7308 = vshrl.u32 %v7307, 7
        %v7309 = vsub.s32 %v7306, %v7308
        %v7310 = vrot.slane %v7296, %v7309
        %v7311 = vcombine.low %v7036, %v7124
        %v7312 = vcombine.high %v7036, %v7124
        %v7314 = vunpack.c.l.s4 1983009808
        %v7315 = vunpack.c.0.s8 %v7314
        %v7316 = vlaneseq
        %v7317 = vshrl.u32 %v7316, 7
        %v7318 = vsub.s32 %v7315, %v7317
        %v7319 = vrot.slane %v7311, %v7318
        %v7321 = vunpack.c.l.s4 1983009808
        %v7322 = vunpack.c.0.s8 %v7321
        %v7323 = vlaneseq
        %v7324 = vshrl.u32 %v7323, 7
        %v7325 = vsub.s32 %v7322, %v7324
        %v7326 = vrot.slane %v7312, %v7325
        %v7327 = vcombine.low %v7271, %v7287
        %v7328 = vcombine.high %v7271, %v7287
        %v7330 = vunpack.c.l.s4 1934713408
        %v7331 = vunpack.c.0.s8 %v7330
        %v7332 = vlaneseq
        %v7333 = vshrl.u32 %v7332, 7
        %v7334 = vsub.s32 %v7331, %v7333
        %v7335 = vrot.slane %v7327, %v7334
        %v7337 = vunpack.c.l.s4 1934713408
        %v7338 = vunpack.c.0.s8 %v7337
        %v7339 = vlaneseq
        %v7340 = vshrl.u32 %v7339, 7
        %v7341 = vsub.s32 %v7338, %v7340
        %v7342 = vrot.slane %v7328, %v7341
        %v7343 = vcombine.low %v7278, %v7294
        %v7344 = vcombine.high %v7278, %v7294
        %v7346 = vunpack.c.l.s4 1934713408
        %v7347 = vunpack.c.0.s8 %v7346
        %v7348 = vlaneseq
        %v7349 = vshrl.u32 %v7348, 7
        %v7350 = vsub.s32 %v7347, %v7349
        %v7351 = vrot.slane %v7343, %v7350
        %v7353 = vunpack.c.l.s4 1934713408
        %v7354 = vunpack.c.0.s8 %v7353
        %v7355 = vlaneseq
        %v7356 = vshrl.u32 %v7355, 7
        %v7357 = vsub.s32 %v7354, %v7356
        %v7358 = vrot.slane %v7344, %v7357
        %v7359 = vcombine.low %v7303, %v7319
        %v7360 = vcombine.high %v7303, %v7319
        %v7362 = vunpack.c.l.s4 1934713408
        %v7363 = vunpack.c.0.s8 %v7362
        %v7364 = vlaneseq
        %v7365 = vshrl.u32 %v7364, 7
        %v7366 = vsub.s32 %v7363, %v7365
        %v7367 = vrot.slane %v7359, %v7366
        %v7369 = vunpack.c.l.s4 1934713408
        %v7370 = vunpack.c.0.s8 %v7369
        %v7371 = vlaneseq
        %v7372 = vshrl.u32 %v7371, 7
        %v7373 = vsub.s32 %v7370, %v7372
        %v7374 = vrot.slane %v7360, %v7373
        %v7375 = vcombine.low %v7310, %v7326
        %v7376 = vcombine.high %v7310, %v7326
        %v7378 = vunpack.c.l.s4 1934713408
        %v7379 = vunpack.c.0.s8 %v7378
        %v7380 = vlaneseq
        %v7381 = vshrl.u32 %v7380, 7
        %v7382 = vsub.s32 %v7379, %v7381
        %v7383 = vrot.slane %v7375, %v7382
        %v7385 = vunpack.c.l.s4 1934713408
        %v7386 = vunpack.c.0.s8 %v7385
        %v7387 = vlaneseq
        %v7388 = vshrl.u32 %v7387, 7
        %v7389 = vsub.s32 %v7386, %v7388
        %v7390 = vrot.slane %v7376, %v7389
        %v7391 = vcombine.low %v7335, %v7367
        %v7392 = vcombine.high %v7335, %v7367
        %v7393 = vcombine.low %v7342, %v7374
        %v7394 = vcombine.high %v7342, %v7374
        %v7395 = vcombine.low %v7351, %v7383
        %v7396 = vcombine.high %v7351, %v7383
        %v7397 = vcombine.low %v7358, %v7390
        %v7398 = vcombine.high %v7358, %v7390
        %v7399 = vcombine.low %v7255, %v7257
        %v7400 = vcombine.high %v7255, %v7257
        %v7402 = vunpack.c.l.s4 1983009808
        %v7403 = vunpack.c.0.s8 %v7402
        %v7404 = vlaneseq
        %v7405 = vshrl.u32 %v7404, 7
        %v7406 = vsub.s32 %v7403, %v7405
        %v7407 = vrot.slane %v7399, %v7406
        %v7409 = vunpack.c.l.s4 1983009808
        %v7410 = vunpack.c.0.s8 %v7409
        %v7411 = vlaneseq
        %v7412 = vshrl.u32 %v7411, 7
        %v7413 = vsub.s32 %v7410, %v7412
        %v7414 = vrot.slane %v7400, %v7413
        %v7415 = vcombine.low %v7256, %v7258
        %v7416 = vcombine.high %v7256, %v7258
        %v7418 = vunpack.c.l.s4 1983009808
        %v7419 = vunpack.c.0.s8 %v7418
        %v7420 = vlaneseq
        %v7421 = vshrl.u32 %v7420, 7
        %v7422 = vsub.s32 %v7419, %v7421
        %v7423 = vrot.slane %v7415, %v7422
        %v7425 = vunpack.c.l.s4 1983009808
        %v7426 = vunpack.c.0.s8 %v7425
        %v7427 = vlaneseq
        %v7428 = vshrl.u32 %v7427, 7
        %v7429 = vsub.s32 %v7426, %v7428
        %v7430 = vrot.slane %v7416, %v7429
        %v7431 = vcombine.low %v7259, %v7261
        %v7432 = vcombine.high %v7259, %v7261
        %v7434 = vunpack.c.l.s4 1983009808
        %v7435 = vunpack.c.0.s8 %v7434
        %v7436 = vlaneseq
        %v7437 = vshrl.u32 %v7436, 7
        %v7438 = vsub.s32 %v7435, %v7437
        %v7439 = vrot.slane %v7431, %v7438
        %v7441 = vunpack.c.l.s4 1983009808
        %v7442 = vunpack.c.0.s8 %v7441
        %v7443 = vlaneseq
        %v7444 = vshrl.u32 %v7443, 7
        %v7445 = vsub.s32 %v7442, %v7444
        %v7446 = vrot.slane %v7432, %v7445
        %v7447 = vcombine.low %v7260, %v7262
        %v7448 = vcombine.high %v7260, %v7262
        %v7450 = vunpack.c.l.s4 1983009808
        %v7451 = vunpack.c.0.s8 %v7450
        %v7452 = vlaneseq
        %v7453 = vshrl.u32 %v7452, 7
        %v7454 = vsub.s32 %v7451, %v7453
        %v7455 = vrot.slane %v7447, %v7454
        %v7457 = vunpack.c.l.s4 1983009808
        %v7458 = vunpack.c.0.s8 %v7457
        %v7459 = vlaneseq
        %v7460 = vshrl.u32 %v7459, 7
        %v7461 = vsub.s32 %v7458, %v7460
        %v7462 = vrot.slane %v7448, %v7461
        %v7463 = vcombine.low %v7407, %v7423
        %v7464 = vcombine.high %v7407, %v7423
        %v7466 = vunpack.c.l.s4 1934713408
        %v7467 = vunpack.c.0.s8 %v7466
        %v7468 = vlaneseq
        %v7469 = vshrl.u32 %v7468, 7
        %v7470 = vsub.s32 %v7467, %v7469
        %v7471 = vrot.slane %v7463, %v7470
        %v7473 = vunpack.c.l.s4 1934713408
        %v7474 = vunpack.c.0.s8 %v7473
        %v7475 = vlaneseq
        %v7476 = vshrl.u32 %v7475, 7
        %v7477 = vsub.s32 %v7474, %v7476
        %v7478 = vrot.slane %v7464, %v7477
        %v7479 = vcombine.low %v7414, %v7430
        %v7480 = vcombine.high %v7414, %v7430
        %v7482 = vunpack.c.l.s4 1934713408
        %v7483 = vunpack.c.0.s8 %v7482
        %v7484 = vlaneseq
        %v7485 = vshrl.u32 %v7484, 7
        %v7486 = vsub.s32 %v7483, %v7485
        %v7487 = vrot.slane %v7479, %v7486
        %v7489 = vunpack.c.l.s4 1934713408
        %v7490 = vunpack.c.0.s8 %v7489
        %v7491 = vlaneseq
        %v7492 = vshrl.u32 %v7491, 7
        %v7493 = vsub.s32 %v7490, %v7492
        %v7494 = vrot.slane %v7480, %v7493
        %v7495 = vcombine.low %v7439, %v7455
        %v7496 = vcombine.high %v7439, %v7455
        %v7498 = vunpack.c.l.s4 1934713408
        %v7499 = vunpack.c.0.s8 %v7498
        %v7500 = vlaneseq
        %v7501 = vshrl.u32 %v7500, 7
        %v7502 = vsub.s32 %v7499, %v7501
        %v7503 = vrot.slane %v7495, %v7502
        %v7505 = vunpack.c.l.s4 1934713408
        %v7506 = vunpack.c.0.s8 %v7505
        %v7507 = vlaneseq
        %v7508 = vshrl.u32 %v7507, 7
        %v7509 = vsub.s32 %v7506, %v7508
        %v7510 = vrot.slane %v7496, %v7509
        %v7511 = vcombine.low %v7446, %v7462
        %v7512 = vcombine.high %v7446, %v7462
        %v7514 = vunpack.c.l.s4 1934713408
        %v7515 = vunpack.c.0.s8 %v7514
        %v7516 = vlaneseq
        %v7517 = vshrl.u32 %v7516, 7
        %v7518 = vsub.s32 %v7515, %v7517
        %v7519 = vrot.slane %v7511, %v7518
        %v7521 = vunpack.c.l.s4 1934713408
        %v7522 = vunpack.c.0.s8 %v7521
        %v7523 = vlaneseq
        %v7524 = vshrl.u32 %v7523, 7
        %v7525 = vsub.s32 %v7522, %v7524
        %v7526 = vrot.slane %v7512, %v7525
        %v7527 = vcombine.low %v7471, %v7503
        %v7528 = vcombine.high %v7471, %v7503
        %v7529 = vcombine.low %v7478, %v7510
        %v7530 = vcombine.high %v7478, %v7510
        %v7531 = vcombine.low %v7487, %v7519
        %v7532 = vcombine.high %v7487, %v7519
        %v7533 = vcombine.low %v7494, %v7526
        %v7534 = vcombine.high %v7494, %v7526
        %v7535 = vcombine.low %v7391, %v7393
        %v7536 = vcombine.high %v7391, %v7393
        %v7538 = vunpack.c.l.s4 1983009808
        %v7539 = vunpack.c.0.s8 %v7538
        %v7540 = vlaneseq
        %v7541 = vshrl.u32 %v7540, 7
        %v7542 = vsub.s32 %v7539, %v7541
        %v7543 = vrot.slane %v7535, %v7542
        %v7545 = vunpack.c.l.s4 1983009808
        %v7546 = vunpack.c.0.s8 %v7545
        %v7547 = vlaneseq
        %v7548 = vshrl.u32 %v7547, 7
        %v7549 = vsub.s32 %v7546, %v7548
        %v7550 = vrot.slane %v7536, %v7549
        %v7551 = vcombine.low %v7392, %v7394
        %v7552 = vcombine.high %v7392, %v7394
        %v7554 = vunpack.c.l.s4 1983009808
        %v7555 = vunpack.c.0.s8 %v7554
        %v7556 = vlaneseq
        %v7557 = vshrl.u32 %v7556, 7
        %v7558 = vsub.s32 %v7555, %v7557
        %v7559 = vrot.slane %v7551, %v7558
        %v7561 = vunpack.c.l.s4 1983009808
        %v7562 = vunpack.c.0.s8 %v7561
        %v7563 = vlaneseq
        %v7564 = vshrl.u32 %v7563, 7
        %v7565 = vsub.s32 %v7562, %v7564
        %v7566 = vrot.slane %v7552, %v7565
        %v7567 = vcombine.low %v7395, %v7397
        %v7568 = vcombine.high %v7395, %v7397
        %v7570 = vunpack.c.l.s4 1983009808
        %v7571 = vunpack.c.0.s8 %v7570
        %v7572 = vlaneseq
        %v7573 = vshrl.u32 %v7572, 7
        %v7574 = vsub.s32 %v7571, %v7573
        %v7575 = vrot.slane %v7567, %v7574
        %v7577 = vunpack.c.l.s4 1983009808
        %v7578 = vunpack.c.0.s8 %v7577
        %v7579 = vlaneseq
        %v7580 = vshrl.u32 %v7579, 7
        %v7581 = vsub.s32 %v7578, %v7580
        %v7582 = vrot.slane %v7568, %v7581
        %v7583 = vcombine.low %v7396, %v7398
        %v7584 = vcombine.high %v7396, %v7398
        %v7586 = vunpack.c.l.s4 1983009808
        %v7587 = vunpack.c.0.s8 %v7586
        %v7588 = vlaneseq
        %v7589 = vshrl.u32 %v7588, 7
        %v7590 = vsub.s32 %v7587, %v7589
        %v7591 = vrot.slane %v7583, %v7590
        %v7593 = vunpack.c.l.s4 1983009808
        %v7594 = vunpack.c.0.s8 %v7593
        %v7595 = vlaneseq
        %v7596 = vshrl.u32 %v7595, 7
        %v7597 = vsub.s32 %v7594, %v7596
        %v7598 = vrot.slane %v7584, %v7597
        %v7599 = vcombine.low %v7543, %v7559
        %v7600 = vcombine.high %v7543, %v7559
        %v7602 = vunpack.c.l.s4 1934713408
        %v7603 = vunpack.c.0.s8 %v7602
        %v7604 = vlaneseq
        %v7605 = vshrl.u32 %v7604, 7
        %v7606 = vsub.s32 %v7603, %v7605
        %v7607 = vrot.slane %v7599, %v7606
        %v7609 = vunpack.c.l.s4 1934713408
        %v7610 = vunpack.c.0.s8 %v7609
        %v7611 = vlaneseq
        %v7612 = vshrl.u32 %v7611, 7
        %v7613 = vsub.s32 %v7610, %v7612
        %v7614 = vrot.slane %v7600, %v7613
        %v7615 = vcombine.low %v7550, %v7566
        %v7616 = vcombine.high %v7550, %v7566
        %v7618 = vunpack.c.l.s4 1934713408
        %v7619 = vunpack.c.0.s8 %v7618
        %v7620 = vlaneseq
        %v7621 = vshrl.u32 %v7620, 7
        %v7622 = vsub.s32 %v7619, %v7621
        %v7623 = vrot.slane %v7615, %v7622
        %v7625 = vunpack.c.l.s4 1934713408
        %v7626 = vunpack.c.0.s8 %v7625
        %v7627 = vlaneseq
        %v7628 = vshrl.u32 %v7627, 7
        %v7629 = vsub.s32 %v7626, %v7628
        %v7630 = vrot.slane %v7616, %v7629
        %v7631 = vcombine.low %v7575, %v7591
        %v7632 = vcombine.high %v7575, %v7591
        %v7634 = vunpack.c.l.s4 1934713408
        %v7635 = vunpack.c.0.s8 %v7634
        %v7636 = vlaneseq
        %v7637 = vshrl.u32 %v7636, 7
        %v7638 = vsub.s32 %v7635, %v7637
        %v7639 = vrot.slane %v7631, %v7638
        %v7641 = vunpack.c.l.s4 1934713408
        %v7642 = vunpack.c.0.s8 %v7641
        %v7643 = vlaneseq
        %v7644 = vshrl.u32 %v7643, 7
        %v7645 = vsub.s32 %v7642, %v7644
        %v7646 = vrot.slane %v7632, %v7645
        %v7647 = vcombine.low %v7582, %v7598
        %v7648 = vcombine.high %v7582, %v7598
        %v7650 = vunpack.c.l.s4 1934713408
        %v7651 = vunpack.c.0.s8 %v7650
        %v7652 = vlaneseq
        %v7653 = vshrl.u32 %v7652, 7
        %v7654 = vsub.s32 %v7651, %v7653
        %v7655 = vrot.slane %v7647, %v7654
        %v7657 = vunpack.c.l.s4 1934713408
        %v7658 = vunpack.c.0.s8 %v7657
        %v7659 = vlaneseq
        %v7660 = vshrl.u32 %v7659, 7
        %v7661 = vsub.s32 %v7658, %v7660
        %v7662 = vrot.slane %v7648, %v7661
        %v7663 = vcombine.low %v7607, %v7639
        %v7664 = vcombine.high %v7607, %v7639
        %v7665 = vcombine.low %v7614, %v7646
        %v7666 = vcombine.high %v7614, %v7646
        %v7667 = vcombine.low %v7623, %v7655
        %v7668 = vcombine.high %v7623, %v7655
        %v7669 = vcombine.low %v7630, %v7662
        %v7670 = vcombine.high %v7630, %v7662
        %7673 = vrot.lane.b32.xlu0 %v7528, 16
        %v7674 = vpop.permute.xlu0 %7673
        %7675 = vrot.lane.b32.xlu0 %v7664, 16
        %v7676 = vpop.permute.xlu0 %7675
        %7681 = vrot.lane.b32.xlu0 %v7529, 32
        %v7682 = vpop.permute.xlu0 %7681
        %7683 = vrot.lane.b32.xlu0 %v7665, 32
        %v7684 = vpop.permute.xlu0 %7683
        %7689 = vrot.lane.b32.xlu0 %v7530, 48
        %v7690 = vpop.permute.xlu0 %7689
        %7691 = vrot.lane.b32.xlu0 %v7666, 48
        %v7692 = vpop.permute.xlu0 %7691
        %7697 = vrot.lane.b32.xlu0 %v7531, 64
        %v7698 = vpop.permute.xlu0 %7697
        %7699 = vrot.lane.b32.xlu0 %v7667, 64
        %v7700 = vpop.permute.xlu0 %7699
        %7705 = vrot.lane.b32.xlu0 %v7532, 80
        %v7706 = vpop.permute.xlu0 %7705
        %7707 = vrot.lane.b32.xlu0 %v7668, 80
        %v7708 = vpop.permute.xlu0 %7707
        %7713 = vrot.lane.b32.xlu0 %v7533, 96
        %v7714 = vpop.permute.xlu0 %7713
        %7715 = vrot.lane.b32.xlu0 %v7669, 96
        %v7716 = vpop.permute.xlu0 %7715
        %7721 = vrot.lane.b32.xlu0 %v7534, 112
        %v7722 = vpop.permute.xlu0 %7721
        %7723 = vrot.lane.b32.xlu0 %v7670, 112
        %v7724 = vpop.permute.xlu0 %7723
        %v7727 = vsel %vm2894, %v7527, %v7674
        %v7728 = vsel %vm2894, %v7663, %v7676
        %v7729 = vsel %vm4409, %v7727, %v7682
        %v7730 = vsel %vm4409, %v7728, %v7684
        %v7731 = vsel %vm4412, %v7729, %v7690
        %v7732 = vsel %vm4412, %v7730, %v7692
        %v7733 = vsel %vm4415, %v7731, %v7698
        %v7734 = vsel %vm4415, %v7732, %v7700
        %v7735 = vsel %vm4418, %v7733, %v7706
        %v7736 = vsel %vm4418, %v7734, %v7708
        %v7737 = vsel %vm4421, %v7735, %v7714
        %v7738 = vsel %vm4421, %v7736, %v7716
        %v7739 = vsel %vm4424, %v7737, %v7722
        %v7740 = vsel %vm4424, %v7738, %v7724
        %v7741 = vpack.c.bf16 %v4426, %v4425
        %v7742 = vpack.c.bf16 %v7740, %v7739
        %v7743 = vld [vmem:[%s577] sm:$0xf]
        %v7744 = vld [vmem:[%s577 + $0x4] sm:$0xf]
        %v7745 = vld [vmem:[%s577 + $0x8] sm:$0xf]
        %v7746 = vld [vmem:[%s577 + $0xc] sm:$0xf]
        %v7747 = vld [vmem:[%s577 + $0x10] sm:$0xf]
        %v7748 = vld [vmem:[%s577 + $0x14] sm:$0xf]
        %v7749 = vld [vmem:[%s577 + $0x18] sm:$0xf]
        %v7750 = vld [vmem:[%s577 + $0x1c] sm:$0xf]
        %v7751 = vld [vmem:[%s577 + $0x20] sm:$0xf]
        %v7752 = vld [vmem:[%s577 + $0x24] sm:$0xf]
        %v7753 = vld [vmem:[%s577 + $0x28] sm:$0xf]
        %v7754 = vld [vmem:[%s577 + $0x2c] sm:$0xf]
        %v7755 = vld [vmem:[%s577 + $0x30] sm:$0xf]
        %v7756 = vld [vmem:[%s577 + $0x34] sm:$0xf]
        %v7757 = vld [vmem:[%s577 + $0x38] sm:$0xf]
        %v7758 = vld [vmem:[%s577 + $0x3c] sm:$0xf]
        %v7759 = vlaneseq
        %v7760 = vshrl.u32 %v7759, 7
        %v7761 = vsub.s32 5, %v7760
        %v7762 = vrot.slane %v689, %v7761
        %v7779 = vunpack.c.l.b16 %v7743
        %v7780 = vunpack.c.l.b16 %v7744
        %v7781 = vunpack.c.l.b16 %v7745
        %v7782 = vunpack.c.l.b16 %v7746
        %v7783 = vunpack.c.l.b16 %v7747
        %v7784 = vunpack.c.l.b16 %v7748
        %v7785 = vunpack.c.l.b16 %v7749
        %v7786 = vunpack.c.l.b16 %v7750
        %v7787 = vunpack.c.l.b16 %v7751
        %v7788 = vunpack.c.l.b16 %v7752
        %v7789 = vunpack.c.l.b16 %v7753
        %v7790 = vunpack.c.l.b16 %v7754
        %v7791 = vunpack.c.l.b16 %v7755
        %v7792 = vunpack.c.l.b16 %v7756
        %v7793 = vunpack.c.l.b16 %v7757
        %v7794 = vunpack.c.l.b16 %v7758
        %v7795 = vpack.c.b16 %v7780, %v7779
        %v7796 = vpack.c.b16 %v7782, %v7781
        %v7797 = vpack.c.b16 %v7784, %v7783
        %v7798 = vpack.c.b16 %v7786, %v7785
        %v7799 = vpack.c.b16 %v7788, %v7787
        %v7800 = vpack.c.b16 %v7790, %v7789
        %v7801 = vpack.c.b16 %v7792, %v7791
        %v7802 = vpack.c.b16 %v7794, %v7793
        %7811 = vmatprep.subr.bf16.mxu0 0
        %7812 = vmatpush1.bf16.msra.mxu0 %v7795
        %7813 = vmatprep.subr.bf16.mxu0 0
        %7814 = vmatpush1.bf16.msra.mxu0 %v7796
        %7815 = vmatprep.subr.bf16.mxu0 0
        %7816 = vmatpush1.bf16.msra.mxu0 %v7797
        %7817 = vmatprep.subr.bf16.mxu0 0
        %7818 = vmatpush1.bf16.msra.mxu0 %v7798
        %7819 = vmatprep.subr.bf16.mxu0 0
        %7820 = vmatpush1.bf16.msra.mxu0 %v7799
        %7821 = vmatprep.subr.bf16.mxu0 0
        %7822 = vmatpush1.bf16.msra.mxu0 %v7800
        %7823 = vmatprep.subr.bf16.mxu0 0
        %7824 = vmatpush1.bf16.msra.mxu0 %v7801
        %7825 = vmatprep.subr.bf16.mxu0 0
        %7826 = vmatpush1.bf16.msra.mxu0 %v7802
        %7827 = vmatprep.subr.bf16.mxu0 0
        %7828 = vmatpush1.bf16.msra.mxu0 0
        %7829 = vmatprep.subr.bf16.mxu0 0
        %7830 = vmatpush1.bf16.msra.mxu0 0
        %7831 = vmatprep.subr.bf16.mxu0 0
        %7832 = vmatpush1.bf16.msra.mxu0 0
        %7833 = vmatprep.subr.bf16.mxu0 0
        %7834 = vmatpush1.bf16.msra.mxu0 0
        %7835 = vmatprep.subr.bf16.mxu0 0
        %7836 = vmatpush1.bf16.msra.mxu0 0
        %7837 = vmatprep.subr.bf16.mxu0 0
        %7838 = vmatpush1.bf16.msra.mxu0 0
        %7839 = vmatprep.subr.bf16.mxu0 0
        %7840 = vmatpush1.bf16.msra.mxu0 0
        %7841 = vmatprep.subr.bf16.mxu0 0
        %7842 = vmatpush1.bf16.msra.mxu0 0
        %7843 = vmatprep.mubr.bf16.mxu0 0
        %7844 = vmatmul.mubr.bf16.gmra.mrb[0].mxu0 %v7741
        %v7845 = vpop.f32.mrb[0].mxu0
        %v7846 = vadd.f32 %v7762, %v7845
        %v7847 = vpop.f32.mrb[0].mxu0
        %v7848 = vpop.f32.mrb[0].mxu0
        %v7849 = vadd.f32 %v7762, %v7848
        %v7850 = vpop.f32.mrb[0].mxu0
        %7851 = vmatprep.mubr.bf16.mxu0 0
        %7852 = vmatmul.mubr.bf16.gmra.mrb[0].mxu0 %v7742
        %v7853 = vpop.f32.mrb[0].mxu0
        %v7854 = vadd.f32 %v7762, %v7853
        %v7855 = vpop.f32.mrb[0].mxu0
        %v7856 = vpop.f32.mrb[0].mxu0
        %v7857 = vadd.f32 %v7762, %v7856
        %v7858 = vpop.f32.mrb[0].mxu0
        %7859 = vdwg.mxu0
        %v7860 = vadd.f32 %v685, %v7846
        %v7861 = vadd.f32 %v686, %v7849
        %v7862 = vadd.f32 %v687, %v7854
        %v7863 = vadd.f32 %v688, %v7857
        %7864 = vadd.xlane.f32.xlu0 %v7860
        %v7865 = vpop.xlane.xlu0 %7864
        %7866 = vadd.xlane.f32.xlu0 %v7861
        %v7867 = vpop.xlane.xlu0 %7866
        %7868 = vadd.xlane.f32.xlu0 %v7862
        %v7869 = vpop.xlane.xlu0 %7868
        %7870 = vadd.xlane.f32.xlu0 %v7863
        %v7871 = vpop.xlane.xlu0 %7870
        %v7872 = vmul.f32 %v7865, %v700
        %v7873 = vmul.f32 %v7867, %v700
        %v7874 = vmul.f32 %v7869, %v700
        %v7875 = vmul.f32 %v7871, %v700
        %v7876 = vsub.f32 %v7860, %v7872
        %v7877 = vsub.f32 %v7861, %v7873
        %v7878 = vsub.f32 %v7862, %v7874
        %v7879 = vsub.f32 %v7863, %v7875
        %v7880 = vmul.f32 %v7876, %v7876
        %v7881 = vmul.f32 %v7877, %v7877
        %v7882 = vmul.f32 %v7878, %v7878
        %v7883 = vmul.f32 %v7879, %v7879
        %7884 = vadd.xlane.f32.xlu0 %v7880
        %v7885 = vpop.xlane.xlu0 %7884
        %7886 = vadd.xlane.f32.xlu0 %v7881
        %v7887 = vpop.xlane.xlu0 %7886
        %7888 = vadd.xlane.f32.xlu0 %v7882
        %v7889 = vpop.xlane.xlu0 %7888
        %7890 = vadd.xlane.f32.xlu0 %v7883
        %v7891 = vpop.xlane.xlu0 %7890
        %v7892 = vmul.f32 %v7885, %v700
        %v7893 = vmul.f32 %v7887, %v700
        %v7894 = vmul.f32 %v7889, %v700
        %v7895 = vmul.f32 %v7891, %v700
        %v7896 = vadd.f32 %v7892, 1e-05
        %v7897 = vadd.f32 %v7893, 1e-05
        %v7898 = vadd.f32 %v7894, 1e-05
        %v7899 = vadd.f32 %v7895, 1e-05
        %v7900 = vrsqrt.pop %v7896
        %v7901 = vrsqrt.pop %v7897
        %v7902 = vrsqrt.pop %v7898
        %v7903 = vrsqrt.pop %v7899
        %v7904 = vmul.f32 %v7876, %v7900
        %v7905 = vmul.f32 %v7877, %v7901
        %v7906 = vmul.f32 %v7878, %v7902
        %v7907 = vmul.f32 %v7879, %v7903
        %v7908 = vlaneseq
        %v7909 = vshrl.u32 %v7908, 7
        %v7910 = vsub.s32 6, %v7909
        %v7911 = vrot.slane %v689, %v7910
        %v7912 = vmul.f32 %v7904, %v7911
        %v7913 = vmul.f32 %v7905, %v7911
        %v7914 = vmul.f32 %v7906, %v7911
        %v7915 = vmul.f32 %v7907, %v7911
        %v7916 = vlaneseq
        %v7917 = vshrl.u32 %v7916, 7
        %v7918 = vsub.s32 7, %v7917
        %v7919 = vrot.slane %v689, %v7918
        %v7920 = vadd.f32 %v7912, %v7919
        %v7921 = vadd.f32 %v7913, %v7919
        %v7922 = vadd.f32 %v7914, %v7919
        %v7923 = vadd.f32 %v7915, %v7919
        %v7924 = vpack.c.bf16 %v7921, %v7920
        %v7925 = vpack.c.bf16 %v7923, %v7922
        %v7926 = vld [vmem:[%s586] sm:$0xff]
        %v7927 = vld [vmem:[%s586 + $0x8] sm:$0xff]
        %v7928 = vld [vmem:[%s586 + $0x10] sm:$0xff]
        %v7929 = vld [vmem:[%s586 + $0x18] sm:$0xff]
        %v7930 = vld [vmem:[%s586 + $0x20] sm:$0xff]
        %v7931 = vld [vmem:[%s586 + $0x28] sm:$0xff]
        %v7932 = vld [vmem:[%s586 + $0x30] sm:$0xff]
        %v7933 = vld [vmem:[%s586 + $0x38] sm:$0xff]
        %v7934 = vld [vmem:[%s586 + $0x40] sm:$0xff]
        %v7935 = vld [vmem:[%s586 + $0x48] sm:$0xff]
        %v7936 = vld [vmem:[%s586 + $0x50] sm:$0xff]
        %v7937 = vld [vmem:[%s586 + $0x58] sm:$0xff]
        %v7938 = vld [vmem:[%s586 + $0x60] sm:$0xff]
        %v7939 = vld [vmem:[%s586 + $0x68] sm:$0xff]
        %v7940 = vld [vmem:[%s586 + $0x70] sm:$0xff]
        %v7941 = vld [vmem:[%s586 + $0x78] sm:$0xff]
        %v7943 = vlaneseq
        %v7944 = vshrl.u32 %v7943, 7
        %v7945 = vsub.s32 0, %v7944
        %v7946 = vrot.slane %v691, %v7945
        %v7947 = vlaneseq
        %v7948 = vshrl.u32 %v7947, 7
        %v7949 = vsub.s32 1, %v7948
        %v7950 = vrot.slane %v691, %v7949
        %v7969 = vunpack.c.l.b16 %v7926
        %v7970 = vunpack.c.h.b16 %v7926
        %v7971 = vunpack.c.l.b16 %v7927
        %v7972 = vunpack.c.h.b16 %v7927
        %v7973 = vunpack.c.l.b16 %v7928
        %v7974 = vunpack.c.h.b16 %v7928
        %v7975 = vunpack.c.l.b16 %v7929
        %v7976 = vunpack.c.h.b16 %v7929
        %v7977 = vunpack.c.l.b16 %v7930
        %v7978 = vunpack.c.h.b16 %v7930
        %v7979 = vunpack.c.l.b16 %v7931
        %v7980 = vunpack.c.h.b16 %v7931
        %v7981 = vunpack.c.l.b16 %v7932
        %v7982 = vunpack.c.h.b16 %v7932
        %v7983 = vunpack.c.l.b16 %v7933
        %v7984 = vunpack.c.h.b16 %v7933
        %v7985 = vunpack.c.l.b16 %v7934
        %v7986 = vunpack.c.h.b16 %v7934
        %v7987 = vunpack.c.l.b16 %v7935
        %v7988 = vunpack.c.h.b16 %v7935
        %v7989 = vunpack.c.l.b16 %v7936
        %v7990 = vunpack.c.h.b16 %v7936
        %v7991 = vunpack.c.l.b16 %v7937
        %v7992 = vunpack.c.h.b16 %v7937
        %v7993 = vunpack.c.l.b16 %v7938
        %v7994 = vunpack.c.h.b16 %v7938
        %v7995 = vunpack.c.l.b16 %v7939
        %v7996 = vunpack.c.h.b16 %v7939
        %v7997 = vunpack.c.l.b16 %v7940
        %v7998 = vunpack.c.h.b16 %v7940
        %v7999 = vunpack.c.l.b16 %v7941
        %v8000 = vunpack.c.h.b16 %v7941
        %v8001 = vpack.c.b16 %v7971, %v7969
        %v8002 = vpack.c.b16 %v7972, %v7970
        %v8003 = vpack.c.b16 %v7975, %v7973
        %v8004 = vpack.c.b16 %v7976, %v7974
        %v8005 = vpack.c.b16 %v7979, %v7977
        %v8006 = vpack.c.b16 %v7980, %v7978
        %v8007 = vpack.c.b16 %v7983, %v7981
        %v8008 = vpack.c.b16 %v7984, %v7982
        %v8009 = vpack.c.b16 %v7987, %v7985
        %v8010 = vpack.c.b16 %v7988, %v7986
        %v8011 = vpack.c.b16 %v7991, %v7989
        %v8012 = vpack.c.b16 %v7992, %v7990
        %v8013 = vpack.c.b16 %v7995, %v7993
        %v8014 = vpack.c.b16 %v7996, %v7994
        %v8015 = vpack.c.b16 %v7999, %v7997
        %v8016 = vpack.c.b16 %v8000, %v7998
        %8033 = vmatprep.subr.bf16.mxu0 %v8002
        %8034 = vmatpush1.bf16.msra.mxu0 %v8001
        %8035 = vmatprep.subr.bf16.mxu0 %v8004
        %8036 = vmatpush1.bf16.msra.mxu0 %v8003
        %8037 = vmatprep.subr.bf16.mxu0 %v8006
        %8038 = vmatpush1.bf16.msra.mxu0 %v8005
        %8039 = vmatprep.subr.bf16.mxu0 %v8008
        %8040 = vmatpush1.bf16.msra.mxu0 %v8007
        %8041 = vmatprep.subr.bf16.mxu0 %v8010
        %8042 = vmatpush1.bf16.msra.mxu0 %v8009
        %8043 = vmatprep.subr.bf16.mxu0 %v8012
        %8044 = vmatpush1.bf16.msra.mxu0 %v8011
        %8045 = vmatprep.subr.bf16.mxu0 %v8014
        %8046 = vmatpush1.bf16.msra.mxu0 %v8013
        %8047 = vmatprep.subr.bf16.mxu0 %v8016
        %8048 = vmatpush1.bf16.msra.mxu0 %v8015
        %8049 = vmatprep.subr.bf16.mxu0 0
        %8050 = vmatpush1.bf16.msra.mxu0 0
        %8051 = vmatprep.subr.bf16.mxu0 0
        %8052 = vmatpush1.bf16.msra.mxu0 0
        %8053 = vmatprep.subr.bf16.mxu0 0
        %8054 = vmatpush1.bf16.msra.mxu0 0
        %8055 = vmatprep.subr.bf16.mxu0 0
        %8056 = vmatpush1.bf16.msra.mxu0 0
        %8057 = vmatprep.subr.bf16.mxu0 0
        %8058 = vmatpush1.bf16.msra.mxu0 0
        %8059 = vmatprep.subr.bf16.mxu0 0
        %8060 = vmatpush1.bf16.msra.mxu0 0
        %8061 = vmatprep.subr.bf16.mxu0 0
        %8062 = vmatpush1.bf16.msra.mxu0 0
        %8063 = vmatprep.subr.bf16.mxu0 0
        %8064 = vmatpush1.bf16.msra.mxu0 0
        %8065 = vmatprep.mubr.bf16.mxu0 0
        %8066 = vmatmul.mubr.bf16.gmra.mrb[0].mxu0 %v7924
        %v8067 = vpop.f32.mrb[0].mxu0
        %v8068 = vadd.f32 %v7946, %v8067
        %v8069 = vpop.f32.mrb[0].mxu0
        %v8070 = vadd.f32 %v7950, %v8069
        %v8071 = vpop.f32.mrb[0].mxu0
        %v8072 = vadd.f32 %v7946, %v8071
        %v8073 = vpop.f32.mrb[0].mxu0
        %v8074 = vadd.f32 %v7950, %v8073
        %8075 = vmatprep.mubr.bf16.mxu0 0
        %8076 = vmatmul.mubr.bf16.gmra.mrb[0].mxu0 %v7925
        %v8077 = vpop.f32.mrb[0].mxu0
        %v8078 = vadd.f32 %v7946, %v8077
        %v8079 = vpop.f32.mrb[0].mxu0
        %v8080 = vadd.f32 %v7950, %v8079
        %v8081 = vpop.f32.mrb[0].mxu0
        %v8082 = vadd.f32 %v7946, %v8081
        %v8083 = vpop.f32.mrb[0].mxu0
        %v8084 = vadd.f32 %v7950, %v8083
        %8085 = vdwg.mxu0
        %v8086 = vmax.f32 %v8068, 0.0
        %v8087 = vmax.f32 %v8070, 0.0
        %v8088 = vmax.f32 %v8072, 0.0
        %v8089 = vmax.f32 %v8074, 0.0
        %v8090 = vmax.f32 %v8078, 0.0
        %v8091 = vmax.f32 %v8080, 0.0
        %v8092 = vmax.f32 %v8082, 0.0
        %v8093 = vmax.f32 %v8084, 0.0
        %v8094 = vpack.c.bf16 %v8088, %v8086
        %v8095 = vpack.c.bf16 %v8089, %v8087
        %v8096 = vpack.c.bf16 %v8092, %v8090
        %v8097 = vpack.c.bf16 %v8093, %v8091
        %v8098 = vld [vmem:[%s595] sm:$0xf]
        %v8099 = vld [vmem:[%s595 + $0x4] sm:$0xf]
        %v8100 = vld [vmem:[%s595 + $0x8] sm:$0xf]
        %v8101 = vld [vmem:[%s595 + $0xc] sm:$0xf]
        %v8102 = vld [vmem:[%s595 + $0x10] sm:$0xf]
        %v8103 = vld [vmem:[%s595 + $0x14] sm:$0xf]
        %v8104 = vld [vmem:[%s595 + $0x18] sm:$0xf]
        %v8105 = vld [vmem:[%s595 + $0x1c] sm:$0xf]
        %v8106 = vld [vmem:[%s595 + $0x20] sm:$0xf]
        %v8107 = vld [vmem:[%s595 + $0x24] sm:$0xf]
        %v8108 = vld [vmem:[%s595 + $0x28] sm:$0xf]
        %v8109 = vld [vmem:[%s595 + $0x2c] sm:$0xf]
        %v8110 = vld [vmem:[%s595 + $0x30] sm:$0xf]
        %v8111 = vld [vmem:[%s595 + $0x34] sm:$0xf]
        %v8112 = vld [vmem:[%s595 + $0x38] sm:$0xf]
        %v8113 = vld [vmem:[%s595 + $0x3c] sm:$0xf]
        %v8114 = vld [vmem:[%s595 + $0x40] sm:$0xf]
        %v8115 = vld [vmem:[%s595 + $0x44] sm:$0xf]
        %v8116 = vld [vmem:[%s595 + $0x48] sm:$0xf]
        %v8117 = vld [vmem:[%s595 + $0x4c] sm:$0xf]
        %v8118 = vld [vmem:[%s595 + $0x50] sm:$0xf]
        %v8119 = vld [vmem:[%s595 + $0x54] sm:$0xf]
        %v8120 = vld [vmem:[%s595 + $0x58] sm:$0xf]
        %v8121 = vld [vmem:[%s595 + $0x5c] sm:$0xf]
        %v8122 = vld [vmem:[%s595 + $0x60] sm:$0xf]
        %v8123 = vld [vmem:[%s595 + $0x64] sm:$0xf]
        %v8124 = vld [vmem:[%s595 + $0x68] sm:$0xf]
        %v8125 = vld [vmem:[%s595 + $0x6c] sm:$0xf]
        %v8126 = vld [vmem:[%s595 + $0x70] sm:$0xf]
        %v8127 = vld [vmem:[%s595 + $0x74] sm:$0xf]
        %v8128 = vld [vmem:[%s595 + $0x78] sm:$0xf]
        %v8129 = vld [vmem:[%s595 + $0x7c] sm:$0xf]
        %v8130 = vlaneseq
        %v8131 = vshrl.u32 %v8130, 7
        %v8132 = vsub.s32 0, %v8131
        %v8133 = vrot.slane %v690, %v8132
        %v8166 = vunpack.c.l.b16 %v8098
        %v8167 = vunpack.c.l.b16 %v8099
        %v8168 = vunpack.c.l.b16 %v8100
        %v8169 = vunpack.c.l.b16 %v8101
        %v8170 = vunpack.c.l.b16 %v8102
        %v8171 = vunpack.c.l.b16 %v8103
        %v8172 = vunpack.c.l.b16 %v8104
        %v8173 = vunpack.c.l.b16 %v8105
        %v8174 = vunpack.c.l.b16 %v8106
        %v8175 = vunpack.c.l.b16 %v8107
        %v8176 = vunpack.c.l.b16 %v8108
        %v8177 = vunpack.c.l.b16 %v8109
        %v8178 = vunpack.c.l.b16 %v8110
        %v8179 = vunpack.c.l.b16 %v8111
        %v8180 = vunpack.c.l.b16 %v8112
        %v8181 = vunpack.c.l.b16 %v8113
        %v8182 = vunpack.c.l.b16 %v8114
        %v8183 = vunpack.c.l.b16 %v8115
        %v8184 = vunpack.c.l.b16 %v8116
        %v8185 = vunpack.c.l.b16 %v8117
        %v8186 = vunpack.c.l.b16 %v8118
        %v8187 = vunpack.c.l.b16 %v8119
        %v8188 = vunpack.c.l.b16 %v8120
        %v8189 = vunpack.c.l.b16 %v8121
        %v8190 = vunpack.c.l.b16 %v8122
        %v8191 = vunpack.c.l.b16 %v8123
        %v8192 = vunpack.c.l.b16 %v8124
        %v8193 = vunpack.c.l.b16 %v8125
        %v8194 = vunpack.c.l.b16 %v8126
        %v8195 = vunpack.c.l.b16 %v8127
        %v8196 = vunpack.c.l.b16 %v8128
        %v8197 = vunpack.c.l.b16 %v8129
        %v8198 = vpack.c.b16 %v8167, %v8166
        %v8199 = vpack.c.b16 %v8169, %v8168
        %v8200 = vpack.c.b16 %v8171, %v8170
        %v8201 = vpack.c.b16 %v8173, %v8172
        %v8202 = vpack.c.b16 %v8175, %v8174
        %v8203 = vpack.c.b16 %v8177, %v8176
        %v8204 = vpack.c.b16 %v8179, %v8178
        %v8205 = vpack.c.b16 %v8181, %v8180
        %v8206 = vpack.c.b16 %v8183, %v8182
        %v8207 = vpack.c.b16 %v8185, %v8184
        %v8208 = vpack.c.b16 %v8187, %v8186
        %v8209 = vpack.c.b16 %v8189, %v8188
        %v8210 = vpack.c.b16 %v8191, %v8190
        %v8211 = vpack.c.b16 %v8193, %v8192
        %v8212 = vpack.c.b16 %v8195, %v8194
        %v8213 = vpack.c.b16 %v8197, %v8196
        %8230 = vmatprep.subr.bf16.mxu0 0
        %8231 = vmatpush1.bf16.msra.mxu0 %v8198
        %8232 = vmatprep.subr.bf16.mxu0 0
        %8233 = vmatpush1.bf16.msra.mxu0 %v8199
        %8234 = vmatprep.subr.bf16.mxu0 0
        %8235 = vmatpush1.bf16.msra.mxu0 %v8200
        %8236 = vmatprep.subr.bf16.mxu0 0
        %8237 = vmatpush1.bf16.msra.mxu0 %v8201
        %8238 = vmatprep.subr.bf16.mxu0 0
        %8239 = vmatpush1.bf16.msra.mxu0 %v8202
        %8240 = vmatprep.subr.bf16.mxu0 0
        %8241 = vmatpush1.bf16.msra.mxu0 %v8203
        %8242 = vmatprep.subr.bf16.mxu0 0
        %8243 = vmatpush1.bf16.msra.mxu0 %v8204
        %8244 = vmatprep.subr.bf16.mxu0 0
        %8245 = vmatpush1.bf16.msra.mxu0 %v8205
        %8246 = vmatprep.subr.bf16.mxu0 0
        %8247 = vmatpush1.bf16.msra.mxu0 %v8206
        %8248 = vmatprep.subr.bf16.mxu0 0
        %8249 = vmatpush1.bf16.msra.mxu0 %v8207
        %8250 = vmatprep.subr.bf16.mxu0 0
        %8251 = vmatpush1.bf16.msra.mxu0 %v8208
        %8252 = vmatprep.subr.bf16.mxu0 0
        %8253 = vmatpush1.bf16.msra.mxu0 %v8209
        %8254 = vmatprep.subr.bf16.mxu0 0
        %8255 = vmatpush1.bf16.msra.mxu0 %v8210
        %8256 = vmatprep.subr.bf16.mxu0 0
        %8257 = vmatpush1.bf16.msra.mxu0 %v8211
        %8258 = vmatprep.subr.bf16.mxu0 0
        %8259 = vmatpush1.bf16.msra.mxu0 %v8212
        %8260 = vmatprep.subr.bf16.mxu0 0
        %8261 = vmatpush1.bf16.msra.mxu0 %v8213
        %8262 = vmatprep.mubr.bf16.mxu0 %v8095
        %8263 = vmatmul.mubr.bf16.gmra.mrb[0].mxu0 %v8094
        %v8264 = vpop.f32.mrb[0].mxu0
        %v8265 = vadd.f32 %v8133, %v8264
        %v8266 = vpop.f32.mrb[0].mxu0
        %v8267 = vpop.f32.mrb[0].mxu0
        %v8268 = vadd.f32 %v8133, %v8267
        %v8269 = vpop.f32.mrb[0].mxu0
        %8270 = vmatprep.mubr.bf16.mxu0 %v8097
        %8271 = vmatmul.mubr.bf16.gmra.mrb[0].mxu0 %v8096
        %v8272 = vpop.f32.mrb[0].mxu0
        %v8273 = vadd.f32 %v8133, %v8272
        %v8274 = vpop.f32.mrb[0].mxu0
        %v8275 = vpop.f32.mrb[0].mxu0
        %v8276 = vadd.f32 %v8133, %v8275
        %v8277 = vpop.f32.mrb[0].mxu0
        %8278 = vdwg.mxu0
        %v8279 = vadd.f32 %v7860, %v8265
        %v8280 = vadd.f32 %v7861, %v8268
        %v8281 = vadd.f32 %v7862, %v8273
        %v8282 = vadd.f32 %v7863, %v8276
        %8283 = vst [vmem:[%s669] sm:$0xff] %v8279
        %8284 = vst [vmem:[%s669 + $0x8] sm:$0xff] %v8280
        %8285 = vst [vmem:[%s669 + $0x10] sm:$0xff] %v8281
        %8286 = vst [vmem:[%s669 + $0x18] sm:$0xff] %v8282
        %s8287 = sand.u32 %s292, 1
        %s8288 = scalar_lea.sflag [#allocation4], %s8287
        %s8289 = sand.u32 %s292, 1
        %s8290 = smul.addr %s8289, 32
        %s8291 = scalar_lea.vmem [#allocation17], %s8290
        // Predicated region
        $region97: #{tpu_custom_call.1} parent=55 // pred_check
          %p8292 = pneg %p302
        $region98: #{tpu_custom_call.1} parent=55 // pred_check_branch
          %8294 = sbr.rel (%p8292) target = $region100
        $region99: #{tpu_custom_call.1} parent=55 // pred_region
          %s8295 = smul.u32 2, %s42
          %s8297 = ssub.s32 512, 512
          %8298 = vsyncadd %s8288, %s8297
          %s8299 = smul.addr %s8295, 2
          %s8300 = smul.addr %s8299, 128
          %s8301 = scalar_lea.hbm %s9, %s8300
          %s8302 = sshll.u32 %s8291, 4
          %s8303 = int_to_ptr.vmem [resolvable:$true] %s8302
          %8308 = dma.vmem_to_hbm [thread:$0]  %s8303, 512, %s8301, %s8288, 128, 128, 8
        $region100: #{tpu_custom_call.1} parent=55 // pred_fallthru
          _
      $region56: #{tpu_custom_call.1} parent=5 // pred_fallthru
        _
      %p8309 = scmp.le.s32.totalorder 2, %s33
      // Predicated region
      $region101: #{tpu_custom_call.1} parent=5 // pred_check
        %p8310 = pneg %p8309
      $region102: #{tpu_custom_call.1} parent=5 // pred_check_branch
        %8312 = sbr.rel (%p8310) target = $region104
      $region103: #{tpu_custom_call.1} parent=5 // pred_region
        %s8313 = ssub.s32 %s33, 2
        // Predicated region
        $region105: #{tpu_custom_call.1} parent=103 // pred_check
          %p8314 = pneg %p308
        $region106: #{tpu_custom_call.1} parent=103 // pred_check_branch
          %8316 = sbr.rel (%p8314) target = $region108
        $region107: #{tpu_custom_call.1} parent=103 // pred_region
          %s8317 = sand.u32 %s293, 1
          %s8318 = scalar_lea.sflag [#allocation4], %s8317
          %s8319 = sand.u32 %s293, 1
          %s8320 = smul.addr %s8319, 32
          %s8321 = scalar_lea.vmem [#allocation17], %s8320
          %8322 = dma.done %s8318, 512
        $region108: #{tpu_custom_call.1} parent=103 // pred_fallthru
          _
      $region104: #{tpu_custom_call.1} parent=5 // pred_fallthru
        _
    $region6: #{tpu_custom_call.1} parent=1 // loop_footer
      %s37 = sadd.s32 1, %s33
    $region7: #{tpu_custom_call.1} parent=1 // loop_footer_branch
      %32 = sbr.rel target = $region3
    $region8: #{tpu_custom_call.1} parent=1 // loop_exit
      _
    %8323 = vsyncpa [#allocation3], 1
    %s8324 = scalar_lea.sflag [#allocation3], 1
    %8325 = vsyncpa %s8324, 1
    %8326 = vsyncpa [#allocation6], 1
    %s8327 = scalar_lea.sflag [#allocation6], 1
    %8328 = vsyncpa %s8327, 1
    %8329 = vsyncpa [#allocation9], 1
    %s8330 = scalar_lea.sflag [#allocation9], 1
    %8331 = vsyncpa %s8330, 1
    %8332 = vsyncpa [#allocation12], 1
    %s8333 = scalar_lea.sflag [#allocation12], 1
    %8334 = vsyncpa %s8333, 1
    %8335 = vsyncpa [#allocation15], 1
    %s8336 = scalar_lea.sflag [#allocation15], 1
    %8337 = vsyncpa %s8336, 1
    %8338 = vsyncpa [#allocation4], 1
    %s8339 = scalar_lea.sflag [#allocation4], 1
    %8340 = vsyncpa %s8339, 1

</llo_original>
